<compile_context>
chip_gen: v6e
topology: v6e:2x2x1
jax: 0.10.0
libtpu: 0.0.40
codegen_flags: <defaults>
</compile_context>

<pallas_src>
import functools
import math

import jax
import jax.numpy as jnp
from jax import lax
from jax.experimental import pallas as pl
from jax.experimental.pallas import tpu as pltpu


# ---------------------------------------------------------------------------
# VMEM budgeting (generation aware, Mosaic-padding aware).
# ---------------------------------------------------------------------------

_DEF_VMEM = 64 * 1024 * 1024  # assume the smallest (v7x per-core VMEM) if unknown


def _rup(x, m):
    return (x + m - 1) // m * m


def _lane(c):
    return _rup(max(int(c), 1), 128)


@functools.lru_cache(maxsize=None)
def _vmem_caps():
    """Returns (tile working-set budget, vmem_limit_bytes) for this chip."""
    cap = _DEF_VMEM
    try:
        info = pltpu.get_tpu_info()
        cap = int(getattr(info, "vmem_capacity_bytes", 0) or _DEF_VMEM)
    except Exception:
        cap = _DEF_VMEM
    budget = max(16 << 20, min(int(cap * 0.40), 96 << 20))
    limit = max(budget + (8 << 20), min(int(cap * 0.75), 110 << 20))
    return budget, limit


def _conv_tile_bytes(th_out, w_out, cin, cout, out_isz, *, pair=False, up2=False):
    """Over-estimate of one grid step's VMEM working set with Mosaic padding
    (lane dim -> multiple of 128, sublane dim -> multiple of 16)."""
    bf = 2  # bf16 itemsize
    lci, lco, lk = _lane(cin), _lane(cout), _lane(9 * cin)
    th_in = th_out // 2 if up2 else th_out
    w_in = w_out // 2 if up2 else w_out
    halo = 4 if pair else 2
    sub_wi = _rup(w_in, 16)
    sub_wo = _rup(w_out + 2, 16)
    m1 = (th_out + (2 if pair else 0)) * w_out    # conv1 im2col rows
    m2 = th_out * w_out
    b = 0
    b += 2 * th_in * sub_wi * lci * bf            # input row block (double buffered)
    b += 2 * halo * sub_wi * lci * bf             # halo rows (double buffered)
    b += 2 * th_out * sub_wo * lco * out_isz      # output block (double buffered)
    b += (th_out + 4) * sub_wo * lci * bf         # zero-padded input slab
    if up2:
        b += (th_out + 4) * sub_wo * lci * bf     # NN-upsample temporaries
    b += m1 * lk * bf                             # im2col (K = 9*Cin)
    b += m1 * lco * 4                             # f32 accumulator
    if pair:
        b += m1 * lci * (4 + bf)                  # intermediate activation (f32+bf16)
        b += m2 * lk * bf                         # second im2col
        b += m2 * lco * 4                         # second accumulator
    return b + (4 << 20)                          # weights / fudge


def _pick_tile_rows(h, bytes_fn, budget, batch):
    """Largest tile row-count whose padded working set fits `budget`.  Prefers
    divisors of `h` (avoids the ragged path); when batch == 1 keeps >= 2 row
    tiles so v7x megacore has two grid points to shard."""
    cap = h if batch > 1 else max(1, -(-h // 2))
    th = cap
    while th > 1 and bytes_fn(th) > budget:
        shrunk = int(th * budget / max(bytes_fn(th), 1))
        th = max(1, min(th - 1, shrunk))
    for d in range(th, 0, -1):
        if h % d == 0:
            if 3 * d >= th:
                return d
            break
    return th


# ---------------------------------------------------------------------------
# Kernels.
# ---------------------------------------------------------------------------

def _conv3x3_kernel(xb_ref, xh_ref, w_ref, o_ref, *, th_src, w_src, cin, cout,
                    h_src, relu, up2, ragged):
    """One row tile of a 3x3 same conv (optionally on the nearest-x2 upsample of
    the input), single K=9*Cin MXU matmul, fused ReLU epilogue."""
    t = pl.program_id(1)
    xb = xb_ref[...]                                           # (th_src, w_src, cin)
    if ragged:  # zero rows that lie beyond the image (last, partial tile)
        rows = lax.broadcasted_iota(jnp.int32, (th_src, 1, 1), 0)
        xb = jnp.where(rows < (h_src - t * th_src), xb, jnp.zeros_like(xb))
    top = xh_ref[0:1]                                          # row t*th_src - 1 (or 0)
    bot = xh_ref[1:2]                                          # row t*th_src + th_src (or 0)
    if up2:
        th_out, w_out = 2 * th_src, 2 * w_src
        xb = jnp.broadcast_to(xb[:, None], (th_src, 2, w_src, cin)
                              ).reshape(th_out, w_src, cin)    # nearest x2 (rows)
        slab = jnp.concatenate([top, xb, bot], axis=0)         # (th_out+2, w_src, cin)
        slab = jnp.broadcast_to(slab[:, :, None, :], (th_out + 2, w_src, 2, cin)
                                ).reshape(th_out + 2, w_out, cin)  # nearest x2 (cols)
    else:
        th_out, w_out = th_src, w_src
        slab = jnp.concatenate([top, xb, bot], axis=0)         # (th_out+2, w_src, cin)
    zc = jnp.zeros((th_out + 2, 1, cin), slab.dtype)
    slab = jnp.concatenate([zc, slab, zc], axis=1)             # (th_out+2, w_out+2, cin)
    taps = [slab[dy:dy + th_out, dx:dx + w_out, :]
            for dy in range(3) for dx in range(3)]
    a = jnp.concatenate(taps, axis=-1).reshape(th_out * w_out, 9 * cin)
    acc = jnp.dot(a, w_ref[...], preferred_element_type=jnp.float32)
    acc = acc.reshape(th_out, w_out, cout)
    if relu:
        acc = jnp.maximum(acc, 0.0)
    o_ref[...] = acc.astype(o_ref.dtype)


def _resblock_kernel(xb_ref, xh_ref, w1_ref, w2_ref, o_ref, *, th, w, c, h, ragged):
    """Fused ResidualBlock tile: conv3x3 -> ReLU -> conv3x3 -> skip add.  The
    intermediate activation stays in VMEM (2-row halo on the input)."""
    t = pl.program_id(1)
    xb = xb_ref[...]                                           # (th, w, c)
    if ragged:
        rows = lax.broadcasted_iota(jnp.int32, (th, 1, 1), 0)
        xb = jnp.where(rows < (h - t * th), xb, jnp.zeros_like(xb))
    slab = jnp.concatenate([xh_ref[0:2], xb, xh_ref[2:4]], axis=0)   # (th+4, w, c)
    zc = jnp.zeros((th + 4, 1, c), slab.dtype)
    slab = jnp.concatenate([zc, slab, zc], axis=1)             # (th+4, w+2, c)
    # conv1 over th+2 rows (one extra on each side for conv2's window) + ReLU.
    taps1 = [slab[dy:dy + th + 2, dx:dx + w, :]
             for dy in range(3) for dx in range(3)]
    a1 = jnp.concatenate(taps1, axis=-1).reshape((th + 2) * w, 9 * c)
    mid = jnp.dot(a1, w1_ref[...], preferred_element_type=jnp.float32)
    mid = jnp.maximum(mid, 0.0).reshape(th + 2, w, c)
    # Rows of the intermediate that are conv2's vertical zero padding
    # (global rows < 0 or >= h) must be zero, not conv1-of-padding values.
    rows2 = lax.broadcasted_iota(jnp.int32, (th + 2, 1, 1), 0)
    gr = t * th - 1 + rows2
    mid = jnp.where((gr >= 0) & (gr < h), mid, 0.0).astype(jnp.bfloat16)
    zc2 = jnp.zeros((th + 2, 1, c), mid.dtype)
    mid = jnp.concatenate([zc2, mid, zc2], axis=1)             # (th+2, w+2, c)
    taps2 = [mid[dy:dy + th, dx:dx + w, :]
             for dy in range(3) for dx in range(3)]
    a2 = jnp.concatenate(taps2, axis=-1).reshape(th * w, 9 * c)
    y = jnp.dot(a2, w2_ref[...], preferred_element_type=jnp.float32)
    y = y.reshape(th, w, c) + xb.astype(jnp.float32)           # conv -> skip add
    o_ref[...] = y.astype(o_ref.dtype)


# ---------------------------------------------------------------------------
# Wrappers.
# ---------------------------------------------------------------------------

def _halo_rows(x, nt, th, halo):
    """(B, nt, 2*halo, W, C): the `halo` rows above and below each row tile;
    rows outside the image are zero (the conv's vertical zero padding).  This
    is the only duplicated activation data (a few rows per tile)."""
    B, H, W, C = x.shape
    starts = jnp.arange(nt, dtype=jnp.int32)[:, None] * th
    offs = jnp.concatenate([jnp.arange(-halo, 0, dtype=jnp.int32),
                            jnp.arange(th, th + halo, dtype=jnp.int32)])
    idx = starts + offs[None, :]                               # (nt, 2*halo)
    valid = (idx >= 0) & (idx < H)
    rows = jnp.take(x, jnp.clip(idx, 0, H - 1).reshape(-1), axis=1)
    rows = rows.reshape(B, nt, 2 * halo, W, C)
    return jnp.where(valid[None, :, :, None, None], rows, jnp.zeros((), x.dtype))


def conv3x3(x, w, *, relu=False, up2=False, out_dtype=jnp.bfloat16,
            max_tile_rows=None):
    """3x3, stride-1, pad-1, bias-free conv (optionally preceded by a fused
    nearest-neighbour x2 upsample), fused ReLU epilogue.  NHWC in / NHWC out."""
    B, Hs, Ws, Cin = x.shape
    Cout = w.shape[-1]
    Hout, Wout = (2 * Hs, 2 * Ws) if up2 else (Hs, Ws)
    out_isz = jnp.dtype(out_dtype).itemsize
    budget, vlim = _vmem_caps()
    bytes_fn = lambda ts: _conv_tile_bytes(2 * ts if up2 else ts, Wout, Cin,
                                           Cout, out_isz, up2=up2)
    ths = _pick_tile_rows(Hs, bytes_fn, budget, B)
    if max_tile_rows is not None:
        ths = max(1, min(ths, max_tile_rows))
    nt = (Hs + ths - 1) // ths
    th_out = 2 * ths if up2 else ths

    x = x.astype(jnp.bfloat16)
    wk = w.reshape(9 * Cin, Cout).astype(jnp.bfloat16)
    halos = _halo_rows(x, nt, ths, 1)

    kernel = functools.partial(
        _conv3x3_kernel, th_src=ths, w_src=Ws, cin=Cin, cout=Cout, h_src=Hs,
        relu=relu, up2=up2, ragged=(Hs % ths != 0))
    return pl.pallas_call(
        kernel,
        out_shape=jax.ShapeDtypeStruct((B, Hout, Wout, Cout), out_dtype),
        grid=(B, nt),
        in_specs=[
            pl.BlockSpec((None, ths, Ws, Cin), lambda b, t: (b, t, 0, 0)),
            pl.BlockSpec((None, None, 2, Ws, Cin), lambda b, t: (b, t, 0, 0, 0)),
            pl.BlockSpec((9 * Cin, Cout), lambda b, t: (0, 0)),
        ],
        out_specs=pl.BlockSpec((None, th_out, Wout, Cout),
                               lambda b, t: (b, t, 0, 0)),
        compiler_params=pltpu.CompilerParams(
            dimension_semantics=("parallel", "parallel"),
            vmem_limit_bytes=vlim),
    )(x, halos, wk)


def residual_block(x, w1, w2, *, max_tile_rows=None):
    """Fused ResidualBlock (conv -> ReLU -> conv -> skip add) in one pallas_call."""
    B, H, W, C = x.shape
    budget, vlim = _vmem_caps()
    bytes_fn = lambda ts: _conv_tile_bytes(ts, W, C, C, 2, pair=True)
    th = _pick_tile_rows(H, bytes_fn, budget, B)
    if max_tile_rows is not None:
        th = max(1, min(th, max_tile_rows))
    nt = (H + th - 1) // th

    x = x.astype(jnp.bfloat16)
    w1k = w1.reshape(9 * C, C).astype(jnp.bfloat16)
    w2k = w2.reshape(9 * C, C).astype(jnp.bfloat16)
    halos = _halo_rows(x, nt, th, 2)

    kernel = functools.partial(_resblock_kernel, th=th, w=W, c=C, h=H,
                               ragged=(H % th != 0))
    return pl.pallas_call(
        kernel,
        out_shape=jax.ShapeDtypeStruct((B, H, W, C), jnp.bfloat16),
        grid=(B, nt),
        in_specs=[
            pl.BlockSpec((None, th, W, C), lambda b, t: (b, t, 0, 0)),
            pl.BlockSpec((None, None, 4, W, C), lambda b, t: (b, t, 0, 0, 0)),
            pl.BlockSpec((9 * C, C), lambda b, t: (0, 0)),
            pl.BlockSpec((9 * C, C), lambda b, t: (0, 0)),
        ],
        out_specs=pl.BlockSpec((None, th, W, C), lambda b, t: (b, t, 0, 0)),
        compiler_params=pltpu.CompilerParams(
            dimension_semantics=("parallel", "parallel"),
            vmem_limit_bytes=vlim),
    )(x, halos, w1k, w2k)


# ---------------------------------------------------------------------------
# Bicubic upsample matching torch interpolate(mode='bicubic',
# align_corners=False) - Keys a=-0.75, half-pixel centers, clamped edges.
# Phase-decomposed separable filter: no 4x taps tensor, no gathers.
# ---------------------------------------------------------------------------

def _keys_weights(t, a=-0.75):
    s = 1.0 - t
    return (a * t * s * s,
            (a + 2.0) * t ** 3 - (a + 3.0) * t ** 2 + 1.0,
            (a + 2.0) * s ** 3 - (a + 3.0) * s ** 2 + 1.0,
            a * s * t * t)


def _shift_clamped(x, d, axis):
    """out[..., q, ...] = x[..., clamp(q + d, 0, n-1), ...] for integer d."""
    n = x.shape[axis]
    d = max(-(n - 1), min(d, n - 1))
    if d == 0:
        return x
    if d > 0:
        main = lax.slice_in_dim(x, d, n, axis=axis)
        edge = lax.slice_in_dim(x, n - 1, n, axis=axis)
        return jnp.concatenate([main] + [edge] * d, axis=axis)
    k = -d
    main = lax.slice_in_dim(x, 0, n - k, axis=axis)
    edge = lax.slice_in_dim(x, 0, 1, axis=axis)
    return jnp.concatenate([edge] * k + [main], axis=axis)


def _bicubic_upsample_axis(x, axis, s):
    if s == 1:
        return x
    n = x.shape[axis]
    phases = []
    for p in range(s):
        real = (p + 0.5) / s - 0.5
        d0 = int(math.floor(real))
        wts = _keys_weights(real - d0)
        acc = None
        for k in range(4):
            term = wts[k] * _shift_clamped(x, d0 - 1 + k, axis)
            acc = term if acc is None else acc + term
        phases.append(acc)
    y = jnp.stack(phases, axis=axis + 1)
    shape = list(x.shape)
    shape[axis] = n * s
    return y.reshape(shape)


def bicubic_upsample(x, scale):
    y = _bicubic_upsample_axis(x, 1, scale)
    return _bicubic_upsample_axis(y, 2, scale)


# ---------------------------------------------------------------------------
# Parameters and forward pass.
# ---------------------------------------------------------------------------

def init_params(key, *, scale, c, f, n, l):
    """Matches the PyTorch __init__ (normal_, std=sqrt(2/(f*f*Cout)); residual
    convs additionally divided by l).  Weight layout: (kh, kw, Cin, Cout)."""
    assert f == 3, "these Pallas kernels implement the 3x3 case EnhanceNet uses"
    n_up = int(round(math.log2(scale))) if scale > 1 else 0
    keys = iter(jax.random.split(key, 4 + 2 * l + max(n_up, 1)))
    std_n = math.sqrt(2.0 / (f * f * n))
    std_c = math.sqrt(2.0 / (f * f * c))

    def normal(k, shape, std):
        return (std * jax.random.normal(k, shape)).astype(jnp.float32)

    return {
        "input": normal(next(keys), (f, f, c, n), std_n),
        "residual": [(normal(next(keys), (f, f, n, n), std_n / l),
                      normal(next(keys), (f, f, n, n), std_n / l))
                     for _ in range(l)],
        "upscale": [normal(next(keys), (f, f, n, n), std_n) for _ in range(n_up)],
        "out1": normal(next(keys), (f, f, n, n), std_n),
        "out2": normal(next(keys), (f, f, n, c), std_c),
    }


def enhancenet_forward(x_nchw, params, scale, max_tile_rows=None):
    """Forward pass equivalent to EnhanceNet.forward.  Input/output NCHW f32."""
    x = jnp.transpose(x_nchw, (0, 2, 3, 1)).astype(jnp.float32)   # NCHW -> NHWC
    inp = x
    # self.input: conv(c->n) + ReLU
    y = conv3x3(x, params["input"], relu=True, max_tile_rows=max_tile_rows)
    # self.residual: l x fused [conv + ReLU, conv, skip add]
    for w1, w2 in params["residual"]:
        y = residual_block(y, w1, w2, max_tile_rows=max_tile_rows)
    # self.upscale: log2(scale) x [nearest x2 (in-kernel), conv, ReLU]
    for w in params["upscale"]:
        y = conv3x3(y, w, relu=True, up2=True, max_tile_rows=max_tile_rows)
    # self.output: conv(n->n) + ReLU, conv(n->c)
    y = conv3x3(y, params["out1"], relu=True, max_tile_rows=max_tile_rows)
    y = conv3x3(y, params["out2"], out_dtype=jnp.float32,
                max_tile_rows=max_tile_rows)
    # + bicubic-upsampled input (align_corners=False, a=-0.75, like PyTorch)
    y = y + bicubic_upsample(inp, scale)
    return jnp.transpose(y, (0, 3, 1, 2))                          # NHWC -> NCHW


# ---------------------------------------------------------------------------
# Reference forward (XLA convs, same bf16 discipline) used for validation.
# ---------------------------------------------------------------------------

def _ref_conv(x, w, relu=False):
    y = lax.conv_general_dilated(
        x.astype(jnp.bfloat16), w.astype(jnp.bfloat16), (1, 1), "SAME",
        dimension_numbers=("NHWC", "HWIO", "NHWC"),
        preferred_element_type=jnp.float32)
    return jnp.maximum(y, 0.0) if relu else y


def reference_forward(x_nchw, params, scale):
    x = jnp.transpose(x_nchw, (0, 2, 3, 1)).astype(jnp.float32)
    inp = x
    y = _ref_conv(x, params["input"], relu=True).astype(jnp.bfloat16)
    for w1, w2 in params["residual"]:
        h = _ref_conv(y, w1, relu=True).astype(jnp.bfloat16)
        y = (_ref_conv(h, w2) + y.astype(jnp.float32)).astype(jnp.bfloat16)
    for w in params["upscale"]:
        yu = jnp.repeat(jnp.repeat(y, 2, axis=1), 2, axis=2)
        y = _ref_conv(yu, w, relu=True).astype(jnp.bfloat16)
    y = _ref_conv(y, params["out1"], relu=True).astype(jnp.bfloat16)
    y = _ref_conv(y, params["out2"])
    y = y + bicubic_upsample(inp, scale)
    return jnp.transpose(y, (0, 3, 1, 2))


if __name__ == "__main__":
    # Small, module-consistent config: scale=2, c=3 (RGB), f=3, n=16, l=2.
    scale, c, f, n, l = 2, 3, 3, 16, 2
    B, H, W = 2, 16, 16

    key = jax.random.PRNGKey(0)
    k_param, k_input = jax.random.split(key)
    params = init_params(k_param, scale=scale, c=c, f=f, n=n, l=l)
    x = jax.random.normal(k_input, (B, c, H, W), dtype=jnp.float32)  # NCHW

    # max_tile_rows=8 forces multiple row tiles so the halo paths are exercised.
    fwd = jax.jit(enhancenet_forward, static_argnums=(2, 3))
    out = jax.block_until_ready(fwd(x, params, scale, 8))
    assert out.shape == (B, c, H * scale, W * scale), out.shape
    assert out.dtype == jnp.float32

    ref = jax.block_until_ready(
        jax.jit(reference_forward, static_argnums=(2,))(x, params, scale))
    err = float(jnp.max(jnp.abs(out - ref)))
    assert err < 0.35, f"kernel/reference mismatch: max abs err = {err}"
    print("KERNEL_OK")
</pallas_src>

<mosaic_0001>
module attributes {stable_mosaic.version = 11 : i64} {
  func.func @_conv3x3_kernel(%arg0: i32, %arg1: i32, %arg2: memref<1x8x16x3xbf16, #tpu.memory_space<vmem>>, %arg3: memref<1x1x2x16x3xbf16, #tpu.memory_space<vmem>>, %arg4: memref<27x16xbf16, #tpu.memory_space<vmem>>, %arg5: memref<1x8x16x16xbf16, #tpu.memory_space<vmem>>) attributes {dimension_semantics = [#tpu.dimension_semantics<parallel>, #tpu.dimension_semantics<parallel>], iteration_bounds = array<i64: 2, 2>, scalar_prefetch = 0 : i64, scratch_operands = 0 : i64, tpu.core_type = #tpu.core_type<tc>, window_params = [{transform_indices = @transform_0, window_bounds = array<i64: 1, 8, 16, 3>}, {transform_indices = @transform_1, window_bounds = array<i64: 1, 1, 2, 16, 3>}, {pipeline_mode = #tpu.pipeline_mode<synchronous>, transform_indices = @transform_2, window_bounds = array<i64: 27, 16>}, {transform_indices = @transform_3, window_bounds = array<i64: 1, 8, 16, 16>}]} {
    %c0 = arith.constant 0 : index
    %c0_0 = arith.constant 0 : index
    %c0_1 = arith.constant 0 : index
    %c0_2 = arith.constant 0 : index
    %0 = vector.load %arg2[%c0, %c0_0, %c0_1, %c0_2] : memref<1x8x16x3xbf16, #tpu.memory_space<vmem>>, vector<1x8x16x3xbf16>
    %1 = vector.shape_cast %0 : vector<1x8x16x3xbf16> to vector<8x16x3xbf16>
    %c0_3 = arith.constant 0 : index
    %c0_4 = arith.constant 0 : index
    %c0_5 = arith.constant 0 : index
    %c0_6 = arith.constant 0 : index
    %c0_7 = arith.constant 0 : index
    %2 = vector.load %arg3[%c0_3, %c0_4, %c0_5, %c0_6, %c0_7] : memref<1x1x2x16x3xbf16, #tpu.memory_space<vmem>>, vector<1x1x1x16x3xbf16>
    %3 = vector.shape_cast %2 : vector<1x1x1x16x3xbf16> to vector<1x16x3xbf16>
    %c0_8 = arith.constant 0 : index
    %c0_9 = arith.constant 0 : index
    %c1 = arith.constant 1 : index
    %c0_10 = arith.constant 0 : index
    %c0_11 = arith.constant 0 : index
    %4 = vector.load %arg3[%c0_8, %c0_9, %c1, %c0_10, %c0_11] : memref<1x1x2x16x3xbf16, #tpu.memory_space<vmem>>, vector<1x1x1x16x3xbf16>
    %5 = vector.shape_cast %4 : vector<1x1x1x16x3xbf16> to vector<1x16x3xbf16>
    %6 = tpu.concatenate %3, %1, %5 in 0 : vector<1x16x3xbf16>, vector<8x16x3xbf16>, vector<1x16x3xbf16> -> vector<10x16x3xbf16>
    %cst = arith.constant 0.000000e+00 : bf16
    %7 = vector.broadcast %cst : bf16 to vector<10x1x3xbf16>
    %8 = tpu.concatenate %7, %6, %7 in 1 : vector<10x1x3xbf16>, vector<10x16x3xbf16>, vector<10x1x3xbf16> -> vector<10x18x3xbf16>
    %9 = vector.extract_strided_slice %8 {offsets = [0, 0, 0], sizes = [8, 16, 3], strides = [1, 1, 1]} : vector<10x18x3xbf16> to vector<8x16x3xbf16>
    %10 = vector.extract_strided_slice %8 {offsets = [0, 1, 0], sizes = [8, 16, 3], strides = [1, 1, 1]} : vector<10x18x3xbf16> to vector<8x16x3xbf16>
    %11 = vector.extract_strided_slice %8 {offsets = [0, 2, 0], sizes = [8, 16, 3], strides = [1, 1, 1]} : vector<10x18x3xbf16> to vector<8x16x3xbf16>
    %12 = vector.extract_strided_slice %8 {offsets = [1, 0, 0], sizes = [8, 16, 3], strides = [1, 1, 1]} : vector<10x18x3xbf16> to vector<8x16x3xbf16>
    %13 = vector.extract_strided_slice %8 {offsets = [1, 1, 0], sizes = [8, 16, 3], strides = [1, 1, 1]} : vector<10x18x3xbf16> to vector<8x16x3xbf16>
    %14 = vector.extract_strided_slice %8 {offsets = [1, 2, 0], sizes = [8, 16, 3], strides = [1, 1, 1]} : vector<10x18x3xbf16> to vector<8x16x3xbf16>
    %15 = vector.extract_strided_slice %8 {offsets = [2, 0, 0], sizes = [8, 16, 3], strides = [1, 1, 1]} : vector<10x18x3xbf16> to vector<8x16x3xbf16>
    %16 = vector.extract_strided_slice %8 {offsets = [2, 1, 0], sizes = [8, 16, 3], strides = [1, 1, 1]} : vector<10x18x3xbf16> to vector<8x16x3xbf16>
    %17 = vector.extract_strided_slice %8 {offsets = [2, 2, 0], sizes = [8, 16, 3], strides = [1, 1, 1]} : vector<10x18x3xbf16> to vector<8x16x3xbf16>
    %18 = tpu.concatenate %9, %10, %11, %12, %13, %14, %15, %16, %17 in 2 : vector<8x16x3xbf16>, vector<8x16x3xbf16>, vector<8x16x3xbf16>, vector<8x16x3xbf16>, vector<8x16x3xbf16>, vector<8x16x3xbf16>, vector<8x16x3xbf16>, vector<8x16x3xbf16>, vector<8x16x3xbf16> -> vector<8x16x27xbf16>
    %19 = vector.shape_cast %18 : vector<8x16x27xbf16> to vector<128x27xbf16>
    %c0_12 = arith.constant 0 : index
    %c0_13 = arith.constant 0 : index
    %20 = vector.load %arg4[%c0_12, %c0_13] : memref<27x16xbf16, #tpu.memory_space<vmem>>, vector<27x16xbf16>
    %cst_14 = arith.constant dense<0.000000e+00> : vector<128x16xf32>
    %21 = tpu.matmul %19, %20, %cst_14 {dimension_numbers = #tpu.dot_dimension_numbers<[1], [0], [0], [1], [0, 0, 1, 1], [], []>} : vector<128x27xbf16>, vector<27x16xbf16>, vector<128x16xf32> -> vector<128x16xf32>
    %22 = vector.shape_cast %21 : vector<128x16xf32> to vector<8x16x16xf32>
    %cst_15 = arith.constant 0.000000e+00 : f32
    %23 = vector.broadcast %cst_15 : f32 to vector<8x16x16xf32>
    %24 = arith.maximumf %22, %23 : vector<8x16x16xf32>
    %25 = arith.truncf %24 : vector<8x16x16xf32> to vector<8x16x16xbf16>
    %c0_16 = arith.constant 0 : index
    %c0_17 = arith.constant 0 : index
    %c0_18 = arith.constant 0 : index
    %c0_19 = arith.constant 0 : index
    %26 = vector.load %arg5[%c0_16, %c0_17, %c0_18, %c0_19] : memref<1x8x16x16xbf16, #tpu.memory_space<vmem>>, vector<1x8x16x16xbf16>
    %27 = vector.shape_cast %26 : vector<1x8x16x16xbf16> to vector<8x16x16xbf16>
    %28 = vector.shape_cast %25 : vector<8x16x16xbf16> to vector<1x8x16x16xbf16>
    tpu.vector_store %arg5[%c0_16, %c0_17, %c0_18, %c0_19], %28 {strides = array<i32>} : memref<1x8x16x16xbf16, #tpu.memory_space<vmem>>, vector<1x8x16x16xbf16>,
    return
  }
  func.func @transform_0(%arg0: i32, %arg1: i32) -> (i32, i32, i32, i32) {
    %c0_i32 = arith.constant 0 : i32
    %c0_i32_0 = arith.constant 0 : i32
    %c0_i32_1 = arith.constant 0 : i32
    return %arg0, %arg1, %c0_i32, %c0_i32_0 : i32, i32, i32, i32
  }
  func.func @transform_1(%arg0: i32, %arg1: i32) -> (i32, i32, i32, i32, i32) {
    %c0_i32 = arith.constant 0 : i32
    %c0_i32_0 = arith.constant 0 : i32
    %c0_i32_1 = arith.constant 0 : i32
    %c0_i32_2 = arith.constant 0 : i32
    return %arg0, %arg1, %c0_i32, %c0_i32_0, %c0_i32_1 : i32, i32, i32, i32, i32
  }
  func.func @transform_2(%arg0: i32, %arg1: i32) -> (i32, i32) {
    %c0_i32 = arith.constant 0 : i32
    %c0_i32_0 = arith.constant 0 : i32
    %c0_i32_1 = arith.constant 0 : i32
    return %c0_i32, %c0_i32_0 : i32, i32
  }
  func.func @transform_3(%arg0: i32, %arg1: i32) -> (i32, i32, i32, i32) {
    %c0_i32 = arith.constant 0 : i32
    %c0_i32_0 = arith.constant 0 : i32
    %c0_i32_1 = arith.constant 0 : i32
    return %arg0, %arg1, %c0_i32, %c0_i32_0 : i32, i32, i32, i32
  }
}

module attributes {stable_mosaic.version = 11 : i64} {
  func.func @_resblock_kernel(%arg0: i32, %arg1: i32, %arg2: memref<1x8x16x16xbf16, #tpu.memory_space<vmem>>, %arg3: memref<1x1x4x16x16xbf16, #tpu.memory_space<vmem>>, %arg4: memref<144x16xbf16, #tpu.memory_space<vmem>>, %arg5: memref<144x16xbf16, #tpu.memory_space<vmem>>, %arg6: memref<1x8x16x16xbf16, #tpu.memory_space<vmem>>) attributes {dimension_semantics = [#tpu.dimension_semantics<parallel>, #tpu.dimension_semantics<parallel>], iteration_bounds = array<i64: 2, 2>, scalar_prefetch = 0 : i64, scratch_operands = 0 : i64, tpu.core_type = #tpu.core_type<tc>, window_params = [{transform_indices = @transform_0, window_bounds = array<i64: 1, 8, 16, 16>}, {transform_indices = @transform_1, window_bounds = array<i64: 1, 1, 4, 16, 16>}, {pipeline_mode = #tpu.pipeline_mode<synchronous>, transform_indices = @transform_2, window_bounds = array<i64: 144, 16>}, {pipeline_mode = #tpu.pipeline_mode<synchronous>, transform_indices = @transform_3, window_bounds = array<i64: 144, 16>}, {transform_indices = @transform_4, window_bounds = array<i64: 1, 8, 16, 16>}]} {
    %c0 = arith.constant 0 : index
    %c0_0 = arith.constant 0 : index
    %c0_1 = arith.constant 0 : index
    %c0_2 = arith.constant 0 : index
    %0 = vector.load %arg2[%c0, %c0_0, %c0_1, %c0_2] : memref<1x8x16x16xbf16, #tpu.memory_space<vmem>>, vector<1x8x16x16xbf16>
    %1 = vector.shape_cast %0 : vector<1x8x16x16xbf16> to vector<8x16x16xbf16>
    %c0_3 = arith.constant 0 : index
    %c0_4 = arith.constant 0 : index
    %c0_5 = arith.constant 0 : index
    %c0_6 = arith.constant 0 : index
    %c0_7 = arith.constant 0 : index
    %2 = vector.load %arg3[%c0_3, %c0_4, %c0_5, %c0_6, %c0_7] : memref<1x1x4x16x16xbf16, #tpu.memory_space<vmem>>, vector<1x1x2x16x16xbf16>
    %3 = vector.shape_cast %2 : vector<1x1x2x16x16xbf16> to vector<2x16x16xbf16>
    %c0_8 = arith.constant 0 : index
    %c0_9 = arith.constant 0 : index
    %c2 = arith.constant 2 : index
    %c0_10 = arith.constant 0 : index
    %c0_11 = arith.constant 0 : index
    %4 = vector.load %arg3[%c0_8, %c0_9, %c2, %c0_10, %c0_11] : memref<1x1x4x16x16xbf16, #tpu.memory_space<vmem>>, vector<1x1x2x16x16xbf16>
    %5 = vector.shape_cast %4 : vector<1x1x2x16x16xbf16> to vector<2x16x16xbf16>
    %6 = tpu.concatenate %3, %1, %5 in 0 : vector<2x16x16xbf16>, vector<8x16x16xbf16>, vector<2x16x16xbf16> -> vector<12x16x16xbf16>
    %cst = arith.constant 0.000000e+00 : bf16
    %7 = vector.broadcast %cst : bf16 to vector<12x1x16xbf16>
    %8 = tpu.concatenate %7, %6, %7 in 1 : vector<12x1x16xbf16>, vector<12x16x16xbf16>, vector<12x1x16xbf16> -> vector<12x18x16xbf16>
    %9 = vector.extract_strided_slice %8 {offsets = [0, 0, 0], sizes = [10, 16, 16], strides = [1, 1, 1]} : vector<12x18x16xbf16> to vector<10x16x16xbf16>
    %10 = vector.extract_strided_slice %8 {offsets = [0, 1, 0], sizes = [10, 16, 16], strides = [1, 1, 1]} : vector<12x18x16xbf16> to vector<10x16x16xbf16>
    %11 = vector.extract_strided_slice %8 {offsets = [0, 2, 0], sizes = [10, 16, 16], strides = [1, 1, 1]} : vector<12x18x16xbf16> to vector<10x16x16xbf16>
    %12 = vector.extract_strided_slice %8 {offsets = [1, 0, 0], sizes = [10, 16, 16], strides = [1, 1, 1]} : vector<12x18x16xbf16> to vector<10x16x16xbf16>
    %13 = vector.extract_strided_slice %8 {offsets = [1, 1, 0], sizes = [10, 16, 16], strides = [1, 1, 1]} : vector<12x18x16xbf16> to vector<10x16x16xbf16>
    %14 = vector.extract_strided_slice %8 {offsets = [1, 2, 0], sizes = [10, 16, 16], strides = [1, 1, 1]} : vector<12x18x16xbf16> to vector<10x16x16xbf16>
    %15 = vector.extract_strided_slice %8 {offsets = [2, 0, 0], sizes = [10, 16, 16], strides = [1, 1, 1]} : vector<12x18x16xbf16> to vector<10x16x16xbf16>
    %16 = vector.extract_strided_slice %8 {offsets = [2, 1, 0], sizes = [10, 16, 16], strides = [1, 1, 1]} : vector<12x18x16xbf16> to vector<10x16x16xbf16>
    %17 = vector.extract_strided_slice %8 {offsets = [2, 2, 0], sizes = [10, 16, 16], strides = [1, 1, 1]} : vector<12x18x16xbf16> to vector<10x16x16xbf16>
    %18 = tpu.concatenate %9, %10, %11, %12, %13, %14, %15, %16, %17 in 2 : vector<10x16x16xbf16>, vector<10x16x16xbf16>, vector<10x16x16xbf16>, vector<10x16x16xbf16>, vector<10x16x16xbf16>, vector<10x16x16xbf16>, vector<10x16x16xbf16>, vector<10x16x16xbf16>, vector<10x16x16xbf16> -> vector<10x16x144xbf16>
    %19 = vector.shape_cast %18 : vector<10x16x144xbf16> to vector<160x144xbf16>
    %c0_12 = arith.constant 0 : index
    %c0_13 = arith.constant 0 : index
    %20 = vector.load %arg4[%c0_12, %c0_13] : memref<144x16xbf16, #tpu.memory_space<vmem>>, vector<144x16xbf16>
    %cst_14 = arith.constant dense<0.000000e+00> : vector<160x16xf32>
    %21 = tpu.matmul %19, %20, %cst_14 {dimension_numbers = #tpu.dot_dimension_numbers<[1], [0], [0], [1], [0, 0, 1, 1], [], []>} : vector<160x144xbf16>, vector<144x16xbf16>, vector<160x16xf32> -> vector<160x16xf32>
    %cst_15 = arith.constant 0.000000e+00 : f32
    %22 = vector.broadcast %cst_15 : f32 to vector<160x16xf32>
    %23 = arith.maximumf %21, %22 : vector<160x16xf32>
    %24 = vector.shape_cast %23 : vector<160x16xf32> to vector<10x16x16xf32>
    %25 = tpu.iota {dimensions = array<i32: 0>} : vector<10x1x1xi32>
    %c8_i32 = arith.constant 8 : i32
    %26 = arith.muli %arg1, %c8_i32 : i32
    %c1_i32 = arith.constant 1 : i32
    %27 = arith.subi %26, %c1_i32 : i32
    %28 = vector.broadcast %27 : i32 to vector<10x1x1xi32>
    %29 = arith.addi %28, %25 : vector<10x1x1xi32>
    %c0_i32 = arith.constant 0 : i32
    %30 = vector.broadcast %c0_i32 : i32 to vector<10x1x1xi32>
    %31 = arith.cmpi sge, %29, %30 : vector<10x1x1xi32>
    %c16_i32 = arith.constant 16 : i32
    %32 = vector.broadcast %c16_i32 : i32 to vector<10x1x1xi32>
    %33 = arith.cmpi slt, %29, %32 : vector<10x1x1xi32>
    %34 = arith.andi %31, %33 : vector<10x1x1xi1>
    %cst_16 = arith.constant 0.000000e+00 : f32
    %35 = vector.shape_cast %34 : vector<10x1x1xi1> to vector<10x1x1xi1>
    %36 = vector.broadcast %35 : vector<10x1x1xi1> to vector<10x16x16xi1>
    %37 = vector.broadcast %cst_16 : f32 to vector<10x16x16xf32>
    %38 = arith.select %36, %24, %37 : vector<10x16x16xi1>, vector<10x16x16xf32>
    %39 = arith.truncf %38 : vector<10x16x16xf32> to vector<10x16x16xbf16>
    %cst_17 = arith.constant 0.000000e+00 : bf16
    %40 = vector.broadcast %cst_17 : bf16 to vector<10x1x16xbf16>
    %41 = tpu.concatenate %40, %39, %40 in 1 : vector<10x1x16xbf16>, vector<10x16x16xbf16>, vector<10x1x16xbf16> -> vector<10x18x16xbf16>
    %42 = vector.extract_strided_slice %41 {offsets = [0, 0, 0], sizes = [8, 16, 16], strides = [1, 1, 1]} : vector<10x18x16xbf16> to vector<8x16x16xbf16>
    %43 = vector.extract_strided_slice %41 {offsets = [0, 1, 0], sizes = [8, 16, 16], strides = [1, 1, 1]} : vector<10x18x16xbf16> to vector<8x16x16xbf16>
    %44 = vector.extract_strided_slice %41 {offsets = [0, 2, 0], sizes = [8, 16, 16], strides = [1, 1, 1]} : vector<10x18x16xbf16> to vector<8x16x16xbf16>
    %45 = vector.extract_strided_slice %41 {offsets = [1, 0, 0], sizes = [8, 16, 16], strides = [1, 1, 1]} : vector<10x18x16xbf16> to vector<8x16x16xbf16>
    %46 = vector.extract_strided_slice %41 {offsets = [1, 1, 0], sizes = [8, 16, 16], strides = [1, 1, 1]} : vector<10x18x16xbf16> to vector<8x16x16xbf16>
    %47 = vector.extract_strided_slice %41 {offsets = [1, 2, 0], sizes = [8, 16, 16], strides = [1, 1, 1]} : vector<10x18x16xbf16> to vector<8x16x16xbf16>
    %48 = vector.extract_strided_slice %41 {offsets = [2, 0, 0], sizes = [8, 16, 16], strides = [1, 1, 1]} : vector<10x18x16xbf16> to vector<8x16x16xbf16>
    %49 = vector.extract_strided_slice %41 {offsets = [2, 1, 0], sizes = [8, 16, 16], strides = [1, 1, 1]} : vector<10x18x16xbf16> to vector<8x16x16xbf16>
    %50 = vector.extract_strided_slice %41 {offsets = [2, 2, 0], sizes = [8, 16, 16], strides = [1, 1, 1]} : vector<10x18x16xbf16> to vector<8x16x16xbf16>
    %51 = tpu.concatenate %42, %43, %44, %45, %46, %47, %48, %49, %50 in 2 : vector<8x16x16xbf16>, vector<8x16x16xbf16>, vector<8x16x16xbf16>, vector<8x16x16xbf16>, vector<8x16x16xbf16>, vector<8x16x16xbf16>, vector<8x16x16xbf16>, vector<8x16x16xbf16>, vector<8x16x16xbf16> -> vector<8x16x144xbf16>
    %52 = vector.shape_cast %51 : vector<8x16x144xbf16> to vector<128x144xbf16>
    %c0_18 = arith.constant 0 : index
    %c0_19 = arith.constant 0 : index
    %53 = vector.load %arg5[%c0_18, %c0_19] : memref<144x16xbf16, #tpu.memory_space<vmem>>, vector<144x16xbf16>
    %cst_20 = arith.constant dense<0.000000e+00> : vector<128x16xf32>
    %54 = tpu.matmul %52, %53, %cst_20 {dimension_numbers = #tpu.dot_dimension_numbers<[1], [0], [0], [1], [0, 0, 1, 1], [], []>} : vector<128x144xbf16>, vector<144x16xbf16>, vector<128x16xf32> -> vector<128x16xf32>
    %55 = vector.shape_cast %54 : vector<128x16xf32> to vector<8x16x16xf32>
    %56 = arith.extf %1 : vector<8x16x16xbf16> to vector<8x16x16xf32>
    %57 = arith.addf %55, %56 : vector<8x16x16xf32>
    %58 = arith.truncf %57 : vector<8x16x16xf32> to vector<8x16x16xbf16>
    %c0_21 = arith.constant 0 : index
    %c0_22 = arith.constant 0 : index
    %c0_23 = arith.constant 0 : index
    %c0_24 = arith.constant 0 : index
    %59 = vector.load %arg6[%c0_21, %c0_22, %c0_23, %c0_24] : memref<1x8x16x16xbf16, #tpu.memory_space<vmem>>, vector<1x8x16x16xbf16>
    %60 = vector.shape_cast %59 : vector<1x8x16x16xbf16> to vector<8x16x16xbf16>
    %61 = vector.shape_cast %58 : vector<8x16x16xbf16> to vector<1x8x16x16xbf16>
    tpu.vector_store %arg6[%c0_21, %c0_22, %c0_23, %c0_24], %61 {strides = array<i32>} : memref<1x8x16x16xbf16, #tpu.memory_space<vmem>>, vector<1x8x16x16xbf16>,
    return
  }
  func.func @transform_0(%arg0: i32, %arg1: i32) -> (i32, i32, i32, i32) {
    %c0_i32 = arith.constant 0 : i32
    %c0_i32_0 = arith.constant 0 : i32
    %c0_i32_1 = arith.constant 0 : i32
    return %arg0, %arg1, %c0_i32, %c0_i32_0 : i32, i32, i32, i32
  }
  func.func @transform_1(%arg0: i32, %arg1: i32) -> (i32, i32, i32, i32, i32) {
    %c0_i32 = arith.constant 0 : i32
    %c0_i32_0 = arith.constant 0 : i32
    %c0_i32_1 = arith.constant 0 : i32
    %c0_i32_2 = arith.constant 0 : i32
    return %arg0, %arg1, %c0_i32, %c0_i32_0, %c0_i32_1 : i32, i32, i32, i32, i32
  }
  func.func @transform_2(%arg0: i32, %arg1: i32) -> (i32, i32) {
    %c0_i32 = arith.constant 0 : i32
    %c0_i32_0 = arith.constant 0 : i32
    %c0_i32_1 = arith.constant 0 : i32
    return %c0_i32, %c0_i32_0 : i32, i32
  }
  func.func @transform_3(%arg0: i32, %arg1: i32) -> (i32, i32) {
    %c0_i32 = arith.constant 0 : i32
    %c0_i32_0 = arith.constant 0 : i32
    %c0_i32_1 = arith.constant 0 : i32
    return %c0_i32, %c0_i32_0 : i32, i32
  }
  func.func @transform_4(%arg0: i32, %arg1: i32) -> (i32, i32, i32, i32) {
    %c0_i32 = arith.constant 0 : i32
    %c0_i32_0 = arith.constant 0 : i32
    %c0_i32_1 = arith.constant 0 : i32
    return %arg0, %arg1, %c0_i32, %c0_i32_0 : i32, i32, i32, i32
  }
}

module attributes {stable_mosaic.version = 11 : i64} {
  func.func @_conv3x3_kernel(%arg0: i32, %arg1: i32, %arg2: memref<1x8x16x16xbf16, #tpu.memory_space<vmem>>, %arg3: memref<1x1x2x16x16xbf16, #tpu.memory_space<vmem>>, %arg4: memref<144x16xbf16, #tpu.memory_space<vmem>>, %arg5: memref<1x16x32x16xbf16, #tpu.memory_space<vmem>>) attributes {dimension_semantics = [#tpu.dimension_semantics<parallel>, #tpu.dimension_semantics<parallel>], iteration_bounds = array<i64: 2, 2>, scalar_prefetch = 0 : i64, scratch_operands = 0 : i64, tpu.core_type = #tpu.core_type<tc>, window_params = [{transform_indices = @transform_0, window_bounds = array<i64: 1, 8, 16, 16>}, {transform_indices = @transform_1, window_bounds = array<i64: 1, 1, 2, 16, 16>}, {pipeline_mode = #tpu.pipeline_mode<synchronous>, transform_indices = @transform_2, window_bounds = array<i64: 144, 16>}, {transform_indices = @transform_3, window_bounds = array<i64: 1, 16, 32, 16>}]} {
    %c0 = arith.constant 0 : index
    %c0_0 = arith.constant 0 : index
    %c0_1 = arith.constant 0 : index
    %c0_2 = arith.constant 0 : index
    %0 = vector.load %arg2[%c0, %c0_0, %c0_1, %c0_2] : memref<1x8x16x16xbf16, #tpu.memory_space<vmem>>, vector<1x8x16x16xbf16>
    %1 = vector.shape_cast %0 : vector<1x8x16x16xbf16> to vector<8x16x16xbf16>
    %c0_3 = arith.constant 0 : index
    %c0_4 = arith.constant 0 : index
    %c0_5 = arith.constant 0 : index
    %c0_6 = arith.constant 0 : index
    %c0_7 = arith.constant 0 : index
    %2 = vector.load %arg3[%c0_3, %c0_4, %c0_5, %c0_6, %c0_7] : memref<1x1x2x16x16xbf16, #tpu.memory_space<vmem>>, vector<1x1x1x16x16xbf16>
    %3 = vector.shape_cast %2 : vector<1x1x1x16x16xbf16> to vector<1x16x16xbf16>
    %c0_8 = arith.constant 0 : index
    %c0_9 = arith.constant 0 : index
    %c1 = arith.constant 1 : index
    %c0_10 = arith.constant 0 : index
    %c0_11 = arith.constant 0 : index
    %4 = vector.load %arg3[%c0_8, %c0_9, %c1, %c0_10, %c0_11] : memref<1x1x2x16x16xbf16, #tpu.memory_space<vmem>>, vector<1x1x1x16x16xbf16>
    %5 = vector.shape_cast %4 : vector<1x1x1x16x16xbf16> to vector<1x16x16xbf16>
    %6 = vector.shape_cast %1 : vector<8x16x16xbf16> to vector<8x1x16x16xbf16>
    %7 = vector.shape_cast %6 : vector<8x1x16x16xbf16> to vector<8x1x16x16xbf16>
    %8 = vector.broadcast %7 : vector<8x1x16x16xbf16> to vector<8x2x16x16xbf16>
    %9 = vector.shape_cast %8 : vector<8x2x16x16xbf16> to vector<16x16x16xbf16>
    %10 = tpu.concatenate %3, %9, %5 in 0 : vector<1x16x16xbf16>, vector<16x16x16xbf16>, vector<1x16x16xbf16> -> vector<18x16x16xbf16>
    %11 = vector.shape_cast %10 : vector<18x16x16xbf16> to vector<18x16x1x16xbf16>
    %12 = vector.shape_cast %11 : vector<18x16x1x16xbf16> to vector<18x16x1x16xbf16>
    %13 = vector.broadcast %12 : vector<18x16x1x16xbf16> to vector<18x16x2x16xbf16>
    %14 = vector.shape_cast %13 : vector<18x16x2x16xbf16> to vector<18x32x16xbf16>
    %cst = arith.constant 0.000000e+00 : bf16
    %15 = vector.broadcast %cst : bf16 to vector<18x1x16xbf16>
    %16 = tpu.concatenate %15, %14, %15 in 1 : vector<18x1x16xbf16>, vector<18x32x16xbf16>, vector<18x1x16xbf16> -> vector<18x34x16xbf16>
    %17 = vector.extract_strided_slice %16 {offsets = [0, 0, 0], sizes = [16, 32, 16], strides = [1, 1, 1]} : vector<18x34x16xbf16> to vector<16x32x16xbf16>
    %18 = vector.extract_strided_slice %16 {offsets = [0, 1, 0], sizes = [16, 32, 16], strides = [1, 1, 1]} : vector<18x34x16xbf16> to vector<16x32x16xbf16>
    %19 = vector.extract_strided_slice %16 {offsets = [0, 2, 0], sizes = [16, 32, 16], strides = [1, 1, 1]} : vector<18x34x16xbf16> to vector<16x32x16xbf16>
    %20 = vector.extract_strided_slice %16 {offsets = [1, 0, 0], sizes = [16, 32, 16], strides = [1, 1, 1]} : vector<18x34x16xbf16> to vector<16x32x16xbf16>
    %21 = vector.extract_strided_slice %16 {offsets = [1, 1, 0], sizes = [16, 32, 16], strides = [1, 1, 1]} : vector<18x34x16xbf16> to vector<16x32x16xbf16>
    %22 = vector.extract_strided_slice %16 {offsets = [1, 2, 0], sizes = [16, 32, 16], strides = [1, 1, 1]} : vector<18x34x16xbf16> to vector<16x32x16xbf16>
    %23 = vector.extract_strided_slice %16 {offsets = [2, 0, 0], sizes = [16, 32, 16], strides = [1, 1, 1]} : vector<18x34x16xbf16> to vector<16x32x16xbf16>
    %24 = vector.extract_strided_slice %16 {offsets = [2, 1, 0], sizes = [16, 32, 16], strides = [1, 1, 1]} : vector<18x34x16xbf16> to vector<16x32x16xbf16>
    %25 = vector.extract_strided_slice %16 {offsets = [2, 2, 0], sizes = [16, 32, 16], strides = [1, 1, 1]} : vector<18x34x16xbf16> to vector<16x32x16xbf16>
    %26 = tpu.concatenate %17, %18, %19, %20, %21, %22, %23, %24, %25 in 2 : vector<16x32x16xbf16>, vector<16x32x16xbf16>, vector<16x32x16xbf16>, vector<16x32x16xbf16>, vector<16x32x16xbf16>, vector<16x32x16xbf16>, vector<16x32x16xbf16>, vector<16x32x16xbf16>, vector<16x32x16xbf16> -> vector<16x32x144xbf16>
    %27 = vector.shape_cast %26 : vector<16x32x144xbf16> to vector<512x144xbf16>
    %c0_12 = arith.constant 0 : index
    %c0_13 = arith.constant 0 : index
    %28 = vector.load %arg4[%c0_12, %c0_13] : memref<144x16xbf16, #tpu.memory_space<vmem>>, vector<144x16xbf16>
    %cst_14 = arith.constant dense<0.000000e+00> : vector<512x16xf32>
    %29 = tpu.matmul %27, %28, %cst_14 {dimension_numbers = #tpu.dot_dimension_numbers<[1], [0], [0], [1], [0, 0, 1, 1], [], []>} : vector<512x144xbf16>, vector<144x16xbf16>, vector<512x16xf32> -> vector<512x16xf32>
    %30 = vector.shape_cast %29 : vector<512x16xf32> to vector<16x32x16xf32>
    %cst_15 = arith.constant 0.000000e+00 : f32
    %31 = vector.broadcast %cst_15 : f32 to vector<16x32x16xf32>
    %32 = arith.maximumf %30, %31 : vector<16x32x16xf32>
    %33 = arith.truncf %32 : vector<16x32x16xf32> to vector<16x32x16xbf16>
    %c0_16 = arith.constant 0 : index
    %c0_17 = arith.constant 0 : index
    %c0_18 = arith.constant 0 : index
    %c0_19 = arith.constant 0 : index
    %34 = vector.load %arg5[%c0_16, %c0_17, %c0_18, %c0_19] : memref<1x16x32x16xbf16, #tpu.memory_space<vmem>>, vector<1x16x32x16xbf16>
    %35 = vector.shape_cast %34 : vector<1x16x32x16xbf16> to vector<16x32x16xbf16>
    %36 = vector.shape_cast %33 : vector<16x32x16xbf16> to vector<1x16x32x16xbf16>
    tpu.vector_store %arg5[%c0_16, %c0_17, %c0_18, %c0_19], %36 {strides = array<i32>} : memref<1x16x32x16xbf16, #tpu.memory_space<vmem>>, vector<1x16x32x16xbf16>,
    return
  }
  func.func @transform_0(%arg0: i32, %arg1: i32) -> (i32, i32, i32, i32) {
    %c0_i32 = arith.constant 0 : i32
    %c0_i32_0 = arith.constant 0 : i32
    %c0_i32_1 = arith.constant 0 : i32
    return %arg0, %arg1, %c0_i32, %c0_i32_0 : i32, i32, i32, i32
  }
  func.func @transform_1(%arg0: i32, %arg1: i32) -> (i32, i32, i32, i32, i32) {
    %c0_i32 = arith.constant 0 : i32
    %c0_i32_0 = arith.constant 0 : i32
    %c0_i32_1 = arith.constant 0 : i32
    %c0_i32_2 = arith.constant 0 : i32
    return %arg0, %arg1, %c0_i32, %c0_i32_0, %c0_i32_1 : i32, i32, i32, i32, i32
  }
  func.func @transform_2(%arg0: i32, %arg1: i32) -> (i32, i32) {
    %c0_i32 = arith.constant 0 : i32
    %c0_i32_0 = arith.constant 0 : i32
    %c0_i32_1 = arith.constant 0 : i32
    return %c0_i32, %c0_i32_0 : i32, i32
  }
  func.func @transform_3(%arg0: i32, %arg1: i32) -> (i32, i32, i32, i32) {
    %c0_i32 = arith.constant 0 : i32
    %c0_i32_0 = arith.constant 0 : i32
    %c0_i32_1 = arith.constant 0 : i32
    return %arg0, %arg1, %c0_i32, %c0_i32_0 : i32, i32, i32, i32
  }
}

module attributes {stable_mosaic.version = 11 : i64} {
  func.func @_conv3x3_kernel(%arg0: i32, %arg1: i32, %arg2: memref<1x8x32x16xbf16, #tpu.memory_space<vmem>>, %arg3: memref<1x1x2x32x16xbf16, #tpu.memory_space<vmem>>, %arg4: memref<144x3xbf16, #tpu.memory_space<vmem>>, %arg5: memref<1x8x32x3xf32, #tpu.memory_space<vmem>>) attributes {dimension_semantics = [#tpu.dimension_semantics<parallel>, #tpu.dimension_semantics<parallel>], iteration_bounds = array<i64: 2, 4>, scalar_prefetch = 0 : i64, scratch_operands = 0 : i64, tpu.core_type = #tpu.core_type<tc>, window_params = [{transform_indices = @transform_0, window_bounds = array<i64: 1, 8, 32, 16>}, {transform_indices = @transform_1, window_bounds = array<i64: 1, 1, 2, 32, 16>}, {pipeline_mode = #tpu.pipeline_mode<synchronous>, transform_indices = @transform_2, window_bounds = array<i64: 144, 3>}, {transform_indices = @transform_3, window_bounds = array<i64: 1, 8, 32, 3>}]} {
    %c0 = arith.constant 0 : index
    %c0_0 = arith.constant 0 : index
    %c0_1 = arith.constant 0 : index
    %c0_2 = arith.constant 0 : index
    %0 = vector.load %arg2[%c0, %c0_0, %c0_1, %c0_2] : memref<1x8x32x16xbf16, #tpu.memory_space<vmem>>, vector<1x8x32x16xbf16>
    %1 = vector.shape_cast %0 : vector<1x8x32x16xbf16> to vector<8x32x16xbf16>
    %c0_3 = arith.constant 0 : index
    %c0_4 = arith.constant 0 : index
    %c0_5 = arith.constant 0 : index
    %c0_6 = arith.constant 0 : index
    %c0_7 = arith.constant 0 : index
    %2 = vector.load %arg3[%c0_3, %c0_4, %c0_5, %c0_6, %c0_7] : memref<1x1x2x32x16xbf16, #tpu.memory_space<vmem>>, vector<1x1x1x32x16xbf16>
    %3 = vector.shape_cast %2 : vector<1x1x1x32x16xbf16> to vector<1x32x16xbf16>
    %c0_8 = arith.constant 0 : index
    %c0_9 = arith.constant 0 : index
    %c1 = arith.constant 1 : index
    %c0_10 = arith.constant 0 : index
    %c0_11 = arith.constant 0 : index
    %4 = vector.load %arg3[%c0_8, %c0_9, %c1, %c0_10, %c0_11] : memref<1x1x2x32x16xbf16, #tpu.memory_space<vmem>>, vector<1x1x1x32x16xbf16>
    %5 = vector.shape_cast %4 : vector<1x1x1x32x16xbf16> to vector<1x32x16xbf16>
    %6 = tpu.concatenate %3, %1, %5 in 0 : vector<1x32x16xbf16>, vector<8x32x16xbf16>, vector<1x32x16xbf16> -> vector<10x32x16xbf16>
    %cst = arith.constant 0.000000e+00 : bf16
    %7 = vector.broadcast %cst : bf16 to vector<10x1x16xbf16>
    %8 = tpu.concatenate %7, %6, %7 in 1 : vector<10x1x16xbf16>, vector<10x32x16xbf16>, vector<10x1x16xbf16> -> vector<10x34x16xbf16>
    %9 = vector.extract_strided_slice %8 {offsets = [0, 0, 0], sizes = [8, 32, 16], strides = [1, 1, 1]} : vector<10x34x16xbf16> to vector<8x32x16xbf16>
    %10 = vector.extract_strided_slice %8 {offsets = [0, 1, 0], sizes = [8, 32, 16], strides = [1, 1, 1]} : vector<10x34x16xbf16> to vector<8x32x16xbf16>
    %11 = vector.extract_strided_slice %8 {offsets = [0, 2, 0], sizes = [8, 32, 16], strides = [1, 1, 1]} : vector<10x34x16xbf16> to vector<8x32x16xbf16>
    %12 = vector.extract_strided_slice %8 {offsets = [1, 0, 0], sizes = [8, 32, 16], strides = [1, 1, 1]} : vector<10x34x16xbf16> to vector<8x32x16xbf16>
    %13 = vector.extract_strided_slice %8 {offsets = [1, 1, 0], sizes = [8, 32, 16], strides = [1, 1, 1]} : vector<10x34x16xbf16> to vector<8x32x16xbf16>
    %14 = vector.extract_strided_slice %8 {offsets = [1, 2, 0], sizes = [8, 32, 16], strides = [1, 1, 1]} : vector<10x34x16xbf16> to vector<8x32x16xbf16>
    %15 = vector.extract_strided_slice %8 {offsets = [2, 0, 0], sizes = [8, 32, 16], strides = [1, 1, 1]} : vector<10x34x16xbf16> to vector<8x32x16xbf16>
    %16 = vector.extract_strided_slice %8 {offsets = [2, 1, 0], sizes = [8, 32, 16], strides = [1, 1, 1]} : vector<10x34x16xbf16> to vector<8x32x16xbf16>
    %17 = vector.extract_strided_slice %8 {offsets = [2, 2, 0], sizes = [8, 32, 16], strides = [1, 1, 1]} : vector<10x34x16xbf16> to vector<8x32x16xbf16>
    %18 = tpu.concatenate %9, %10, %11, %12, %13, %14, %15, %16, %17 in 2 : vector<8x32x16xbf16>, vector<8x32x16xbf16>, vector<8x32x16xbf16>, vector<8x32x16xbf16>, vector<8x32x16xbf16>, vector<8x32x16xbf16>, vector<8x32x16xbf16>, vector<8x32x16xbf16>, vector<8x32x16xbf16> -> vector<8x32x144xbf16>
    %19 = vector.shape_cast %18 : vector<8x32x144xbf16> to vector<256x144xbf16>
    %c0_12 = arith.constant 0 : index
    %c0_13 = arith.constant 0 : index
    %20 = vector.load %arg4[%c0_12, %c0_13] : memref<144x3xbf16, #tpu.memory_space<vmem>>, vector<144x3xbf16>
    %cst_14 = arith.constant dense<0.000000e+00> : vector<256x3xf32>
    %21 = tpu.matmul %19, %20, %cst_14 {dimension_numbers = #tpu.dot_dimension_numbers<[1], [0], [0], [1], [0, 0, 1, 1], [], []>} : vector<256x144xbf16>, vector<144x3xbf16>, vector<256x3xf32> -> vector<256x3xf32>
    %22 = vector.shape_cast %21 : vector<256x3xf32> to vector<8x32x3xf32>
    %c0_15 = arith.constant 0 : index
    %c0_16 = arith.constant 0 : index
    %c0_17 = arith.constant 0 : index
    %c0_18 = arith.constant 0 : index
    %23 = vector.load %arg5[%c0_15, %c0_16, %c0_17, %c0_18] : memref<1x8x32x3xf32, #tpu.memory_space<vmem>>, vector<1x8x32x3xf32>
    %24 = vector.shape_cast %23 : vector<1x8x32x3xf32> to vector<8x32x3xf32>
    %25 = vector.shape_cast %22 : vector<8x32x3xf32> to vector<1x8x32x3xf32>
    tpu.vector_store %arg5[%c0_15, %c0_16, %c0_17, %c0_18], %25 {strides = array<i32>} : memref<1x8x32x3xf32, #tpu.memory_space<vmem>>, vector<1x8x32x3xf32>,
    return
  }
  func.func @transform_0(%arg0: i32, %arg1: i32) -> (i32, i32, i32, i32) {
    %c0_i32 = arith.constant 0 : i32
    %c0_i32_0 = arith.constant 0 : i32
    %c0_i32_1 = arith.constant 0 : i32
    return %arg0, %arg1, %c0_i32, %c0_i32_0 : i32, i32, i32, i32
  }
  func.func @transform_1(%arg0: i32, %arg1: i32) -> (i32, i32, i32, i32, i32) {
    %c0_i32 = arith.constant 0 : i32
    %c0_i32_0 = arith.constant 0 : i32
    %c0_i32_1 = arith.constant 0 : i32
    %c0_i32_2 = arith.constant 0 : i32
    return %arg0, %arg1, %c0_i32, %c0_i32_0, %c0_i32_1 : i32, i32, i32, i32, i32
  }
  func.func @transform_2(%arg0: i32, %arg1: i32) -> (i32, i32) {
    %c0_i32 = arith.constant 0 : i32
    %c0_i32_0 = arith.constant 0 : i32
    %c0_i32_1 = arith.constant 0 : i32
    return %c0_i32, %c0_i32_0 : i32, i32
  }
  func.func @transform_3(%arg0: i32, %arg1: i32) -> (i32, i32, i32, i32) {
    %c0_i32 = arith.constant 0 : i32
    %c0_i32_0 = arith.constant 0 : i32
    %c0_i32_1 = arith.constant 0 : i32
    return %arg0, %arg1, %c0_i32, %c0_i32_0 : i32, i32, i32, i32
  }
}

module attributes {stable_mosaic.version = 11 : i64} {
  func.func @_conv3x3_kernel(%arg0: i32, %arg1: i32, %arg2: memref<1x8x32x16xbf16, #tpu.memory_space<vmem>>, %arg3: memref<1x1x2x32x16xbf16, #tpu.memory_space<vmem>>, %arg4: memref<144x16xbf16, #tpu.memory_space<vmem>>, %arg5: memref<1x8x32x16xbf16, #tpu.memory_space<vmem>>) attributes {dimension_semantics = [#tpu.dimension_semantics<parallel>, #tpu.dimension_semantics<parallel>], iteration_bounds = array<i64: 2, 4>, scalar_prefetch = 0 : i64, scratch_operands = 0 : i64, tpu.core_type = #tpu.core_type<tc>, window_params = [{transform_indices = @transform_0, window_bounds = array<i64: 1, 8, 32, 16>}, {transform_indices = @transform_1, window_bounds = array<i64: 1, 1, 2, 32, 16>}, {pipeline_mode = #tpu.pipeline_mode<synchronous>, transform_indices = @transform_2, window_bounds = array<i64: 144, 16>}, {transform_indices = @transform_3, window_bounds = array<i64: 1, 8, 32, 16>}]} {
    %c0 = arith.constant 0 : index
    %c0_0 = arith.constant 0 : index
    %c0_1 = arith.constant 0 : index
    %c0_2 = arith.constant 0 : index
    %0 = vector.load %arg2[%c0, %c0_0, %c0_1, %c0_2] : memref<1x8x32x16xbf16, #tpu.memory_space<vmem>>, vector<1x8x32x16xbf16>
    %1 = vector.shape_cast %0 : vector<1x8x32x16xbf16> to vector<8x32x16xbf16>
    %c0_3 = arith.constant 0 : index
    %c0_4 = arith.constant 0 : index
    %c0_5 = arith.constant 0 : index
    %c0_6 = arith.constant 0 : index
    %c0_7 = arith.constant 0 : index
    %2 = vector.load %arg3[%c0_3, %c0_4, %c0_5, %c0_6, %c0_7] : memref<1x1x2x32x16xbf16, #tpu.memory_space<vmem>>, vector<1x1x1x32x16xbf16>
    %3 = vector.shape_cast %2 : vector<1x1x1x32x16xbf16> to vector<1x32x16xbf16>
    %c0_8 = arith.constant 0 : index
    %c0_9 = arith.constant 0 : index
    %c1 = arith.constant 1 : index
    %c0_10 = arith.constant 0 : index
    %c0_11 = arith.constant 0 : index
    %4 = vector.load %arg3[%c0_8, %c0_9, %c1, %c0_10, %c0_11] : memref<1x1x2x32x16xbf16, #tpu.memory_space<vmem>>, vector<1x1x1x32x16xbf16>
    %5 = vector.shape_cast %4 : vector<1x1x1x32x16xbf16> to vector<1x32x16xbf16>
    %6 = tpu.concatenate %3, %1, %5 in 0 : vector<1x32x16xbf16>, vector<8x32x16xbf16>, vector<1x32x16xbf16> -> vector<10x32x16xbf16>
    %cst = arith.constant 0.000000e+00 : bf16
    %7 = vector.broadcast %cst : bf16 to vector<10x1x16xbf16>
    %8 = tpu.concatenate %7, %6, %7 in 1 : vector<10x1x16xbf16>, vector<10x32x16xbf16>, vector<10x1x16xbf16> -> vector<10x34x16xbf16>
    %9 = vector.extract_strided_slice %8 {offsets = [0, 0, 0], sizes = [8, 32, 16], strides = [1, 1, 1]} : vector<10x34x16xbf16> to vector<8x32x16xbf16>
    %10 = vector.extract_strided_slice %8 {offsets = [0, 1, 0], sizes = [8, 32, 16], strides = [1, 1, 1]} : vector<10x34x16xbf16> to vector<8x32x16xbf16>
    %11 = vector.extract_strided_slice %8 {offsets = [0, 2, 0], sizes = [8, 32, 16], strides = [1, 1, 1]} : vector<10x34x16xbf16> to vector<8x32x16xbf16>
    %12 = vector.extract_strided_slice %8 {offsets = [1, 0, 0], sizes = [8, 32, 16], strides = [1, 1, 1]} : vector<10x34x16xbf16> to vector<8x32x16xbf16>
    %13 = vector.extract_strided_slice %8 {offsets = [1, 1, 0], sizes = [8, 32, 16], strides = [1, 1, 1]} : vector<10x34x16xbf16> to vector<8x32x16xbf16>
    %14 = vector.extract_strided_slice %8 {offsets = [1, 2, 0], sizes = [8, 32, 16], strides = [1, 1, 1]} : vector<10x34x16xbf16> to vector<8x32x16xbf16>
    %15 = vector.extract_strided_slice %8 {offsets = [2, 0, 0], sizes = [8, 32, 16], strides = [1, 1, 1]} : vector<10x34x16xbf16> to vector<8x32x16xbf16>
    %16 = vector.extract_strided_slice %8 {offsets = [2, 1, 0], sizes = [8, 32, 16], strides = [1, 1, 1]} : vector<10x34x16xbf16> to vector<8x32x16xbf16>
    %17 = vector.extract_strided_slice %8 {offsets = [2, 2, 0], sizes = [8, 32, 16], strides = [1, 1, 1]} : vector<10x34x16xbf16> to vector<8x32x16xbf16>
    %18 = tpu.concatenate %9, %10, %11, %12, %13, %14, %15, %16, %17 in 2 : vector<8x32x16xbf16>, vector<8x32x16xbf16>, vector<8x32x16xbf16>, vector<8x32x16xbf16>, vector<8x32x16xbf16>, vector<8x32x16xbf16>, vector<8x32x16xbf16>, vector<8x32x16xbf16>, vector<8x32x16xbf16> -> vector<8x32x144xbf16>
    %19 = vector.shape_cast %18 : vector<8x32x144xbf16> to vector<256x144xbf16>
    %c0_12 = arith.constant 0 : index
    %c0_13 = arith.constant 0 : index
    %20 = vector.load %arg4[%c0_12, %c0_13] : memref<144x16xbf16, #tpu.memory_space<vmem>>, vector<144x16xbf16>
    %cst_14 = arith.constant dense<0.000000e+00> : vector<256x16xf32>
    %21 = tpu.matmul %19, %20, %cst_14 {dimension_numbers = #tpu.dot_dimension_numbers<[1], [0], [0], [1], [0, 0, 1, 1], [], []>} : vector<256x144xbf16>, vector<144x16xbf16>, vector<256x16xf32> -> vector<256x16xf32>
    %22 = vector.shape_cast %21 : vector<256x16xf32> to vector<8x32x16xf32>
    %cst_15 = arith.constant 0.000000e+00 : f32
    %23 = vector.broadcast %cst_15 : f32 to vector<8x32x16xf32>
    %24 = arith.maximumf %22, %23 : vector<8x32x16xf32>
    %25 = arith.truncf %24 : vector<8x32x16xf32> to vector<8x32x16xbf16>
    %c0_16 = arith.constant 0 : index
    %c0_17 = arith.constant 0 : index
    %c0_18 = arith.constant 0 : index
    %c0_19 = arith.constant 0 : index
    %26 = vector.load %arg5[%c0_16, %c0_17, %c0_18, %c0_19] : memref<1x8x32x16xbf16, #tpu.memory_space<vmem>>, vector<1x8x32x16xbf16>
    %27 = vector.shape_cast %26 : vector<1x8x32x16xbf16> to vector<8x32x16xbf16>
    %28 = vector.shape_cast %25 : vector<8x32x16xbf16> to vector<1x8x32x16xbf16>
    tpu.vector_store %arg5[%c0_16, %c0_17, %c0_18, %c0_19], %28 {strides = array<i32>} : memref<1x8x32x16xbf16, #tpu.memory_space<vmem>>, vector<1x8x32x16xbf16>,
    return
  }
  func.func @transform_0(%arg0: i32, %arg1: i32) -> (i32, i32, i32, i32) {
    %c0_i32 = arith.constant 0 : i32
    %c0_i32_0 = arith.constant 0 : i32
    %c0_i32_1 = arith.constant 0 : i32
    return %arg0, %arg1, %c0_i32, %c0_i32_0 : i32, i32, i32, i32
  }
  func.func @transform_1(%arg0: i32, %arg1: i32) -> (i32, i32, i32, i32, i32) {
    %c0_i32 = arith.constant 0 : i32
    %c0_i32_0 = arith.constant 0 : i32
    %c0_i32_1 = arith.constant 0 : i32
    %c0_i32_2 = arith.constant 0 : i32
    return %arg0, %arg1, %c0_i32, %c0_i32_0, %c0_i32_1 : i32, i32, i32, i32, i32
  }
  func.func @transform_2(%arg0: i32, %arg1: i32) -> (i32, i32) {
    %c0_i32 = arith.constant 0 : i32
    %c0_i32_0 = arith.constant 0 : i32
    %c0_i32_1 = arith.constant 0 : i32
    return %c0_i32, %c0_i32_0 : i32, i32
  }
  func.func @transform_3(%arg0: i32, %arg1: i32) -> (i32, i32, i32, i32) {
    %c0_i32 = arith.constant 0 : i32
    %c0_i32_0 = arith.constant 0 : i32
    %c0_i32_1 = arith.constant 0 : i32
    return %arg0, %arg1, %c0_i32, %c0_i32_0 : i32, i32, i32, i32
  }
}

</mosaic_0001>

<llo_original>
// kernel: enhancenet_forward.6
$region0: #{enhancenet_forward.6}
  #allocation0 [shape = 'u32[]', space=smem, size = 0x4, offset = 0x4, fixed_abs, tag = 'smem constant byte address 0x4 - core index']
  #allocation1 [shape = 'u32[144,128]{1,0:T(1,128)}', space=vmem, size = 0x12000, scoped, tag = 'internal scratch']
  %s0 = inlined_call_operand.vmem [shape: bf16[2,16,16,3], index: 0, kind: input, shape index: {}]
  %s1 = inlined_call_operand.vmem [shape: bf16[2,2,2,16,3], index: 1, kind: input, shape index: {}]
  %s2 = inlined_call_operand.vmem [shape: bf16[27,16], index: 2, kind: input, shape index: {}]
  %s3 = inlined_call_operand.vmem [shape: bf16[2,16,16,16], index: 3, kind: output, shape index: {}]
  %s4 = sld [smem:[#allocation0]]
  $region45: #{enhancenet_forward.6} parent=0
    _
  %s6 = ssub.s32 1, %s4
  %s7 = scalar_select 0, %s6, %s4
  loop: start=0, step=1, limit=6
  $region2: #{enhancenet_forward.6} parent=0 // loop_pre_header
    _
  $region3: #{enhancenet_forward.6} parent=0 // loop_header
    %s9 = sphi 0, %s13
    %p10 = scmp.ge.s32.totalorder %s9, 6
    %s16 = sphi 0, %s28
    %s17 = sphi 0, %s24
    %s18 = sphi 0, %s16
    %s19 = sphi 0, %s17
    %s20 = sphi 0, %s18
    %s21 = sphi 0, %s19
    %s33 = sphi 0, %s35
    %s36 = sphi 0, %s33
    %s37 = sphi 0, %s36
    %s53 = sphi 0, %s37
    %s61 = sphi 0, %s63
    %s64 = sphi 0, %s61
    %s65 = sphi 0, %s64
    %s81 = sphi 0, %s65
    %s85 = sphi 0, %s85
    %s87 = sphi 0, %s85
    %s88 = sphi 0, %s87
    %s102 = sphi 0, %s88
    %s110 = sphi 0, %s112
    %s113 = sphi 0, %s110
    %s114 = sphi 0, %s113
    %s130 = sphi 0, %s114
  $region4: #{enhancenet_forward.6} parent=0 // loop_header_branch
    %12 = sbr.rel (%p10) target = $region8
  $region5: #{enhancenet_forward.6} parent=0 // loop_body
    %s14 = ssub.s32 %s9, 1
    %s15 = ssub.s32 %s9, 2
    %s22 = sadd.s32 1, %s17
    %p23 = scmp.ge.s32.totalorder %s22, 2
    %s24 = scalar_select %p23, 0, %s22
    %s25 = sadd.s32 1, %s16
    %s26 = scalar_select %p23, %s25, %s16
    %p27 = scmp.ge.s32.totalorder %s26, 2
    %s28 = scalar_select %p27, 0, %s26
    %s29 = ssub.s32 %s16, %s28
    %s30 = ssub.s32 %s17, %s24
    %s31 = sor.u32 %s29, %s30
    %p32 = scmp.eq.s32.totalorder %s31, 0
    %s34 = sadd.s32 %s33, 1
    %s35 = scalar_select %p32, %s33, %s34
    %p38 = pneg %p32
    %p39 = scmp.eq.s32.totalorder %s9, 3
    %p40 = por %p38, %p39
    %p41 = scmp.ne.s32.totalorder %s33, %s36
    %p42 = scmp.eq.s32.totalorder %s9, 0
    %p43 = por %p41, %p42
    %p44 = scmp.ne.s32.totalorder %s33, %s36
    %p45 = scmp.eq.s32.totalorder %s14, 3
    %p46 = por %p44, %p45
    %p47 = scmp.ne.s32.totalorder %s36, %s37
    %p48 = scmp.eq.s32.totalorder %s14, 0
    %p49 = por %p47, %p48
    %p50 = scmp.ne.s32.totalorder %s36, %s37
    %p51 = scmp.eq.s32.totalorder %s15, 3
    %p52 = por %p50, %p51
    %p54 = scmp.ne.s32.totalorder %s37, %s53
    %p55 = scmp.eq.s32.totalorder %s15, 0
    %p56 = por %p54, %p55
    %s57 = ssub.s32 %s16, %s28
    %s58 = ssub.s32 %s17, %s24
    %s59 = sor.u32 %s57, %s58
    %p60 = scmp.eq.s32.totalorder %s59, 0
    %s62 = sadd.s32 %s61, 1
    %s63 = scalar_select %p60, %s61, %s62
    %p66 = pneg %p60
    %p67 = scmp.eq.s32.totalorder %s9, 3
    %p68 = por %p66, %p67
    %p69 = scmp.ne.s32.totalorder %s61, %s64
    %p70 = scmp.eq.s32.totalorder %s9, 0
    %p71 = por %p69, %p70
    %p72 = scmp.ne.s32.totalorder %s61, %s64
    %p73 = scmp.eq.s32.totalorder %s14, 3
    %p74 = por %p72, %p73
    %p75 = scmp.ne.s32.totalorder %s64, %s65
    %p76 = scmp.eq.s32.totalorder %s14, 0
    %p77 = por %p75, %p76
    %p78 = scmp.ne.s32.totalorder %s64, %s65
    %p79 = scmp.eq.s32.totalorder %s15, 3
    %p80 = por %p78, %p79
    %p82 = scmp.ne.s32.totalorder %s65, %s81
    %p83 = scmp.eq.s32.totalorder %s15, 0
    %p84 = por %p82, %p83
    %s86 = sadd.s32 %s85, 1
    %p89 = scmp.eq.s32.totalorder %s9, 3
    %p90 = scmp.ne.s32.totalorder %s85, %s87
    %p91 = scmp.eq.s32.totalorder %s9, 0
    %p92 = por %p90, %p91
    %p93 = scmp.ne.s32.totalorder %s85, %s87
    %p94 = scmp.eq.s32.totalorder %s14, 3
    %p95 = por %p93, %p94
    %p96 = scmp.ne.s32.totalorder %s87, %s88
    %p97 = scmp.eq.s32.totalorder %s14, 0
    %p98 = por %p96, %p97
    %p99 = scmp.ne.s32.totalorder %s87, %s88
    %p100 = scmp.eq.s32.totalorder %s15, 3
    %p101 = por %p99, %p100
    %p103 = scmp.ne.s32.totalorder %s88, %s102
    %p104 = scmp.eq.s32.totalorder %s15, 0
    %p105 = por %p103, %p104
    %s106 = ssub.s32 %s16, %s28
    %s107 = ssub.s32 %s17, %s24
    %s108 = sor.u32 %s106, %s107
    %p109 = scmp.eq.s32.totalorder %s108, 0
    %s111 = sadd.s32 %s110, 1
    %s112 = scalar_select %p109, %s110, %s111
    %p115 = pneg %p109
    %p116 = scmp.eq.s32.totalorder %s9, 3
    %p117 = por %p115, %p116
    %p118 = scmp.ne.s32.totalorder %s110, %s113
    %p119 = scmp.eq.s32.totalorder %s9, 0
    %p120 = por %p118, %p119
    %p121 = scmp.ne.s32.totalorder %s110, %s113
    %p122 = scmp.eq.s32.totalorder %s14, 3
    %p123 = por %p121, %p122
    %p124 = scmp.ne.s32.totalorder %s113, %s114
    %p125 = scmp.eq.s32.totalorder %s14, 0
    %p126 = por %p124, %p125
    %p127 = scmp.ne.s32.totalorder %s113, %s114
    %p128 = scmp.eq.s32.totalorder %s15, 3
    %p129 = por %p127, %p128
    %p131 = scmp.ne.s32.totalorder %s114, %s130
    %p132 = scmp.eq.s32.totalorder %s15, 0
    %p133 = por %p131, %p132
    %p134 = scmp.le.s32.totalorder 1, %s9
    %p135 = scmp.lt.s32.totalorder %s9, 5
    %p136 = pnand %p134, %p135
    %p137 = pneg %p136
    // Predicated region
    $region9: #{enhancenet_forward.6} parent=5 // pred_check
      _
    $region10: #{enhancenet_forward.6} parent=5 // pred_check_branch
      %139 = sbr.rel (%p136) target = $region12
    $region11: #{enhancenet_forward.6} parent=5 // pred_region
      %s140 = ssub.s32 %s9, 1
      // Predicated region
      $region13: #{enhancenet_forward.6} parent=11 // pred_check
        %p141 = pneg %p98
      $region14: #{enhancenet_forward.6} parent=11 // pred_check_branch
        %143 = sbr.rel (%p141) target = $region16
      $region15: #{enhancenet_forward.6} parent=11 // pred_region
        _
      $region16: #{enhancenet_forward.6} parent=11 // pred_fallthru
        _
    $region12: #{enhancenet_forward.6} parent=5 // pred_fallthru
      _
    %p144 = scmp.lt.s32.totalorder %s9, 4
    // Predicated region
    $region17: #{enhancenet_forward.6} parent=5 // pred_check
      %p145 = pneg %p144
    $region18: #{enhancenet_forward.6} parent=5 // pred_check_branch
      %147 = sbr.rel (%p145) target = $region20
    $region19: #{enhancenet_forward.6} parent=5 // pred_region
      // Predicated region
      $region21: #{enhancenet_forward.6} parent=19 // pred_check
        %p148 = pneg %p43
      $region22: #{enhancenet_forward.6} parent=19 // pred_check_branch
        %150 = sbr.rel (%p148) target = $region24
      $region23: #{enhancenet_forward.6} parent=19 // pred_region
        %s151 = smul.u32 8, %s17
        %p152 = scmp.lt.s32.totalorder %s16, 1
        %s153 = scalar_select %p152, %s16, 1
        %p154 = scmp.lt.s32.totalorder %s151, 15
        %s155 = scalar_select %p154, %s151, 15
        %s156 = smul.addr %s155, 2
        %s157 = smul.addr %s153, 32
        %s158 = sadd.s32 %s156, %s157
        %s159 = smul.addr %s158, 4
        %s160 = scalar_lea.vmem %s0, %s159
        %s161 = smul.u32 8, %s17
      $region24: #{enhancenet_forward.6} parent=19 // pred_fallthru
        _
      // Predicated region
      $region25: #{enhancenet_forward.6} parent=19 // pred_check
        %p162 = pneg %p71
      $region26: #{enhancenet_forward.6} parent=19 // pred_check_branch
        %164 = sbr.rel (%p162) target = $region28
      $region27: #{enhancenet_forward.6} parent=19 // pred_region
        %p165 = scmp.lt.s32.totalorder %s16, 1
        %s166 = scalar_select %p165, %s16, 1
        %p167 = scmp.lt.s32.totalorder %s17, 1
        %s168 = scalar_select %p167, %s17, 1
        %s169 = smul.addr %s168, 4
        %s170 = smul.addr %s166, 8
        %s171 = sadd.s32 %s169, %s170
        %s172 = smul.addr %s171, 4
        %s173 = scalar_lea.vmem %s1, %s172
      $region28: #{enhancenet_forward.6} parent=19 // pred_fallthru
        _
    $region20: #{enhancenet_forward.6} parent=5 // pred_fallthru
      _
    %p174 = scmp.le.s32.totalorder 1, %s9
    %p175 = scmp.lt.s32.totalorder %s9, 5
    %p176 = pnand %p174, %p175
    %p177 = pneg %p176
    // Predicated region
    $region29: #{enhancenet_forward.6} parent=5 // pred_check
      _
    $region30: #{enhancenet_forward.6} parent=5 // pred_check_branch
      %179 = sbr.rel (%p176) target = $region32
    $region31: #{enhancenet_forward.6} parent=5 // pred_region
      %s180 = ssub.s32 %s9, 1
      %s181 = smul.u32 8, %s19
      %p182 = scmp.lt.s32.totalorder %s18, 1
      %s183 = scalar_select %p182, %s18, 1
      %p184 = scmp.lt.s32.totalorder %s181, 15
      %s185 = scalar_select %p184, %s181, 15
      %s186 = smul.addr %s185, 2
      %s187 = smul.addr %s183, 32
      %s188 = sadd.s32 %s186, %s187
      %s189 = smul.addr %s188, 4
      %s190 = scalar_lea.vmem %s0, %s189
      %p191 = pneg %p49
      %p192 = pneg %p46
      %p193 = scmp.lt.s32.totalorder %s18, 1
      %s194 = scalar_select %p193, %s18, 1
      %p195 = scmp.lt.s32.totalorder %s19, 1
      %s196 = scalar_select %p195, %s19, 1
      %s197 = smul.addr %s196, 4
      %s198 = smul.addr %s194, 8
      %s199 = sadd.s32 %s197, %s198
      %s200 = smul.addr %s199, 4
      %s201 = scalar_lea.vmem %s1, %s200
      %p202 = pneg %p77
      %p203 = pneg %p74
      %p204 = pneg %p98
      %p205 = pneg %p95
      %p206 = pneg %p126
      %p207 = pneg %p123
      %s208 = smul.u32 8, %s19
      %p209 = scmp.lt.s32.totalorder %s18, 1
      %s210 = scalar_select %p209, %s18, 1
      %p211 = scmp.lt.s32.totalorder %s208, 15
      %s212 = scalar_select %p211, %s208, 15
      %s213 = smul.addr %s212, 2
      %s214 = smul.addr %s210, 32
      %s215 = sadd.s32 %s213, %s214
      %s216 = smul.addr %s215, 4
      %s217 = scalar_lea.vmem %s3, %s216
      %s218 = smul.u32 8, %s19
      %p219 = scmp.lt.s32.totalorder %s18, 1
      %s220 = scalar_select %p219, %s18, 1
      %p221 = scmp.lt.s32.totalorder %s218, 15
      %s222 = scalar_select %p221, %s218, 15
      %s223 = smul.addr %s222, 2
      %s224 = smul.addr %s220, 32
      %s225 = sadd.s32 %s223, %s224
      %s226 = smul.addr %s225, 4
      %s227 = scalar_lea.vmem %s0, %s226
      %s228 = smul.u32 8, %s19
      %p229 = scmp.lt.s32.totalorder %s18, 1
      %s230 = scalar_select %p229, %s18, 1
      %p231 = scmp.lt.s32.totalorder %s19, 1
      %s232 = scalar_select %p231, %s19, 1
      %s233 = smul.addr %s232, 4
      %s234 = smul.addr %s230, 8
      %s235 = sadd.s32 %s233, %s234
      %s236 = smul.addr %s235, 4
      %s237 = scalar_lea.vmem %s1, %s236
      %s238 = smul.u32 8, %s19
      %p239 = scmp.lt.s32.totalorder %s18, 1
      %s240 = scalar_select %p239, %s18, 1
      %p241 = scmp.lt.s32.totalorder %s238, 15
      %s242 = scalar_select %p241, %s238, 15
      %s243 = smul.addr %s242, 2
      %s244 = smul.addr %s240, 32
      %s245 = sadd.s32 %s243, %s244
      %s246 = smul.addr %s245, 4
      %s247 = scalar_lea.vmem %s3, %s246
      %s248 = smul.u32 8, %s19
      %v250 = vld [vmem:[%s227] sm:$0xf]
      %v251 = vld [vmem:[%s227 + $0x4] sm:$0xf]
      %v252 = vld [vmem:[%s227 + $0x8] sm:$0xf]
      %v253 = vld [vmem:[%s227 + $0xc] sm:$0xf]
      %v254 = vld [vmem:[%s227 + $0x10] sm:$0xf]
      %v255 = vld [vmem:[%s227 + $0x14] sm:$0xf]
      %v256 = vld [vmem:[%s227 + $0x18] sm:$0xf]
      %v257 = vld [vmem:[%s227 + $0x1c] sm:$0xf]
      %v258 = vld [vmem:[%s227 + $0x20] sm:$0xf]
      %v259 = vld [vmem:[%s227 + $0x24] sm:$0xf]
      %v260 = vld [vmem:[%s227 + $0x28] sm:$0xf]
      %v261 = vld [vmem:[%s227 + $0x2c] sm:$0xf]
      %v262 = vld [vmem:[%s227 + $0x30] sm:$0xf]
      %v263 = vld [vmem:[%s227 + $0x34] sm:$0xf]
      %v264 = vld [vmem:[%s227 + $0x38] sm:$0xf]
      %v265 = vld [vmem:[%s227 + $0x3c] sm:$0xf]
      %v266 = vld [vmem:[%s237] sm:$0xf]
      %v267 = vld [vmem:[%s237 + $0x4] sm:$0xf]
      %s268 = scalar_lea.vmem %s237, 8
      %v269 = vld [vmem:[%s268] sm:$0xf]
      %v270 = vld [vmem:[%s268 + $0x4] sm:$0xf]
      %v291 = vunpack.c.l.b16 %v266
      %v292 = vunpack.c.l.b16 %v267
      %v293 = vunpack.c.l.b16 %v250
      %v294 = vunpack.c.l.b16 %v251
      %v295 = vunpack.c.l.b16 %v252
      %v296 = vunpack.c.l.b16 %v253
      %v297 = vunpack.c.l.b16 %v254
      %v298 = vunpack.c.l.b16 %v255
      %v299 = vunpack.c.l.b16 %v256
      %v300 = vunpack.c.l.b16 %v257
      %v301 = vunpack.c.l.b16 %v258
      %v302 = vunpack.c.l.b16 %v259
      %v303 = vunpack.c.l.b16 %v260
      %v304 = vunpack.c.l.b16 %v261
      %v305 = vunpack.c.l.b16 %v262
      %v306 = vunpack.c.l.b16 %v263
      %v307 = vunpack.c.l.b16 %v264
      %v308 = vunpack.c.l.b16 %v265
      %v309 = vunpack.c.l.b16 %v269
      %v310 = vunpack.c.l.b16 %v270
      %v311 = vpack.c.b16 %v292, %v291
      %v312 = vpack.c.b16 %v294, %v293
      %v313 = vpack.c.b16 %v296, %v295
      %v314 = vpack.c.b16 %v298, %v297
      %v315 = vpack.c.b16 %v300, %v299
      %v316 = vpack.c.b16 %v302, %v301
      %v317 = vpack.c.b16 %v304, %v303
      %v318 = vpack.c.b16 %v306, %v305
      %v319 = vpack.c.b16 %v308, %v307
      %v320 = vpack.c.b16 %v310, %v309
      %v322 = vshrl.u32 %v311, 16
      %v324 = vrot.slane %v322, 7
      %v325 = vshll.u32 %v311, 16
      %v327 = vor.u32 %v324, %v325
      %v329 = vshrl.u32 %v312, 16
      %v331 = vrot.slane %v329, 7
      %v332 = vshll.u32 %v312, 16
      %v334 = vor.u32 %v331, %v332
      %v336 = vshrl.u32 %v313, 16
      %v338 = vrot.slane %v336, 7
      %v339 = vshll.u32 %v313, 16
      %v341 = vor.u32 %v338, %v339
      %v343 = vshrl.u32 %v314, 16
      %v345 = vrot.slane %v343, 7
      %v346 = vshll.u32 %v314, 16
      %v348 = vor.u32 %v345, %v346
      %v350 = vshrl.u32 %v315, 16
      %v352 = vrot.slane %v350, 7
      %v353 = vshll.u32 %v315, 16
      %v355 = vor.u32 %v352, %v353
      %v357 = vshrl.u32 %v316, 16
      %v359 = vrot.slane %v357, 7
      %v360 = vshll.u32 %v316, 16
      %v362 = vor.u32 %v359, %v360
      %v364 = vshrl.u32 %v317, 16
      %v366 = vrot.slane %v364, 7
      %v367 = vshll.u32 %v317, 16
      %v369 = vor.u32 %v366, %v367
      %v371 = vshrl.u32 %v318, 16
      %v373 = vrot.slane %v371, 7
      %v374 = vshll.u32 %v318, 16
      %v376 = vor.u32 %v373, %v374
      %v378 = vshrl.u32 %v319, 16
      %v380 = vrot.slane %v378, 7
      %v381 = vshll.u32 %v319, 16
      %v383 = vor.u32 %v380, %v381
      %v385 = vshrl.u32 %v320, 16
      %v387 = vrot.slane %v385, 7
      %v388 = vshll.u32 %v320, 16
      %v390 = vor.u32 %v387, %v388
      %vm411 = vcmask 1040384
      %vm412 = vsmask.f32 256
      %vm413 = vmand %vm411, %vm412
      %v414 = vsel %vm413, 0, %v327
      %v415 = vsel %vm413, 0, %v334
      %v416 = vsel %vm413, 0, %v341
      %v417 = vsel %vm413, 0, %v348
      %v418 = vsel %vm413, 0, %v355
      %v419 = vsel %vm413, 0, %v362
      %v420 = vsel %vm413, 0, %v369
      %v421 = vsel %vm413, 0, %v376
      %v422 = vsel %vm413, 0, %v383
      %v423 = vsel %vm413, 0, %v390
      %v424 = vsel %vm413, %v324, 0
      %v425 = vsel %vm413, %v331, 0
      %v426 = vsel %vm413, %v338, 0
      %v427 = vsel %vm413, %v345, 0
      %v428 = vsel %vm413, %v352, 0
      %v429 = vsel %vm413, %v359, 0
      %v430 = vsel %vm413, %v366, 0
      %v431 = vsel %vm413, %v373, 0
      %v432 = vsel %vm413, %v380, 0
      %v433 = vsel %vm413, %v387, 0
      %vm434 = vsmask.f32 7424
      %v436 = vshrl.u32 %v414, 16
      %v438 = vshll.u32 %v414, 16
      %v440 = vrot.slane %v438, 1
      %v441 = vor.u32 %v436, %v440
      %v443 = vshll.u32 %v424, 16
      %v445 = vrot.slane %v443, 1
      %v446 = vsel %vm434, %v441, %v445
      %v448 = vshrl.u32 %v415, 16
      %v450 = vshll.u32 %v415, 16
      %v452 = vrot.slane %v450, 1
      %v453 = vor.u32 %v448, %v452
      %v455 = vshll.u32 %v425, 16
      %v457 = vrot.slane %v455, 1
      %v458 = vsel %vm434, %v453, %v457
      %v460 = vshrl.u32 %v416, 16
      %v462 = vshll.u32 %v416, 16
      %v464 = vrot.slane %v462, 1
      %v465 = vor.u32 %v460, %v464
      %v467 = vshll.u32 %v426, 16
      %v469 = vrot.slane %v467, 1
      %v470 = vsel %vm434, %v465, %v469
      %v472 = vshrl.u32 %v417, 16
      %v474 = vshll.u32 %v417, 16
      %v476 = vrot.slane %v474, 1
      %v477 = vor.u32 %v472, %v476
      %v479 = vshll.u32 %v427, 16
      %v481 = vrot.slane %v479, 1
      %v482 = vsel %vm434, %v477, %v481
      %v484 = vshrl.u32 %v418, 16
      %v486 = vshll.u32 %v418, 16
      %v488 = vrot.slane %v486, 1
      %v489 = vor.u32 %v484, %v488
      %v491 = vshll.u32 %v428, 16
      %v493 = vrot.slane %v491, 1
      %v494 = vsel %vm434, %v489, %v493
      %v496 = vshrl.u32 %v419, 16
      %v498 = vshll.u32 %v419, 16
      %v500 = vrot.slane %v498, 1
      %v501 = vor.u32 %v496, %v500
      %v503 = vshll.u32 %v429, 16
      %v505 = vrot.slane %v503, 1
      %v506 = vsel %vm434, %v501, %v505
      %v508 = vshrl.u32 %v420, 16
      %v510 = vshll.u32 %v420, 16
      %v512 = vrot.slane %v510, 1
      %v513 = vor.u32 %v508, %v512
      %v515 = vshll.u32 %v430, 16
      %v517 = vrot.slane %v515, 1
      %v518 = vsel %vm434, %v513, %v517
      %v520 = vshrl.u32 %v421, 16
      %v522 = vshll.u32 %v421, 16
      %v524 = vrot.slane %v522, 1
      %v525 = vor.u32 %v520, %v524
      %v527 = vshll.u32 %v431, 16
      %v529 = vrot.slane %v527, 1
      %v530 = vsel %vm434, %v525, %v529
      %531 = vrot.lane.b32.xlu0 %v446, 3
      %v532 = vpop.permute.xlu0 %531
      %533 = vrot.lane.b32.xlu0 %v458, 3
      %v534 = vpop.permute.xlu0 %533
      %535 = vrot.lane.b32.xlu0 %v470, 3
      %v536 = vpop.permute.xlu0 %535
      %537 = vrot.lane.b32.xlu0 %v482, 3
      %v538 = vpop.permute.xlu0 %537
      %539 = vrot.lane.b32.xlu0 %v494, 3
      %v540 = vpop.permute.xlu0 %539
      %541 = vrot.lane.b32.xlu0 %v506, 3
      %v542 = vpop.permute.xlu0 %541
      %543 = vrot.lane.b32.xlu0 %v518, 3
      %v544 = vpop.permute.xlu0 %543
      %545 = vrot.lane.b32.xlu0 %v530, 3
      %v546 = vpop.permute.xlu0 %545
      %vm563 = vcmask 1046528
      %v564 = vrot.slane %v414, 1
      %v565 = vrot.slane %v424, 1
      %v566 = vsel %vm563, %v564, %v565
      %v567 = vrot.slane %v415, 1
      %v568 = vrot.slane %v425, 1
      %v569 = vsel %vm563, %v567, %v568
      %v570 = vrot.slane %v416, 1
      %v571 = vrot.slane %v426, 1
      %v572 = vsel %vm563, %v570, %v571
      %v573 = vrot.slane %v417, 1
      %v574 = vrot.slane %v427, 1
      %v575 = vsel %vm563, %v573, %v574
      %v576 = vrot.slane %v418, 1
      %v577 = vrot.slane %v428, 1
      %v578 = vsel %vm563, %v576, %v577
      %v579 = vrot.slane %v419, 1
      %v580 = vrot.slane %v429, 1
      %v581 = vsel %vm563, %v579, %v580
      %v582 = vrot.slane %v420, 1
      %v583 = vrot.slane %v430, 1
      %v584 = vsel %vm563, %v582, %v583
      %v585 = vrot.slane %v421, 1
      %v586 = vrot.slane %v431, 1
      %v587 = vsel %vm563, %v585, %v586
      %588 = vrot.lane.b32.xlu0 %v566, 6
      %v589 = vpop.permute.xlu0 %588
      %590 = vrot.lane.b32.xlu0 %v569, 6
      %v591 = vpop.permute.xlu0 %590
      %592 = vrot.lane.b32.xlu0 %v572, 6
      %v593 = vpop.permute.xlu0 %592
      %594 = vrot.lane.b32.xlu0 %v575, 6
      %v595 = vpop.permute.xlu0 %594
      %596 = vrot.lane.b32.xlu0 %v578, 6
      %v597 = vpop.permute.xlu0 %596
      %598 = vrot.lane.b32.xlu0 %v581, 6
      %v599 = vpop.permute.xlu0 %598
      %600 = vrot.lane.b32.xlu0 %v584, 6
      %v601 = vpop.permute.xlu0 %600
      %602 = vrot.lane.b32.xlu0 %v587, 6
      %v603 = vpop.permute.xlu0 %602
      %605 = vrot.lane.b32.xlu0 %v415, 9
      %v606 = vpop.permute.xlu0 %605
      %607 = vrot.lane.b32.xlu0 %v416, 9
      %v608 = vpop.permute.xlu0 %607
      %609 = vrot.lane.b32.xlu0 %v417, 9
      %v610 = vpop.permute.xlu0 %609
      %611 = vrot.lane.b32.xlu0 %v418, 9
      %v612 = vpop.permute.xlu0 %611
      %613 = vrot.lane.b32.xlu0 %v419, 9
      %v614 = vpop.permute.xlu0 %613
      %615 = vrot.lane.b32.xlu0 %v420, 9
      %v616 = vpop.permute.xlu0 %615
      %617 = vrot.lane.b32.xlu0 %v421, 9
      %v618 = vpop.permute.xlu0 %617
      %619 = vrot.lane.b32.xlu0 %v422, 9
      %v620 = vpop.permute.xlu0 %619
      %v622 = vshrl.u32 %v422, 16
      %v624 = vshll.u32 %v422, 16
      %v626 = vrot.slane %v624, 1
      %v627 = vor.u32 %v622, %v626
      %v629 = vshll.u32 %v432, 16
      %v631 = vrot.slane %v629, 1
      %v632 = vsel %vm434, %v627, %v631
      %633 = vrot.lane.b32.xlu0 %v458, 12
      %v634 = vpop.permute.xlu0 %633
      %635 = vrot.lane.b32.xlu0 %v470, 12
      %v636 = vpop.permute.xlu0 %635
      %637 = vrot.lane.b32.xlu0 %v482, 12
      %v638 = vpop.permute.xlu0 %637
      %639 = vrot.lane.b32.xlu0 %v494, 12
      %v640 = vpop.permute.xlu0 %639
      %641 = vrot.lane.b32.xlu0 %v506, 12
      %v642 = vpop.permute.xlu0 %641
      %643 = vrot.lane.b32.xlu0 %v518, 12
      %v644 = vpop.permute.xlu0 %643
      %645 = vrot.lane.b32.xlu0 %v530, 12
      %v646 = vpop.permute.xlu0 %645
      %647 = vrot.lane.b32.xlu0 %v632, 12
      %v648 = vpop.permute.xlu0 %647
      %v650 = vrot.slane %v422, 1
      %v651 = vrot.slane %v432, 1
      %v652 = vsel %vm563, %v650, %v651
      %653 = vrot.lane.b32.xlu0 %v569, 15
      %v654 = vpop.permute.xlu0 %653
      %655 = vrot.lane.b32.xlu0 %v572, 15
      %v656 = vpop.permute.xlu0 %655
      %657 = vrot.lane.b32.xlu0 %v575, 15
      %v658 = vpop.permute.xlu0 %657
      %659 = vrot.lane.b32.xlu0 %v578, 15
      %v660 = vpop.permute.xlu0 %659
      %661 = vrot.lane.b32.xlu0 %v581, 15
      %v662 = vpop.permute.xlu0 %661
      %663 = vrot.lane.b32.xlu0 %v584, 15
      %v664 = vpop.permute.xlu0 %663
      %665 = vrot.lane.b32.xlu0 %v587, 15
      %v666 = vpop.permute.xlu0 %665
      %667 = vrot.lane.b32.xlu0 %v652, 15
      %v668 = vpop.permute.xlu0 %667
      %670 = vrot.lane.b32.xlu0 %v416, 18
      %v671 = vpop.permute.xlu0 %670
      %672 = vrot.lane.b32.xlu0 %v417, 18
      %v673 = vpop.permute.xlu0 %672
      %674 = vrot.lane.b32.xlu0 %v418, 18
      %v675 = vpop.permute.xlu0 %674
      %676 = vrot.lane.b32.xlu0 %v419, 18
      %v677 = vpop.permute.xlu0 %676
      %678 = vrot.lane.b32.xlu0 %v420, 18
      %v679 = vpop.permute.xlu0 %678
      %680 = vrot.lane.b32.xlu0 %v421, 18
      %v681 = vpop.permute.xlu0 %680
      %682 = vrot.lane.b32.xlu0 %v422, 18
      %v683 = vpop.permute.xlu0 %682
      %684 = vrot.lane.b32.xlu0 %v423, 18
      %v685 = vpop.permute.xlu0 %684
      %v687 = vshrl.u32 %v423, 16
      %v689 = vshll.u32 %v423, 16
      %v691 = vrot.slane %v689, 1
      %v692 = vor.u32 %v687, %v691
      %v694 = vshll.u32 %v433, 16
      %v696 = vrot.slane %v694, 1
      %v697 = vsel %vm434, %v692, %v696
      %698 = vrot.lane.b32.xlu0 %v470, 21
      %v699 = vpop.permute.xlu0 %698
      %700 = vrot.lane.b32.xlu0 %v482, 21
      %v701 = vpop.permute.xlu0 %700
      %702 = vrot.lane.b32.xlu0 %v494, 21
      %v703 = vpop.permute.xlu0 %702
      %704 = vrot.lane.b32.xlu0 %v506, 21
      %v705 = vpop.permute.xlu0 %704
      %706 = vrot.lane.b32.xlu0 %v518, 21
      %v707 = vpop.permute.xlu0 %706
      %708 = vrot.lane.b32.xlu0 %v530, 21
      %v709 = vpop.permute.xlu0 %708
      %710 = vrot.lane.b32.xlu0 %v632, 21
      %v711 = vpop.permute.xlu0 %710
      %712 = vrot.lane.b32.xlu0 %v697, 21
      %v713 = vpop.permute.xlu0 %712
      %v715 = vrot.slane %v423, 1
      %v716 = vrot.slane %v433, 1
      %v717 = vsel %vm563, %v715, %v716
      %718 = vrot.lane.b32.xlu0 %v572, 24
      %v719 = vpop.permute.xlu0 %718
      %720 = vrot.lane.b32.xlu0 %v575, 24
      %v721 = vpop.permute.xlu0 %720
      %722 = vrot.lane.b32.xlu0 %v578, 24
      %v723 = vpop.permute.xlu0 %722
      %724 = vrot.lane.b32.xlu0 %v581, 24
      %v725 = vpop.permute.xlu0 %724
      %726 = vrot.lane.b32.xlu0 %v584, 24
      %v727 = vpop.permute.xlu0 %726
      %728 = vrot.lane.b32.xlu0 %v587, 24
      %v729 = vpop.permute.xlu0 %728
      %730 = vrot.lane.b32.xlu0 %v652, 24
      %v731 = vpop.permute.xlu0 %730
      %732 = vrot.lane.b32.xlu0 %v717, 24
      %v733 = vpop.permute.xlu0 %732
      %vm734 = vcmask 23552
      %v736 = vsel %vm734, %v414, %v532
      %v738 = vsel %vm734, %v415, %v534
      %v740 = vsel %vm734, %v416, %v536
      %v742 = vsel %vm734, %v417, %v538
      %v744 = vsel %vm734, %v418, %v540
      %v746 = vsel %vm734, %v419, %v542
      %v748 = vsel %vm734, %v420, %v544
      %v750 = vsel %vm734, %v421, %v546
      %vm751 = vcmask 48128
      %v753 = vsel %vm751, %v736, %v589
      %v755 = vsel %vm751, %v738, %v591
      %v757 = vsel %vm751, %v740, %v593
      %v759 = vsel %vm751, %v742, %v595
      %v761 = vsel %vm751, %v744, %v597
      %v763 = vsel %vm751, %v746, %v599
      %v765 = vsel %vm751, %v748, %v601
      %v767 = vsel %vm751, %v750, %v603
      %vm768 = vcmask 72704
      %v770 = vsel %vm768, %v753, %v606
      %v772 = vsel %vm768, %v755, %v608
      %v774 = vsel %vm768, %v757, %v610
      %v776 = vsel %vm768, %v759, %v612
      %v778 = vsel %vm768, %v761, %v614
      %v780 = vsel %vm768, %v763, %v616
      %v782 = vsel %vm768, %v765, %v618
      %v784 = vsel %vm768, %v767, %v620
      %vm785 = vcmask 97280
      %v787 = vsel %vm785, %v770, %v634
      %v789 = vsel %vm785, %v772, %v636
      %v791 = vsel %vm785, %v774, %v638
      %v793 = vsel %vm785, %v776, %v640
      %v795 = vsel %vm785, %v778, %v642
      %v797 = vsel %vm785, %v780, %v644
      %v799 = vsel %vm785, %v782, %v646
      %v801 = vsel %vm785, %v784, %v648
      %vm802 = vcmask 121856
      %v804 = vsel %vm802, %v787, %v654
      %v806 = vsel %vm802, %v789, %v656
      %v808 = vsel %vm802, %v791, %v658
      %v810 = vsel %vm802, %v793, %v660
      %v812 = vsel %vm802, %v795, %v662
      %v814 = vsel %vm802, %v797, %v664
      %v816 = vsel %vm802, %v799, %v666
      %v818 = vsel %vm802, %v801, %v668
      %vm819 = vcmask 146432
      %v821 = vsel %vm819, %v804, %v671
      %v823 = vsel %vm819, %v806, %v673
      %v825 = vsel %vm819, %v808, %v675
      %v827 = vsel %vm819, %v810, %v677
      %v829 = vsel %vm819, %v812, %v679
      %v831 = vsel %vm819, %v814, %v681
      %v833 = vsel %vm819, %v816, %v683
      %v835 = vsel %vm819, %v818, %v685
      %vm836 = vcmask 171008
      %v838 = vsel %vm836, %v821, %v699
      %v840 = vsel %vm836, %v823, %v701
      %v842 = vsel %vm836, %v825, %v703
      %v844 = vsel %vm836, %v827, %v705
      %v846 = vsel %vm836, %v829, %v707
      %v848 = vsel %vm836, %v831, %v709
      %v850 = vsel %vm836, %v833, %v711
      %v852 = vsel %vm836, %v835, %v713
      %vm853 = vcmask 195584
      %v855 = vsel %vm853, %v838, %v719
      %v857 = vsel %vm853, %v840, %v721
      %v859 = vsel %vm853, %v842, %v723
      %v861 = vsel %vm853, %v844, %v725
      %v863 = vsel %vm853, %v846, %v727
      %v865 = vsel %vm853, %v848, %v729
      %v867 = vsel %vm853, %v850, %v731
      %v869 = vsel %vm853, %v852, %v733
      %v870 = vld [vmem:[%s2] sm:$0xf]
      %v871 = vld [vmem:[%s2 + $0x4] sm:$0xf]
      %v872 = vld [vmem:[%s2 + $0x8] sm:$0xf]
      %v873 = vld [vmem:[%s2 + $0xc] sm:$0x3]
      %v878 = vunpack.c.l.b16 %v870
      %v879 = vunpack.c.l.b16 %v871
      %v880 = vunpack.c.l.b16 %v872
      %v881 = vunpack.c.l.b16 %v873
      %v882 = vpack.c.b16 %v879, %v878
      %v883 = vpack.c.b16 %v881, %v880
      %vm885 = vcmask 220160
      %v886 = vsel %vm885, %v855, 0
      %v888 = vsel %vm885, %v857, 0
      %v890 = vsel %vm885, %v859, 0
      %v892 = vsel %vm885, %v861, 0
      %v894 = vsel %vm885, %v863, 0
      %v896 = vsel %vm885, %v865, 0
      %v898 = vsel %vm885, %v867, 0
      %v900 = vsel %vm885, %v869, 0
      %vm902 = vcmask 1044480
      %vm903 = vcmask 1045504
      %v904 = vsel %vm902, 4294967295, 65535
      %v905 = vsel %vm903, %v904, 0
      %v907 = vand.u32 %v883, %v905
      %909 = vmatprep.subr.bf16.mxu0 0
      %910 = vmatpush1.bf16.msra.mxu0 0
      %911 = vmatprep.subr.bf16.mxu0 0
      %912 = vmatpush1.bf16.msra.mxu0 0
      %913 = vmatprep.subr.bf16.mxu0 0
      %914 = vmatpush1.bf16.msra.mxu0 0
      %915 = vmatprep.subr.bf16.mxu0 0
      %916 = vmatpush1.bf16.msra.mxu0 0
      %917 = vmatprep.subr.bf16.mxu0 0
      %918 = vmatpush1.bf16.msra.mxu0 0
      %919 = vmatprep.subr.bf16.mxu0 0
      %920 = vmatpush1.bf16.msra.mxu0 0
      %921 = vmatprep.subr.bf16.mxu0 0
      %922 = vmatpush1.bf16.msra.mxu0 %v907
      %923 = vmatprep.subr.bf16.mxu0 0
      %924 = vmatpush1.bf16.msra.mxu0 %v882
      %925 = vmatprep.subr.bf16.mxu0 0
      %926 = vmatpush2.bf16.msra.mxu0 0
      %927 = vmatprep.subr.bf16.mxu0 0
      %928 = vmatpush2.bf16.msra.mxu0 0
      %929 = vmatprep.subr.bf16.mxu0 0
      %930 = vmatpush2.bf16.msra.mxu0 0
      %931 = vmatprep.subr.bf16.mxu0 0
      %932 = vmatpush2.bf16.msra.mxu0 0
      %933 = vmatprep.subr.bf16.mxu0 0
      %934 = vmatpush2.bf16.msra.mxu0 0
      %935 = vmatprep.subr.bf16.mxu0 0
      %936 = vmatpush2.bf16.msra.mxu0 0
      %937 = vmatprep.subr.bf16.mxu0 0
      %938 = vmatpush2.bf16.msra.mxu0 0
      %939 = vmatprep.subr.bf16.mxu0 0
      %940 = vmatpush2.bf16.msra.mxu0 0
      %941 = vmatprep.mubr.bf16.mxu0 0
      %942 = vmatmul.mubr.bf16.gmra.mxu0 %v886
      %v943 = vpop.f32.mrf.mxu0
      %v944 = vadd.f32 0.0, %v943
      %v945 = vpop.f32.mrf.mxu0
      %v946 = vpop.f32.mrf.mxu0
      %v947 = vadd.f32 0.0, %v946
      %v948 = vpop.f32.mrf.mxu0
      %949 = vmatprep.mubr.bf16.mxu0 0
      %950 = vmatmul.mubr.bf16.gmra.mxu0 %v888
      %v951 = vpop.f32.mrf.mxu0
      %v952 = vadd.f32 0.0, %v951
      %v953 = vpop.f32.mrf.mxu0
      %v954 = vpop.f32.mrf.mxu0
      %v955 = vadd.f32 0.0, %v954
      %v956 = vpop.f32.mrf.mxu0
      %957 = vmatprep.mubr.bf16.mxu0 0
      %958 = vmatmul.mubr.bf16.gmra.mxu0 %v890
      %v959 = vpop.f32.mrf.mxu0
      %v960 = vadd.f32 0.0, %v959
      %v961 = vpop.f32.mrf.mxu0
      %v962 = vpop.f32.mrf.mxu0
      %v963 = vadd.f32 0.0, %v962
      %v964 = vpop.f32.mrf.mxu0
      %965 = vmatprep.mubr.bf16.mxu0 0
      %966 = vmatmul.mubr.bf16.gmra.mxu0 %v892
      %v967 = vpop.f32.mrf.mxu0
      %v968 = vadd.f32 0.0, %v967
      %v969 = vpop.f32.mrf.mxu0
      %v970 = vpop.f32.mrf.mxu0
      %v971 = vadd.f32 0.0, %v970
      %v972 = vpop.f32.mrf.mxu0
      %973 = vmatprep.mubr.bf16.mxu0 0
      %974 = vmatmul.mubr.bf16.gmra.mxu0 %v894
      %v975 = vpop.f32.mrf.mxu0
      %v976 = vadd.f32 0.0, %v975
      %v977 = vpop.f32.mrf.mxu0
      %v978 = vpop.f32.mrf.mxu0
      %v979 = vadd.f32 0.0, %v978
      %v980 = vpop.f32.mrf.mxu0
      %981 = vmatprep.mubr.bf16.mxu0 0
      %982 = vmatmul.mubr.bf16.gmra.mxu0 %v896
      %v983 = vpop.f32.mrf.mxu0
      %v984 = vadd.f32 0.0, %v983
      %v985 = vpop.f32.mrf.mxu0
      %v986 = vpop.f32.mrf.mxu0
      %v987 = vadd.f32 0.0, %v986
      %v988 = vpop.f32.mrf.mxu0
      %989 = vmatprep.mubr.bf16.mxu0 0
      %990 = vmatmul.mubr.bf16.gmra.mxu0 %v898
      %v991 = vpop.f32.mrf.mxu0
      %v992 = vadd.f32 0.0, %v991
      %v993 = vpop.f32.mrf.mxu0
      %v994 = vpop.f32.mrf.mxu0
      %v995 = vadd.f32 0.0, %v994
      %v996 = vpop.f32.mrf.mxu0
      %997 = vmatprep.mubr.bf16.mxu0 0
      %998 = vmatmul.mubr.bf16.gmra.mxu0 %v900
      %v999 = vpop.f32.mrf.mxu0
      %v1000 = vadd.f32 0.0, %v999
      %v1001 = vpop.f32.mrf.mxu0
      %v1002 = vpop.f32.mrf.mxu0
      %v1003 = vadd.f32 0.0, %v1002
      %v1004 = vpop.f32.mrf.mxu0
      %1005 = vdwg.mxu0
      %v1006 = vmax.f32 %v944, 0.0
      %v1007 = vmax.f32 %v947, 0.0
      %v1008 = vmax.f32 %v952, 0.0
      %v1009 = vmax.f32 %v955, 0.0
      %v1010 = vmax.f32 %v960, 0.0
      %v1011 = vmax.f32 %v963, 0.0
      %v1012 = vmax.f32 %v968, 0.0
      %v1013 = vmax.f32 %v971, 0.0
      %v1014 = vmax.f32 %v976, 0.0
      %v1015 = vmax.f32 %v979, 0.0
      %v1016 = vmax.f32 %v984, 0.0
      %v1017 = vmax.f32 %v987, 0.0
      %v1018 = vmax.f32 %v992, 0.0
      %v1019 = vmax.f32 %v995, 0.0
      %v1020 = vmax.f32 %v1000, 0.0
      %v1021 = vmax.f32 %v1003, 0.0
      %v1022 = vpack.c.bf16 %v1007, %v1006
      %v1023 = vpack.c.bf16 %v1009, %v1008
      %v1024 = vpack.c.bf16 %v1011, %v1010
      %v1025 = vpack.c.bf16 %v1013, %v1012
      %v1026 = vpack.c.bf16 %v1015, %v1014
      %v1027 = vpack.c.bf16 %v1017, %v1016
      %v1028 = vpack.c.bf16 %v1019, %v1018
      %v1029 = vpack.c.bf16 %v1021, %v1020
      %v1038 = vunpack.c.l.b16 %v1022
      %v1039 = vunpack.c.h.b16 %v1022
      %v1040 = vunpack.c.l.b16 %v1023
      %v1041 = vunpack.c.h.b16 %v1023
      %v1042 = vunpack.c.l.b16 %v1024
      %v1043 = vunpack.c.h.b16 %v1024
      %v1044 = vunpack.c.l.b16 %v1025
      %v1045 = vunpack.c.h.b16 %v1025
      %v1046 = vunpack.c.l.b16 %v1026
      %v1047 = vunpack.c.h.b16 %v1026
      %v1048 = vunpack.c.l.b16 %v1027
      %v1049 = vunpack.c.h.b16 %v1027
      %v1050 = vunpack.c.l.b16 %v1028
      %v1051 = vunpack.c.h.b16 %v1028
      %v1052 = vunpack.c.l.b16 %v1029
      %v1053 = vunpack.c.h.b16 %v1029
      %v1054 = vpack.c.b16 %v1038, %v1038
      %v1055 = vpack.c.b16 %v1039, %v1039
      %v1056 = vpack.c.b16 %v1040, %v1040
      %v1057 = vpack.c.b16 %v1041, %v1041
      %v1058 = vpack.c.b16 %v1042, %v1042
      %v1059 = vpack.c.b16 %v1043, %v1043
      %v1060 = vpack.c.b16 %v1044, %v1044
      %v1061 = vpack.c.b16 %v1045, %v1045
      %v1062 = vpack.c.b16 %v1046, %v1046
      %v1063 = vpack.c.b16 %v1047, %v1047
      %v1064 = vpack.c.b16 %v1048, %v1048
      %v1065 = vpack.c.b16 %v1049, %v1049
      %v1066 = vpack.c.b16 %v1050, %v1050
      %v1067 = vpack.c.b16 %v1051, %v1051
      %v1068 = vpack.c.b16 %v1052, %v1052
      %v1069 = vpack.c.b16 %v1053, %v1053
      %vm1086 = vcmask 125952
      %1087 = vst.msk [vmem:[%s247] sm:$0xf] %vm1086, %v1054
      %1088 = vst.msk [vmem:[%s247 + $0x4] sm:$0xf] %vm1086, %v1055
      %1089 = vst.msk [vmem:[%s247 + $0x8] sm:$0xf] %vm1086, %v1056
      %1090 = vst.msk [vmem:[%s247 + $0xc] sm:$0xf] %vm1086, %v1057
      %1091 = vst.msk [vmem:[%s247 + $0x10] sm:$0xf] %vm1086, %v1058
      %1092 = vst.msk [vmem:[%s247 + $0x14] sm:$0xf] %vm1086, %v1059
      %1093 = vst.msk [vmem:[%s247 + $0x18] sm:$0xf] %vm1086, %v1060
      %1094 = vst.msk [vmem:[%s247 + $0x1c] sm:$0xf] %vm1086, %v1061
      %1095 = vst.msk [vmem:[%s247 + $0x20] sm:$0xf] %vm1086, %v1062
      %1096 = vst.msk [vmem:[%s247 + $0x24] sm:$0xf] %vm1086, %v1063
      %1097 = vst.msk [vmem:[%s247 + $0x28] sm:$0xf] %vm1086, %v1064
      %1098 = vst.msk [vmem:[%s247 + $0x2c] sm:$0xf] %vm1086, %v1065
      %1099 = vst.msk [vmem:[%s247 + $0x30] sm:$0xf] %vm1086, %v1066
      %1100 = vst.msk [vmem:[%s247 + $0x34] sm:$0xf] %vm1086, %v1067
      %1101 = vst.msk [vmem:[%s247 + $0x38] sm:$0xf] %vm1086, %v1068
      %1102 = vst.msk [vmem:[%s247 + $0x3c] sm:$0xf] %vm1086, %v1069
      %s1103 = smul.u32 8, %s19
      %p1104 = scmp.lt.s32.totalorder %s18, 1
      %s1105 = scalar_select %p1104, %s18, 1
      %p1106 = scmp.lt.s32.totalorder %s1103, 15
      %s1107 = scalar_select %p1106, %s1103, 15
      %s1108 = smul.addr %s1107, 2
      %s1109 = smul.addr %s1105, 32
      %s1110 = sadd.s32 %s1108, %s1109
      %s1111 = smul.addr %s1110, 4
      %s1112 = scalar_lea.vmem %s3, %s1111
      // Predicated region
      $region33: #{enhancenet_forward.6} parent=31 // pred_check
        %p1113 = pneg %p123
      $region34: #{enhancenet_forward.6} parent=31 // pred_check_branch
        %1115 = sbr.rel (%p1113) target = $region36
      $region35: #{enhancenet_forward.6} parent=31 // pred_region
        %s1116 = smul.u32 8, %s19
      $region36: #{enhancenet_forward.6} parent=31 // pred_fallthru
        _
    $region32: #{enhancenet_forward.6} parent=5 // pred_fallthru
      _
    %p1117 = scmp.le.s32.totalorder 2, %s9
    // Predicated region
    $region37: #{enhancenet_forward.6} parent=5 // pred_check
      %p1118 = pneg %p1117
    $region38: #{enhancenet_forward.6} parent=5 // pred_check_branch
      %1120 = sbr.rel (%p1118) target = $region40
    $region39: #{enhancenet_forward.6} parent=5 // pred_region
      %s1121 = ssub.s32 %s9, 2
      // Predicated region
      $region41: #{enhancenet_forward.6} parent=39 // pred_check
        %p1122 = pneg %p129
      $region42: #{enhancenet_forward.6} parent=39 // pred_check_branch
        %1124 = sbr.rel (%p1122) target = $region44
      $region43: #{enhancenet_forward.6} parent=39 // pred_region
        %s1125 = smul.u32 8, %s21
        %p1126 = scmp.lt.s32.totalorder %s20, 1
        %s1127 = scalar_select %p1126, %s20, 1
        %p1128 = scmp.lt.s32.totalorder %s1125, 15
        %s1129 = scalar_select %p1128, %s1125, 15
        %s1130 = smul.addr %s1129, 2
        %s1131 = smul.addr %s1127, 32
        %s1132 = sadd.s32 %s1130, %s1131
        %s1133 = smul.addr %s1132, 4
        %s1134 = scalar_lea.vmem %s3, %s1133
      $region44: #{enhancenet_forward.6} parent=39 // pred_fallthru
        _
    $region40: #{enhancenet_forward.6} parent=5 // pred_fallthru
      _
  $region6: #{enhancenet_forward.6} parent=0 // loop_footer
    %s13 = sadd.s32 1, %s9
  $region7: #{enhancenet_forward.6} parent=0 // loop_footer_branch
    %8 = sbr.rel target = $region3
  $region8: #{enhancenet_forward.6} parent=0 // loop_exit
    _

// kernel: enhancenet_forward.7
$region0: #{enhancenet_forward.7}
  #allocation0 [shape = 'u32[]', space=smem, size = 0x4, offset = 0x4, fixed_abs, tag = 'smem constant byte address 0x4 - core index']
  #allocation1 [shape = 'u32[144,128]{1,0:T(1,128)}', space=vmem, size = 0x12000, scoped, tag = 'internal scratch']
  %s0 = inlined_call_operand.vmem [shape: bf16[2,16,16,16], index: 0, kind: input, shape index: {}]
  %s1 = inlined_call_operand.vmem [shape: bf16[2,2,4,16,16], index: 1, kind: input, shape index: {}]
  %s2 = inlined_call_operand.vmem [shape: bf16[144,16], index: 2, kind: input, shape index: {}]
  %s3 = inlined_call_operand.vmem [shape: bf16[144,16], index: 3, kind: input, shape index: {}]
  %s4 = inlined_call_operand.vmem [shape: bf16[2,16,16,16], index: 4, kind: output, shape index: {}]
  %s5 = sld [smem:[#allocation0]]
  $region49: #{enhancenet_forward.7} parent=0
    _
  %s7 = ssub.s32 1, %s5
  %s8 = scalar_select 0, %s7, %s5
  loop: start=0, step=1, limit=6
  $region2: #{enhancenet_forward.7} parent=0 // loop_pre_header
    _
  $region3: #{enhancenet_forward.7} parent=0 // loop_header
    %s10 = sphi 0, %s14
    %p11 = scmp.ge.s32.totalorder %s10, 6
    %s17 = sphi 0, %s29
    %s18 = sphi 0, %s25
    %s19 = sphi 0, %s17
    %s20 = sphi 0, %s18
    %s21 = sphi 0, %s19
    %s22 = sphi 0, %s20
    %s34 = sphi 0, %s36
    %s37 = sphi 0, %s34
    %s38 = sphi 0, %s37
    %s54 = sphi 0, %s38
    %s62 = sphi 0, %s64
    %s65 = sphi 0, %s62
    %s66 = sphi 0, %s65
    %s82 = sphi 0, %s66
    %s86 = sphi 0, %s86
    %s88 = sphi 0, %s86
    %s89 = sphi 0, %s88
    %s103 = sphi 0, %s89
    %s107 = sphi 0, %s107
    %s109 = sphi 0, %s107
    %s110 = sphi 0, %s109
    %s124 = sphi 0, %s110
    %s132 = sphi 0, %s134
    %s135 = sphi 0, %s132
    %s136 = sphi 0, %s135
    %s152 = sphi 0, %s136
  $region4: #{enhancenet_forward.7} parent=0 // loop_header_branch
    %13 = sbr.rel (%p11) target = $region8
  $region5: #{enhancenet_forward.7} parent=0 // loop_body
    %s15 = ssub.s32 %s10, 1
    %s16 = ssub.s32 %s10, 2
    %s23 = sadd.s32 1, %s18
    %p24 = scmp.ge.s32.totalorder %s23, 2
    %s25 = scalar_select %p24, 0, %s23
    %s26 = sadd.s32 1, %s17
    %s27 = scalar_select %p24, %s26, %s17
    %p28 = scmp.ge.s32.totalorder %s27, 2
    %s29 = scalar_select %p28, 0, %s27
    %s30 = ssub.s32 %s17, %s29
    %s31 = ssub.s32 %s18, %s25
    %s32 = sor.u32 %s30, %s31
    %p33 = scmp.eq.s32.totalorder %s32, 0
    %s35 = sadd.s32 %s34, 1
    %s36 = scalar_select %p33, %s34, %s35
    %p39 = pneg %p33
    %p40 = scmp.eq.s32.totalorder %s10, 3
    %p41 = por %p39, %p40
    %p42 = scmp.ne.s32.totalorder %s34, %s37
    %p43 = scmp.eq.s32.totalorder %s10, 0
    %p44 = por %p42, %p43
    %p45 = scmp.ne.s32.totalorder %s34, %s37
    %p46 = scmp.eq.s32.totalorder %s15, 3
    %p47 = por %p45, %p46
    %p48 = scmp.ne.s32.totalorder %s37, %s38
    %p49 = scmp.eq.s32.totalorder %s15, 0
    %p50 = por %p48, %p49
    %p51 = scmp.ne.s32.totalorder %s37, %s38
    %p52 = scmp.eq.s32.totalorder %s16, 3
    %p53 = por %p51, %p52
    %p55 = scmp.ne.s32.totalorder %s38, %s54
    %p56 = scmp.eq.s32.totalorder %s16, 0
    %p57 = por %p55, %p56
    %s58 = ssub.s32 %s17, %s29
    %s59 = ssub.s32 %s18, %s25
    %s60 = sor.u32 %s58, %s59
    %p61 = scmp.eq.s32.totalorder %s60, 0
    %s63 = sadd.s32 %s62, 1
    %s64 = scalar_select %p61, %s62, %s63
    %p67 = pneg %p61
    %p68 = scmp.eq.s32.totalorder %s10, 3
    %p69 = por %p67, %p68
    %p70 = scmp.ne.s32.totalorder %s62, %s65
    %p71 = scmp.eq.s32.totalorder %s10, 0
    %p72 = por %p70, %p71
    %p73 = scmp.ne.s32.totalorder %s62, %s65
    %p74 = scmp.eq.s32.totalorder %s15, 3
    %p75 = por %p73, %p74
    %p76 = scmp.ne.s32.totalorder %s65, %s66
    %p77 = scmp.eq.s32.totalorder %s15, 0
    %p78 = por %p76, %p77
    %p79 = scmp.ne.s32.totalorder %s65, %s66
    %p80 = scmp.eq.s32.totalorder %s16, 3
    %p81 = por %p79, %p80
    %p83 = scmp.ne.s32.totalorder %s66, %s82
    %p84 = scmp.eq.s32.totalorder %s16, 0
    %p85 = por %p83, %p84
    %s87 = sadd.s32 %s86, 1
    %p90 = scmp.eq.s32.totalorder %s10, 3
    %p91 = scmp.ne.s32.totalorder %s86, %s88
    %p92 = scmp.eq.s32.totalorder %s10, 0
    %p93 = por %p91, %p92
    %p94 = scmp.ne.s32.totalorder %s86, %s88
    %p95 = scmp.eq.s32.totalorder %s15, 3
    %p96 = por %p94, %p95
    %p97 = scmp.ne.s32.totalorder %s88, %s89
    %p98 = scmp.eq.s32.totalorder %s15, 0
    %p99 = por %p97, %p98
    %p100 = scmp.ne.s32.totalorder %s88, %s89
    %p101 = scmp.eq.s32.totalorder %s16, 3
    %p102 = por %p100, %p101
    %p104 = scmp.ne.s32.totalorder %s89, %s103
    %p105 = scmp.eq.s32.totalorder %s16, 0
    %p106 = por %p104, %p105
    %s108 = sadd.s32 %s107, 1
    %p111 = scmp.eq.s32.totalorder %s10, 3
    %p112 = scmp.ne.s32.totalorder %s107, %s109
    %p113 = scmp.eq.s32.totalorder %s10, 0
    %p114 = por %p112, %p113
    %p115 = scmp.ne.s32.totalorder %s107, %s109
    %p116 = scmp.eq.s32.totalorder %s15, 3
    %p117 = por %p115, %p116
    %p118 = scmp.ne.s32.totalorder %s109, %s110
    %p119 = scmp.eq.s32.totalorder %s15, 0
    %p120 = por %p118, %p119
    %p121 = scmp.ne.s32.totalorder %s109, %s110
    %p122 = scmp.eq.s32.totalorder %s16, 3
    %p123 = por %p121, %p122
    %p125 = scmp.ne.s32.totalorder %s110, %s124
    %p126 = scmp.eq.s32.totalorder %s16, 0
    %p127 = por %p125, %p126
    %s128 = ssub.s32 %s17, %s29
    %s129 = ssub.s32 %s18, %s25
    %s130 = sor.u32 %s128, %s129
    %p131 = scmp.eq.s32.totalorder %s130, 0
    %s133 = sadd.s32 %s132, 1
    %s134 = scalar_select %p131, %s132, %s133
    %p137 = pneg %p131
    %p138 = scmp.eq.s32.totalorder %s10, 3
    %p139 = por %p137, %p138
    %p140 = scmp.ne.s32.totalorder %s132, %s135
    %p141 = scmp.eq.s32.totalorder %s10, 0
    %p142 = por %p140, %p141
    %p143 = scmp.ne.s32.totalorder %s132, %s135
    %p144 = scmp.eq.s32.totalorder %s15, 3
    %p145 = por %p143, %p144
    %p146 = scmp.ne.s32.totalorder %s135, %s136
    %p147 = scmp.eq.s32.totalorder %s15, 0
    %p148 = por %p146, %p147
    %p149 = scmp.ne.s32.totalorder %s135, %s136
    %p150 = scmp.eq.s32.totalorder %s16, 3
    %p151 = por %p149, %p150
    %p153 = scmp.ne.s32.totalorder %s136, %s152
    %p154 = scmp.eq.s32.totalorder %s16, 0
    %p155 = por %p153, %p154
    %p156 = scmp.le.s32.totalorder 1, %s10
    %p157 = scmp.lt.s32.totalorder %s10, 5
    %p158 = pnand %p156, %p157
    %p159 = pneg %p158
    // Predicated region
    $region9: #{enhancenet_forward.7} parent=5 // pred_check
      _
    $region10: #{enhancenet_forward.7} parent=5 // pred_check_branch
      %161 = sbr.rel (%p158) target = $region12
    $region11: #{enhancenet_forward.7} parent=5 // pred_region
      %s162 = ssub.s32 %s10, 1
      // Predicated region
      $region13: #{enhancenet_forward.7} parent=11 // pred_check
        %p163 = pneg %p99
      $region14: #{enhancenet_forward.7} parent=11 // pred_check_branch
        %165 = sbr.rel (%p163) target = $region16
      $region15: #{enhancenet_forward.7} parent=11 // pred_region
        _
      $region16: #{enhancenet_forward.7} parent=11 // pred_fallthru
        _
      // Predicated region
      $region17: #{enhancenet_forward.7} parent=11 // pred_check
        %p166 = pneg %p120
      $region18: #{enhancenet_forward.7} parent=11 // pred_check_branch
        %168 = sbr.rel (%p166) target = $region20
      $region19: #{enhancenet_forward.7} parent=11 // pred_region
        _
      $region20: #{enhancenet_forward.7} parent=11 // pred_fallthru
        _
    $region12: #{enhancenet_forward.7} parent=5 // pred_fallthru
      _
    %p169 = scmp.lt.s32.totalorder %s10, 4
    // Predicated region
    $region21: #{enhancenet_forward.7} parent=5 // pred_check
      %p170 = pneg %p169
    $region22: #{enhancenet_forward.7} parent=5 // pred_check_branch
      %172 = sbr.rel (%p170) target = $region24
    $region23: #{enhancenet_forward.7} parent=5 // pred_region
      // Predicated region
      $region25: #{enhancenet_forward.7} parent=23 // pred_check
        %p173 = pneg %p44
      $region26: #{enhancenet_forward.7} parent=23 // pred_check_branch
        %175 = sbr.rel (%p173) target = $region28
      $region27: #{enhancenet_forward.7} parent=23 // pred_region
        %s176 = smul.u32 8, %s18
        %p177 = scmp.lt.s32.totalorder %s17, 1
        %s178 = scalar_select %p177, %s17, 1
        %p179 = scmp.lt.s32.totalorder %s176, 15
        %s180 = scalar_select %p179, %s176, 15
        %s181 = smul.addr %s180, 2
        %s182 = smul.addr %s178, 32
        %s183 = sadd.s32 %s181, %s182
        %s184 = smul.addr %s183, 4
        %s185 = scalar_lea.vmem %s0, %s184
        %s186 = smul.u32 8, %s18
      $region28: #{enhancenet_forward.7} parent=23 // pred_fallthru
        _
      // Predicated region
      $region29: #{enhancenet_forward.7} parent=23 // pred_check
        %p187 = pneg %p72
      $region30: #{enhancenet_forward.7} parent=23 // pred_check_branch
        %189 = sbr.rel (%p187) target = $region32
      $region31: #{enhancenet_forward.7} parent=23 // pred_region
        %p190 = scmp.lt.s32.totalorder %s17, 1
        %s191 = scalar_select %p190, %s17, 1
        %p192 = scmp.lt.s32.totalorder %s18, 1
        %s193 = scalar_select %p192, %s18, 1
        %s194 = smul.addr %s193, 8
        %s195 = smul.addr %s191, 16
        %s196 = sadd.s32 %s194, %s195
        %s197 = smul.addr %s196, 4
        %s198 = scalar_lea.vmem %s1, %s197
      $region32: #{enhancenet_forward.7} parent=23 // pred_fallthru
        _
    $region24: #{enhancenet_forward.7} parent=5 // pred_fallthru
      _
    %p199 = scmp.le.s32.totalorder 1, %s10
    %p200 = scmp.lt.s32.totalorder %s10, 5
    %p201 = pnand %p199, %p200
    %p202 = pneg %p201
    // Predicated region
    $region33: #{enhancenet_forward.7} parent=5 // pred_check
      _
    $region34: #{enhancenet_forward.7} parent=5 // pred_check_branch
      %204 = sbr.rel (%p201) target = $region36
    $region35: #{enhancenet_forward.7} parent=5 // pred_region
      %s205 = ssub.s32 %s10, 1
      %s206 = smul.u32 8, %s20
      %p207 = scmp.lt.s32.totalorder %s19, 1
      %s208 = scalar_select %p207, %s19, 1
      %p209 = scmp.lt.s32.totalorder %s206, 15
      %s210 = scalar_select %p209, %s206, 15
      %s211 = smul.addr %s210, 2
      %s212 = smul.addr %s208, 32
      %s213 = sadd.s32 %s211, %s212
      %s214 = smul.addr %s213, 4
      %s215 = scalar_lea.vmem %s0, %s214
      %p216 = pneg %p50
      %p217 = pneg %p47
      %p218 = scmp.lt.s32.totalorder %s19, 1
      %s219 = scalar_select %p218, %s19, 1
      %p220 = scmp.lt.s32.totalorder %s20, 1
      %s221 = scalar_select %p220, %s20, 1
      %s222 = smul.addr %s221, 8
      %s223 = smul.addr %s219, 16
      %s224 = sadd.s32 %s222, %s223
      %s225 = smul.addr %s224, 4
      %s226 = scalar_lea.vmem %s1, %s225
      %p227 = pneg %p78
      %p228 = pneg %p75
      %p229 = pneg %p99
      %p230 = pneg %p96
      %p231 = pneg %p120
      %p232 = pneg %p117
      %p233 = pneg %p148
      %p234 = pneg %p145
      %s235 = smul.u32 8, %s20
      %p236 = scmp.lt.s32.totalorder %s19, 1
      %s237 = scalar_select %p236, %s19, 1
      %p238 = scmp.lt.s32.totalorder %s235, 15
      %s239 = scalar_select %p238, %s235, 15
      %s240 = smul.addr %s239, 2
      %s241 = smul.addr %s237, 32
      %s242 = sadd.s32 %s240, %s241
      %s243 = smul.addr %s242, 4
      %s244 = scalar_lea.vmem %s4, %s243
      %s245 = smul.u32 8, %s20
      %p246 = scmp.lt.s32.totalorder %s19, 1
      %s247 = scalar_select %p246, %s19, 1
      %p248 = scmp.lt.s32.totalorder %s245, 15
      %s249 = scalar_select %p248, %s245, 15
      %s250 = smul.addr %s249, 2
      %s251 = smul.addr %s247, 32
      %s252 = sadd.s32 %s250, %s251
      %s253 = smul.addr %s252, 4
      %s254 = scalar_lea.vmem %s0, %s253
      %s255 = smul.u32 8, %s20
      %p256 = scmp.lt.s32.totalorder %s19, 1
      %s257 = scalar_select %p256, %s19, 1
      %p258 = scmp.lt.s32.totalorder %s20, 1
      %s259 = scalar_select %p258, %s20, 1
      %s260 = smul.addr %s259, 8
      %s261 = smul.addr %s257, 16
      %s262 = sadd.s32 %s260, %s261
      %s263 = smul.addr %s262, 4
      %s264 = scalar_lea.vmem %s1, %s263
      %s265 = smul.u32 8, %s20
      %p266 = scmp.lt.s32.totalorder %s19, 1
      %s267 = scalar_select %p266, %s19, 1
      %p268 = scmp.lt.s32.totalorder %s265, 15
      %s269 = scalar_select %p268, %s265, 15
      %s270 = smul.addr %s269, 2
      %s271 = smul.addr %s267, 32
      %s272 = sadd.s32 %s270, %s271
      %s273 = smul.addr %s272, 4
      %s274 = scalar_lea.vmem %s4, %s273
      %s275 = smul.u32 8, %s20
      %v277 = vld [vmem:[%s254] sm:$0xf]
      %v278 = vld [vmem:[%s254 + $0x4] sm:$0xf]
      %v279 = vld [vmem:[%s254 + $0x8] sm:$0xf]
      %v280 = vld [vmem:[%s254 + $0xc] sm:$0xf]
      %v281 = vld [vmem:[%s254 + $0x10] sm:$0xf]
      %v282 = vld [vmem:[%s254 + $0x14] sm:$0xf]
      %v283 = vld [vmem:[%s254 + $0x18] sm:$0xf]
      %v284 = vld [vmem:[%s254 + $0x1c] sm:$0xf]
      %v285 = vld [vmem:[%s254 + $0x20] sm:$0xf]
      %v286 = vld [vmem:[%s254 + $0x24] sm:$0xf]
      %v287 = vld [vmem:[%s254 + $0x28] sm:$0xf]
      %v288 = vld [vmem:[%s254 + $0x2c] sm:$0xf]
      %v289 = vld [vmem:[%s254 + $0x30] sm:$0xf]
      %v290 = vld [vmem:[%s254 + $0x34] sm:$0xf]
      %v291 = vld [vmem:[%s254 + $0x38] sm:$0xf]
      %v292 = vld [vmem:[%s254 + $0x3c] sm:$0xf]
      %v293 = vld [vmem:[%s264] sm:$0xf]
      %v294 = vld [vmem:[%s264 + $0x4] sm:$0xf]
      %v295 = vld [vmem:[%s264 + $0x8] sm:$0xf]
      %v296 = vld [vmem:[%s264 + $0xc] sm:$0xf]
      %s297 = scalar_lea.vmem %s264, 16
      %v298 = vld [vmem:[%s297] sm:$0xf]
      %v299 = vld [vmem:[%s297 + $0x4] sm:$0xf]
      %v300 = vld [vmem:[%s297 + $0x8] sm:$0xf]
      %v301 = vld [vmem:[%s297 + $0xc] sm:$0xf]
      %v326 = vunpack.c.l.b16 %v293
      %v327 = vunpack.c.l.b16 %v294
      %v328 = vunpack.c.l.b16 %v295
      %v329 = vunpack.c.l.b16 %v296
      %v330 = vunpack.c.l.b16 %v277
      %v331 = vunpack.c.l.b16 %v278
      %v332 = vunpack.c.l.b16 %v279
      %v333 = vunpack.c.l.b16 %v280
      %v334 = vunpack.c.l.b16 %v281
      %v335 = vunpack.c.l.b16 %v282
      %v336 = vunpack.c.l.b16 %v283
      %v337 = vunpack.c.l.b16 %v284
      %v338 = vunpack.c.l.b16 %v285
      %v339 = vunpack.c.l.b16 %v286
      %v340 = vunpack.c.l.b16 %v287
      %v341 = vunpack.c.l.b16 %v288
      %v342 = vunpack.c.l.b16 %v289
      %v343 = vunpack.c.l.b16 %v290
      %v344 = vunpack.c.l.b16 %v291
      %v345 = vunpack.c.l.b16 %v292
      %v346 = vunpack.c.l.b16 %v298
      %v347 = vunpack.c.l.b16 %v299
      %v348 = vunpack.c.l.b16 %v300
      %v349 = vunpack.c.l.b16 %v301
      %v350 = vpack.c.b16 %v327, %v326
      %v351 = vpack.c.b16 %v329, %v328
      %v352 = vpack.c.b16 %v331, %v330
      %v353 = vpack.c.b16 %v333, %v332
      %v354 = vpack.c.b16 %v335, %v334
      %v355 = vpack.c.b16 %v337, %v336
      %v356 = vpack.c.b16 %v339, %v338
      %v357 = vpack.c.b16 %v341, %v340
      %v358 = vpack.c.b16 %v343, %v342
      %v359 = vpack.c.b16 %v345, %v344
      %v360 = vpack.c.b16 %v347, %v346
      %v361 = vpack.c.b16 %v349, %v348
      %v363 = vshrl.u32 %v350, 16
      %v365 = vrot.slane %v363, 7
      %v366 = vshll.u32 %v350, 16
      %v368 = vor.u32 %v365, %v366
      %v370 = vshrl.u32 %v351, 16
      %v372 = vrot.slane %v370, 7
      %v373 = vshll.u32 %v351, 16
      %v375 = vor.u32 %v372, %v373
      %v377 = vshrl.u32 %v352, 16
      %v379 = vrot.slane %v377, 7
      %v380 = vshll.u32 %v352, 16
      %v382 = vor.u32 %v379, %v380
      %v384 = vshrl.u32 %v353, 16
      %v386 = vrot.slane %v384, 7
      %v387 = vshll.u32 %v353, 16
      %v389 = vor.u32 %v386, %v387
      %v391 = vshrl.u32 %v354, 16
      %v393 = vrot.slane %v391, 7
      %v394 = vshll.u32 %v354, 16
      %v396 = vor.u32 %v393, %v394
      %v398 = vshrl.u32 %v355, 16
      %v400 = vrot.slane %v398, 7
      %v401 = vshll.u32 %v355, 16
      %v403 = vor.u32 %v400, %v401
      %v405 = vshrl.u32 %v356, 16
      %v407 = vrot.slane %v405, 7
      %v408 = vshll.u32 %v356, 16
      %v410 = vor.u32 %v407, %v408
      %v412 = vshrl.u32 %v357, 16
      %v414 = vrot.slane %v412, 7
      %v415 = vshll.u32 %v357, 16
      %v417 = vor.u32 %v414, %v415
      %v419 = vshrl.u32 %v358, 16
      %v421 = vrot.slane %v419, 7
      %v422 = vshll.u32 %v358, 16
      %v424 = vor.u32 %v421, %v422
      %v426 = vshrl.u32 %v359, 16
      %v428 = vrot.slane %v426, 7
      %v429 = vshll.u32 %v359, 16
      %v431 = vor.u32 %v428, %v429
      %v433 = vshrl.u32 %v360, 16
      %v435 = vrot.slane %v433, 7
      %v436 = vshll.u32 %v360, 16
      %v438 = vor.u32 %v435, %v436
      %v440 = vshrl.u32 %v361, 16
      %v442 = vrot.slane %v440, 7
      %v443 = vshll.u32 %v361, 16
      %v445 = vor.u32 %v442, %v443
      %vm470 = vcmask 1040384
      %vm471 = vsmask.f32 256
      %vm472 = vmand %vm470, %vm471
      %v473 = vsel %vm472, 0, %v368
      %v474 = vsel %vm472, 0, %v375
      %v475 = vsel %vm472, 0, %v382
      %v476 = vsel %vm472, 0, %v389
      %v477 = vsel %vm472, 0, %v396
      %v478 = vsel %vm472, 0, %v403
      %v479 = vsel %vm472, 0, %v410
      %v480 = vsel %vm472, 0, %v417
      %v481 = vsel %vm472, 0, %v424
      %v482 = vsel %vm472, 0, %v431
      %v483 = vsel %vm472, 0, %v438
      %v484 = vsel %vm472, 0, %v445
      %v485 = vsel %vm472, %v365, 0
      %v486 = vsel %vm472, %v372, 0
      %v487 = vsel %vm472, %v379, 0
      %v488 = vsel %vm472, %v386, 0
      %v489 = vsel %vm472, %v393, 0
      %v490 = vsel %vm472, %v400, 0
      %v491 = vsel %vm472, %v407, 0
      %v492 = vsel %vm472, %v414, 0
      %v493 = vsel %vm472, %v421, 0
      %v494 = vsel %vm472, %v428, 0
      %v495 = vsel %vm472, %v435, 0
      %v496 = vsel %vm472, %v442, 0
      %vm497 = vsmask.f32 7424
      %v499 = vshrl.u32 %v473, 16
      %v501 = vshll.u32 %v473, 16
      %v503 = vrot.slane %v501, 1
      %v504 = vor.u32 %v499, %v503
      %v506 = vshll.u32 %v485, 16
      %v508 = vrot.slane %v506, 1
      %v509 = vsel %vm497, %v504, %v508
      %v511 = vshrl.u32 %v474, 16
      %v513 = vshll.u32 %v474, 16
      %v515 = vrot.slane %v513, 1
      %v516 = vor.u32 %v511, %v515
      %v518 = vshll.u32 %v486, 16
      %v520 = vrot.slane %v518, 1
      %v521 = vsel %vm497, %v516, %v520
      %v523 = vshrl.u32 %v475, 16
      %v525 = vshll.u32 %v475, 16
      %v527 = vrot.slane %v525, 1
      %v528 = vor.u32 %v523, %v527
      %v530 = vshll.u32 %v487, 16
      %v532 = vrot.slane %v530, 1
      %v533 = vsel %vm497, %v528, %v532
      %v535 = vshrl.u32 %v476, 16
      %v537 = vshll.u32 %v476, 16
      %v539 = vrot.slane %v537, 1
      %v540 = vor.u32 %v535, %v539
      %v542 = vshll.u32 %v488, 16
      %v544 = vrot.slane %v542, 1
      %v545 = vsel %vm497, %v540, %v544
      %v547 = vshrl.u32 %v477, 16
      %v549 = vshll.u32 %v477, 16
      %v551 = vrot.slane %v549, 1
      %v552 = vor.u32 %v547, %v551
      %v554 = vshll.u32 %v489, 16
      %v556 = vrot.slane %v554, 1
      %v557 = vsel %vm497, %v552, %v556
      %v559 = vshrl.u32 %v478, 16
      %v561 = vshll.u32 %v478, 16
      %v563 = vrot.slane %v561, 1
      %v564 = vor.u32 %v559, %v563
      %v566 = vshll.u32 %v490, 16
      %v568 = vrot.slane %v566, 1
      %v569 = vsel %vm497, %v564, %v568
      %v571 = vshrl.u32 %v479, 16
      %v573 = vshll.u32 %v479, 16
      %v575 = vrot.slane %v573, 1
      %v576 = vor.u32 %v571, %v575
      %v578 = vshll.u32 %v491, 16
      %v580 = vrot.slane %v578, 1
      %v581 = vsel %vm497, %v576, %v580
      %v583 = vshrl.u32 %v480, 16
      %v585 = vshll.u32 %v480, 16
      %v587 = vrot.slane %v585, 1
      %v588 = vor.u32 %v583, %v587
      %v590 = vshll.u32 %v492, 16
      %v592 = vrot.slane %v590, 1
      %v593 = vsel %vm497, %v588, %v592
      %v595 = vshrl.u32 %v481, 16
      %v597 = vshll.u32 %v481, 16
      %v599 = vrot.slane %v597, 1
      %v600 = vor.u32 %v595, %v599
      %v602 = vshll.u32 %v493, 16
      %v604 = vrot.slane %v602, 1
      %v605 = vsel %vm497, %v600, %v604
      %v607 = vshrl.u32 %v482, 16
      %v609 = vshll.u32 %v482, 16
      %v611 = vrot.slane %v609, 1
      %v612 = vor.u32 %v607, %v611
      %v614 = vshll.u32 %v494, 16
      %v616 = vrot.slane %v614, 1
      %v617 = vsel %vm497, %v612, %v616
      %618 = vrot.lane.b32.xlu0 %v509, 16
      %v619 = vpop.permute.xlu0 %618
      %620 = vrot.lane.b32.xlu0 %v521, 16
      %v621 = vpop.permute.xlu0 %620
      %622 = vrot.lane.b32.xlu0 %v533, 16
      %v623 = vpop.permute.xlu0 %622
      %624 = vrot.lane.b32.xlu0 %v545, 16
      %v625 = vpop.permute.xlu0 %624
      %626 = vrot.lane.b32.xlu0 %v557, 16
      %v627 = vpop.permute.xlu0 %626
      %628 = vrot.lane.b32.xlu0 %v569, 16
      %v629 = vpop.permute.xlu0 %628
      %630 = vrot.lane.b32.xlu0 %v581, 16
      %v631 = vpop.permute.xlu0 %630
      %632 = vrot.lane.b32.xlu0 %v593, 16
      %v633 = vpop.permute.xlu0 %632
      %634 = vrot.lane.b32.xlu0 %v605, 16
      %v635 = vpop.permute.xlu0 %634
      %636 = vrot.lane.b32.xlu0 %v617, 16
      %v637 = vpop.permute.xlu0 %636
      %vm658 = vcmask 1046528
      %v659 = vrot.slane %v473, 1
      %v660 = vrot.slane %v485, 1
      %v661 = vsel %vm658, %v659, %v660
      %v662 = vrot.slane %v474, 1
      %v663 = vrot.slane %v486, 1
      %v664 = vsel %vm658, %v662, %v663
      %v665 = vrot.slane %v475, 1
      %v666 = vrot.slane %v487, 1
      %v667 = vsel %vm658, %v665, %v666
      %v668 = vrot.slane %v476, 1
      %v669 = vrot.slane %v488, 1
      %v670 = vsel %vm658, %v668, %v669
      %v671 = vrot.slane %v477, 1
      %v672 = vrot.slane %v489, 1
      %v673 = vsel %vm658, %v671, %v672
      %v674 = vrot.slane %v478, 1
      %v675 = vrot.slane %v490, 1
      %v676 = vsel %vm658, %v674, %v675
      %v677 = vrot.slane %v479, 1
      %v678 = vrot.slane %v491, 1
      %v679 = vsel %vm658, %v677, %v678
      %v680 = vrot.slane %v480, 1
      %v681 = vrot.slane %v492, 1
      %v682 = vsel %vm658, %v680, %v681
      %v683 = vrot.slane %v481, 1
      %v684 = vrot.slane %v493, 1
      %v685 = vsel %vm658, %v683, %v684
      %v686 = vrot.slane %v482, 1
      %v687 = vrot.slane %v494, 1
      %v688 = vsel %vm658, %v686, %v687
      %689 = vrot.lane.b32.xlu0 %v661, 32
      %v690 = vpop.permute.xlu0 %689
      %691 = vrot.lane.b32.xlu0 %v664, 32
      %v692 = vpop.permute.xlu0 %691
      %693 = vrot.lane.b32.xlu0 %v667, 32
      %v694 = vpop.permute.xlu0 %693
      %695 = vrot.lane.b32.xlu0 %v670, 32
      %v696 = vpop.permute.xlu0 %695
      %697 = vrot.lane.b32.xlu0 %v673, 32
      %v698 = vpop.permute.xlu0 %697
      %699 = vrot.lane.b32.xlu0 %v676, 32
      %v700 = vpop.permute.xlu0 %699
      %701 = vrot.lane.b32.xlu0 %v679, 32
      %v702 = vpop.permute.xlu0 %701
      %703 = vrot.lane.b32.xlu0 %v682, 32
      %v704 = vpop.permute.xlu0 %703
      %705 = vrot.lane.b32.xlu0 %v685, 32
      %v706 = vpop.permute.xlu0 %705
      %707 = vrot.lane.b32.xlu0 %v688, 32
      %v708 = vpop.permute.xlu0 %707
      %710 = vrot.lane.b32.xlu0 %v474, 48
      %v711 = vpop.permute.xlu0 %710
      %712 = vrot.lane.b32.xlu0 %v475, 48
      %v713 = vpop.permute.xlu0 %712
      %714 = vrot.lane.b32.xlu0 %v476, 48
      %v715 = vpop.permute.xlu0 %714
      %716 = vrot.lane.b32.xlu0 %v477, 48
      %v717 = vpop.permute.xlu0 %716
      %718 = vrot.lane.b32.xlu0 %v478, 48
      %v719 = vpop.permute.xlu0 %718
      %720 = vrot.lane.b32.xlu0 %v479, 48
      %v721 = vpop.permute.xlu0 %720
      %722 = vrot.lane.b32.xlu0 %v480, 48
      %v723 = vpop.permute.xlu0 %722
      %724 = vrot.lane.b32.xlu0 %v481, 48
      %v725 = vpop.permute.xlu0 %724
      %726 = vrot.lane.b32.xlu0 %v482, 48
      %v727 = vpop.permute.xlu0 %726
      %728 = vrot.lane.b32.xlu0 %v483, 48
      %v729 = vpop.permute.xlu0 %728
      %v731 = vshrl.u32 %v483, 16
      %v733 = vshll.u32 %v483, 16
      %v735 = vrot.slane %v733, 1
      %v736 = vor.u32 %v731, %v735
      %v738 = vshll.u32 %v495, 16
      %v740 = vrot.slane %v738, 1
      %v741 = vsel %vm497, %v736, %v740
      %742 = vrot.lane.b32.xlu0 %v521, 64
      %v743 = vpop.permute.xlu0 %742
      %744 = vrot.lane.b32.xlu0 %v533, 64
      %v745 = vpop.permute.xlu0 %744
      %746 = vrot.lane.b32.xlu0 %v545, 64
      %v747 = vpop.permute.xlu0 %746
      %748 = vrot.lane.b32.xlu0 %v557, 64
      %v749 = vpop.permute.xlu0 %748
      %750 = vrot.lane.b32.xlu0 %v569, 64
      %v751 = vpop.permute.xlu0 %750
      %752 = vrot.lane.b32.xlu0 %v581, 64
      %v753 = vpop.permute.xlu0 %752
      %754 = vrot.lane.b32.xlu0 %v593, 64
      %v755 = vpop.permute.xlu0 %754
      %756 = vrot.lane.b32.xlu0 %v605, 64
      %v757 = vpop.permute.xlu0 %756
      %758 = vrot.lane.b32.xlu0 %v617, 64
      %v759 = vpop.permute.xlu0 %758
      %760 = vrot.lane.b32.xlu0 %v741, 64
      %v761 = vpop.permute.xlu0 %760
      %v763 = vrot.slane %v483, 1
      %v764 = vrot.slane %v495, 1
      %v765 = vsel %vm658, %v763, %v764
      %766 = vrot.lane.b32.xlu0 %v664, 80
      %v767 = vpop.permute.xlu0 %766
      %768 = vrot.lane.b32.xlu0 %v667, 80
      %v769 = vpop.permute.xlu0 %768
      %770 = vrot.lane.b32.xlu0 %v670, 80
      %v771 = vpop.permute.xlu0 %770
      %772 = vrot.lane.b32.xlu0 %v673, 80
      %v773 = vpop.permute.xlu0 %772
      %774 = vrot.lane.b32.xlu0 %v676, 80
      %v775 = vpop.permute.xlu0 %774
      %776 = vrot.lane.b32.xlu0 %v679, 80
      %v777 = vpop.permute.xlu0 %776
      %778 = vrot.lane.b32.xlu0 %v682, 80
      %v779 = vpop.permute.xlu0 %778
      %780 = vrot.lane.b32.xlu0 %v685, 80
      %v781 = vpop.permute.xlu0 %780
      %782 = vrot.lane.b32.xlu0 %v688, 80
      %v783 = vpop.permute.xlu0 %782
      %784 = vrot.lane.b32.xlu0 %v765, 80
      %v785 = vpop.permute.xlu0 %784
      %787 = vrot.lane.b32.xlu0 %v475, 96
      %v788 = vpop.permute.xlu0 %787
      %789 = vrot.lane.b32.xlu0 %v476, 96
      %v790 = vpop.permute.xlu0 %789
      %791 = vrot.lane.b32.xlu0 %v477, 96
      %v792 = vpop.permute.xlu0 %791
      %793 = vrot.lane.b32.xlu0 %v478, 96
      %v794 = vpop.permute.xlu0 %793
      %795 = vrot.lane.b32.xlu0 %v479, 96
      %v796 = vpop.permute.xlu0 %795
      %797 = vrot.lane.b32.xlu0 %v480, 96
      %v798 = vpop.permute.xlu0 %797
      %799 = vrot.lane.b32.xlu0 %v481, 96
      %v800 = vpop.permute.xlu0 %799
      %801 = vrot.lane.b32.xlu0 %v482, 96
      %v802 = vpop.permute.xlu0 %801
      %803 = vrot.lane.b32.xlu0 %v483, 96
      %v804 = vpop.permute.xlu0 %803
      %805 = vrot.lane.b32.xlu0 %v484, 96
      %v806 = vpop.permute.xlu0 %805
      %v808 = vshrl.u32 %v484, 16
      %v810 = vshll.u32 %v484, 16
      %v812 = vrot.slane %v810, 1
      %v813 = vor.u32 %v808, %v812
      %v815 = vshll.u32 %v496, 16
      %v817 = vrot.slane %v815, 1
      %v818 = vsel %vm497, %v813, %v817
      %819 = vrot.lane.b32.xlu0 %v533, 112
      %v820 = vpop.permute.xlu0 %819
      %821 = vrot.lane.b32.xlu0 %v545, 112
      %v822 = vpop.permute.xlu0 %821
      %823 = vrot.lane.b32.xlu0 %v557, 112
      %v824 = vpop.permute.xlu0 %823
      %825 = vrot.lane.b32.xlu0 %v569, 112
      %v826 = vpop.permute.xlu0 %825
      %827 = vrot.lane.b32.xlu0 %v581, 112
      %v828 = vpop.permute.xlu0 %827
      %829 = vrot.lane.b32.xlu0 %v593, 112
      %v830 = vpop.permute.xlu0 %829
      %831 = vrot.lane.b32.xlu0 %v605, 112
      %v832 = vpop.permute.xlu0 %831
      %833 = vrot.lane.b32.xlu0 %v617, 112
      %v834 = vpop.permute.xlu0 %833
      %835 = vrot.lane.b32.xlu0 %v741, 112
      %v836 = vpop.permute.xlu0 %835
      %837 = vrot.lane.b32.xlu0 %v818, 112
      %v838 = vpop.permute.xlu0 %837
      %v840 = vrot.slane %v484, 1
      %v841 = vrot.slane %v496, 1
      %v842 = vsel %vm658, %v840, %v841
      %vm843 = vcmask 130048
      %v845 = vsel %vm843, %v473, %v619
      %v847 = vsel %vm843, %v474, %v621
      %v849 = vsel %vm843, %v475, %v623
      %v851 = vsel %vm843, %v476, %v625
      %v853 = vsel %vm843, %v477, %v627
      %v855 = vsel %vm843, %v478, %v629
      %v857 = vsel %vm843, %v479, %v631
      %v859 = vsel %vm843, %v480, %v633
      %v861 = vsel %vm843, %v481, %v635
      %v863 = vsel %vm843, %v482, %v637
      %vm864 = vcmask 261120
      %v866 = vsel %vm864, %v845, %v690
      %v868 = vsel %vm864, %v847, %v692
      %v870 = vsel %vm864, %v849, %v694
      %v872 = vsel %vm864, %v851, %v696
      %v874 = vsel %vm864, %v853, %v698
      %v876 = vsel %vm864, %v855, %v700
      %v878 = vsel %vm864, %v857, %v702
      %v880 = vsel %vm864, %v859, %v704
      %v882 = vsel %vm864, %v861, %v706
      %v884 = vsel %vm864, %v863, %v708
      %vm885 = vcmask 392192
      %v887 = vsel %vm885, %v866, %v711
      %v889 = vsel %vm885, %v868, %v713
      %v891 = vsel %vm885, %v870, %v715
      %v893 = vsel %vm885, %v872, %v717
      %v895 = vsel %vm885, %v874, %v719
      %v897 = vsel %vm885, %v876, %v721
      %v899 = vsel %vm885, %v878, %v723
      %v901 = vsel %vm885, %v880, %v725
      %v903 = vsel %vm885, %v882, %v727
      %v905 = vsel %vm885, %v884, %v729
      %vm906 = vcmask 523264
      %v908 = vsel %vm906, %v887, %v743
      %v910 = vsel %vm906, %v889, %v745
      %v912 = vsel %vm906, %v891, %v747
      %v914 = vsel %vm906, %v893, %v749
      %v916 = vsel %vm906, %v895, %v751
      %v918 = vsel %vm906, %v897, %v753
      %v920 = vsel %vm906, %v899, %v755
      %v922 = vsel %vm906, %v901, %v757
      %v924 = vsel %vm906, %v903, %v759
      %v926 = vsel %vm906, %v905, %v761
      %vm927 = vcmask 654336
      %v929 = vsel %vm927, %v908, %v767
      %v931 = vsel %vm927, %v910, %v769
      %v933 = vsel %vm927, %v912, %v771
      %v935 = vsel %vm927, %v914, %v773
      %v937 = vsel %vm927, %v916, %v775
      %v939 = vsel %vm927, %v918, %v777
      %v941 = vsel %vm927, %v920, %v779
      %v943 = vsel %vm927, %v922, %v781
      %v945 = vsel %vm927, %v924, %v783
      %v947 = vsel %vm927, %v926, %v785
      %vm948 = vcmask 785408
      %v950 = vsel %vm948, %v929, %v788
      %v952 = vsel %vm948, %v931, %v790
      %v954 = vsel %vm948, %v933, %v792
      %v956 = vsel %vm948, %v935, %v794
      %v958 = vsel %vm948, %v937, %v796
      %v960 = vsel %vm948, %v939, %v798
      %v962 = vsel %vm948, %v941, %v800
      %v964 = vsel %vm948, %v943, %v802
      %v966 = vsel %vm948, %v945, %v804
      %v968 = vsel %vm948, %v947, %v806
      %vm969 = vcmask 916480
      %v971 = vsel %vm969, %v950, %v820
      %v974 = vsel %vm969, %v952, %v822
      %v977 = vsel %vm969, %v954, %v824
      %v980 = vsel %vm969, %v956, %v826
      %v983 = vsel %vm969, %v958, %v828
      %v986 = vsel %vm969, %v960, %v830
      %v989 = vsel %vm969, %v962, %v832
      %v992 = vsel %vm969, %v964, %v834
      %v995 = vsel %vm969, %v966, %v836
      %v998 = vsel %vm969, %v968, %v838
      %v1000 = vld [vmem:[%s2] sm:$0xf]
      %v1001 = vld [vmem:[%s2 + $0x4] sm:$0xf]
      %v1002 = vld [vmem:[%s2 + $0x8] sm:$0xf]
      %v1003 = vld [vmem:[%s2 + $0xc] sm:$0xf]
      %v1004 = vld [vmem:[%s2 + $0x10] sm:$0xf]
      %v1005 = vld [vmem:[%s2 + $0x14] sm:$0xf]
      %v1006 = vld [vmem:[%s2 + $0x18] sm:$0xf]
      %v1007 = vld [vmem:[%s2 + $0x1c] sm:$0xf]
      %v1008 = vld [vmem:[%s2 + $0x20] sm:$0xf]
      %v1009 = vld [vmem:[%s2 + $0x24] sm:$0xf]
      %v1010 = vld [vmem:[%s2 + $0x28] sm:$0xf]
      %v1011 = vld [vmem:[%s2 + $0x2c] sm:$0xf]
      %v1012 = vld [vmem:[%s2 + $0x30] sm:$0xf]
      %v1013 = vld [vmem:[%s2 + $0x34] sm:$0xf]
      %v1014 = vld [vmem:[%s2 + $0x38] sm:$0xf]
      %v1015 = vld [vmem:[%s2 + $0x3c] sm:$0xf]
      %v1016 = vld [vmem:[%s2 + $0x40] sm:$0xf]
      %v1017 = vld [vmem:[%s2 + $0x44] sm:$0xf]
      %v1036 = vunpack.c.l.b16 %v1000
      %v1037 = vunpack.c.l.b16 %v1001
      %v1038 = vunpack.c.l.b16 %v1002
      %v1039 = vunpack.c.l.b16 %v1003
      %v1040 = vunpack.c.l.b16 %v1004
      %v1041 = vunpack.c.l.b16 %v1005
      %v1042 = vunpack.c.l.b16 %v1006
      %v1043 = vunpack.c.l.b16 %v1007
      %v1044 = vunpack.c.l.b16 %v1008
      %v1045 = vunpack.c.l.b16 %v1009
      %v1046 = vunpack.c.l.b16 %v1010
      %v1047 = vunpack.c.l.b16 %v1011
      %v1048 = vunpack.c.l.b16 %v1012
      %v1049 = vunpack.c.l.b16 %v1013
      %v1050 = vunpack.c.l.b16 %v1014
      %v1051 = vunpack.c.l.b16 %v1015
      %v1052 = vunpack.c.l.b16 %v1016
      %v1053 = vunpack.c.l.b16 %v1017
      %v1054 = vpack.c.b16 %v1037, %v1036
      %v1055 = vpack.c.b16 %v1039, %v1038
      %v1056 = vpack.c.b16 %v1041, %v1040
      %v1057 = vpack.c.b16 %v1043, %v1042
      %v1058 = vpack.c.b16 %v1045, %v1044
      %v1059 = vpack.c.b16 %v1047, %v1046
      %v1060 = vpack.c.b16 %v1049, %v1048
      %v1061 = vpack.c.b16 %v1051, %v1050
      %v1062 = vpack.c.b16 %v1053, %v1052
      %v1073 = vsel %vm843, %v667, 0
      %v1076 = vsel %vm843, %v670, 0
      %v1079 = vsel %vm843, %v673, 0
      %v1082 = vsel %vm843, %v676, 0
      %v1085 = vsel %vm843, %v679, 0
      %v1088 = vsel %vm843, %v682, 0
      %v1091 = vsel %vm843, %v685, 0
      %v1094 = vsel %vm843, %v688, 0
      %v1097 = vsel %vm843, %v765, 0
      %v1100 = vsel %vm843, %v842, 0
      %1102 = vmatprep.subr.bf16.mxu0 0
      %1103 = vmatpush1.bf16.msra.mxu0 %v1061
      %1104 = vmatprep.subr.bf16.mxu0 0
      %1105 = vmatpush1.bf16.msra.mxu0 %v1060
      %1106 = vmatprep.subr.bf16.mxu0 0
      %1107 = vmatpush1.bf16.msra.mxu0 %v1059
      %1108 = vmatprep.subr.bf16.mxu0 0
      %1109 = vmatpush1.bf16.msra.mxu0 %v1058
      %1110 = vmatprep.subr.bf16.mxu0 0
      %1111 = vmatpush1.bf16.msra.mxu0 %v1057
      %1112 = vmatprep.subr.bf16.mxu0 0
      %1113 = vmatpush1.bf16.msra.mxu0 %v1056
      %1114 = vmatprep.subr.bf16.mxu0 0
      %1115 = vmatpush1.bf16.msra.mxu0 %v1055
      %1116 = vmatprep.subr.bf16.mxu0 0
      %1117 = vmatpush1.bf16.msra.mxu0 %v1054
      %1118 = vmatprep.subr.bf16.mxu0 0
      %1119 = vmatpush2.bf16.msra.mxu0 0
      %1120 = vmatprep.subr.bf16.mxu0 0
      %1121 = vmatpush2.bf16.msra.mxu0 0
      %1122 = vmatprep.subr.bf16.mxu0 0
      %1123 = vmatpush2.bf16.msra.mxu0 0
      %1124 = vmatprep.subr.bf16.mxu0 0
      %1125 = vmatpush2.bf16.msra.mxu0 0
      %1126 = vmatprep.subr.bf16.mxu0 0
      %1127 = vmatpush2.bf16.msra.mxu0 0
      %1128 = vmatprep.subr.bf16.mxu0 0
      %1129 = vmatpush2.bf16.msra.mxu0 0
      %1130 = vmatprep.subr.bf16.mxu0 0
      %1131 = vmatpush2.bf16.msra.mxu0 0
      %1132 = vmatprep.subr.bf16.mxu0 0
      %1133 = vmatpush2.bf16.msra.mxu0 %v1062
      %1134 = vmatprep.mubr.bf16.mxu0 %v1073
      %1135 = vmatmul.mubr.bf16.gmra.mxu0 %v971
      %v1136 = vpop.f32.mrf.mxu0
      %v1137 = vadd.f32 0.0, %v1136
      %v1138 = vpop.f32.mrf.mxu0
      %v1139 = vpop.f32.mrf.mxu0
      %v1140 = vadd.f32 0.0, %v1139
      %v1141 = vpop.f32.mrf.mxu0
      %1142 = vmatprep.mubr.bf16.mxu0 %v1076
      %1143 = vmatmul.mubr.bf16.gmra.mxu0 %v974
      %v1144 = vpop.f32.mrf.mxu0
      %v1145 = vadd.f32 0.0, %v1144
      %v1146 = vpop.f32.mrf.mxu0
      %v1147 = vpop.f32.mrf.mxu0
      %v1148 = vadd.f32 0.0, %v1147
      %v1149 = vpop.f32.mrf.mxu0
      %1150 = vmatprep.mubr.bf16.mxu0 %v1079
      %1151 = vmatmul.mubr.bf16.gmra.mxu0 %v977
      %v1152 = vpop.f32.mrf.mxu0
      %v1153 = vadd.f32 0.0, %v1152
      %v1154 = vpop.f32.mrf.mxu0
      %v1155 = vpop.f32.mrf.mxu0
      %v1156 = vadd.f32 0.0, %v1155
      %v1157 = vpop.f32.mrf.mxu0
      %1158 = vmatprep.mubr.bf16.mxu0 %v1082
      %1159 = vmatmul.mubr.bf16.gmra.mxu0 %v980
      %v1160 = vpop.f32.mrf.mxu0
      %v1161 = vadd.f32 0.0, %v1160
      %v1162 = vpop.f32.mrf.mxu0
      %v1163 = vpop.f32.mrf.mxu0
      %v1164 = vadd.f32 0.0, %v1163
      %v1165 = vpop.f32.mrf.mxu0
      %1166 = vmatprep.mubr.bf16.mxu0 %v1085
      %1167 = vmatmul.mubr.bf16.gmra.mxu0 %v983
      %v1168 = vpop.f32.mrf.mxu0
      %v1169 = vadd.f32 0.0, %v1168
      %v1170 = vpop.f32.mrf.mxu0
      %v1171 = vpop.f32.mrf.mxu0
      %v1172 = vadd.f32 0.0, %v1171
      %v1173 = vpop.f32.mrf.mxu0
      %1174 = vmatprep.mubr.bf16.mxu0 %v1088
      %1175 = vmatmul.mubr.bf16.gmra.mxu0 %v986
      %v1176 = vpop.f32.mrf.mxu0
      %v1177 = vadd.f32 0.0, %v1176
      %v1178 = vpop.f32.mrf.mxu0
      %v1179 = vpop.f32.mrf.mxu0
      %v1180 = vadd.f32 0.0, %v1179
      %v1181 = vpop.f32.mrf.mxu0
      %1182 = vmatprep.mubr.bf16.mxu0 %v1091
      %1183 = vmatmul.mubr.bf16.gmra.mxu0 %v989
      %v1184 = vpop.f32.mrf.mxu0
      %v1185 = vadd.f32 0.0, %v1184
      %v1186 = vpop.f32.mrf.mxu0
      %v1187 = vpop.f32.mrf.mxu0
      %v1188 = vadd.f32 0.0, %v1187
      %v1189 = vpop.f32.mrf.mxu0
      %1190 = vmatprep.mubr.bf16.mxu0 %v1094
      %1191 = vmatmul.mubr.bf16.gmra.mxu0 %v992
      %v1192 = vpop.f32.mrf.mxu0
      %v1193 = vadd.f32 0.0, %v1192
      %v1194 = vpop.f32.mrf.mxu0
      %v1195 = vpop.f32.mrf.mxu0
      %v1196 = vadd.f32 0.0, %v1195
      %v1197 = vpop.f32.mrf.mxu0
      %1198 = vmatprep.mubr.bf16.mxu0 %v1097
      %1199 = vmatmul.mubr.bf16.gmra.mxu0 %v995
      %v1200 = vpop.f32.mrf.mxu0
      %v1201 = vadd.f32 0.0, %v1200
      %v1202 = vpop.f32.mrf.mxu0
      %v1203 = vpop.f32.mrf.mxu0
      %v1204 = vadd.f32 0.0, %v1203
      %v1205 = vpop.f32.mrf.mxu0
      %1206 = vmatprep.mubr.bf16.mxu0 %v1100
      %1207 = vmatmul.mubr.bf16.gmra.mxu0 %v998
      %v1208 = vpop.f32.mrf.mxu0
      %v1209 = vadd.f32 0.0, %v1208
      %v1210 = vpop.f32.mrf.mxu0
      %v1211 = vpop.f32.mrf.mxu0
      %v1212 = vadd.f32 0.0, %v1211
      %v1213 = vpop.f32.mrf.mxu0
      %1214 = vdwg.mxu0
      %v1215 = vmax.f32 %v1137, 0.0
      %v1216 = vmax.f32 %v1140, 0.0
      %v1217 = vmax.f32 %v1145, 0.0
      %v1218 = vmax.f32 %v1148, 0.0
      %v1219 = vmax.f32 %v1153, 0.0
      %v1220 = vmax.f32 %v1156, 0.0
      %v1221 = vmax.f32 %v1161, 0.0
      %v1222 = vmax.f32 %v1164, 0.0
      %v1223 = vmax.f32 %v1169, 0.0
      %v1224 = vmax.f32 %v1172, 0.0
      %v1225 = vmax.f32 %v1177, 0.0
      %v1226 = vmax.f32 %v1180, 0.0
      %v1227 = vmax.f32 %v1185, 0.0
      %v1228 = vmax.f32 %v1188, 0.0
      %v1229 = vmax.f32 %v1193, 0.0
      %v1230 = vmax.f32 %v1196, 0.0
      %v1231 = vmax.f32 %v1201, 0.0
      %v1232 = vmax.f32 %v1204, 0.0
      %v1233 = vmax.f32 %v1209, 0.0
      %v1234 = vmax.f32 %v1212, 0.0
      %s1235 = smul.u32 %s20, 8
      %s1236 = ssub.s32 %s1235, 1
      %v1237 = vstv %s1236
      %v1238 = vadd.s32 %v1237, 1
      %v1239 = vadd.s32 %v1237, 2
      %v1240 = vadd.s32 %v1237, 3
      %v1241 = vadd.s32 %v1237, 4
      %v1242 = vadd.s32 %v1237, 5
      %v1243 = vadd.s32 %v1237, 6
      %v1244 = vadd.s32 %v1237, 7
      %v1245 = vadd.s32 %v1237, 8
      %v1246 = vadd.s32 %v1237, 9
      %vm1247 = vcmp.ge.s32.totalorder %v1237, 0
      %vm1248 = vcmp.ge.s32.totalorder %v1238, 0
      %vm1249 = vcmp.ge.s32.totalorder %v1239, 0
      %vm1250 = vcmp.ge.s32.totalorder %v1240, 0
      %vm1251 = vcmp.ge.s32.totalorder %v1241, 0
      %vm1252 = vcmp.ge.s32.totalorder %v1242, 0
      %vm1253 = vcmp.ge.s32.totalorder %v1243, 0
      %vm1254 = vcmp.ge.s32.totalorder %v1244, 0
      %vm1255 = vcmp.ge.s32.totalorder %v1245, 0
      %vm1256 = vcmp.ge.s32.totalorder %v1246, 0
      %vm1257 = vcmp.lt.s32.totalorder %v1237, 16
      %vm1258 = vcmp.lt.s32.totalorder %v1238, 16
      %vm1259 = vcmp.lt.s32.totalorder %v1239, 16
      %vm1260 = vcmp.lt.s32.totalorder %v1240, 16
      %vm1261 = vcmp.lt.s32.totalorder %v1241, 16
      %vm1262 = vcmp.lt.s32.totalorder %v1242, 16
      %vm1263 = vcmp.lt.s32.totalorder %v1243, 16
      %vm1264 = vcmp.lt.s32.totalorder %v1244, 16
      %vm1265 = vcmp.lt.s32.totalorder %v1245, 16
      %vm1266 = vcmp.lt.s32.totalorder %v1246, 16
      %vm1267 = vmand %vm1247, %vm1257
      %vm1268 = vmand %vm1248, %vm1258
      %vm1269 = vmand %vm1249, %vm1259
      %vm1270 = vmand %vm1250, %vm1260
      %vm1271 = vmand %vm1251, %vm1261
      %vm1272 = vmand %vm1252, %vm1262
      %vm1273 = vmand %vm1253, %vm1263
      %vm1274 = vmand %vm1254, %vm1264
      %vm1275 = vmand %vm1255, %vm1265
      %vm1276 = vmand %vm1256, %vm1266
      %v1277 = vsel %vm1267, 1, 0
      %v1278 = vsel %vm1268, 1, 0
      %v1279 = vsel %vm1269, 1, 0
      %v1280 = vsel %vm1270, 1, 0
      %v1281 = vsel %vm1271, 1, 0
      %v1282 = vsel %vm1272, 1, 0
      %v1283 = vsel %vm1273, 1, 0
      %v1284 = vsel %vm1274, 1, 0
      %v1285 = vsel %vm1275, 1, 0
      %v1286 = vsel %vm1276, 1, 0
      %vm1287 = vcmp.eq.s32.totalorder %v1277, 1
      %vm1288 = vcmp.eq.s32.totalorder %v1278, 1
      %vm1289 = vcmp.eq.s32.totalorder %v1279, 1
      %vm1290 = vcmp.eq.s32.totalorder %v1280, 1
      %vm1291 = vcmp.eq.s32.totalorder %v1281, 1
      %vm1292 = vcmp.eq.s32.totalorder %v1282, 1
      %vm1293 = vcmp.eq.s32.totalorder %v1283, 1
      %vm1294 = vcmp.eq.s32.totalorder %v1284, 1
      %vm1295 = vcmp.eq.s32.totalorder %v1285, 1
      %vm1296 = vcmp.eq.s32.totalorder %v1286, 1
      %v1297 = vsel %vm1287, %v1215, 0.0
      %v1298 = vsel %vm1287, %v1216, 0.0
      %v1299 = vsel %vm1288, %v1217, 0.0
      %v1300 = vsel %vm1288, %v1218, 0.0
      %v1301 = vsel %vm1289, %v1219, 0.0
      %v1302 = vsel %vm1289, %v1220, 0.0
      %v1303 = vsel %vm1290, %v1221, 0.0
      %v1304 = vsel %vm1290, %v1222, 0.0
      %v1305 = vsel %vm1291, %v1223, 0.0
      %v1306 = vsel %vm1291, %v1224, 0.0
      %v1307 = vsel %vm1292, %v1225, 0.0
      %v1308 = vsel %vm1292, %v1226, 0.0
      %v1309 = vsel %vm1293, %v1227, 0.0
      %v1310 = vsel %vm1293, %v1228, 0.0
      %v1311 = vsel %vm1294, %v1229, 0.0
      %v1312 = vsel %vm1294, %v1230, 0.0
      %v1313 = vsel %vm1295, %v1231, 0.0
      %v1314 = vsel %vm1295, %v1232, 0.0
      %v1315 = vsel %vm1296, %v1233, 0.0
      %v1316 = vsel %vm1296, %v1234, 0.0
      %v1317 = vpack.c.bf16 %v1298, %v1297
      %v1318 = vpack.c.bf16 %v1300, %v1299
      %v1319 = vpack.c.bf16 %v1302, %v1301
      %v1320 = vpack.c.bf16 %v1304, %v1303
      %v1321 = vpack.c.bf16 %v1306, %v1305
      %v1322 = vpack.c.bf16 %v1308, %v1307
      %v1323 = vpack.c.bf16 %v1310, %v1309
      %v1324 = vpack.c.bf16 %v1312, %v1311
      %v1325 = vpack.c.bf16 %v1314, %v1313
      %v1326 = vpack.c.bf16 %v1316, %v1315
      %v1328 = vshrl.u32 %v1317, 16
      %v1330 = vrot.slane %v1328, 7
      %v1331 = vshll.u32 %v1317, 16
      %v1333 = vor.u32 %v1330, %v1331
      %v1335 = vshrl.u32 %v1318, 16
      %v1337 = vrot.slane %v1335, 7
      %v1338 = vshll.u32 %v1318, 16
      %v1340 = vor.u32 %v1337, %v1338
      %v1342 = vshrl.u32 %v1319, 16
      %v1344 = vrot.slane %v1342, 7
      %v1345 = vshll.u32 %v1319, 16
      %v1347 = vor.u32 %v1344, %v1345
      %v1349 = vshrl.u32 %v1320, 16
      %v1351 = vrot.slane %v1349, 7
      %v1352 = vshll.u32 %v1320, 16
      %v1354 = vor.u32 %v1351, %v1352
      %v1356 = vshrl.u32 %v1321, 16
      %v1358 = vrot.slane %v1356, 7
      %v1359 = vshll.u32 %v1321, 16
      %v1361 = vor.u32 %v1358, %v1359
      %v1363 = vshrl.u32 %v1322, 16
      %v1365 = vrot.slane %v1363, 7
      %v1366 = vshll.u32 %v1322, 16
      %v1368 = vor.u32 %v1365, %v1366
      %v1370 = vshrl.u32 %v1323, 16
      %v1372 = vrot.slane %v1370, 7
      %v1373 = vshll.u32 %v1323, 16
      %v1375 = vor.u32 %v1372, %v1373
      %v1377 = vshrl.u32 %v1324, 16
      %v1379 = vrot.slane %v1377, 7
      %v1380 = vshll.u32 %v1324, 16
      %v1382 = vor.u32 %v1379, %v1380
      %v1384 = vshrl.u32 %v1325, 16
      %v1386 = vrot.slane %v1384, 7
      %v1387 = vshll.u32 %v1325, 16
      %v1389 = vor.u32 %v1386, %v1387
      %v1391 = vshrl.u32 %v1326, 16
      %v1393 = vrot.slane %v1391, 7
      %v1394 = vshll.u32 %v1326, 16
      %v1396 = vor.u32 %v1393, %v1394
      %v1417 = vsel %vm472, 0, %v1333
      %v1418 = vsel %vm472, 0, %v1340
      %v1419 = vsel %vm472, 0, %v1347
      %v1420 = vsel %vm472, 0, %v1354
      %v1421 = vsel %vm472, 0, %v1361
      %v1422 = vsel %vm472, 0, %v1368
      %v1423 = vsel %vm472, 0, %v1375
      %v1424 = vsel %vm472, 0, %v1382
      %v1425 = vsel %vm472, 0, %v1389
      %v1426 = vsel %vm472, 0, %v1396
      %v1427 = vsel %vm472, %v1330, 0
      %v1428 = vsel %vm472, %v1337, 0
      %v1429 = vsel %vm472, %v1344, 0
      %v1430 = vsel %vm472, %v1351, 0
      %v1431 = vsel %vm472, %v1358, 0
      %v1432 = vsel %vm472, %v1365, 0
      %v1433 = vsel %vm472, %v1372, 0
      %v1434 = vsel %vm472, %v1379, 0
      %v1435 = vsel %vm472, %v1386, 0
      %v1436 = vsel %vm472, %v1393, 0
      %v1438 = vshrl.u32 %v1417, 16
      %v1440 = vshll.u32 %v1417, 16
      %v1442 = vrot.slane %v1440, 1
      %v1443 = vor.u32 %v1438, %v1442
      %v1445 = vshll.u32 %v1427, 16
      %v1447 = vrot.slane %v1445, 1
      %v1448 = vsel %vm497, %v1443, %v1447
      %v1450 = vshrl.u32 %v1418, 16
      %v1452 = vshll.u32 %v1418, 16
      %v1454 = vrot.slane %v1452, 1
      %v1455 = vor.u32 %v1450, %v1454
      %v1457 = vshll.u32 %v1428, 16
      %v1459 = vrot.slane %v1457, 1
      %v1460 = vsel %vm497, %v1455, %v1459
      %v1462 = vshrl.u32 %v1419, 16
      %v1464 = vshll.u32 %v1419, 16
      %v1466 = vrot.slane %v1464, 1
      %v1467 = vor.u32 %v1462, %v1466
      %v1469 = vshll.u32 %v1429, 16
      %v1471 = vrot.slane %v1469, 1
      %v1472 = vsel %vm497, %v1467, %v1471
      %v1474 = vshrl.u32 %v1420, 16
      %v1476 = vshll.u32 %v1420, 16
      %v1478 = vrot.slane %v1476, 1
      %v1479 = vor.u32 %v1474, %v1478
      %v1481 = vshll.u32 %v1430, 16
      %v1483 = vrot.slane %v1481, 1
      %v1484 = vsel %vm497, %v1479, %v1483
      %v1486 = vshrl.u32 %v1421, 16
      %v1488 = vshll.u32 %v1421, 16
      %v1490 = vrot.slane %v1488, 1
      %v1491 = vor.u32 %v1486, %v1490
      %v1493 = vshll.u32 %v1431, 16
      %v1495 = vrot.slane %v1493, 1
      %v1496 = vsel %vm497, %v1491, %v1495
      %v1498 = vshrl.u32 %v1422, 16
      %v1500 = vshll.u32 %v1422, 16
      %v1502 = vrot.slane %v1500, 1
      %v1503 = vor.u32 %v1498, %v1502
      %v1505 = vshll.u32 %v1432, 16
      %v1507 = vrot.slane %v1505, 1
      %v1508 = vsel %vm497, %v1503, %v1507
      %v1510 = vshrl.u32 %v1423, 16
      %v1512 = vshll.u32 %v1423, 16
      %v1514 = vrot.slane %v1512, 1
      %v1515 = vor.u32 %v1510, %v1514
      %v1517 = vshll.u32 %v1433, 16
      %v1519 = vrot.slane %v1517, 1
      %v1520 = vsel %vm497, %v1515, %v1519
      %v1522 = vshrl.u32 %v1424, 16
      %v1524 = vshll.u32 %v1424, 16
      %v1526 = vrot.slane %v1524, 1
      %v1527 = vor.u32 %v1522, %v1526
      %v1529 = vshll.u32 %v1434, 16
      %v1531 = vrot.slane %v1529, 1
      %v1532 = vsel %vm497, %v1527, %v1531
      %1533 = vrot.lane.b32.xlu0 %v1448, 16
      %v1534 = vpop.permute.xlu0 %1533
      %1535 = vrot.lane.b32.xlu0 %v1460, 16
      %v1536 = vpop.permute.xlu0 %1535
      %1537 = vrot.lane.b32.xlu0 %v1472, 16
      %v1538 = vpop.permute.xlu0 %1537
      %1539 = vrot.lane.b32.xlu0 %v1484, 16
      %v1540 = vpop.permute.xlu0 %1539
      %1541 = vrot.lane.b32.xlu0 %v1496, 16
      %v1542 = vpop.permute.xlu0 %1541
      %1543 = vrot.lane.b32.xlu0 %v1508, 16
      %v1544 = vpop.permute.xlu0 %1543
      %1545 = vrot.lane.b32.xlu0 %v1520, 16
      %v1546 = vpop.permute.xlu0 %1545
      %1547 = vrot.lane.b32.xlu0 %v1532, 16
      %v1548 = vpop.permute.xlu0 %1547
      %v1565 = vrot.slane %v1417, 1
      %v1566 = vrot.slane %v1427, 1
      %v1567 = vsel %vm658, %v1565, %v1566
      %v1568 = vrot.slane %v1418, 1
      %v1569 = vrot.slane %v1428, 1
      %v1570 = vsel %vm658, %v1568, %v1569
      %v1571 = vrot.slane %v1419, 1
      %v1572 = vrot.slane %v1429, 1
      %v1573 = vsel %vm658, %v1571, %v1572
      %v1574 = vrot.slane %v1420, 1
      %v1575 = vrot.slane %v1430, 1
      %v1576 = vsel %vm658, %v1574, %v1575
      %v1577 = vrot.slane %v1421, 1
      %v1578 = vrot.slane %v1431, 1
      %v1579 = vsel %vm658, %v1577, %v1578
      %v1580 = vrot.slane %v1422, 1
      %v1581 = vrot.slane %v1432, 1
      %v1582 = vsel %vm658, %v1580, %v1581
      %v1583 = vrot.slane %v1423, 1
      %v1584 = vrot.slane %v1433, 1
      %v1585 = vsel %vm658, %v1583, %v1584
      %v1586 = vrot.slane %v1424, 1
      %v1587 = vrot.slane %v1434, 1
      %v1588 = vsel %vm658, %v1586, %v1587
      %1589 = vrot.lane.b32.xlu0 %v1567, 32
      %v1590 = vpop.permute.xlu0 %1589
      %1591 = vrot.lane.b32.xlu0 %v1570, 32
      %v1592 = vpop.permute.xlu0 %1591
      %1593 = vrot.lane.b32.xlu0 %v1573, 32
      %v1594 = vpop.permute.xlu0 %1593
      %1595 = vrot.lane.b32.xlu0 %v1576, 32
      %v1596 = vpop.permute.xlu0 %1595
      %1597 = vrot.lane.b32.xlu0 %v1579, 32
      %v1598 = vpop.permute.xlu0 %1597
      %1599 = vrot.lane.b32.xlu0 %v1582, 32
      %v1600 = vpop.permute.xlu0 %1599
      %1601 = vrot.lane.b32.xlu0 %v1585, 32
      %v1602 = vpop.permute.xlu0 %1601
      %1603 = vrot.lane.b32.xlu0 %v1588, 32
      %v1604 = vpop.permute.xlu0 %1603
      %1606 = vrot.lane.b32.xlu0 %v1418, 48
      %v1607 = vpop.permute.xlu0 %1606
      %1608 = vrot.lane.b32.xlu0 %v1419, 48
      %v1609 = vpop.permute.xlu0 %1608
      %1610 = vrot.lane.b32.xlu0 %v1420, 48
      %v1611 = vpop.permute.xlu0 %1610
      %1612 = vrot.lane.b32.xlu0 %v1421, 48
      %v1613 = vpop.permute.xlu0 %1612
      %1614 = vrot.lane.b32.xlu0 %v1422, 48
      %v1615 = vpop.permute.xlu0 %1614
      %1616 = vrot.lane.b32.xlu0 %v1423, 48
      %v1617 = vpop.permute.xlu0 %1616
      %1618 = vrot.lane.b32.xlu0 %v1424, 48
      %v1619 = vpop.permute.xlu0 %1618
      %1620 = vrot.lane.b32.xlu0 %v1425, 48
      %v1621 = vpop.permute.xlu0 %1620
      %v1623 = vshrl.u32 %v1425, 16
      %v1625 = vshll.u32 %v1425, 16
      %v1627 = vrot.slane %v1625, 1
      %v1628 = vor.u32 %v1623, %v1627
      %v1630 = vshll.u32 %v1435, 16
      %v1632 = vrot.slane %v1630, 1
      %v1633 = vsel %vm497, %v1628, %v1632
      %1634 = vrot.lane.b32.xlu0 %v1460, 64
      %v1635 = vpop.permute.xlu0 %1634
      %1636 = vrot.lane.b32.xlu0 %v1472, 64
      %v1637 = vpop.permute.xlu0 %1636
      %1638 = vrot.lane.b32.xlu0 %v1484, 64
      %v1639 = vpop.permute.xlu0 %1638
      %1640 = vrot.lane.b32.xlu0 %v1496, 64
      %v1641 = vpop.permute.xlu0 %1640
      %1642 = vrot.lane.b32.xlu0 %v1508, 64
      %v1643 = vpop.permute.xlu0 %1642
      %1644 = vrot.lane.b32.xlu0 %v1520, 64
      %v1645 = vpop.permute.xlu0 %1644
      %1646 = vrot.lane.b32.xlu0 %v1532, 64
      %v1647 = vpop.permute.xlu0 %1646
      %1648 = vrot.lane.b32.xlu0 %v1633, 64
      %v1649 = vpop.permute.xlu0 %1648
      %v1651 = vrot.slane %v1425, 1
      %v1652 = vrot.slane %v1435, 1
      %v1653 = vsel %vm658, %v1651, %v1652
      %1654 = vrot.lane.b32.xlu0 %v1570, 80
      %v1655 = vpop.permute.xlu0 %1654
      %1656 = vrot.lane.b32.xlu0 %v1573, 80
      %v1657 = vpop.permute.xlu0 %1656
      %1658 = vrot.lane.b32.xlu0 %v1576, 80
      %v1659 = vpop.permute.xlu0 %1658
      %1660 = vrot.lane.b32.xlu0 %v1579, 80
      %v1661 = vpop.permute.xlu0 %1660
      %1662 = vrot.lane.b32.xlu0 %v1582, 80
      %v1663 = vpop.permute.xlu0 %1662
      %1664 = vrot.lane.b32.xlu0 %v1585, 80
      %v1665 = vpop.permute.xlu0 %1664
      %1666 = vrot.lane.b32.xlu0 %v1588, 80
      %v1667 = vpop.permute.xlu0 %1666
      %1668 = vrot.lane.b32.xlu0 %v1653, 80
      %v1669 = vpop.permute.xlu0 %1668
      %1671 = vrot.lane.b32.xlu0 %v1419, 96
      %v1672 = vpop.permute.xlu0 %1671
      %1673 = vrot.lane.b32.xlu0 %v1420, 96
      %v1674 = vpop.permute.xlu0 %1673
      %1675 = vrot.lane.b32.xlu0 %v1421, 96
      %v1676 = vpop.permute.xlu0 %1675
      %1677 = vrot.lane.b32.xlu0 %v1422, 96
      %v1678 = vpop.permute.xlu0 %1677
      %1679 = vrot.lane.b32.xlu0 %v1423, 96
      %v1680 = vpop.permute.xlu0 %1679
      %1681 = vrot.lane.b32.xlu0 %v1424, 96
      %v1682 = vpop.permute.xlu0 %1681
      %1683 = vrot.lane.b32.xlu0 %v1425, 96
      %v1684 = vpop.permute.xlu0 %1683
      %1685 = vrot.lane.b32.xlu0 %v1426, 96
      %v1686 = vpop.permute.xlu0 %1685
      %v1688 = vshrl.u32 %v1426, 16
      %v1690 = vshll.u32 %v1426, 16
      %v1692 = vrot.slane %v1690, 1
      %v1693 = vor.u32 %v1688, %v1692
      %v1695 = vshll.u32 %v1436, 16
      %v1697 = vrot.slane %v1695, 1
      %v1698 = vsel %vm497, %v1693, %v1697
      %1699 = vrot.lane.b32.xlu0 %v1472, 112
      %v1700 = vpop.permute.xlu0 %1699
      %1701 = vrot.lane.b32.xlu0 %v1484, 112
      %v1702 = vpop.permute.xlu0 %1701
      %1703 = vrot.lane.b32.xlu0 %v1496, 112
      %v1704 = vpop.permute.xlu0 %1703
      %1705 = vrot.lane.b32.xlu0 %v1508, 112
      %v1706 = vpop.permute.xlu0 %1705
      %1707 = vrot.lane.b32.xlu0 %v1520, 112
      %v1708 = vpop.permute.xlu0 %1707
      %1709 = vrot.lane.b32.xlu0 %v1532, 112
      %v1710 = vpop.permute.xlu0 %1709
      %1711 = vrot.lane.b32.xlu0 %v1633, 112
      %v1712 = vpop.permute.xlu0 %1711
      %1713 = vrot.lane.b32.xlu0 %v1698, 112
      %v1714 = vpop.permute.xlu0 %1713
      %v1716 = vrot.slane %v1426, 1
      %v1717 = vrot.slane %v1436, 1
      %v1718 = vsel %vm658, %v1716, %v1717
      %v1720 = vsel %vm843, %v1417, %v1534
      %v1722 = vsel %vm843, %v1418, %v1536
      %v1724 = vsel %vm843, %v1419, %v1538
      %v1726 = vsel %vm843, %v1420, %v1540
      %v1728 = vsel %vm843, %v1421, %v1542
      %v1730 = vsel %vm843, %v1422, %v1544
      %v1732 = vsel %vm843, %v1423, %v1546
      %v1734 = vsel %vm843, %v1424, %v1548
      %v1736 = vsel %vm864, %v1720, %v1590
      %v1738 = vsel %vm864, %v1722, %v1592
      %v1740 = vsel %vm864, %v1724, %v1594
      %v1742 = vsel %vm864, %v1726, %v1596
      %v1744 = vsel %vm864, %v1728, %v1598
      %v1746 = vsel %vm864, %v1730, %v1600
      %v1748 = vsel %vm864, %v1732, %v1602
      %v1750 = vsel %vm864, %v1734, %v1604
      %v1752 = vsel %vm885, %v1736, %v1607
      %v1754 = vsel %vm885, %v1738, %v1609
      %v1756 = vsel %vm885, %v1740, %v1611
      %v1758 = vsel %vm885, %v1742, %v1613
      %v1760 = vsel %vm885, %v1744, %v1615
      %v1762 = vsel %vm885, %v1746, %v1617
      %v1764 = vsel %vm885, %v1748, %v1619
      %v1766 = vsel %vm885, %v1750, %v1621
      %v1768 = vsel %vm906, %v1752, %v1635
      %v1770 = vsel %vm906, %v1754, %v1637
      %v1772 = vsel %vm906, %v1756, %v1639
      %v1774 = vsel %vm906, %v1758, %v1641
      %v1776 = vsel %vm906, %v1760, %v1643
      %v1778 = vsel %vm906, %v1762, %v1645
      %v1780 = vsel %vm906, %v1764, %v1647
      %v1782 = vsel %vm906, %v1766, %v1649
      %v1784 = vsel %vm927, %v1768, %v1655
      %v1786 = vsel %vm927, %v1770, %v1657
      %v1788 = vsel %vm927, %v1772, %v1659
      %v1790 = vsel %vm927, %v1774, %v1661
      %v1792 = vsel %vm927, %v1776, %v1663
      %v1794 = vsel %vm927, %v1778, %v1665
      %v1796 = vsel %vm927, %v1780, %v1667
      %v1798 = vsel %vm927, %v1782, %v1669
      %v1800 = vsel %vm948, %v1784, %v1672
      %v1802 = vsel %vm948, %v1786, %v1674
      %v1804 = vsel %vm948, %v1788, %v1676
      %v1806 = vsel %vm948, %v1790, %v1678
      %v1808 = vsel %vm948, %v1792, %v1680
      %v1810 = vsel %vm948, %v1794, %v1682
      %v1812 = vsel %vm948, %v1796, %v1684
      %v1814 = vsel %vm948, %v1798, %v1686
      %v1816 = vsel %vm969, %v1800, %v1700
      %v1819 = vsel %vm969, %v1802, %v1702
      %v1822 = vsel %vm969, %v1804, %v1704
      %v1825 = vsel %vm969, %v1806, %v1706
      %v1828 = vsel %vm969, %v1808, %v1708
      %v1831 = vsel %vm969, %v1810, %v1710
      %v1834 = vsel %vm969, %v1812, %v1712
      %v1837 = vsel %vm969, %v1814, %v1714
      %v1839 = vld [vmem:[%s3] sm:$0xf]
      %v1840 = vld [vmem:[%s3 + $0x4] sm:$0xf]
      %v1841 = vld [vmem:[%s3 + $0x8] sm:$0xf]
      %v1842 = vld [vmem:[%s3 + $0xc] sm:$0xf]
      %v1843 = vld [vmem:[%s3 + $0x10] sm:$0xf]
      %v1844 = vld [vmem:[%s3 + $0x14] sm:$0xf]
      %v1845 = vld [vmem:[%s3 + $0x18] sm:$0xf]
      %v1846 = vld [vmem:[%s3 + $0x1c] sm:$0xf]
      %v1847 = vld [vmem:[%s3 + $0x20] sm:$0xf]
      %v1848 = vld [vmem:[%s3 + $0x24] sm:$0xf]
      %v1849 = vld [vmem:[%s3 + $0x28] sm:$0xf]
      %v1850 = vld [vmem:[%s3 + $0x2c] sm:$0xf]
      %v1851 = vld [vmem:[%s3 + $0x30] sm:$0xf]
      %v1852 = vld [vmem:[%s3 + $0x34] sm:$0xf]
      %v1853 = vld [vmem:[%s3 + $0x38] sm:$0xf]
      %v1854 = vld [vmem:[%s3 + $0x3c] sm:$0xf]
      %v1855 = vld [vmem:[%s3 + $0x40] sm:$0xf]
      %v1856 = vld [vmem:[%s3 + $0x44] sm:$0xf]
      %v1875 = vunpack.c.l.b16 %v1839
      %v1876 = vunpack.c.l.b16 %v1840
      %v1877 = vunpack.c.l.b16 %v1841
      %v1878 = vunpack.c.l.b16 %v1842
      %v1879 = vunpack.c.l.b16 %v1843
      %v1880 = vunpack.c.l.b16 %v1844
      %v1881 = vunpack.c.l.b16 %v1845
      %v1882 = vunpack.c.l.b16 %v1846
      %v1883 = vunpack.c.l.b16 %v1847
      %v1884 = vunpack.c.l.b16 %v1848
      %v1885 = vunpack.c.l.b16 %v1849
      %v1886 = vunpack.c.l.b16 %v1850
      %v1887 = vunpack.c.l.b16 %v1851
      %v1888 = vunpack.c.l.b16 %v1852
      %v1889 = vunpack.c.l.b16 %v1853
      %v1890 = vunpack.c.l.b16 %v1854
      %v1891 = vunpack.c.l.b16 %v1855
      %v1892 = vunpack.c.l.b16 %v1856
      %v1893 = vpack.c.b16 %v1876, %v1875
      %v1894 = vpack.c.b16 %v1878, %v1877
      %v1895 = vpack.c.b16 %v1880, %v1879
      %v1896 = vpack.c.b16 %v1882, %v1881
      %v1897 = vpack.c.b16 %v1884, %v1883
      %v1898 = vpack.c.b16 %v1886, %v1885
      %v1899 = vpack.c.b16 %v1888, %v1887
      %v1900 = vpack.c.b16 %v1890, %v1889
      %v1901 = vpack.c.b16 %v1892, %v1891
      %v1912 = vsel %vm843, %v1573, 0
      %v1915 = vsel %vm843, %v1576, 0
      %v1918 = vsel %vm843, %v1579, 0
      %v1921 = vsel %vm843, %v1582, 0
      %v1924 = vsel %vm843, %v1585, 0
      %v1927 = vsel %vm843, %v1588, 0
      %v1930 = vsel %vm843, %v1653, 0
      %v1933 = vsel %vm843, %v1718, 0
      %1935 = vmatprep.subr.bf16.mxu0 0
      %1936 = vmatpush1.bf16.msra.mxu0 %v1900
      %1937 = vmatprep.subr.bf16.mxu0 0
      %1938 = vmatpush1.bf16.msra.mxu0 %v1899
      %1939 = vmatprep.subr.bf16.mxu0 0
      %1940 = vmatpush1.bf16.msra.mxu0 %v1898
      %1941 = vmatprep.subr.bf16.mxu0 0
      %1942 = vmatpush1.bf16.msra.mxu0 %v1897
      %1943 = vmatprep.subr.bf16.mxu0 0
      %1944 = vmatpush1.bf16.msra.mxu0 %v1896
      %1945 = vmatprep.subr.bf16.mxu0 0
      %1946 = vmatpush1.bf16.msra.mxu0 %v1895
      %1947 = vmatprep.subr.bf16.mxu0 0
      %1948 = vmatpush1.bf16.msra.mxu0 %v1894
      %1949 = vmatprep.subr.bf16.mxu0 0
      %1950 = vmatpush1.bf16.msra.mxu0 %v1893
      %1951 = vmatprep.subr.bf16.mxu0 0
      %1952 = vmatpush2.bf16.msra.mxu0 0
      %1953 = vmatprep.subr.bf16.mxu0 0
      %1954 = vmatpush2.bf16.msra.mxu0 0
      %1955 = vmatprep.subr.bf16.mxu0 0
      %1956 = vmatpush2.bf16.msra.mxu0 0
      %1957 = vmatprep.subr.bf16.mxu0 0
      %1958 = vmatpush2.bf16.msra.mxu0 0
      %1959 = vmatprep.subr.bf16.mxu0 0
      %1960 = vmatpush2.bf16.msra.mxu0 0
      %1961 = vmatprep.subr.bf16.mxu0 0
      %1962 = vmatpush2.bf16.msra.mxu0 0
      %1963 = vmatprep.subr.bf16.mxu0 0
      %1964 = vmatpush2.bf16.msra.mxu0 0
      %1965 = vmatprep.subr.bf16.mxu0 0
      %1966 = vmatpush2.bf16.msra.mxu0 %v1901
      %1967 = vmatprep.mubr.bf16.mxu0 %v1912
      %1968 = vmatmul.mubr.bf16.gmra.mxu0 %v1816
      %v1969 = vpop.f32.mrf.mxu0
      %v1970 = vadd.f32 0.0, %v1969
      %v1971 = vpop.f32.mrf.mxu0
      %v1972 = vpop.f32.mrf.mxu0
      %v1973 = vadd.f32 0.0, %v1972
      %v1974 = vpop.f32.mrf.mxu0
      %1975 = vmatprep.mubr.bf16.mxu0 %v1915
      %1976 = vmatmul.mubr.bf16.gmra.mxu0 %v1819
      %v1977 = vpop.f32.mrf.mxu0
      %v1978 = vadd.f32 0.0, %v1977
      %v1979 = vpop.f32.mrf.mxu0
      %v1980 = vpop.f32.mrf.mxu0
      %v1981 = vadd.f32 0.0, %v1980
      %v1982 = vpop.f32.mrf.mxu0
      %1983 = vmatprep.mubr.bf16.mxu0 %v1918
      %1984 = vmatmul.mubr.bf16.gmra.mxu0 %v1822
      %v1985 = vpop.f32.mrf.mxu0
      %v1986 = vadd.f32 0.0, %v1985
      %v1987 = vpop.f32.mrf.mxu0
      %v1988 = vpop.f32.mrf.mxu0
      %v1989 = vadd.f32 0.0, %v1988
      %v1990 = vpop.f32.mrf.mxu0
      %1991 = vmatprep.mubr.bf16.mxu0 %v1921
      %1992 = vmatmul.mubr.bf16.gmra.mxu0 %v1825
      %v1993 = vpop.f32.mrf.mxu0
      %v1994 = vadd.f32 0.0, %v1993
      %v1995 = vpop.f32.mrf.mxu0
      %v1996 = vpop.f32.mrf.mxu0
      %v1997 = vadd.f32 0.0, %v1996
      %v1998 = vpop.f32.mrf.mxu0
      %1999 = vmatprep.mubr.bf16.mxu0 %v1924
      %2000 = vmatmul.mubr.bf16.gmra.mxu0 %v1828
      %v2001 = vpop.f32.mrf.mxu0
      %v2002 = vadd.f32 0.0, %v2001
      %v2003 = vpop.f32.mrf.mxu0
      %v2004 = vpop.f32.mrf.mxu0
      %v2005 = vadd.f32 0.0, %v2004
      %v2006 = vpop.f32.mrf.mxu0
      %2007 = vmatprep.mubr.bf16.mxu0 %v1927
      %2008 = vmatmul.mubr.bf16.gmra.mxu0 %v1831
      %v2009 = vpop.f32.mrf.mxu0
      %v2010 = vadd.f32 0.0, %v2009
      %v2011 = vpop.f32.mrf.mxu0
      %v2012 = vpop.f32.mrf.mxu0
      %v2013 = vadd.f32 0.0, %v2012
      %v2014 = vpop.f32.mrf.mxu0
      %2015 = vmatprep.mubr.bf16.mxu0 %v1930
      %2016 = vmatmul.mubr.bf16.gmra.mxu0 %v1834
      %v2017 = vpop.f32.mrf.mxu0
      %v2018 = vadd.f32 0.0, %v2017
      %v2019 = vpop.f32.mrf.mxu0
      %v2020 = vpop.f32.mrf.mxu0
      %v2021 = vadd.f32 0.0, %v2020
      %v2022 = vpop.f32.mrf.mxu0
      %2023 = vmatprep.mubr.bf16.mxu0 %v1933
      %2024 = vmatmul.mubr.bf16.gmra.mxu0 %v1837
      %v2025 = vpop.f32.mrf.mxu0
      %v2026 = vadd.f32 0.0, %v2025
      %v2027 = vpop.f32.mrf.mxu0
      %v2028 = vpop.f32.mrf.mxu0
      %v2029 = vadd.f32 0.0, %v2028
      %v2030 = vpop.f32.mrf.mxu0
      %2031 = vdwg.mxu0
      %v2032 = vunpack.c.l.bf16 %v277
      %v2033 = vunpack.c.l.bf16 %v278
      %v2034 = vunpack.c.l.bf16 %v279
      %v2035 = vunpack.c.l.bf16 %v280
      %v2036 = vunpack.c.l.bf16 %v281
      %v2037 = vunpack.c.l.bf16 %v282
      %v2038 = vunpack.c.l.bf16 %v283
      %v2039 = vunpack.c.l.bf16 %v284
      %v2040 = vunpack.c.l.bf16 %v285
      %v2041 = vunpack.c.l.bf16 %v286
      %v2042 = vunpack.c.l.bf16 %v287
      %v2043 = vunpack.c.l.bf16 %v288
      %v2044 = vunpack.c.l.bf16 %v289
      %v2045 = vunpack.c.l.bf16 %v290
      %v2046 = vunpack.c.l.bf16 %v291
      %v2047 = vunpack.c.l.bf16 %v292
      %v2048 = vadd.f32 %v1970, %v2032
      %v2049 = vadd.f32 %v1973, %v2033
      %v2050 = vadd.f32 %v1978, %v2034
      %v2051 = vadd.f32 %v1981, %v2035
      %v2052 = vadd.f32 %v1986, %v2036
      %v2053 = vadd.f32 %v1989, %v2037
      %v2054 = vadd.f32 %v1994, %v2038
      %v2055 = vadd.f32 %v1997, %v2039
      %v2056 = vadd.f32 %v2002, %v2040
      %v2057 = vadd.f32 %v2005, %v2041
      %v2058 = vadd.f32 %v2010, %v2042
      %v2059 = vadd.f32 %v2013, %v2043
      %v2060 = vadd.f32 %v2018, %v2044
      %v2061 = vadd.f32 %v2021, %v2045
      %v2062 = vadd.f32 %v2026, %v2046
      %v2063 = vadd.f32 %v2029, %v2047
      %v2064 = vpack.c.bf16 %v2049, %v2048
      %v2065 = vpack.c.bf16 %v2051, %v2050
      %v2066 = vpack.c.bf16 %v2053, %v2052
      %v2067 = vpack.c.bf16 %v2055, %v2054
      %v2068 = vpack.c.bf16 %v2057, %v2056
      %v2069 = vpack.c.bf16 %v2059, %v2058
      %v2070 = vpack.c.bf16 %v2061, %v2060
      %v2071 = vpack.c.bf16 %v2063, %v2062
      %v2080 = vunpack.c.l.b16 %v2064
      %v2081 = vunpack.c.h.b16 %v2064
      %v2082 = vunpack.c.l.b16 %v2065
      %v2083 = vunpack.c.h.b16 %v2065
      %v2084 = vunpack.c.l.b16 %v2066
      %v2085 = vunpack.c.h.b16 %v2066
      %v2086 = vunpack.c.l.b16 %v2067
      %v2087 = vunpack.c.h.b16 %v2067
      %v2088 = vunpack.c.l.b16 %v2068
      %v2089 = vunpack.c.h.b16 %v2068
      %v2090 = vunpack.c.l.b16 %v2069
      %v2091 = vunpack.c.h.b16 %v2069
      %v2092 = vunpack.c.l.b16 %v2070
      %v2093 = vunpack.c.h.b16 %v2070
      %v2094 = vunpack.c.l.b16 %v2071
      %v2095 = vunpack.c.h.b16 %v2071
      %v2096 = vpack.c.b16 %v2080, %v2080
      %v2097 = vpack.c.b16 %v2081, %v2081
      %v2098 = vpack.c.b16 %v2082, %v2082
      %v2099 = vpack.c.b16 %v2083, %v2083
      %v2100 = vpack.c.b16 %v2084, %v2084
      %v2101 = vpack.c.b16 %v2085, %v2085
      %v2102 = vpack.c.b16 %v2086, %v2086
      %v2103 = vpack.c.b16 %v2087, %v2087
      %v2104 = vpack.c.b16 %v2088, %v2088
      %v2105 = vpack.c.b16 %v2089, %v2089
      %v2106 = vpack.c.b16 %v2090, %v2090
      %v2107 = vpack.c.b16 %v2091, %v2091
      %v2108 = vpack.c.b16 %v2092, %v2092
      %v2109 = vpack.c.b16 %v2093, %v2093
      %v2110 = vpack.c.b16 %v2094, %v2094
      %v2111 = vpack.c.b16 %v2095, %v2095
      %vm2128 = vcmask 125952
      %2129 = vst.msk [vmem:[%s274] sm:$0xf] %vm2128, %v2096
      %2130 = vst.msk [vmem:[%s274 + $0x4] sm:$0xf] %vm2128, %v2097
      %2131 = vst.msk [vmem:[%s274 + $0x8] sm:$0xf] %vm2128, %v2098
      %2132 = vst.msk [vmem:[%s274 + $0xc] sm:$0xf] %vm2128, %v2099
      %2133 = vst.msk [vmem:[%s274 + $0x10] sm:$0xf] %vm2128, %v2100
      %2134 = vst.msk [vmem:[%s274 + $0x14] sm:$0xf] %vm2128, %v2101
      %2135 = vst.msk [vmem:[%s274 + $0x18] sm:$0xf] %vm2128, %v2102
      %2136 = vst.msk [vmem:[%s274 + $0x1c] sm:$0xf] %vm2128, %v2103
      %2137 = vst.msk [vmem:[%s274 + $0x20] sm:$0xf] %vm2128, %v2104
      %2138 = vst.msk [vmem:[%s274 + $0x24] sm:$0xf] %vm2128, %v2105
      %2139 = vst.msk [vmem:[%s274 + $0x28] sm:$0xf] %vm2128, %v2106
      %2140 = vst.msk [vmem:[%s274 + $0x2c] sm:$0xf] %vm2128, %v2107
      %2141 = vst.msk [vmem:[%s274 + $0x30] sm:$0xf] %vm2128, %v2108
      %2142 = vst.msk [vmem:[%s274 + $0x34] sm:$0xf] %vm2128, %v2109
      %2143 = vst.msk [vmem:[%s274 + $0x38] sm:$0xf] %vm2128, %v2110
      %2144 = vst.msk [vmem:[%s274 + $0x3c] sm:$0xf] %vm2128, %v2111
      %s2145 = smul.u32 8, %s20
      %p2146 = scmp.lt.s32.totalorder %s19, 1
      %s2147 = scalar_select %p2146, %s19, 1
      %p2148 = scmp.lt.s32.totalorder %s2145, 15
      %s2149 = scalar_select %p2148, %s2145, 15
      %s2150 = smul.addr %s2149, 2
      %s2151 = smul.addr %s2147, 32
      %s2152 = sadd.s32 %s2150, %s2151
      %s2153 = smul.addr %s2152, 4
      %s2154 = scalar_lea.vmem %s4, %s2153
      // Predicated region
      $region37: #{enhancenet_forward.7} parent=35 // pred_check
        %p2155 = pneg %p145
      $region38: #{enhancenet_forward.7} parent=35 // pred_check_branch
        %2157 = sbr.rel (%p2155) target = $region40
      $region39: #{enhancenet_forward.7} parent=35 // pred_region
        %s2158 = smul.u32 8, %s20
      $region40: #{enhancenet_forward.7} parent=35 // pred_fallthru
        _
    $region36: #{enhancenet_forward.7} parent=5 // pred_fallthru
      _
    %p2159 = scmp.le.s32.totalorder 2, %s10
    // Predicated region
    $region41: #{enhancenet_forward.7} parent=5 // pred_check
      %p2160 = pneg %p2159
    $region42: #{enhancenet_forward.7} parent=5 // pred_check_branch
      %2162 = sbr.rel (%p2160) target = $region44
    $region43: #{enhancenet_forward.7} parent=5 // pred_region
      %s2163 = ssub.s32 %s10, 2
      // Predicated region
      $region45: #{enhancenet_forward.7} parent=43 // pred_check
        %p2164 = pneg %p151
      $region46: #{enhancenet_forward.7} parent=43 // pred_check_branch
        %2166 = sbr.rel (%p2164) target = $region48
      $region47: #{enhancenet_forward.7} parent=43 // pred_region
        %s2167 = smul.u32 8, %s22
        %p2168 = scmp.lt.s32.totalorder %s21, 1
        %s2169 = scalar_select %p2168, %s21, 1
        %p2170 = scmp.lt.s32.totalorder %s2167, 15
        %s2171 = scalar_select %p2170, %s2167, 15
        %s2172 = smul.addr %s2171, 2
        %s2173 = smul.addr %s2169, 32
        %s2174 = sadd.s32 %s2172, %s2173
        %s2175 = smul.addr %s2174, 4
        %s2176 = scalar_lea.vmem %s4, %s2175
      $region48: #{enhancenet_forward.7} parent=43 // pred_fallthru
        _
    $region44: #{enhancenet_forward.7} parent=5 // pred_fallthru
      _
  $region6: #{enhancenet_forward.7} parent=0 // loop_footer
    %s14 = sadd.s32 1, %s10
  $region7: #{enhancenet_forward.7} parent=0 // loop_footer_branch
    %9 = sbr.rel target = $region3
  $region8: #{enhancenet_forward.7} parent=0 // loop_exit
    _

// kernel: enhancenet_forward.11
$region0: #{enhancenet_forward.11}
  #allocation0 [shape = 'u32[]', space=smem, size = 0x4, offset = 0x4, fixed_abs, tag = 'smem constant byte address 0x4 - core index']
  #allocation1 [shape = 'u32[144,128]{1,0:T(1,128)}', space=vmem, size = 0x12000, scoped, tag = 'internal scratch']
  %s0 = inlined_call_operand.vmem [shape: bf16[2,32,32,16], index: 0, kind: input, shape index: {}]
  %s1 = inlined_call_operand.vmem [shape: bf16[2,4,2,32,16], index: 1, kind: input, shape index: {}]
  %s2 = inlined_call_operand.vmem [shape: bf16[144,3], index: 2, kind: input, shape index: {}]
  %s3 = inlined_call_operand.vmem [shape: f32[2,32,32,3], index: 3, kind: output, shape index: {}]
  %s4 = sld [smem:[#allocation0]]
  $region45: #{enhancenet_forward.11} parent=0
    _
  %s6 = ssub.s32 1, %s4
  %s7 = scalar_select 0, %s6, %s4
  loop: start=0, step=1, limit=10
  $region2: #{enhancenet_forward.11} parent=0 // loop_pre_header
    _
  $region3: #{enhancenet_forward.11} parent=0 // loop_header
    %s9 = sphi 0, %s13
    %p10 = scmp.ge.s32.totalorder %s9, 10
    %s16 = sphi 0, %s28
    %s17 = sphi 0, %s24
    %s18 = sphi 0, %s16
    %s19 = sphi 0, %s17
    %s20 = sphi 0, %s18
    %s21 = sphi 0, %s19
    %s33 = sphi 0, %s35
    %s36 = sphi 0, %s33
    %s37 = sphi 0, %s36
    %s53 = sphi 0, %s37
    %s61 = sphi 0, %s63
    %s64 = sphi 0, %s61
    %s65 = sphi 0, %s64
    %s81 = sphi 0, %s65
    %s85 = sphi 0, %s85
    %s87 = sphi 0, %s85
    %s88 = sphi 0, %s87
    %s102 = sphi 0, %s88
    %s110 = sphi 0, %s112
    %s113 = sphi 0, %s110
    %s114 = sphi 0, %s113
    %s130 = sphi 0, %s114
  $region4: #{enhancenet_forward.11} parent=0 // loop_header_branch
    %12 = sbr.rel (%p10) target = $region8
  $region5: #{enhancenet_forward.11} parent=0 // loop_body
    %s14 = ssub.s32 %s9, 1
    %s15 = ssub.s32 %s9, 2
    %s22 = sadd.s32 1, %s17
    %p23 = scmp.ge.s32.totalorder %s22, 4
    %s24 = scalar_select %p23, 0, %s22
    %s25 = sadd.s32 1, %s16
    %s26 = scalar_select %p23, %s25, %s16
    %p27 = scmp.ge.s32.totalorder %s26, 2
    %s28 = scalar_select %p27, 0, %s26
    %s29 = ssub.s32 %s16, %s28
    %s30 = ssub.s32 %s17, %s24
    %s31 = sor.u32 %s29, %s30
    %p32 = scmp.eq.s32.totalorder %s31, 0
    %s34 = sadd.s32 %s33, 1
    %s35 = scalar_select %p32, %s33, %s34
    %p38 = pneg %p32
    %p39 = scmp.eq.s32.totalorder %s9, 7
    %p40 = por %p38, %p39
    %p41 = scmp.ne.s32.totalorder %s33, %s36
    %p42 = scmp.eq.s32.totalorder %s9, 0
    %p43 = por %p41, %p42
    %p44 = scmp.ne.s32.totalorder %s33, %s36
    %p45 = scmp.eq.s32.totalorder %s14, 7
    %p46 = por %p44, %p45
    %p47 = scmp.ne.s32.totalorder %s36, %s37
    %p48 = scmp.eq.s32.totalorder %s14, 0
    %p49 = por %p47, %p48
    %p50 = scmp.ne.s32.totalorder %s36, %s37
    %p51 = scmp.eq.s32.totalorder %s15, 7
    %p52 = por %p50, %p51
    %p54 = scmp.ne.s32.totalorder %s37, %s53
    %p55 = scmp.eq.s32.totalorder %s15, 0
    %p56 = por %p54, %p55
    %s57 = ssub.s32 %s16, %s28
    %s58 = ssub.s32 %s17, %s24
    %s59 = sor.u32 %s57, %s58
    %p60 = scmp.eq.s32.totalorder %s59, 0
    %s62 = sadd.s32 %s61, 1
    %s63 = scalar_select %p60, %s61, %s62
    %p66 = pneg %p60
    %p67 = scmp.eq.s32.totalorder %s9, 7
    %p68 = por %p66, %p67
    %p69 = scmp.ne.s32.totalorder %s61, %s64
    %p70 = scmp.eq.s32.totalorder %s9, 0
    %p71 = por %p69, %p70
    %p72 = scmp.ne.s32.totalorder %s61, %s64
    %p73 = scmp.eq.s32.totalorder %s14, 7
    %p74 = por %p72, %p73
    %p75 = scmp.ne.s32.totalorder %s64, %s65
    %p76 = scmp.eq.s32.totalorder %s14, 0
    %p77 = por %p75, %p76
    %p78 = scmp.ne.s32.totalorder %s64, %s65
    %p79 = scmp.eq.s32.totalorder %s15, 7
    %p80 = por %p78, %p79
    %p82 = scmp.ne.s32.totalorder %s65, %s81
    %p83 = scmp.eq.s32.totalorder %s15, 0
    %p84 = por %p82, %p83
    %s86 = sadd.s32 %s85, 1
    %p89 = scmp.eq.s32.totalorder %s9, 7
    %p90 = scmp.ne.s32.totalorder %s85, %s87
    %p91 = scmp.eq.s32.totalorder %s9, 0
    %p92 = por %p90, %p91
    %p93 = scmp.ne.s32.totalorder %s85, %s87
    %p94 = scmp.eq.s32.totalorder %s14, 7
    %p95 = por %p93, %p94
    %p96 = scmp.ne.s32.totalorder %s87, %s88
    %p97 = scmp.eq.s32.totalorder %s14, 0
    %p98 = por %p96, %p97
    %p99 = scmp.ne.s32.totalorder %s87, %s88
    %p100 = scmp.eq.s32.totalorder %s15, 7
    %p101 = por %p99, %p100
    %p103 = scmp.ne.s32.totalorder %s88, %s102
    %p104 = scmp.eq.s32.totalorder %s15, 0
    %p105 = por %p103, %p104
    %s106 = ssub.s32 %s16, %s28
    %s107 = ssub.s32 %s17, %s24
    %s108 = sor.u32 %s106, %s107
    %p109 = scmp.eq.s32.totalorder %s108, 0
    %s111 = sadd.s32 %s110, 1
    %s112 = scalar_select %p109, %s110, %s111
    %p115 = pneg %p109
    %p116 = scmp.eq.s32.totalorder %s9, 7
    %p117 = por %p115, %p116
    %p118 = scmp.ne.s32.totalorder %s110, %s113
    %p119 = scmp.eq.s32.totalorder %s9, 0
    %p120 = por %p118, %p119
    %p121 = scmp.ne.s32.totalorder %s110, %s113
    %p122 = scmp.eq.s32.totalorder %s14, 7
    %p123 = por %p121, %p122
    %p124 = scmp.ne.s32.totalorder %s113, %s114
    %p125 = scmp.eq.s32.totalorder %s14, 0
    %p126 = por %p124, %p125
    %p127 = scmp.ne.s32.totalorder %s113, %s114
    %p128 = scmp.eq.s32.totalorder %s15, 7
    %p129 = por %p127, %p128
    %p131 = scmp.ne.s32.totalorder %s114, %s130
    %p132 = scmp.eq.s32.totalorder %s15, 0
    %p133 = por %p131, %p132
    %p134 = scmp.le.s32.totalorder 1, %s9
    %p135 = scmp.lt.s32.totalorder %s9, 9
    %p136 = pnand %p134, %p135
    %p137 = pneg %p136
    // Predicated region
    $region9: #{enhancenet_forward.11} parent=5 // pred_check
      _
    $region10: #{enhancenet_forward.11} parent=5 // pred_check_branch
      %139 = sbr.rel (%p136) target = $region12
    $region11: #{enhancenet_forward.11} parent=5 // pred_region
      %s140 = ssub.s32 %s9, 1
      // Predicated region
      $region13: #{enhancenet_forward.11} parent=11 // pred_check
        %p141 = pneg %p98
      $region14: #{enhancenet_forward.11} parent=11 // pred_check_branch
        %143 = sbr.rel (%p141) target = $region16
      $region15: #{enhancenet_forward.11} parent=11 // pred_region
        _
      $region16: #{enhancenet_forward.11} parent=11 // pred_fallthru
        _
    $region12: #{enhancenet_forward.11} parent=5 // pred_fallthru
      _
    %p144 = scmp.lt.s32.totalorder %s9, 8
    // Predicated region
    $region17: #{enhancenet_forward.11} parent=5 // pred_check
      %p145 = pneg %p144
    $region18: #{enhancenet_forward.11} parent=5 // pred_check_branch
      %147 = sbr.rel (%p145) target = $region20
    $region19: #{enhancenet_forward.11} parent=5 // pred_region
      // Predicated region
      $region21: #{enhancenet_forward.11} parent=19 // pred_check
        %p148 = pneg %p43
      $region22: #{enhancenet_forward.11} parent=19 // pred_check_branch
        %150 = sbr.rel (%p148) target = $region24
      $region23: #{enhancenet_forward.11} parent=19 // pred_region
        %s151 = smul.u32 8, %s17
        %p152 = scmp.lt.s32.totalorder %s16, 1
        %s153 = scalar_select %p152, %s16, 1
        %p154 = scmp.lt.s32.totalorder %s151, 31
        %s155 = scalar_select %p154, %s151, 31
        %s156 = smul.addr %s155, 4
        %s157 = smul.addr %s153, 128
        %s158 = sadd.s32 %s156, %s157
        %s159 = smul.addr %s158, 4
        %s160 = scalar_lea.vmem %s0, %s159
        %s161 = smul.u32 8, %s17
      $region24: #{enhancenet_forward.11} parent=19 // pred_fallthru
        _
      // Predicated region
      $region25: #{enhancenet_forward.11} parent=19 // pred_check
        %p162 = pneg %p71
      $region26: #{enhancenet_forward.11} parent=19 // pred_check_branch
        %164 = sbr.rel (%p162) target = $region28
      $region27: #{enhancenet_forward.11} parent=19 // pred_region
        %p165 = scmp.lt.s32.totalorder %s16, 1
        %s166 = scalar_select %p165, %s16, 1
        %p167 = scmp.lt.s32.totalorder %s17, 3
        %s168 = scalar_select %p167, %s17, 3
        %s169 = smul.addr %s168, 8
        %s170 = smul.addr %s166, 32
        %s171 = sadd.s32 %s169, %s170
        %s172 = smul.addr %s171, 4
        %s173 = scalar_lea.vmem %s1, %s172
      $region28: #{enhancenet_forward.11} parent=19 // pred_fallthru
        _
    $region20: #{enhancenet_forward.11} parent=5 // pred_fallthru
      _
    %p174 = scmp.le.s32.totalorder 1, %s9
    %p175 = scmp.lt.s32.totalorder %s9, 9
    %p176 = pnand %p174, %p175
    %p177 = pneg %p176
    // Predicated region
    $region29: #{enhancenet_forward.11} parent=5 // pred_check
      _
    $region30: #{enhancenet_forward.11} parent=5 // pred_check_branch
      %179 = sbr.rel (%p176) target = $region32
    $region31: #{enhancenet_forward.11} parent=5 // pred_region
      %s180 = ssub.s32 %s9, 1
      %s181 = smul.u32 8, %s19
      %p182 = scmp.lt.s32.totalorder %s18, 1
      %s183 = scalar_select %p182, %s18, 1
      %p184 = scmp.lt.s32.totalorder %s181, 31
      %s185 = scalar_select %p184, %s181, 31
      %s186 = smul.addr %s185, 4
      %s187 = smul.addr %s183, 128
      %s188 = sadd.s32 %s186, %s187
      %s189 = smul.addr %s188, 4
      %s190 = scalar_lea.vmem %s0, %s189
      %p191 = pneg %p49
      %p192 = pneg %p46
      %p193 = scmp.lt.s32.totalorder %s18, 1
      %s194 = scalar_select %p193, %s18, 1
      %p195 = scmp.lt.s32.totalorder %s19, 3
      %s196 = scalar_select %p195, %s19, 3
      %s197 = smul.addr %s196, 8
      %s198 = smul.addr %s194, 32
      %s199 = sadd.s32 %s197, %s198
      %s200 = smul.addr %s199, 4
      %s201 = scalar_lea.vmem %s1, %s200
      %p202 = pneg %p77
      %p203 = pneg %p74
      %p204 = pneg %p98
      %p205 = pneg %p95
      %p206 = pneg %p126
      %p207 = pneg %p123
      %s208 = smul.u32 8, %s19
      %p209 = scmp.lt.s32.totalorder %s18, 1
      %s210 = scalar_select %p209, %s18, 1
      %p211 = scmp.lt.s32.totalorder %s208, 31
      %s212 = scalar_select %p211, %s208, 31
      %s213 = smul.addr %s212, 4
      %s214 = smul.addr %s210, 128
      %s215 = sadd.s32 %s213, %s214
      %s216 = smul.addr %s215, 8
      %s217 = scalar_lea.vmem %s3, %s216
      %s218 = smul.u32 8, %s19
      %p219 = scmp.lt.s32.totalorder %s18, 1
      %s220 = scalar_select %p219, %s18, 1
      %p221 = scmp.lt.s32.totalorder %s218, 31
      %s222 = scalar_select %p221, %s218, 31
      %s223 = smul.addr %s222, 4
      %s224 = smul.addr %s220, 128
      %s225 = sadd.s32 %s223, %s224
      %s226 = smul.addr %s225, 4
      %s227 = scalar_lea.vmem %s0, %s226
      %s228 = smul.u32 8, %s19
      %p229 = scmp.lt.s32.totalorder %s18, 1
      %s230 = scalar_select %p229, %s18, 1
      %p231 = scmp.lt.s32.totalorder %s19, 3
      %s232 = scalar_select %p231, %s19, 3
      %s233 = smul.addr %s232, 8
      %s234 = smul.addr %s230, 32
      %s235 = sadd.s32 %s233, %s234
      %s236 = smul.addr %s235, 4
      %s237 = scalar_lea.vmem %s1, %s236
      %s238 = smul.u32 8, %s19
      %p239 = scmp.lt.s32.totalorder %s18, 1
      %s240 = scalar_select %p239, %s18, 1
      %p241 = scmp.lt.s32.totalorder %s238, 31
      %s242 = scalar_select %p241, %s238, 31
      %s243 = smul.addr %s242, 4
      %s244 = smul.addr %s240, 128
      %s245 = sadd.s32 %s243, %s244
      %s246 = smul.addr %s245, 8
      %s247 = scalar_lea.vmem %s3, %s246
      %s248 = smul.u32 8, %s19
      %v250 = vld [vmem:[%s227] sm:$0xf]
      %v251 = vld [vmem:[%s227 + $0x4] sm:$0xf]
      %v252 = vld [vmem:[%s227 + $0x8] sm:$0xf]
      %v253 = vld [vmem:[%s227 + $0xc] sm:$0xf]
      %v254 = vld [vmem:[%s227 + $0x10] sm:$0xf]
      %v255 = vld [vmem:[%s227 + $0x14] sm:$0xf]
      %v256 = vld [vmem:[%s227 + $0x18] sm:$0xf]
      %v257 = vld [vmem:[%s227 + $0x1c] sm:$0xf]
      %v258 = vld [vmem:[%s227 + $0x20] sm:$0xf]
      %v259 = vld [vmem:[%s227 + $0x24] sm:$0xf]
      %v260 = vld [vmem:[%s227 + $0x28] sm:$0xf]
      %v261 = vld [vmem:[%s227 + $0x2c] sm:$0xf]
      %v262 = vld [vmem:[%s227 + $0x30] sm:$0xf]
      %v263 = vld [vmem:[%s227 + $0x34] sm:$0xf]
      %v264 = vld [vmem:[%s227 + $0x38] sm:$0xf]
      %v265 = vld [vmem:[%s227 + $0x3c] sm:$0xf]
      %v266 = vld [vmem:[%s227 + $0x40] sm:$0xf]
      %v267 = vld [vmem:[%s227 + $0x44] sm:$0xf]
      %v268 = vld [vmem:[%s227 + $0x48] sm:$0xf]
      %v269 = vld [vmem:[%s227 + $0x4c] sm:$0xf]
      %v270 = vld [vmem:[%s227 + $0x50] sm:$0xf]
      %v271 = vld [vmem:[%s227 + $0x54] sm:$0xf]
      %v272 = vld [vmem:[%s227 + $0x58] sm:$0xf]
      %v273 = vld [vmem:[%s227 + $0x5c] sm:$0xf]
      %v274 = vld [vmem:[%s227 + $0x60] sm:$0xf]
      %v275 = vld [vmem:[%s227 + $0x64] sm:$0xf]
      %v276 = vld [vmem:[%s227 + $0x68] sm:$0xf]
      %v277 = vld [vmem:[%s227 + $0x6c] sm:$0xf]
      %v278 = vld [vmem:[%s227 + $0x70] sm:$0xf]
      %v279 = vld [vmem:[%s227 + $0x74] sm:$0xf]
      %v280 = vld [vmem:[%s227 + $0x78] sm:$0xf]
      %v281 = vld [vmem:[%s227 + $0x7c] sm:$0xf]
      %v282 = vld [vmem:[%s237] sm:$0xf]
      %v283 = vld [vmem:[%s237 + $0x4] sm:$0xf]
      %v284 = vld [vmem:[%s237 + $0x8] sm:$0xf]
      %v285 = vld [vmem:[%s237 + $0xc] sm:$0xf]
      %s286 = scalar_lea.vmem %s237, 16
      %v287 = vld [vmem:[%s286] sm:$0xf]
      %v288 = vld [vmem:[%s286 + $0x4] sm:$0xf]
      %v289 = vld [vmem:[%s286 + $0x8] sm:$0xf]
      %v290 = vld [vmem:[%s286 + $0xc] sm:$0xf]
      %v331 = vunpack.c.l.b16 %v282
      %v332 = vunpack.c.l.b16 %v283
      %v333 = vunpack.c.l.b16 %v284
      %v334 = vunpack.c.l.b16 %v285
      %v335 = vunpack.c.l.b16 %v250
      %v336 = vunpack.c.l.b16 %v251
      %v337 = vunpack.c.l.b16 %v252
      %v338 = vunpack.c.l.b16 %v253
      %v339 = vunpack.c.l.b16 %v254
      %v340 = vunpack.c.l.b16 %v255
      %v341 = vunpack.c.l.b16 %v256
      %v342 = vunpack.c.l.b16 %v257
      %v343 = vunpack.c.l.b16 %v258
      %v344 = vunpack.c.l.b16 %v259
      %v345 = vunpack.c.l.b16 %v260
      %v346 = vunpack.c.l.b16 %v261
      %v347 = vunpack.c.l.b16 %v262
      %v348 = vunpack.c.l.b16 %v263
      %v349 = vunpack.c.l.b16 %v264
      %v350 = vunpack.c.l.b16 %v265
      %v351 = vunpack.c.l.b16 %v266
      %v352 = vunpack.c.l.b16 %v267
      %v353 = vunpack.c.l.b16 %v268
      %v354 = vunpack.c.l.b16 %v269
      %v355 = vunpack.c.l.b16 %v270
      %v356 = vunpack.c.l.b16 %v271
      %v357 = vunpack.c.l.b16 %v272
      %v358 = vunpack.c.l.b16 %v273
      %v359 = vunpack.c.l.b16 %v274
      %v360 = vunpack.c.l.b16 %v275
      %v361 = vunpack.c.l.b16 %v276
      %v362 = vunpack.c.l.b16 %v277
      %v363 = vunpack.c.l.b16 %v278
      %v364 = vunpack.c.l.b16 %v279
      %v365 = vunpack.c.l.b16 %v280
      %v366 = vunpack.c.l.b16 %v281
      %v367 = vunpack.c.l.b16 %v287
      %v368 = vunpack.c.l.b16 %v288
      %v369 = vunpack.c.l.b16 %v289
      %v370 = vunpack.c.l.b16 %v290
      %v371 = vpack.c.b16 %v332, %v331
      %v372 = vpack.c.b16 %v334, %v333
      %v373 = vpack.c.b16 %v336, %v335
      %v374 = vpack.c.b16 %v338, %v337
      %v375 = vpack.c.b16 %v340, %v339
      %v376 = vpack.c.b16 %v342, %v341
      %v377 = vpack.c.b16 %v344, %v343
      %v378 = vpack.c.b16 %v346, %v345
      %v379 = vpack.c.b16 %v348, %v347
      %v380 = vpack.c.b16 %v350, %v349
      %v381 = vpack.c.b16 %v352, %v351
      %v382 = vpack.c.b16 %v354, %v353
      %v383 = vpack.c.b16 %v356, %v355
      %v384 = vpack.c.b16 %v358, %v357
      %v385 = vpack.c.b16 %v360, %v359
      %v386 = vpack.c.b16 %v362, %v361
      %v387 = vpack.c.b16 %v364, %v363
      %v388 = vpack.c.b16 %v366, %v365
      %v389 = vpack.c.b16 %v368, %v367
      %v390 = vpack.c.b16 %v370, %v369
      %vm391 = vsmask.f32 256
      %v393 = vshrl.u32 %v371, 16
      %v395 = vrot.slane %v393, 7
      %v396 = vshll.u32 %v371, 16
      %v398 = vor.u32 %v395, %v396
      %v400 = vshrl.u32 %v372, 16
      %v402 = vrot.slane %v400, 7
      %v403 = vshll.u32 %v372, 16
      %v405 = vor.u32 %v402, %v403
      %v406 = vsel %vm391, %v395, %v405
      %v408 = vshrl.u32 %v373, 16
      %v410 = vrot.slane %v408, 7
      %v411 = vshll.u32 %v373, 16
      %v413 = vor.u32 %v410, %v411
      %v415 = vshrl.u32 %v374, 16
      %v417 = vrot.slane %v415, 7
      %v418 = vshll.u32 %v374, 16
      %v420 = vor.u32 %v417, %v418
      %v421 = vsel %vm391, %v410, %v420
      %v423 = vshrl.u32 %v375, 16
      %v425 = vrot.slane %v423, 7
      %v426 = vshll.u32 %v375, 16
      %v428 = vor.u32 %v425, %v426
      %v430 = vshrl.u32 %v376, 16
      %v432 = vrot.slane %v430, 7
      %v433 = vshll.u32 %v376, 16
      %v435 = vor.u32 %v432, %v433
      %v436 = vsel %vm391, %v425, %v435
      %v438 = vshrl.u32 %v377, 16
      %v440 = vrot.slane %v438, 7
      %v441 = vshll.u32 %v377, 16
      %v443 = vor.u32 %v440, %v441
      %v445 = vshrl.u32 %v378, 16
      %v447 = vrot.slane %v445, 7
      %v448 = vshll.u32 %v378, 16
      %v450 = vor.u32 %v447, %v448
      %v451 = vsel %vm391, %v440, %v450
      %v453 = vshrl.u32 %v379, 16
      %v455 = vrot.slane %v453, 7
      %v456 = vshll.u32 %v379, 16
      %v458 = vor.u32 %v455, %v456
      %v460 = vshrl.u32 %v380, 16
      %v462 = vrot.slane %v460, 7
      %v463 = vshll.u32 %v380, 16
      %v465 = vor.u32 %v462, %v463
      %v466 = vsel %vm391, %v455, %v465
      %v468 = vshrl.u32 %v381, 16
      %v470 = vrot.slane %v468, 7
      %v471 = vshll.u32 %v381, 16
      %v473 = vor.u32 %v470, %v471
      %v475 = vshrl.u32 %v382, 16
      %v477 = vrot.slane %v475, 7
      %v478 = vshll.u32 %v382, 16
      %v480 = vor.u32 %v477, %v478
      %v481 = vsel %vm391, %v470, %v480
      %v483 = vshrl.u32 %v383, 16
      %v485 = vrot.slane %v483, 7
      %v486 = vshll.u32 %v383, 16
      %v488 = vor.u32 %v485, %v486
      %v490 = vshrl.u32 %v384, 16
      %v492 = vrot.slane %v490, 7
      %v493 = vshll.u32 %v384, 16
      %v495 = vor.u32 %v492, %v493
      %v496 = vsel %vm391, %v485, %v495
      %v498 = vshrl.u32 %v385, 16
      %v500 = vrot.slane %v498, 7
      %v501 = vshll.u32 %v385, 16
      %v503 = vor.u32 %v500, %v501
      %v505 = vshrl.u32 %v386, 16
      %v507 = vrot.slane %v505, 7
      %v508 = vshll.u32 %v386, 16
      %v510 = vor.u32 %v507, %v508
      %v511 = vsel %vm391, %v500, %v510
      %v513 = vshrl.u32 %v387, 16
      %v515 = vrot.slane %v513, 7
      %v516 = vshll.u32 %v387, 16
      %v518 = vor.u32 %v515, %v516
      %v520 = vshrl.u32 %v388, 16
      %v522 = vrot.slane %v520, 7
      %v523 = vshll.u32 %v388, 16
      %v525 = vor.u32 %v522, %v523
      %v526 = vsel %vm391, %v515, %v525
      %v528 = vshrl.u32 %v389, 16
      %v530 = vrot.slane %v528, 7
      %v531 = vshll.u32 %v389, 16
      %v533 = vor.u32 %v530, %v531
      %v535 = vshrl.u32 %v390, 16
      %v537 = vrot.slane %v535, 7
      %v538 = vshll.u32 %v390, 16
      %v540 = vor.u32 %v537, %v538
      %v541 = vsel %vm391, %v530, %v540
      %vm562 = vcmask 1040384
      %vm563 = vmand %vm562, %vm391
      %v564 = vsel %vm563, 0, %v398
      %v565 = vsel %vm563, 0, %v413
      %v566 = vsel %vm563, 0, %v428
      %v567 = vsel %vm563, 0, %v443
      %v568 = vsel %vm563, 0, %v458
      %v569 = vsel %vm563, 0, %v473
      %v570 = vsel %vm563, 0, %v488
      %v571 = vsel %vm563, 0, %v503
      %v572 = vsel %vm563, 0, %v518
      %v573 = vsel %vm563, 0, %v533
      %v574 = vsel %vm563, %v402, 0
      %v575 = vsel %vm563, %v417, 0
      %v576 = vsel %vm563, %v432, 0
      %v577 = vsel %vm563, %v447, 0
      %v578 = vsel %vm563, %v462, 0
      %v579 = vsel %vm563, %v477, 0
      %v580 = vsel %vm563, %v492, 0
      %v581 = vsel %vm563, %v507, 0
      %v582 = vsel %vm563, %v522, 0
      %v583 = vsel %vm563, %v537, 0
      %vm584 = vsmask.f32 7424
      %v586 = vshrl.u32 %v564, 16
      %v588 = vshll.u32 %v564, 16
      %v590 = vrot.slane %v588, 1
      %v591 = vor.u32 %v586, %v590
      %v593 = vshll.u32 %v406, 16
      %v595 = vrot.slane %v593, 1
      %v596 = vsel %vm584, %v591, %v595
      %v597 = vshrl.u32 %v406, 16
      %v599 = vor.u32 %v597, %v595
      %v601 = vshll.u32 %v574, 16
      %v603 = vrot.slane %v601, 1
      %v604 = vsel %vm584, %v599, %v603
      %v606 = vshrl.u32 %v565, 16
      %v608 = vshll.u32 %v565, 16
      %v610 = vrot.slane %v608, 1
      %v611 = vor.u32 %v606, %v610
      %v613 = vshll.u32 %v421, 16
      %v615 = vrot.slane %v613, 1
      %v616 = vsel %vm584, %v611, %v615
      %v617 = vshrl.u32 %v421, 16
      %v619 = vor.u32 %v617, %v615
      %v621 = vshll.u32 %v575, 16
      %v623 = vrot.slane %v621, 1
      %v624 = vsel %vm584, %v619, %v623
      %v626 = vshrl.u32 %v566, 16
      %v628 = vshll.u32 %v566, 16
      %v630 = vrot.slane %v628, 1
      %v631 = vor.u32 %v626, %v630
      %v633 = vshll.u32 %v436, 16
      %v635 = vrot.slane %v633, 1
      %v636 = vsel %vm584, %v631, %v635
      %v637 = vshrl.u32 %v436, 16
      %v639 = vor.u32 %v637, %v635
      %v641 = vshll.u32 %v576, 16
      %v643 = vrot.slane %v641, 1
      %v644 = vsel %vm584, %v639, %v643
      %v646 = vshrl.u32 %v567, 16
      %v648 = vshll.u32 %v567, 16
      %v650 = vrot.slane %v648, 1
      %v651 = vor.u32 %v646, %v650
      %v653 = vshll.u32 %v451, 16
      %v655 = vrot.slane %v653, 1
      %v656 = vsel %vm584, %v651, %v655
      %v657 = vshrl.u32 %v451, 16
      %v659 = vor.u32 %v657, %v655
      %v661 = vshll.u32 %v577, 16
      %v663 = vrot.slane %v661, 1
      %v664 = vsel %vm584, %v659, %v663
      %v666 = vshrl.u32 %v568, 16
      %v668 = vshll.u32 %v568, 16
      %v670 = vrot.slane %v668, 1
      %v671 = vor.u32 %v666, %v670
      %v673 = vshll.u32 %v466, 16
      %v675 = vrot.slane %v673, 1
      %v676 = vsel %vm584, %v671, %v675
      %v677 = vshrl.u32 %v466, 16
      %v679 = vor.u32 %v677, %v675
      %v681 = vshll.u32 %v578, 16
      %v683 = vrot.slane %v681, 1
      %v684 = vsel %vm584, %v679, %v683
      %v686 = vshrl.u32 %v569, 16
      %v688 = vshll.u32 %v569, 16
      %v690 = vrot.slane %v688, 1
      %v691 = vor.u32 %v686, %v690
      %v693 = vshll.u32 %v481, 16
      %v695 = vrot.slane %v693, 1
      %v696 = vsel %vm584, %v691, %v695
      %v697 = vshrl.u32 %v481, 16
      %v699 = vor.u32 %v697, %v695
      %v701 = vshll.u32 %v579, 16
      %v703 = vrot.slane %v701, 1
      %v704 = vsel %vm584, %v699, %v703
      %v706 = vshrl.u32 %v570, 16
      %v708 = vshll.u32 %v570, 16
      %v710 = vrot.slane %v708, 1
      %v711 = vor.u32 %v706, %v710
      %v713 = vshll.u32 %v496, 16
      %v715 = vrot.slane %v713, 1
      %v716 = vsel %vm584, %v711, %v715
      %v717 = vshrl.u32 %v496, 16
      %v719 = vor.u32 %v717, %v715
      %v721 = vshll.u32 %v580, 16
      %v723 = vrot.slane %v721, 1
      %v724 = vsel %vm584, %v719, %v723
      %v726 = vshrl.u32 %v571, 16
      %v728 = vshll.u32 %v571, 16
      %v730 = vrot.slane %v728, 1
      %v731 = vor.u32 %v726, %v730
      %v733 = vshll.u32 %v511, 16
      %v735 = vrot.slane %v733, 1
      %v736 = vsel %vm584, %v731, %v735
      %v737 = vshrl.u32 %v511, 16
      %v739 = vor.u32 %v737, %v735
      %v741 = vshll.u32 %v581, 16
      %v743 = vrot.slane %v741, 1
      %v744 = vsel %vm584, %v739, %v743
      %745 = vrot.lane.b32.xlu0 %v596, 16
      %v746 = vpop.permute.xlu0 %745
      %747 = vrot.lane.b32.xlu0 %v604, 16
      %v748 = vpop.permute.xlu0 %747
      %749 = vrot.lane.b32.xlu0 %v616, 16
      %v750 = vpop.permute.xlu0 %749
      %751 = vrot.lane.b32.xlu0 %v624, 16
      %v752 = vpop.permute.xlu0 %751
      %753 = vrot.lane.b32.xlu0 %v636, 16
      %v754 = vpop.permute.xlu0 %753
      %755 = vrot.lane.b32.xlu0 %v644, 16
      %v756 = vpop.permute.xlu0 %755
      %757 = vrot.lane.b32.xlu0 %v656, 16
      %v758 = vpop.permute.xlu0 %757
      %759 = vrot.lane.b32.xlu0 %v664, 16
      %v760 = vpop.permute.xlu0 %759
      %761 = vrot.lane.b32.xlu0 %v676, 16
      %v762 = vpop.permute.xlu0 %761
      %763 = vrot.lane.b32.xlu0 %v684, 16
      %v764 = vpop.permute.xlu0 %763
      %765 = vrot.lane.b32.xlu0 %v696, 16
      %v766 = vpop.permute.xlu0 %765
      %767 = vrot.lane.b32.xlu0 %v704, 16
      %v768 = vpop.permute.xlu0 %767
      %769 = vrot.lane.b32.xlu0 %v716, 16
      %v770 = vpop.permute.xlu0 %769
      %771 = vrot.lane.b32.xlu0 %v724, 16
      %v772 = vpop.permute.xlu0 %771
      %773 = vrot.lane.b32.xlu0 %v736, 16
      %v774 = vpop.permute.xlu0 %773
      %775 = vrot.lane.b32.xlu0 %v744, 16
      %v776 = vpop.permute.xlu0 %775
      %vm793 = vcmask 1046528
      %v794 = vrot.slane %v564, 1
      %v795 = vrot.slane %v406, 1
      %v796 = vsel %vm793, %v794, %v795
      %v797 = vrot.slane %v574, 1
      %v798 = vsel %vm793, %v795, %v797
      %v799 = vrot.slane %v565, 1
      %v800 = vrot.slane %v421, 1
      %v801 = vsel %vm793, %v799, %v800
      %v802 = vrot.slane %v575, 1
      %v803 = vsel %vm793, %v800, %v802
      %v804 = vrot.slane %v566, 1
      %v805 = vrot.slane %v436, 1
      %v806 = vsel %vm793, %v804, %v805
      %v807 = vrot.slane %v576, 1
      %v808 = vsel %vm793, %v805, %v807
      %v809 = vrot.slane %v567, 1
      %v810 = vrot.slane %v451, 1
      %v811 = vsel %vm793, %v809, %v810
      %v812 = vrot.slane %v577, 1
      %v813 = vsel %vm793, %v810, %v812
      %v814 = vrot.slane %v568, 1
      %v815 = vrot.slane %v466, 1
      %v816 = vsel %vm793, %v814, %v815
      %v817 = vrot.slane %v578, 1
      %v818 = vsel %vm793, %v815, %v817
      %v819 = vrot.slane %v569, 1
      %v820 = vrot.slane %v481, 1
      %v821 = vsel %vm793, %v819, %v820
      %v822 = vrot.slane %v579, 1
      %v823 = vsel %vm793, %v820, %v822
      %v824 = vrot.slane %v570, 1
      %v825 = vrot.slane %v496, 1
      %v826 = vsel %vm793, %v824, %v825
      %v827 = vrot.slane %v580, 1
      %v828 = vsel %vm793, %v825, %v827
      %v829 = vrot.slane %v571, 1
      %v830 = vrot.slane %v511, 1
      %v831 = vsel %vm793, %v829, %v830
      %v832 = vrot.slane %v581, 1
      %v833 = vsel %vm793, %v830, %v832
      %834 = vrot.lane.b32.xlu0 %v796, 32
      %v835 = vpop.permute.xlu0 %834
      %836 = vrot.lane.b32.xlu0 %v798, 32
      %v837 = vpop.permute.xlu0 %836
      %838 = vrot.lane.b32.xlu0 %v801, 32
      %v839 = vpop.permute.xlu0 %838
      %840 = vrot.lane.b32.xlu0 %v803, 32
      %v841 = vpop.permute.xlu0 %840
      %842 = vrot.lane.b32.xlu0 %v806, 32
      %v843 = vpop.permute.xlu0 %842
      %844 = vrot.lane.b32.xlu0 %v808, 32
      %v845 = vpop.permute.xlu0 %844
      %846 = vrot.lane.b32.xlu0 %v811, 32
      %v847 = vpop.permute.xlu0 %846
      %848 = vrot.lane.b32.xlu0 %v813, 32
      %v849 = vpop.permute.xlu0 %848
      %850 = vrot.lane.b32.xlu0 %v816, 32
      %v851 = vpop.permute.xlu0 %850
      %852 = vrot.lane.b32.xlu0 %v818, 32
      %v853 = vpop.permute.xlu0 %852
      %854 = vrot.lane.b32.xlu0 %v821, 32
      %v855 = vpop.permute.xlu0 %854
      %856 = vrot.lane.b32.xlu0 %v823, 32
      %v857 = vpop.permute.xlu0 %856
      %858 = vrot.lane.b32.xlu0 %v826, 32
      %v859 = vpop.permute.xlu0 %858
      %860 = vrot.lane.b32.xlu0 %v828, 32
      %v861 = vpop.permute.xlu0 %860
      %862 = vrot.lane.b32.xlu0 %v831, 32
      %v863 = vpop.permute.xlu0 %862
      %864 = vrot.lane.b32.xlu0 %v833, 32
      %v865 = vpop.permute.xlu0 %864
      %867 = vrot.lane.b32.xlu0 %v565, 48
      %v868 = vpop.permute.xlu0 %867
      %869 = vrot.lane.b32.xlu0 %v421, 48
      %v870 = vpop.permute.xlu0 %869
      %871 = vrot.lane.b32.xlu0 %v566, 48
      %v872 = vpop.permute.xlu0 %871
      %873 = vrot.lane.b32.xlu0 %v436, 48
      %v874 = vpop.permute.xlu0 %873
      %875 = vrot.lane.b32.xlu0 %v567, 48
      %v876 = vpop.permute.xlu0 %875
      %877 = vrot.lane.b32.xlu0 %v451, 48
      %v878 = vpop.permute.xlu0 %877
      %879 = vrot.lane.b32.xlu0 %v568, 48
      %v880 = vpop.permute.xlu0 %879
      %881 = vrot.lane.b32.xlu0 %v466, 48
      %v882 = vpop.permute.xlu0 %881
      %883 = vrot.lane.b32.xlu0 %v569, 48
      %v884 = vpop.permute.xlu0 %883
      %885 = vrot.lane.b32.xlu0 %v481, 48
      %v886 = vpop.permute.xlu0 %885
      %887 = vrot.lane.b32.xlu0 %v570, 48
      %v888 = vpop.permute.xlu0 %887
      %889 = vrot.lane.b32.xlu0 %v496, 48
      %v890 = vpop.permute.xlu0 %889
      %891 = vrot.lane.b32.xlu0 %v571, 48
      %v892 = vpop.permute.xlu0 %891
      %893 = vrot.lane.b32.xlu0 %v511, 48
      %v894 = vpop.permute.xlu0 %893
      %895 = vrot.lane.b32.xlu0 %v572, 48
      %v896 = vpop.permute.xlu0 %895
      %897 = vrot.lane.b32.xlu0 %v526, 48
      %v898 = vpop.permute.xlu0 %897
      %v900 = vshrl.u32 %v572, 16
      %v902 = vshll.u32 %v572, 16
      %v904 = vrot.slane %v902, 1
      %v905 = vor.u32 %v900, %v904
      %v907 = vshll.u32 %v526, 16
      %v909 = vrot.slane %v907, 1
      %v910 = vsel %vm584, %v905, %v909
      %v911 = vshrl.u32 %v526, 16
      %v913 = vor.u32 %v911, %v909
      %v915 = vshll.u32 %v582, 16
      %v917 = vrot.slane %v915, 1
      %v918 = vsel %vm584, %v913, %v917
      %919 = vrot.lane.b32.xlu0 %v616, 64
      %v920 = vpop.permute.xlu0 %919
      %921 = vrot.lane.b32.xlu0 %v624, 64
      %v922 = vpop.permute.xlu0 %921
      %923 = vrot.lane.b32.xlu0 %v636, 64
      %v924 = vpop.permute.xlu0 %923
      %925 = vrot.lane.b32.xlu0 %v644, 64
      %v926 = vpop.permute.xlu0 %925
      %927 = vrot.lane.b32.xlu0 %v656, 64
      %v928 = vpop.permute.xlu0 %927
      %929 = vrot.lane.b32.xlu0 %v664, 64
      %v930 = vpop.permute.xlu0 %929
      %931 = vrot.lane.b32.xlu0 %v676, 64
      %v932 = vpop.permute.xlu0 %931
      %933 = vrot.lane.b32.xlu0 %v684, 64
      %v934 = vpop.permute.xlu0 %933
      %935 = vrot.lane.b32.xlu0 %v696, 64
      %v936 = vpop.permute.xlu0 %935
      %937 = vrot.lane.b32.xlu0 %v704, 64
      %v938 = vpop.permute.xlu0 %937
      %939 = vrot.lane.b32.xlu0 %v716, 64
      %v940 = vpop.permute.xlu0 %939
      %941 = vrot.lane.b32.xlu0 %v724, 64
      %v942 = vpop.permute.xlu0 %941
      %943 = vrot.lane.b32.xlu0 %v736, 64
      %v944 = vpop.permute.xlu0 %943
      %945 = vrot.lane.b32.xlu0 %v744, 64
      %v946 = vpop.permute.xlu0 %945
      %947 = vrot.lane.b32.xlu0 %v910, 64
      %v948 = vpop.permute.xlu0 %947
      %949 = vrot.lane.b32.xlu0 %v918, 64
      %v950 = vpop.permute.xlu0 %949
      %v952 = vrot.slane %v572, 1
      %v953 = vrot.slane %v526, 1
      %v954 = vsel %vm793, %v952, %v953
      %v955 = vrot.slane %v582, 1
      %v956 = vsel %vm793, %v953, %v955
      %957 = vrot.lane.b32.xlu0 %v801, 80
      %v958 = vpop.permute.xlu0 %957
      %959 = vrot.lane.b32.xlu0 %v803, 80
      %v960 = vpop.permute.xlu0 %959
      %961 = vrot.lane.b32.xlu0 %v806, 80
      %v962 = vpop.permute.xlu0 %961
      %963 = vrot.lane.b32.xlu0 %v808, 80
      %v964 = vpop.permute.xlu0 %963
      %965 = vrot.lane.b32.xlu0 %v811, 80
      %v966 = vpop.permute.xlu0 %965
      %967 = vrot.lane.b32.xlu0 %v813, 80
      %v968 = vpop.permute.xlu0 %967
      %969 = vrot.lane.b32.xlu0 %v816, 80
      %v970 = vpop.permute.xlu0 %969
      %971 = vrot.lane.b32.xlu0 %v818, 80
      %v972 = vpop.permute.xlu0 %971
      %973 = vrot.lane.b32.xlu0 %v821, 80
      %v974 = vpop.permute.xlu0 %973
      %975 = vrot.lane.b32.xlu0 %v823, 80
      %v976 = vpop.permute.xlu0 %975
      %977 = vrot.lane.b32.xlu0 %v826, 80
      %v978 = vpop.permute.xlu0 %977
      %979 = vrot.lane.b32.xlu0 %v828, 80
      %v980 = vpop.permute.xlu0 %979
      %981 = vrot.lane.b32.xlu0 %v831, 80
      %v982 = vpop.permute.xlu0 %981
      %983 = vrot.lane.b32.xlu0 %v833, 80
      %v984 = vpop.permute.xlu0 %983
      %985 = vrot.lane.b32.xlu0 %v954, 80
      %v986 = vpop.permute.xlu0 %985
      %987 = vrot.lane.b32.xlu0 %v956, 80
      %v988 = vpop.permute.xlu0 %987
      %990 = vrot.lane.b32.xlu0 %v566, 96
      %v991 = vpop.permute.xlu0 %990
      %992 = vrot.lane.b32.xlu0 %v436, 96
      %v993 = vpop.permute.xlu0 %992
      %994 = vrot.lane.b32.xlu0 %v567, 96
      %v995 = vpop.permute.xlu0 %994
      %996 = vrot.lane.b32.xlu0 %v451, 96
      %v997 = vpop.permute.xlu0 %996
      %998 = vrot.lane.b32.xlu0 %v568, 96
      %v999 = vpop.permute.xlu0 %998
      %1000 = vrot.lane.b32.xlu0 %v466, 96
      %v1001 = vpop.permute.xlu0 %1000
      %1002 = vrot.lane.b32.xlu0 %v569, 96
      %v1003 = vpop.permute.xlu0 %1002
      %1004 = vrot.lane.b32.xlu0 %v481, 96
      %v1005 = vpop.permute.xlu0 %1004
      %1006 = vrot.lane.b32.xlu0 %v570, 96
      %v1007 = vpop.permute.xlu0 %1006
      %1008 = vrot.lane.b32.xlu0 %v496, 96
      %v1009 = vpop.permute.xlu0 %1008
      %1010 = vrot.lane.b32.xlu0 %v571, 96
      %v1011 = vpop.permute.xlu0 %1010
      %1012 = vrot.lane.b32.xlu0 %v511, 96
      %v1013 = vpop.permute.xlu0 %1012
      %1014 = vrot.lane.b32.xlu0 %v572, 96
      %v1015 = vpop.permute.xlu0 %1014
      %1016 = vrot.lane.b32.xlu0 %v526, 96
      %v1017 = vpop.permute.xlu0 %1016
      %1018 = vrot.lane.b32.xlu0 %v573, 96
      %v1019 = vpop.permute.xlu0 %1018
      %1020 = vrot.lane.b32.xlu0 %v541, 96
      %v1021 = vpop.permute.xlu0 %1020
      %v1023 = vshrl.u32 %v573, 16
      %v1025 = vshll.u32 %v573, 16
      %v1027 = vrot.slane %v1025, 1
      %v1028 = vor.u32 %v1023, %v1027
      %v1030 = vshll.u32 %v541, 16
      %v1032 = vrot.slane %v1030, 1
      %v1033 = vsel %vm584, %v1028, %v1032
      %v1034 = vshrl.u32 %v541, 16
      %v1036 = vor.u32 %v1034, %v1032
      %v1038 = vshll.u32 %v583, 16
      %v1040 = vrot.slane %v1038, 1
      %v1041 = vsel %vm584, %v1036, %v1040
      %1042 = vrot.lane.b32.xlu0 %v636, 112
      %v1043 = vpop.permute.xlu0 %1042
      %1044 = vrot.lane.b32.xlu0 %v644, 112
      %v1045 = vpop.permute.xlu0 %1044
      %1046 = vrot.lane.b32.xlu0 %v656, 112
      %v1047 = vpop.permute.xlu0 %1046
      %1048 = vrot.lane.b32.xlu0 %v664, 112
      %v1049 = vpop.permute.xlu0 %1048
      %1050 = vrot.lane.b32.xlu0 %v676, 112
      %v1051 = vpop.permute.xlu0 %1050
      %1052 = vrot.lane.b32.xlu0 %v684, 112
      %v1053 = vpop.permute.xlu0 %1052
      %1054 = vrot.lane.b32.xlu0 %v696, 112
      %v1055 = vpop.permute.xlu0 %1054
      %1056 = vrot.lane.b32.xlu0 %v704, 112
      %v1057 = vpop.permute.xlu0 %1056
      %1058 = vrot.lane.b32.xlu0 %v716, 112
      %v1059 = vpop.permute.xlu0 %1058
      %1060 = vrot.lane.b32.xlu0 %v724, 112
      %v1061 = vpop.permute.xlu0 %1060
      %1062 = vrot.lane.b32.xlu0 %v736, 112
      %v1063 = vpop.permute.xlu0 %1062
      %1064 = vrot.lane.b32.xlu0 %v744, 112
      %v1065 = vpop.permute.xlu0 %1064
      %1066 = vrot.lane.b32.xlu0 %v910, 112
      %v1067 = vpop.permute.xlu0 %1066
      %1068 = vrot.lane.b32.xlu0 %v918, 112
      %v1069 = vpop.permute.xlu0 %1068
      %1070 = vrot.lane.b32.xlu0 %v1033, 112
      %v1071 = vpop.permute.xlu0 %1070
      %1072 = vrot.lane.b32.xlu0 %v1041, 112
      %v1073 = vpop.permute.xlu0 %1072
      %v1075 = vrot.slane %v573, 1
      %v1076 = vrot.slane %v541, 1
      %v1077 = vsel %vm793, %v1075, %v1076
      %v1078 = vrot.slane %v583, 1
      %v1079 = vsel %vm793, %v1076, %v1078
      %vm1080 = vcmask 130048
      %v1082 = vsel %vm1080, %v564, %v746
      %v1084 = vsel %vm1080, %v406, %v748
      %v1086 = vsel %vm1080, %v565, %v750
      %v1088 = vsel %vm1080, %v421, %v752
      %v1090 = vsel %vm1080, %v566, %v754
      %v1092 = vsel %vm1080, %v436, %v756
      %v1094 = vsel %vm1080, %v567, %v758
      %v1096 = vsel %vm1080, %v451, %v760
      %v1098 = vsel %vm1080, %v568, %v762
      %v1100 = vsel %vm1080, %v466, %v764
      %v1102 = vsel %vm1080, %v569, %v766
      %v1104 = vsel %vm1080, %v481, %v768
      %v1106 = vsel %vm1080, %v570, %v770
      %v1108 = vsel %vm1080, %v496, %v772
      %v1110 = vsel %vm1080, %v571, %v774
      %v1112 = vsel %vm1080, %v511, %v776
      %vm1113 = vcmask 261120
      %v1115 = vsel %vm1113, %v1082, %v835
      %v1117 = vsel %vm1113, %v1084, %v837
      %v1119 = vsel %vm1113, %v1086, %v839
      %v1121 = vsel %vm1113, %v1088, %v841
      %v1123 = vsel %vm1113, %v1090, %v843
      %v1125 = vsel %vm1113, %v1092, %v845
      %v1127 = vsel %vm1113, %v1094, %v847
      %v1129 = vsel %vm1113, %v1096, %v849
      %v1131 = vsel %vm1113, %v1098, %v851
      %v1133 = vsel %vm1113, %v1100, %v853
      %v1135 = vsel %vm1113, %v1102, %v855
      %v1137 = vsel %vm1113, %v1104, %v857
      %v1139 = vsel %vm1113, %v1106, %v859
      %v1141 = vsel %vm1113, %v1108, %v861
      %v1143 = vsel %vm1113, %v1110, %v863
      %v1145 = vsel %vm1113, %v1112, %v865
      %vm1146 = vcmask 392192
      %v1148 = vsel %vm1146, %v1115, %v868
      %v1150 = vsel %vm1146, %v1117, %v870
      %v1152 = vsel %vm1146, %v1119, %v872
      %v1154 = vsel %vm1146, %v1121, %v874
      %v1156 = vsel %vm1146, %v1123, %v876
      %v1158 = vsel %vm1146, %v1125, %v878
      %v1160 = vsel %vm1146, %v1127, %v880
      %v1162 = vsel %vm1146, %v1129, %v882
      %v1164 = vsel %vm1146, %v1131, %v884
      %v1166 = vsel %vm1146, %v1133, %v886
      %v1168 = vsel %vm1146, %v1135, %v888
      %v1170 = vsel %vm1146, %v1137, %v890
      %v1172 = vsel %vm1146, %v1139, %v892
      %v1174 = vsel %vm1146, %v1141, %v894
      %v1176 = vsel %vm1146, %v1143, %v896
      %v1178 = vsel %vm1146, %v1145, %v898
      %vm1179 = vcmask 523264
      %v1181 = vsel %vm1179, %v1148, %v920
      %v1183 = vsel %vm1179, %v1150, %v922
      %v1185 = vsel %vm1179, %v1152, %v924
      %v1187 = vsel %vm1179, %v1154, %v926
      %v1189 = vsel %vm1179, %v1156, %v928
      %v1191 = vsel %vm1179, %v1158, %v930
      %v1193 = vsel %vm1179, %v1160, %v932
      %v1195 = vsel %vm1179, %v1162, %v934
      %v1197 = vsel %vm1179, %v1164, %v936
      %v1199 = vsel %vm1179, %v1166, %v938
      %v1201 = vsel %vm1179, %v1168, %v940
      %v1203 = vsel %vm1179, %v1170, %v942
      %v1205 = vsel %vm1179, %v1172, %v944
      %v1207 = vsel %vm1179, %v1174, %v946
      %v1209 = vsel %vm1179, %v1176, %v948
      %v1211 = vsel %vm1179, %v1178, %v950
      %vm1212 = vcmask 654336
      %v1214 = vsel %vm1212, %v1181, %v958
      %v1216 = vsel %vm1212, %v1183, %v960
      %v1218 = vsel %vm1212, %v1185, %v962
      %v1220 = vsel %vm1212, %v1187, %v964
      %v1222 = vsel %vm1212, %v1189, %v966
      %v1224 = vsel %vm1212, %v1191, %v968
      %v1226 = vsel %vm1212, %v1193, %v970
      %v1228 = vsel %vm1212, %v1195, %v972
      %v1230 = vsel %vm1212, %v1197, %v974
      %v1232 = vsel %vm1212, %v1199, %v976
      %v1234 = vsel %vm1212, %v1201, %v978
      %v1236 = vsel %vm1212, %v1203, %v980
      %v1238 = vsel %vm1212, %v1205, %v982
      %v1240 = vsel %vm1212, %v1207, %v984
      %v1242 = vsel %vm1212, %v1209, %v986
      %v1244 = vsel %vm1212, %v1211, %v988
      %vm1245 = vcmask 785408
      %v1247 = vsel %vm1245, %v1214, %v991
      %v1249 = vsel %vm1245, %v1216, %v993
      %v1251 = vsel %vm1245, %v1218, %v995
      %v1253 = vsel %vm1245, %v1220, %v997
      %v1255 = vsel %vm1245, %v1222, %v999
      %v1257 = vsel %vm1245, %v1224, %v1001
      %v1259 = vsel %vm1245, %v1226, %v1003
      %v1261 = vsel %vm1245, %v1228, %v1005
      %v1263 = vsel %vm1245, %v1230, %v1007
      %v1265 = vsel %vm1245, %v1232, %v1009
      %v1267 = vsel %vm1245, %v1234, %v1011
      %v1269 = vsel %vm1245, %v1236, %v1013
      %v1271 = vsel %vm1245, %v1238, %v1015
      %v1273 = vsel %vm1245, %v1240, %v1017
      %v1275 = vsel %vm1245, %v1242, %v1019
      %v1277 = vsel %vm1245, %v1244, %v1021
      %vm1278 = vcmask 916480
      %v1280 = vsel %vm1278, %v1247, %v1043
      %v1283 = vsel %vm1278, %v1249, %v1045
      %v1286 = vsel %vm1278, %v1251, %v1047
      %v1289 = vsel %vm1278, %v1253, %v1049
      %v1292 = vsel %vm1278, %v1255, %v1051
      %v1295 = vsel %vm1278, %v1257, %v1053
      %v1298 = vsel %vm1278, %v1259, %v1055
      %v1301 = vsel %vm1278, %v1261, %v1057
      %v1304 = vsel %vm1278, %v1263, %v1059
      %v1307 = vsel %vm1278, %v1265, %v1061
      %v1310 = vsel %vm1278, %v1267, %v1063
      %v1313 = vsel %vm1278, %v1269, %v1065
      %v1316 = vsel %vm1278, %v1271, %v1067
      %v1319 = vsel %vm1278, %v1273, %v1069
      %v1322 = vsel %vm1278, %v1275, %v1071
      %v1325 = vsel %vm1278, %v1277, %v1073
      %v1327 = vld [vmem:[%s2] sm:$0xf]
      %v1328 = vld [vmem:[%s2 + $0x4] sm:$0xf]
      %v1329 = vld [vmem:[%s2 + $0x8] sm:$0xf]
      %v1330 = vld [vmem:[%s2 + $0xc] sm:$0xf]
      %v1331 = vld [vmem:[%s2 + $0x10] sm:$0xf]
      %v1332 = vld [vmem:[%s2 + $0x14] sm:$0xf]
      %v1333 = vld [vmem:[%s2 + $0x18] sm:$0xf]
      %v1334 = vld [vmem:[%s2 + $0x1c] sm:$0xf]
      %v1335 = vld [vmem:[%s2 + $0x20] sm:$0xf]
      %v1336 = vld [vmem:[%s2 + $0x24] sm:$0xf]
      %v1337 = vld [vmem:[%s2 + $0x28] sm:$0xf]
      %v1338 = vld [vmem:[%s2 + $0x2c] sm:$0xf]
      %v1339 = vld [vmem:[%s2 + $0x30] sm:$0xf]
      %v1340 = vld [vmem:[%s2 + $0x34] sm:$0xf]
      %v1341 = vld [vmem:[%s2 + $0x38] sm:$0xf]
      %v1342 = vld [vmem:[%s2 + $0x3c] sm:$0xf]
      %v1343 = vld [vmem:[%s2 + $0x40] sm:$0xf]
      %v1344 = vld [vmem:[%s2 + $0x44] sm:$0xf]
      %v1363 = vunpack.c.l.b16 %v1327
      %v1364 = vunpack.c.l.b16 %v1328
      %v1365 = vunpack.c.l.b16 %v1329
      %v1366 = vunpack.c.l.b16 %v1330
      %v1367 = vunpack.c.l.b16 %v1331
      %v1368 = vunpack.c.l.b16 %v1332
      %v1369 = vunpack.c.l.b16 %v1333
      %v1370 = vunpack.c.l.b16 %v1334
      %v1371 = vunpack.c.l.b16 %v1335
      %v1372 = vunpack.c.l.b16 %v1336
      %v1373 = vunpack.c.l.b16 %v1337
      %v1374 = vunpack.c.l.b16 %v1338
      %v1375 = vunpack.c.l.b16 %v1339
      %v1376 = vunpack.c.l.b16 %v1340
      %v1377 = vunpack.c.l.b16 %v1341
      %v1378 = vunpack.c.l.b16 %v1342
      %v1379 = vunpack.c.l.b16 %v1343
      %v1380 = vunpack.c.l.b16 %v1344
      %v1381 = vpack.c.b16 %v1364, %v1363
      %v1382 = vpack.c.b16 %v1366, %v1365
      %v1383 = vpack.c.b16 %v1368, %v1367
      %v1384 = vpack.c.b16 %v1370, %v1369
      %v1385 = vpack.c.b16 %v1372, %v1371
      %v1386 = vpack.c.b16 %v1374, %v1373
      %v1387 = vpack.c.b16 %v1376, %v1375
      %v1388 = vpack.c.b16 %v1378, %v1377
      %v1389 = vpack.c.b16 %v1380, %v1379
      %v1400 = vsel %vm1080, %v806, 0
      %v1403 = vsel %vm1080, %v808, 0
      %v1406 = vsel %vm1080, %v811, 0
      %v1409 = vsel %vm1080, %v813, 0
      %v1412 = vsel %vm1080, %v816, 0
      %v1415 = vsel %vm1080, %v818, 0
      %v1418 = vsel %vm1080, %v821, 0
      %v1421 = vsel %vm1080, %v823, 0
      %v1424 = vsel %vm1080, %v826, 0
      %v1427 = vsel %vm1080, %v828, 0
      %v1430 = vsel %vm1080, %v831, 0
      %v1433 = vsel %vm1080, %v833, 0
      %v1436 = vsel %vm1080, %v954, 0
      %v1439 = vsel %vm1080, %v956, 0
      %v1442 = vsel %vm1080, %v1077, 0
      %v1445 = vsel %vm1080, %v1079, 0
      %1447 = vmatprep.subr.bf16.mxu0 0
      %1448 = vmatpush1.bf16.msra.mxu0 %v1388
      %1449 = vmatprep.subr.bf16.mxu0 0
      %1450 = vmatpush1.bf16.msra.mxu0 %v1387
      %1451 = vmatprep.subr.bf16.mxu0 0
      %1452 = vmatpush1.bf16.msra.mxu0 %v1386
      %1453 = vmatprep.subr.bf16.mxu0 0
      %1454 = vmatpush1.bf16.msra.mxu0 %v1385
      %1455 = vmatprep.subr.bf16.mxu0 0
      %1456 = vmatpush1.bf16.msra.mxu0 %v1384
      %1457 = vmatprep.subr.bf16.mxu0 0
      %1458 = vmatpush1.bf16.msra.mxu0 %v1383
      %1459 = vmatprep.subr.bf16.mxu0 0
      %1460 = vmatpush1.bf16.msra.mxu0 %v1382
      %1461 = vmatprep.subr.bf16.mxu0 0
      %1462 = vmatpush1.bf16.msra.mxu0 %v1381
      %1463 = vmatprep.subr.bf16.mxu0 0
      %1464 = vmatpush2.bf16.msra.mxu0 0
      %1465 = vmatprep.subr.bf16.mxu0 0
      %1466 = vmatpush2.bf16.msra.mxu0 0
      %1467 = vmatprep.subr.bf16.mxu0 0
      %1468 = vmatpush2.bf16.msra.mxu0 0
      %1469 = vmatprep.subr.bf16.mxu0 0
      %1470 = vmatpush2.bf16.msra.mxu0 0
      %1471 = vmatprep.subr.bf16.mxu0 0
      %1472 = vmatpush2.bf16.msra.mxu0 0
      %1473 = vmatprep.subr.bf16.mxu0 0
      %1474 = vmatpush2.bf16.msra.mxu0 0
      %1475 = vmatprep.subr.bf16.mxu0 0
      %1476 = vmatpush2.bf16.msra.mxu0 0
      %1477 = vmatprep.subr.bf16.mxu0 0
      %1478 = vmatpush2.bf16.msra.mxu0 %v1389
      %1479 = vmatprep.mubr.bf16.mxu0 %v1400
      %1480 = vmatmul.mubr.bf16.gmra.mxu0 %v1280
      %v1481 = vpop.f32.mrf.mxu0
      %v1482 = vadd.f32 0.0, %v1481
      %v1483 = vpop.f32.mrf.mxu0
      %v1484 = vpop.f32.mrf.mxu0
      %v1485 = vadd.f32 0.0, %v1484
      %v1486 = vpop.f32.mrf.mxu0
      %1487 = vmatprep.mubr.bf16.mxu0 %v1403
      %1488 = vmatmul.mubr.bf16.gmra.mxu0 %v1283
      %v1489 = vpop.f32.mrf.mxu0
      %v1490 = vadd.f32 0.0, %v1489
      %v1491 = vpop.f32.mrf.mxu0
      %v1492 = vpop.f32.mrf.mxu0
      %v1493 = vadd.f32 0.0, %v1492
      %v1494 = vpop.f32.mrf.mxu0
      %1495 = vmatprep.mubr.bf16.mxu0 %v1406
      %1496 = vmatmul.mubr.bf16.gmra.mxu0 %v1286
      %v1497 = vpop.f32.mrf.mxu0
      %v1498 = vadd.f32 0.0, %v1497
      %v1499 = vpop.f32.mrf.mxu0
      %v1500 = vpop.f32.mrf.mxu0
      %v1501 = vadd.f32 0.0, %v1500
      %v1502 = vpop.f32.mrf.mxu0
      %1503 = vmatprep.mubr.bf16.mxu0 %v1409
      %1504 = vmatmul.mubr.bf16.gmra.mxu0 %v1289
      %v1505 = vpop.f32.mrf.mxu0
      %v1506 = vadd.f32 0.0, %v1505
      %v1507 = vpop.f32.mrf.mxu0
      %v1508 = vpop.f32.mrf.mxu0
      %v1509 = vadd.f32 0.0, %v1508
      %v1510 = vpop.f32.mrf.mxu0
      %1511 = vmatprep.mubr.bf16.mxu0 %v1412
      %1512 = vmatmul.mubr.bf16.gmra.mxu0 %v1292
      %v1513 = vpop.f32.mrf.mxu0
      %v1514 = vadd.f32 0.0, %v1513
      %v1515 = vpop.f32.mrf.mxu0
      %v1516 = vpop.f32.mrf.mxu0
      %v1517 = vadd.f32 0.0, %v1516
      %v1518 = vpop.f32.mrf.mxu0
      %1519 = vmatprep.mubr.bf16.mxu0 %v1415
      %1520 = vmatmul.mubr.bf16.gmra.mxu0 %v1295
      %v1521 = vpop.f32.mrf.mxu0
      %v1522 = vadd.f32 0.0, %v1521
      %v1523 = vpop.f32.mrf.mxu0
      %v1524 = vpop.f32.mrf.mxu0
      %v1525 = vadd.f32 0.0, %v1524
      %v1526 = vpop.f32.mrf.mxu0
      %1527 = vmatprep.mubr.bf16.mxu0 %v1418
      %1528 = vmatmul.mubr.bf16.gmra.mxu0 %v1298
      %v1529 = vpop.f32.mrf.mxu0
      %v1530 = vadd.f32 0.0, %v1529
      %v1531 = vpop.f32.mrf.mxu0
      %v1532 = vpop.f32.mrf.mxu0
      %v1533 = vadd.f32 0.0, %v1532
      %v1534 = vpop.f32.mrf.mxu0
      %1535 = vmatprep.mubr.bf16.mxu0 %v1421
      %1536 = vmatmul.mubr.bf16.gmra.mxu0 %v1301
      %v1537 = vpop.f32.mrf.mxu0
      %v1538 = vadd.f32 0.0, %v1537
      %v1539 = vpop.f32.mrf.mxu0
      %v1540 = vpop.f32.mrf.mxu0
      %v1541 = vadd.f32 0.0, %v1540
      %v1542 = vpop.f32.mrf.mxu0
      %1543 = vmatprep.mubr.bf16.mxu0 %v1424
      %1544 = vmatmul.mubr.bf16.gmra.mxu0 %v1304
      %v1545 = vpop.f32.mrf.mxu0
      %v1546 = vadd.f32 0.0, %v1545
      %v1547 = vpop.f32.mrf.mxu0
      %v1548 = vpop.f32.mrf.mxu0
      %v1549 = vadd.f32 0.0, %v1548
      %v1550 = vpop.f32.mrf.mxu0
      %1551 = vmatprep.mubr.bf16.mxu0 %v1427
      %1552 = vmatmul.mubr.bf16.gmra.mxu0 %v1307
      %v1553 = vpop.f32.mrf.mxu0
      %v1554 = vadd.f32 0.0, %v1553
      %v1555 = vpop.f32.mrf.mxu0
      %v1556 = vpop.f32.mrf.mxu0
      %v1557 = vadd.f32 0.0, %v1556
      %v1558 = vpop.f32.mrf.mxu0
      %1559 = vmatprep.mubr.bf16.mxu0 %v1430
      %1560 = vmatmul.mubr.bf16.gmra.mxu0 %v1310
      %v1561 = vpop.f32.mrf.mxu0
      %v1562 = vadd.f32 0.0, %v1561
      %v1563 = vpop.f32.mrf.mxu0
      %v1564 = vpop.f32.mrf.mxu0
      %v1565 = vadd.f32 0.0, %v1564
      %v1566 = vpop.f32.mrf.mxu0
      %1567 = vmatprep.mubr.bf16.mxu0 %v1433
      %1568 = vmatmul.mubr.bf16.gmra.mxu0 %v1313
      %v1569 = vpop.f32.mrf.mxu0
      %v1570 = vadd.f32 0.0, %v1569
      %v1571 = vpop.f32.mrf.mxu0
      %v1572 = vpop.f32.mrf.mxu0
      %v1573 = vadd.f32 0.0, %v1572
      %v1574 = vpop.f32.mrf.mxu0
      %1575 = vmatprep.mubr.bf16.mxu0 %v1436
      %1576 = vmatmul.mubr.bf16.gmra.mxu0 %v1316
      %v1577 = vpop.f32.mrf.mxu0
      %v1578 = vadd.f32 0.0, %v1577
      %v1579 = vpop.f32.mrf.mxu0
      %v1580 = vpop.f32.mrf.mxu0
      %v1581 = vadd.f32 0.0, %v1580
      %v1582 = vpop.f32.mrf.mxu0
      %1583 = vmatprep.mubr.bf16.mxu0 %v1439
      %1584 = vmatmul.mubr.bf16.gmra.mxu0 %v1319
      %v1585 = vpop.f32.mrf.mxu0
      %v1586 = vadd.f32 0.0, %v1585
      %v1587 = vpop.f32.mrf.mxu0
      %v1588 = vpop.f32.mrf.mxu0
      %v1589 = vadd.f32 0.0, %v1588
      %v1590 = vpop.f32.mrf.mxu0
      %1591 = vmatprep.mubr.bf16.mxu0 %v1442
      %1592 = vmatmul.mubr.bf16.gmra.mxu0 %v1322
      %v1593 = vpop.f32.mrf.mxu0
      %v1594 = vadd.f32 0.0, %v1593
      %v1595 = vpop.f32.mrf.mxu0
      %v1596 = vpop.f32.mrf.mxu0
      %v1597 = vadd.f32 0.0, %v1596
      %v1598 = vpop.f32.mrf.mxu0
      %1599 = vmatprep.mubr.bf16.mxu0 %v1445
      %1600 = vmatmul.mubr.bf16.gmra.mxu0 %v1325
      %v1601 = vpop.f32.mrf.mxu0
      %v1602 = vadd.f32 0.0, %v1601
      %v1603 = vpop.f32.mrf.mxu0
      %v1604 = vpop.f32.mrf.mxu0
      %v1605 = vadd.f32 0.0, %v1604
      %v1606 = vpop.f32.mrf.mxu0
      %1607 = vdwg.mxu0
      %vm1608 = vcmask 23552
      %1609 = vst.msk [vmem:[%s247] sm:$0xff] %vm1608, %v1482
      %1610 = vst.msk [vmem:[%s247 + $0x8] sm:$0xff] %vm1608, %v1485
      %1611 = vst.msk [vmem:[%s247 + $0x10] sm:$0xff] %vm1608, %v1490
      %1612 = vst.msk [vmem:[%s247 + $0x18] sm:$0xff] %vm1608, %v1493
      %1613 = vst.msk [vmem:[%s247 + $0x20] sm:$0xff] %vm1608, %v1498
      %1614 = vst.msk [vmem:[%s247 + $0x28] sm:$0xff] %vm1608, %v1501
      %1615 = vst.msk [vmem:[%s247 + $0x30] sm:$0xff] %vm1608, %v1506
      %1616 = vst.msk [vmem:[%s247 + $0x38] sm:$0xff] %vm1608, %v1509
      %1617 = vst.msk [vmem:[%s247 + $0x40] sm:$0xff] %vm1608, %v1514
      %1618 = vst.msk [vmem:[%s247 + $0x48] sm:$0xff] %vm1608, %v1517
      %1619 = vst.msk [vmem:[%s247 + $0x50] sm:$0xff] %vm1608, %v1522
      %1620 = vst.msk [vmem:[%s247 + $0x58] sm:$0xff] %vm1608, %v1525
      %1621 = vst.msk [vmem:[%s247 + $0x60] sm:$0xff] %vm1608, %v1530
      %1622 = vst.msk [vmem:[%s247 + $0x68] sm:$0xff] %vm1608, %v1533
      %1623 = vst.msk [vmem:[%s247 + $0x70] sm:$0xff] %vm1608, %v1538
      %1624 = vst.msk [vmem:[%s247 + $0x78] sm:$0xff] %vm1608, %v1541
      %1625 = vst.msk [vmem:[%s247 + $0x80] sm:$0xff] %vm1608, %v1546
      %1626 = vst.msk [vmem:[%s247 + $0x88] sm:$0xff] %vm1608, %v1549
      %1627 = vst.msk [vmem:[%s247 + $0x90] sm:$0xff] %vm1608, %v1554
      %1628 = vst.msk [vmem:[%s247 + $0x98] sm:$0xff] %vm1608, %v1557
      %1629 = vst.msk [vmem:[%s247 + $0xa0] sm:$0xff] %vm1608, %v1562
      %1630 = vst.msk [vmem:[%s247 + $0xa8] sm:$0xff] %vm1608, %v1565
      %1631 = vst.msk [vmem:[%s247 + $0xb0] sm:$0xff] %vm1608, %v1570
      %1632 = vst.msk [vmem:[%s247 + $0xb8] sm:$0xff] %vm1608, %v1573
      %1633 = vst.msk [vmem:[%s247 + $0xc0] sm:$0xff] %vm1608, %v1578
      %1634 = vst.msk [vmem:[%s247 + $0xc8] sm:$0xff] %vm1608, %v1581
      %1635 = vst.msk [vmem:[%s247 + $0xd0] sm:$0xff] %vm1608, %v1586
      %1636 = vst.msk [vmem:[%s247 + $0xd8] sm:$0xff] %vm1608, %v1589
      %1637 = vst.msk [vmem:[%s247 + $0xe0] sm:$0xff] %vm1608, %v1594
      %1638 = vst.msk [vmem:[%s247 + $0xe8] sm:$0xff] %vm1608, %v1597
      %1639 = vst.msk [vmem:[%s247 + $0xf0] sm:$0xff] %vm1608, %v1602
      %1640 = vst.msk [vmem:[%s247 + $0xf8] sm:$0xff] %vm1608, %v1605
      %s1641 = smul.u32 8, %s19
      %p1642 = scmp.lt.s32.totalorder %s18, 1
      %s1643 = scalar_select %p1642, %s18, 1
      %p1644 = scmp.lt.s32.totalorder %s1641, 31
      %s1645 = scalar_select %p1644, %s1641, 31
      %s1646 = smul.addr %s1645, 4
      %s1647 = smul.addr %s1643, 128
      %s1648 = sadd.s32 %s1646, %s1647
      %s1649 = smul.addr %s1648, 8
      %s1650 = scalar_lea.vmem %s3, %s1649
      // Predicated region
      $region33: #{enhancenet_forward.11} parent=31 // pred_check
        %p1651 = pneg %p123
      $region34: #{enhancenet_forward.11} parent=31 // pred_check_branch
        %1653 = sbr.rel (%p1651) target = $region36
      $region35: #{enhancenet_forward.11} parent=31 // pred_region
        %s1654 = smul.u32 8, %s19
      $region36: #{enhancenet_forward.11} parent=31 // pred_fallthru
        _
    $region32: #{enhancenet_forward.11} parent=5 // pred_fallthru
      _
    %p1655 = scmp.le.s32.totalorder 2, %s9
    // Predicated region
    $region37: #{enhancenet_forward.11} parent=5 // pred_check
      %p1656 = pneg %p1655
    $region38: #{enhancenet_forward.11} parent=5 // pred_check_branch
      %1658 = sbr.rel (%p1656) target = $region40
    $region39: #{enhancenet_forward.11} parent=5 // pred_region
      %s1659 = ssub.s32 %s9, 2
      // Predicated region
      $region41: #{enhancenet_forward.11} parent=39 // pred_check
        %p1660 = pneg %p129
      $region42: #{enhancenet_forward.11} parent=39 // pred_check_branch
        %1662 = sbr.rel (%p1660) target = $region44
      $region43: #{enhancenet_forward.11} parent=39 // pred_region
        %s1663 = smul.u32 8, %s21
        %p1664 = scmp.lt.s32.totalorder %s20, 1
        %s1665 = scalar_select %p1664, %s20, 1
        %p1666 = scmp.lt.s32.totalorder %s1663, 31
        %s1667 = scalar_select %p1666, %s1663, 31
        %s1668 = smul.addr %s1667, 4
        %s1669 = smul.addr %s1665, 128
        %s1670 = sadd.s32 %s1668, %s1669
        %s1671 = smul.addr %s1670, 8
        %s1672 = scalar_lea.vmem %s3, %s1671
      $region44: #{enhancenet_forward.11} parent=39 // pred_fallthru
        _
    $region40: #{enhancenet_forward.11} parent=5 // pred_fallthru
      _
  $region6: #{enhancenet_forward.11} parent=0 // loop_footer
    %s13 = sadd.s32 1, %s9
  $region7: #{enhancenet_forward.11} parent=0 // loop_footer_branch
    %8 = sbr.rel target = $region3
  $region8: #{enhancenet_forward.11} parent=0 // loop_exit
    _

// kernel: enhancenet_forward.10
$region0: #{enhancenet_forward.10}
  #allocation0 [shape = 'u32[]', space=smem, size = 0x4, offset = 0x4, fixed_abs, tag = 'smem constant byte address 0x4 - core index']
  #allocation1 [shape = 'u32[144,128]{1,0:T(1,128)}', space=vmem, size = 0x12000, scoped, tag = 'internal scratch']
  %s0 = inlined_call_operand.vmem [shape: bf16[2,32,32,16], index: 0, kind: input, shape index: {}]
  %s1 = inlined_call_operand.vmem [shape: bf16[2,4,2,32,16], index: 1, kind: input, shape index: {}]
  %s2 = inlined_call_operand.vmem [shape: bf16[144,16], index: 2, kind: input, shape index: {}]
  %s3 = inlined_call_operand.vmem [shape: bf16[2,32,32,16], index: 3, kind: output, shape index: {}]
  %s4 = sld [smem:[#allocation0]]
  $region45: #{enhancenet_forward.10} parent=0
    _
  %s6 = ssub.s32 1, %s4
  %s7 = scalar_select 0, %s6, %s4
  loop: start=0, step=1, limit=10
  $region2: #{enhancenet_forward.10} parent=0 // loop_pre_header
    _
  $region3: #{enhancenet_forward.10} parent=0 // loop_header
    %s9 = sphi 0, %s13
    %p10 = scmp.ge.s32.totalorder %s9, 10
    %s16 = sphi 0, %s28
    %s17 = sphi 0, %s24
    %s18 = sphi 0, %s16
    %s19 = sphi 0, %s17
    %s20 = sphi 0, %s18
    %s21 = sphi 0, %s19
    %s33 = sphi 0, %s35
    %s36 = sphi 0, %s33
    %s37 = sphi 0, %s36
    %s53 = sphi 0, %s37
    %s61 = sphi 0, %s63
    %s64 = sphi 0, %s61
    %s65 = sphi 0, %s64
    %s81 = sphi 0, %s65
    %s85 = sphi 0, %s85
    %s87 = sphi 0, %s85
    %s88 = sphi 0, %s87
    %s102 = sphi 0, %s88
    %s110 = sphi 0, %s112
    %s113 = sphi 0, %s110
    %s114 = sphi 0, %s113
    %s130 = sphi 0, %s114
  $region4: #{enhancenet_forward.10} parent=0 // loop_header_branch
    %12 = sbr.rel (%p10) target = $region8
  $region5: #{enhancenet_forward.10} parent=0 // loop_body
    %s14 = ssub.s32 %s9, 1
    %s15 = ssub.s32 %s9, 2
    %s22 = sadd.s32 1, %s17
    %p23 = scmp.ge.s32.totalorder %s22, 4
    %s24 = scalar_select %p23, 0, %s22
    %s25 = sadd.s32 1, %s16
    %s26 = scalar_select %p23, %s25, %s16
    %p27 = scmp.ge.s32.totalorder %s26, 2
    %s28 = scalar_select %p27, 0, %s26
    %s29 = ssub.s32 %s16, %s28
    %s30 = ssub.s32 %s17, %s24
    %s31 = sor.u32 %s29, %s30
    %p32 = scmp.eq.s32.totalorder %s31, 0
    %s34 = sadd.s32 %s33, 1
    %s35 = scalar_select %p32, %s33, %s34
    %p38 = pneg %p32
    %p39 = scmp.eq.s32.totalorder %s9, 7
    %p40 = por %p38, %p39
    %p41 = scmp.ne.s32.totalorder %s33, %s36
    %p42 = scmp.eq.s32.totalorder %s9, 0
    %p43 = por %p41, %p42
    %p44 = scmp.ne.s32.totalorder %s33, %s36
    %p45 = scmp.eq.s32.totalorder %s14, 7
    %p46 = por %p44, %p45
    %p47 = scmp.ne.s32.totalorder %s36, %s37
    %p48 = scmp.eq.s32.totalorder %s14, 0
    %p49 = por %p47, %p48
    %p50 = scmp.ne.s32.totalorder %s36, %s37
    %p51 = scmp.eq.s32.totalorder %s15, 7
    %p52 = por %p50, %p51
    %p54 = scmp.ne.s32.totalorder %s37, %s53
    %p55 = scmp.eq.s32.totalorder %s15, 0
    %p56 = por %p54, %p55
    %s57 = ssub.s32 %s16, %s28
    %s58 = ssub.s32 %s17, %s24
    %s59 = sor.u32 %s57, %s58
    %p60 = scmp.eq.s32.totalorder %s59, 0
    %s62 = sadd.s32 %s61, 1
    %s63 = scalar_select %p60, %s61, %s62
    %p66 = pneg %p60
    %p67 = scmp.eq.s32.totalorder %s9, 7
    %p68 = por %p66, %p67
    %p69 = scmp.ne.s32.totalorder %s61, %s64
    %p70 = scmp.eq.s32.totalorder %s9, 0
    %p71 = por %p69, %p70
    %p72 = scmp.ne.s32.totalorder %s61, %s64
    %p73 = scmp.eq.s32.totalorder %s14, 7
    %p74 = por %p72, %p73
    %p75 = scmp.ne.s32.totalorder %s64, %s65
    %p76 = scmp.eq.s32.totalorder %s14, 0
    %p77 = por %p75, %p76
    %p78 = scmp.ne.s32.totalorder %s64, %s65
    %p79 = scmp.eq.s32.totalorder %s15, 7
    %p80 = por %p78, %p79
    %p82 = scmp.ne.s32.totalorder %s65, %s81
    %p83 = scmp.eq.s32.totalorder %s15, 0
    %p84 = por %p82, %p83
    %s86 = sadd.s32 %s85, 1
    %p89 = scmp.eq.s32.totalorder %s9, 7
    %p90 = scmp.ne.s32.totalorder %s85, %s87
    %p91 = scmp.eq.s32.totalorder %s9, 0
    %p92 = por %p90, %p91
    %p93 = scmp.ne.s32.totalorder %s85, %s87
    %p94 = scmp.eq.s32.totalorder %s14, 7
    %p95 = por %p93, %p94
    %p96 = scmp.ne.s32.totalorder %s87, %s88
    %p97 = scmp.eq.s32.totalorder %s14, 0
    %p98 = por %p96, %p97
    %p99 = scmp.ne.s32.totalorder %s87, %s88
    %p100 = scmp.eq.s32.totalorder %s15, 7
    %p101 = por %p99, %p100
    %p103 = scmp.ne.s32.totalorder %s88, %s102
    %p104 = scmp.eq.s32.totalorder %s15, 0
    %p105 = por %p103, %p104
    %s106 = ssub.s32 %s16, %s28
    %s107 = ssub.s32 %s17, %s24
    %s108 = sor.u32 %s106, %s107
    %p109 = scmp.eq.s32.totalorder %s108, 0
    %s111 = sadd.s32 %s110, 1
    %s112 = scalar_select %p109, %s110, %s111
    %p115 = pneg %p109
    %p116 = scmp.eq.s32.totalorder %s9, 7
    %p117 = por %p115, %p116
    %p118 = scmp.ne.s32.totalorder %s110, %s113
    %p119 = scmp.eq.s32.totalorder %s9, 0
    %p120 = por %p118, %p119
    %p121 = scmp.ne.s32.totalorder %s110, %s113
    %p122 = scmp.eq.s32.totalorder %s14, 7
    %p123 = por %p121, %p122
    %p124 = scmp.ne.s32.totalorder %s113, %s114
    %p125 = scmp.eq.s32.totalorder %s14, 0
    %p126 = por %p124, %p125
    %p127 = scmp.ne.s32.totalorder %s113, %s114
    %p128 = scmp.eq.s32.totalorder %s15, 7
    %p129 = por %p127, %p128
    %p131 = scmp.ne.s32.totalorder %s114, %s130
    %p132 = scmp.eq.s32.totalorder %s15, 0
    %p133 = por %p131, %p132
    %p134 = scmp.le.s32.totalorder 1, %s9
    %p135 = scmp.lt.s32.totalorder %s9, 9
    %p136 = pnand %p134, %p135
    %p137 = pneg %p136
    // Predicated region
    $region9: #{enhancenet_forward.10} parent=5 // pred_check
      _
    $region10: #{enhancenet_forward.10} parent=5 // pred_check_branch
      %139 = sbr.rel (%p136) target = $region12
    $region11: #{enhancenet_forward.10} parent=5 // pred_region
      %s140 = ssub.s32 %s9, 1
      // Predicated region
      $region13: #{enhancenet_forward.10} parent=11 // pred_check
        %p141 = pneg %p98
      $region14: #{enhancenet_forward.10} parent=11 // pred_check_branch
        %143 = sbr.rel (%p141) target = $region16
      $region15: #{enhancenet_forward.10} parent=11 // pred_region
        _
      $region16: #{enhancenet_forward.10} parent=11 // pred_fallthru
        _
    $region12: #{enhancenet_forward.10} parent=5 // pred_fallthru
      _
    %p144 = scmp.lt.s32.totalorder %s9, 8
    // Predicated region
    $region17: #{enhancenet_forward.10} parent=5 // pred_check
      %p145 = pneg %p144
    $region18: #{enhancenet_forward.10} parent=5 // pred_check_branch
      %147 = sbr.rel (%p145) target = $region20
    $region19: #{enhancenet_forward.10} parent=5 // pred_region
      // Predicated region
      $region21: #{enhancenet_forward.10} parent=19 // pred_check
        %p148 = pneg %p43
      $region22: #{enhancenet_forward.10} parent=19 // pred_check_branch
        %150 = sbr.rel (%p148) target = $region24
      $region23: #{enhancenet_forward.10} parent=19 // pred_region
        %s151 = smul.u32 8, %s17
        %p152 = scmp.lt.s32.totalorder %s16, 1
        %s153 = scalar_select %p152, %s16, 1
        %p154 = scmp.lt.s32.totalorder %s151, 31
        %s155 = scalar_select %p154, %s151, 31
        %s156 = smul.addr %s155, 4
        %s157 = smul.addr %s153, 128
        %s158 = sadd.s32 %s156, %s157
        %s159 = smul.addr %s158, 4
        %s160 = scalar_lea.vmem %s0, %s159
        %s161 = smul.u32 8, %s17
      $region24: #{enhancenet_forward.10} parent=19 // pred_fallthru
        _
      // Predicated region
      $region25: #{enhancenet_forward.10} parent=19 // pred_check
        %p162 = pneg %p71
      $region26: #{enhancenet_forward.10} parent=19 // pred_check_branch
        %164 = sbr.rel (%p162) target = $region28
      $region27: #{enhancenet_forward.10} parent=19 // pred_region
        %p165 = scmp.lt.s32.totalorder %s16, 1
        %s166 = scalar_select %p165, %s16, 1
        %p167 = scmp.lt.s32.totalorder %s17, 3
        %s168 = scalar_select %p167, %s17, 3
        %s169 = smul.addr %s168, 8
        %s170 = smul.addr %s166, 32
        %s171 = sadd.s32 %s169, %s170
        %s172 = smul.addr %s171, 4
        %s173 = scalar_lea.vmem %s1, %s172
      $region28: #{enhancenet_forward.10} parent=19 // pred_fallthru
        _
    $region20: #{enhancenet_forward.10} parent=5 // pred_fallthru
      _
    %p174 = scmp.le.s32.totalorder 1, %s9
    %p175 = scmp.lt.s32.totalorder %s9, 9
    %p176 = pnand %p174, %p175
    %p177 = pneg %p176
    // Predicated region
    $region29: #{enhancenet_forward.10} parent=5 // pred_check
      _
    $region30: #{enhancenet_forward.10} parent=5 // pred_check_branch
      %179 = sbr.rel (%p176) target = $region32
    $region31: #{enhancenet_forward.10} parent=5 // pred_region
      %s180 = ssub.s32 %s9, 1
      %s181 = smul.u32 8, %s19
      %p182 = scmp.lt.s32.totalorder %s18, 1
      %s183 = scalar_select %p182, %s18, 1
      %p184 = scmp.lt.s32.totalorder %s181, 31
      %s185 = scalar_select %p184, %s181, 31
      %s186 = smul.addr %s185, 4
      %s187 = smul.addr %s183, 128
      %s188 = sadd.s32 %s186, %s187
      %s189 = smul.addr %s188, 4
      %s190 = scalar_lea.vmem %s0, %s189
      %p191 = pneg %p49
      %p192 = pneg %p46
      %p193 = scmp.lt.s32.totalorder %s18, 1
      %s194 = scalar_select %p193, %s18, 1
      %p195 = scmp.lt.s32.totalorder %s19, 3
      %s196 = scalar_select %p195, %s19, 3
      %s197 = smul.addr %s196, 8
      %s198 = smul.addr %s194, 32
      %s199 = sadd.s32 %s197, %s198
      %s200 = smul.addr %s199, 4
      %s201 = scalar_lea.vmem %s1, %s200
      %p202 = pneg %p77
      %p203 = pneg %p74
      %p204 = pneg %p98
      %p205 = pneg %p95
      %p206 = pneg %p126
      %p207 = pneg %p123
      %s208 = smul.u32 8, %s19
      %p209 = scmp.lt.s32.totalorder %s18, 1
      %s210 = scalar_select %p209, %s18, 1
      %p211 = scmp.lt.s32.totalorder %s208, 31
      %s212 = scalar_select %p211, %s208, 31
      %s213 = smul.addr %s212, 4
      %s214 = smul.addr %s210, 128
      %s215 = sadd.s32 %s213, %s214
      %s216 = smul.addr %s215, 4
      %s217 = scalar_lea.vmem %s3, %s216
      %s218 = smul.u32 8, %s19
      %p219 = scmp.lt.s32.totalorder %s18, 1
      %s220 = scalar_select %p219, %s18, 1
      %p221 = scmp.lt.s32.totalorder %s218, 31
      %s222 = scalar_select %p221, %s218, 31
      %s223 = smul.addr %s222, 4
      %s224 = smul.addr %s220, 128
      %s225 = sadd.s32 %s223, %s224
      %s226 = smul.addr %s225, 4
      %s227 = scalar_lea.vmem %s0, %s226
      %s228 = smul.u32 8, %s19
      %p229 = scmp.lt.s32.totalorder %s18, 1
      %s230 = scalar_select %p229, %s18, 1
      %p231 = scmp.lt.s32.totalorder %s19, 3
      %s232 = scalar_select %p231, %s19, 3
      %s233 = smul.addr %s232, 8
      %s234 = smul.addr %s230, 32
      %s235 = sadd.s32 %s233, %s234
      %s236 = smul.addr %s235, 4
      %s237 = scalar_lea.vmem %s1, %s236
      %s238 = smul.u32 8, %s19
      %p239 = scmp.lt.s32.totalorder %s18, 1
      %s240 = scalar_select %p239, %s18, 1
      %p241 = scmp.lt.s32.totalorder %s238, 31
      %s242 = scalar_select %p241, %s238, 31
      %s243 = smul.addr %s242, 4
      %s244 = smul.addr %s240, 128
      %s245 = sadd.s32 %s243, %s244
      %s246 = smul.addr %s245, 4
      %s247 = scalar_lea.vmem %s3, %s246
      %s248 = smul.u32 8, %s19
      %v250 = vld [vmem:[%s227] sm:$0xf]
      %v251 = vld [vmem:[%s227 + $0x4] sm:$0xf]
      %v252 = vld [vmem:[%s227 + $0x8] sm:$0xf]
      %v253 = vld [vmem:[%s227 + $0xc] sm:$0xf]
      %v254 = vld [vmem:[%s227 + $0x10] sm:$0xf]
      %v255 = vld [vmem:[%s227 + $0x14] sm:$0xf]
      %v256 = vld [vmem:[%s227 + $0x18] sm:$0xf]
      %v257 = vld [vmem:[%s227 + $0x1c] sm:$0xf]
      %v258 = vld [vmem:[%s227 + $0x20] sm:$0xf]
      %v259 = vld [vmem:[%s227 + $0x24] sm:$0xf]
      %v260 = vld [vmem:[%s227 + $0x28] sm:$0xf]
      %v261 = vld [vmem:[%s227 + $0x2c] sm:$0xf]
      %v262 = vld [vmem:[%s227 + $0x30] sm:$0xf]
      %v263 = vld [vmem:[%s227 + $0x34] sm:$0xf]
      %v264 = vld [vmem:[%s227 + $0x38] sm:$0xf]
      %v265 = vld [vmem:[%s227 + $0x3c] sm:$0xf]
      %v266 = vld [vmem:[%s227 + $0x40] sm:$0xf]
      %v267 = vld [vmem:[%s227 + $0x44] sm:$0xf]
      %v268 = vld [vmem:[%s227 + $0x48] sm:$0xf]
      %v269 = vld [vmem:[%s227 + $0x4c] sm:$0xf]
      %v270 = vld [vmem:[%s227 + $0x50] sm:$0xf]
      %v271 = vld [vmem:[%s227 + $0x54] sm:$0xf]
      %v272 = vld [vmem:[%s227 + $0x58] sm:$0xf]
      %v273 = vld [vmem:[%s227 + $0x5c] sm:$0xf]
      %v274 = vld [vmem:[%s227 + $0x60] sm:$0xf]
      %v275 = vld [vmem:[%s227 + $0x64] sm:$0xf]
      %v276 = vld [vmem:[%s227 + $0x68] sm:$0xf]
      %v277 = vld [vmem:[%s227 + $0x6c] sm:$0xf]
      %v278 = vld [vmem:[%s227 + $0x70] sm:$0xf]
      %v279 = vld [vmem:[%s227 + $0x74] sm:$0xf]
      %v280 = vld [vmem:[%s227 + $0x78] sm:$0xf]
      %v281 = vld [vmem:[%s227 + $0x7c] sm:$0xf]
      %v282 = vld [vmem:[%s237] sm:$0xf]
      %v283 = vld [vmem:[%s237 + $0x4] sm:$0xf]
      %v284 = vld [vmem:[%s237 + $0x8] sm:$0xf]
      %v285 = vld [vmem:[%s237 + $0xc] sm:$0xf]
      %s286 = scalar_lea.vmem %s237, 16
      %v287 = vld [vmem:[%s286] sm:$0xf]
      %v288 = vld [vmem:[%s286 + $0x4] sm:$0xf]
      %v289 = vld [vmem:[%s286 + $0x8] sm:$0xf]
      %v290 = vld [vmem:[%s286 + $0xc] sm:$0xf]
      %v331 = vunpack.c.l.b16 %v282
      %v332 = vunpack.c.l.b16 %v283
      %v333 = vunpack.c.l.b16 %v284
      %v334 = vunpack.c.l.b16 %v285
      %v335 = vunpack.c.l.b16 %v250
      %v336 = vunpack.c.l.b16 %v251
      %v337 = vunpack.c.l.b16 %v252
      %v338 = vunpack.c.l.b16 %v253
      %v339 = vunpack.c.l.b16 %v254
      %v340 = vunpack.c.l.b16 %v255
      %v341 = vunpack.c.l.b16 %v256
      %v342 = vunpack.c.l.b16 %v257
      %v343 = vunpack.c.l.b16 %v258
      %v344 = vunpack.c.l.b16 %v259
      %v345 = vunpack.c.l.b16 %v260
      %v346 = vunpack.c.l.b16 %v261
      %v347 = vunpack.c.l.b16 %v262
      %v348 = vunpack.c.l.b16 %v263
      %v349 = vunpack.c.l.b16 %v264
      %v350 = vunpack.c.l.b16 %v265
      %v351 = vunpack.c.l.b16 %v266
      %v352 = vunpack.c.l.b16 %v267
      %v353 = vunpack.c.l.b16 %v268
      %v354 = vunpack.c.l.b16 %v269
      %v355 = vunpack.c.l.b16 %v270
      %v356 = vunpack.c.l.b16 %v271
      %v357 = vunpack.c.l.b16 %v272
      %v358 = vunpack.c.l.b16 %v273
      %v359 = vunpack.c.l.b16 %v274
      %v360 = vunpack.c.l.b16 %v275
      %v361 = vunpack.c.l.b16 %v276
      %v362 = vunpack.c.l.b16 %v277
      %v363 = vunpack.c.l.b16 %v278
      %v364 = vunpack.c.l.b16 %v279
      %v365 = vunpack.c.l.b16 %v280
      %v366 = vunpack.c.l.b16 %v281
      %v367 = vunpack.c.l.b16 %v287
      %v368 = vunpack.c.l.b16 %v288
      %v369 = vunpack.c.l.b16 %v289
      %v370 = vunpack.c.l.b16 %v290
      %v371 = vpack.c.b16 %v332, %v331
      %v372 = vpack.c.b16 %v334, %v333
      %v373 = vpack.c.b16 %v336, %v335
      %v374 = vpack.c.b16 %v338, %v337
      %v375 = vpack.c.b16 %v340, %v339
      %v376 = vpack.c.b16 %v342, %v341
      %v377 = vpack.c.b16 %v344, %v343
      %v378 = vpack.c.b16 %v346, %v345
      %v379 = vpack.c.b16 %v348, %v347
      %v380 = vpack.c.b16 %v350, %v349
      %v381 = vpack.c.b16 %v352, %v351
      %v382 = vpack.c.b16 %v354, %v353
      %v383 = vpack.c.b16 %v356, %v355
      %v384 = vpack.c.b16 %v358, %v357
      %v385 = vpack.c.b16 %v360, %v359
      %v386 = vpack.c.b16 %v362, %v361
      %v387 = vpack.c.b16 %v364, %v363
      %v388 = vpack.c.b16 %v366, %v365
      %v389 = vpack.c.b16 %v368, %v367
      %v390 = vpack.c.b16 %v370, %v369
      %vm391 = vsmask.f32 256
      %v393 = vshrl.u32 %v371, 16
      %v395 = vrot.slane %v393, 7
      %v396 = vshll.u32 %v371, 16
      %v398 = vor.u32 %v395, %v396
      %v400 = vshrl.u32 %v372, 16
      %v402 = vrot.slane %v400, 7
      %v403 = vshll.u32 %v372, 16
      %v405 = vor.u32 %v402, %v403
      %v406 = vsel %vm391, %v395, %v405
      %v408 = vshrl.u32 %v373, 16
      %v410 = vrot.slane %v408, 7
      %v411 = vshll.u32 %v373, 16
      %v413 = vor.u32 %v410, %v411
      %v415 = vshrl.u32 %v374, 16
      %v417 = vrot.slane %v415, 7
      %v418 = vshll.u32 %v374, 16
      %v420 = vor.u32 %v417, %v418
      %v421 = vsel %vm391, %v410, %v420
      %v423 = vshrl.u32 %v375, 16
      %v425 = vrot.slane %v423, 7
      %v426 = vshll.u32 %v375, 16
      %v428 = vor.u32 %v425, %v426
      %v430 = vshrl.u32 %v376, 16
      %v432 = vrot.slane %v430, 7
      %v433 = vshll.u32 %v376, 16
      %v435 = vor.u32 %v432, %v433
      %v436 = vsel %vm391, %v425, %v435
      %v438 = vshrl.u32 %v377, 16
      %v440 = vrot.slane %v438, 7
      %v441 = vshll.u32 %v377, 16
      %v443 = vor.u32 %v440, %v441
      %v445 = vshrl.u32 %v378, 16
      %v447 = vrot.slane %v445, 7
      %v448 = vshll.u32 %v378, 16
      %v450 = vor.u32 %v447, %v448
      %v451 = vsel %vm391, %v440, %v450
      %v453 = vshrl.u32 %v379, 16
      %v455 = vrot.slane %v453, 7
      %v456 = vshll.u32 %v379, 16
      %v458 = vor.u32 %v455, %v456
      %v460 = vshrl.u32 %v380, 16
      %v462 = vrot.slane %v460, 7
      %v463 = vshll.u32 %v380, 16
      %v465 = vor.u32 %v462, %v463
      %v466 = vsel %vm391, %v455, %v465
      %v468 = vshrl.u32 %v381, 16
      %v470 = vrot.slane %v468, 7
      %v471 = vshll.u32 %v381, 16
      %v473 = vor.u32 %v470, %v471
      %v475 = vshrl.u32 %v382, 16
      %v477 = vrot.slane %v475, 7
      %v478 = vshll.u32 %v382, 16
      %v480 = vor.u32 %v477, %v478
      %v481 = vsel %vm391, %v470, %v480
      %v483 = vshrl.u32 %v383, 16
      %v485 = vrot.slane %v483, 7
      %v486 = vshll.u32 %v383, 16
      %v488 = vor.u32 %v485, %v486
      %v490 = vshrl.u32 %v384, 16
      %v492 = vrot.slane %v490, 7
      %v493 = vshll.u32 %v384, 16
      %v495 = vor.u32 %v492, %v493
      %v496 = vsel %vm391, %v485, %v495
      %v498 = vshrl.u32 %v385, 16
      %v500 = vrot.slane %v498, 7
      %v501 = vshll.u32 %v385, 16
      %v503 = vor.u32 %v500, %v501
      %v505 = vshrl.u32 %v386, 16
      %v507 = vrot.slane %v505, 7
      %v508 = vshll.u32 %v386, 16
      %v510 = vor.u32 %v507, %v508
      %v511 = vsel %vm391, %v500, %v510
      %v513 = vshrl.u32 %v387, 16
      %v515 = vrot.slane %v513, 7
      %v516 = vshll.u32 %v387, 16
      %v518 = vor.u32 %v515, %v516
      %v520 = vshrl.u32 %v388, 16
      %v522 = vrot.slane %v520, 7
      %v523 = vshll.u32 %v388, 16
      %v525 = vor.u32 %v522, %v523
      %v526 = vsel %vm391, %v515, %v525
      %v528 = vshrl.u32 %v389, 16
      %v530 = vrot.slane %v528, 7
      %v531 = vshll.u32 %v389, 16
      %v533 = vor.u32 %v530, %v531
      %v535 = vshrl.u32 %v390, 16
      %v537 = vrot.slane %v535, 7
      %v538 = vshll.u32 %v390, 16
      %v540 = vor.u32 %v537, %v538
      %v541 = vsel %vm391, %v530, %v540
      %vm562 = vcmask 1040384
      %vm563 = vmand %vm562, %vm391
      %v564 = vsel %vm563, 0, %v398
      %v565 = vsel %vm563, 0, %v413
      %v566 = vsel %vm563, 0, %v428
      %v567 = vsel %vm563, 0, %v443
      %v568 = vsel %vm563, 0, %v458
      %v569 = vsel %vm563, 0, %v473
      %v570 = vsel %vm563, 0, %v488
      %v571 = vsel %vm563, 0, %v503
      %v572 = vsel %vm563, 0, %v518
      %v573 = vsel %vm563, 0, %v533
      %v574 = vsel %vm563, %v402, 0
      %v575 = vsel %vm563, %v417, 0
      %v576 = vsel %vm563, %v432, 0
      %v577 = vsel %vm563, %v447, 0
      %v578 = vsel %vm563, %v462, 0
      %v579 = vsel %vm563, %v477, 0
      %v580 = vsel %vm563, %v492, 0
      %v581 = vsel %vm563, %v507, 0
      %v582 = vsel %vm563, %v522, 0
      %v583 = vsel %vm563, %v537, 0
      %vm584 = vsmask.f32 7424
      %v586 = vshrl.u32 %v564, 16
      %v588 = vshll.u32 %v564, 16
      %v590 = vrot.slane %v588, 1
      %v591 = vor.u32 %v586, %v590
      %v593 = vshll.u32 %v406, 16
      %v595 = vrot.slane %v593, 1
      %v596 = vsel %vm584, %v591, %v595
      %v597 = vshrl.u32 %v406, 16
      %v599 = vor.u32 %v597, %v595
      %v601 = vshll.u32 %v574, 16
      %v603 = vrot.slane %v601, 1
      %v604 = vsel %vm584, %v599, %v603
      %v606 = vshrl.u32 %v565, 16
      %v608 = vshll.u32 %v565, 16
      %v610 = vrot.slane %v608, 1
      %v611 = vor.u32 %v606, %v610
      %v613 = vshll.u32 %v421, 16
      %v615 = vrot.slane %v613, 1
      %v616 = vsel %vm584, %v611, %v615
      %v617 = vshrl.u32 %v421, 16
      %v619 = vor.u32 %v617, %v615
      %v621 = vshll.u32 %v575, 16
      %v623 = vrot.slane %v621, 1
      %v624 = vsel %vm584, %v619, %v623
      %v626 = vshrl.u32 %v566, 16
      %v628 = vshll.u32 %v566, 16
      %v630 = vrot.slane %v628, 1
      %v631 = vor.u32 %v626, %v630
      %v633 = vshll.u32 %v436, 16
      %v635 = vrot.slane %v633, 1
      %v636 = vsel %vm584, %v631, %v635
      %v637 = vshrl.u32 %v436, 16
      %v639 = vor.u32 %v637, %v635
      %v641 = vshll.u32 %v576, 16
      %v643 = vrot.slane %v641, 1
      %v644 = vsel %vm584, %v639, %v643
      %v646 = vshrl.u32 %v567, 16
      %v648 = vshll.u32 %v567, 16
      %v650 = vrot.slane %v648, 1
      %v651 = vor.u32 %v646, %v650
      %v653 = vshll.u32 %v451, 16
      %v655 = vrot.slane %v653, 1
      %v656 = vsel %vm584, %v651, %v655
      %v657 = vshrl.u32 %v451, 16
      %v659 = vor.u32 %v657, %v655
      %v661 = vshll.u32 %v577, 16
      %v663 = vrot.slane %v661, 1
      %v664 = vsel %vm584, %v659, %v663
      %v666 = vshrl.u32 %v568, 16
      %v668 = vshll.u32 %v568, 16
      %v670 = vrot.slane %v668, 1
      %v671 = vor.u32 %v666, %v670
      %v673 = vshll.u32 %v466, 16
      %v675 = vrot.slane %v673, 1
      %v676 = vsel %vm584, %v671, %v675
      %v677 = vshrl.u32 %v466, 16
      %v679 = vor.u32 %v677, %v675
      %v681 = vshll.u32 %v578, 16
      %v683 = vrot.slane %v681, 1
      %v684 = vsel %vm584, %v679, %v683
      %v686 = vshrl.u32 %v569, 16
      %v688 = vshll.u32 %v569, 16
      %v690 = vrot.slane %v688, 1
      %v691 = vor.u32 %v686, %v690
      %v693 = vshll.u32 %v481, 16
      %v695 = vrot.slane %v693, 1
      %v696 = vsel %vm584, %v691, %v695
      %v697 = vshrl.u32 %v481, 16
      %v699 = vor.u32 %v697, %v695
      %v701 = vshll.u32 %v579, 16
      %v703 = vrot.slane %v701, 1
      %v704 = vsel %vm584, %v699, %v703
      %v706 = vshrl.u32 %v570, 16
      %v708 = vshll.u32 %v570, 16
      %v710 = vrot.slane %v708, 1
      %v711 = vor.u32 %v706, %v710
      %v713 = vshll.u32 %v496, 16
      %v715 = vrot.slane %v713, 1
      %v716 = vsel %vm584, %v711, %v715
      %v717 = vshrl.u32 %v496, 16
      %v719 = vor.u32 %v717, %v715
      %v721 = vshll.u32 %v580, 16
      %v723 = vrot.slane %v721, 1
      %v724 = vsel %vm584, %v719, %v723
      %v726 = vshrl.u32 %v571, 16
      %v728 = vshll.u32 %v571, 16
      %v730 = vrot.slane %v728, 1
      %v731 = vor.u32 %v726, %v730
      %v733 = vshll.u32 %v511, 16
      %v735 = vrot.slane %v733, 1
      %v736 = vsel %vm584, %v731, %v735
      %v737 = vshrl.u32 %v511, 16
      %v739 = vor.u32 %v737, %v735
      %v741 = vshll.u32 %v581, 16
      %v743 = vrot.slane %v741, 1
      %v744 = vsel %vm584, %v739, %v743
      %745 = vrot.lane.b32.xlu0 %v596, 16
      %v746 = vpop.permute.xlu0 %745
      %747 = vrot.lane.b32.xlu0 %v604, 16
      %v748 = vpop.permute.xlu0 %747
      %749 = vrot.lane.b32.xlu0 %v616, 16
      %v750 = vpop.permute.xlu0 %749
      %751 = vrot.lane.b32.xlu0 %v624, 16
      %v752 = vpop.permute.xlu0 %751
      %753 = vrot.lane.b32.xlu0 %v636, 16
      %v754 = vpop.permute.xlu0 %753
      %755 = vrot.lane.b32.xlu0 %v644, 16
      %v756 = vpop.permute.xlu0 %755
      %757 = vrot.lane.b32.xlu0 %v656, 16
      %v758 = vpop.permute.xlu0 %757
      %759 = vrot.lane.b32.xlu0 %v664, 16
      %v760 = vpop.permute.xlu0 %759
      %761 = vrot.lane.b32.xlu0 %v676, 16
      %v762 = vpop.permute.xlu0 %761
      %763 = vrot.lane.b32.xlu0 %v684, 16
      %v764 = vpop.permute.xlu0 %763
      %765 = vrot.lane.b32.xlu0 %v696, 16
      %v766 = vpop.permute.xlu0 %765
      %767 = vrot.lane.b32.xlu0 %v704, 16
      %v768 = vpop.permute.xlu0 %767
      %769 = vrot.lane.b32.xlu0 %v716, 16
      %v770 = vpop.permute.xlu0 %769
      %771 = vrot.lane.b32.xlu0 %v724, 16
      %v772 = vpop.permute.xlu0 %771
      %773 = vrot.lane.b32.xlu0 %v736, 16
      %v774 = vpop.permute.xlu0 %773
      %775 = vrot.lane.b32.xlu0 %v744, 16
      %v776 = vpop.permute.xlu0 %775
      %vm793 = vcmask 1046528
      %v794 = vrot.slane %v564, 1
      %v795 = vrot.slane %v406, 1
      %v796 = vsel %vm793, %v794, %v795
      %v797 = vrot.slane %v574, 1
      %v798 = vsel %vm793, %v795, %v797
      %v799 = vrot.slane %v565, 1
      %v800 = vrot.slane %v421, 1
      %v801 = vsel %vm793, %v799, %v800
      %v802 = vrot.slane %v575, 1
      %v803 = vsel %vm793, %v800, %v802
      %v804 = vrot.slane %v566, 1
      %v805 = vrot.slane %v436, 1
      %v806 = vsel %vm793, %v804, %v805
      %v807 = vrot.slane %v576, 1
      %v808 = vsel %vm793, %v805, %v807
      %v809 = vrot.slane %v567, 1
      %v810 = vrot.slane %v451, 1
      %v811 = vsel %vm793, %v809, %v810
      %v812 = vrot.slane %v577, 1
      %v813 = vsel %vm793, %v810, %v812
      %v814 = vrot.slane %v568, 1
      %v815 = vrot.slane %v466, 1
      %v816 = vsel %vm793, %v814, %v815
      %v817 = vrot.slane %v578, 1
      %v818 = vsel %vm793, %v815, %v817
      %v819 = vrot.slane %v569, 1
      %v820 = vrot.slane %v481, 1
      %v821 = vsel %vm793, %v819, %v820
      %v822 = vrot.slane %v579, 1
      %v823 = vsel %vm793, %v820, %v822
      %v824 = vrot.slane %v570, 1
      %v825 = vrot.slane %v496, 1
      %v826 = vsel %vm793, %v824, %v825
      %v827 = vrot.slane %v580, 1
      %v828 = vsel %vm793, %v825, %v827
      %v829 = vrot.slane %v571, 1
      %v830 = vrot.slane %v511, 1
      %v831 = vsel %vm793, %v829, %v830
      %v832 = vrot.slane %v581, 1
      %v833 = vsel %vm793, %v830, %v832
      %834 = vrot.lane.b32.xlu0 %v796, 32
      %v835 = vpop.permute.xlu0 %834
      %836 = vrot.lane.b32.xlu0 %v798, 32
      %v837 = vpop.permute.xlu0 %836
      %838 = vrot.lane.b32.xlu0 %v801, 32
      %v839 = vpop.permute.xlu0 %838
      %840 = vrot.lane.b32.xlu0 %v803, 32
      %v841 = vpop.permute.xlu0 %840
      %842 = vrot.lane.b32.xlu0 %v806, 32
      %v843 = vpop.permute.xlu0 %842
      %844 = vrot.lane.b32.xlu0 %v808, 32
      %v845 = vpop.permute.xlu0 %844
      %846 = vrot.lane.b32.xlu0 %v811, 32
      %v847 = vpop.permute.xlu0 %846
      %848 = vrot.lane.b32.xlu0 %v813, 32
      %v849 = vpop.permute.xlu0 %848
      %850 = vrot.lane.b32.xlu0 %v816, 32
      %v851 = vpop.permute.xlu0 %850
      %852 = vrot.lane.b32.xlu0 %v818, 32
      %v853 = vpop.permute.xlu0 %852
      %854 = vrot.lane.b32.xlu0 %v821, 32
      %v855 = vpop.permute.xlu0 %854
      %856 = vrot.lane.b32.xlu0 %v823, 32
      %v857 = vpop.permute.xlu0 %856
      %858 = vrot.lane.b32.xlu0 %v826, 32
      %v859 = vpop.permute.xlu0 %858
      %860 = vrot.lane.b32.xlu0 %v828, 32
      %v861 = vpop.permute.xlu0 %860
      %862 = vrot.lane.b32.xlu0 %v831, 32
      %v863 = vpop.permute.xlu0 %862
      %864 = vrot.lane.b32.xlu0 %v833, 32
      %v865 = vpop.permute.xlu0 %864
      %867 = vrot.lane.b32.xlu0 %v565, 48
      %v868 = vpop.permute.xlu0 %867
      %869 = vrot.lane.b32.xlu0 %v421, 48
      %v870 = vpop.permute.xlu0 %869
      %871 = vrot.lane.b32.xlu0 %v566, 48
      %v872 = vpop.permute.xlu0 %871
      %873 = vrot.lane.b32.xlu0 %v436, 48
      %v874 = vpop.permute.xlu0 %873
      %875 = vrot.lane.b32.xlu0 %v567, 48
      %v876 = vpop.permute.xlu0 %875
      %877 = vrot.lane.b32.xlu0 %v451, 48
      %v878 = vpop.permute.xlu0 %877
      %879 = vrot.lane.b32.xlu0 %v568, 48
      %v880 = vpop.permute.xlu0 %879
      %881 = vrot.lane.b32.xlu0 %v466, 48
      %v882 = vpop.permute.xlu0 %881
      %883 = vrot.lane.b32.xlu0 %v569, 48
      %v884 = vpop.permute.xlu0 %883
      %885 = vrot.lane.b32.xlu0 %v481, 48
      %v886 = vpop.permute.xlu0 %885
      %887 = vrot.lane.b32.xlu0 %v570, 48
      %v888 = vpop.permute.xlu0 %887
      %889 = vrot.lane.b32.xlu0 %v496, 48
      %v890 = vpop.permute.xlu0 %889
      %891 = vrot.lane.b32.xlu0 %v571, 48
      %v892 = vpop.permute.xlu0 %891
      %893 = vrot.lane.b32.xlu0 %v511, 48
      %v894 = vpop.permute.xlu0 %893
      %895 = vrot.lane.b32.xlu0 %v572, 48
      %v896 = vpop.permute.xlu0 %895
      %897 = vrot.lane.b32.xlu0 %v526, 48
      %v898 = vpop.permute.xlu0 %897
      %v900 = vshrl.u32 %v572, 16
      %v902 = vshll.u32 %v572, 16
      %v904 = vrot.slane %v902, 1
      %v905 = vor.u32 %v900, %v904
      %v907 = vshll.u32 %v526, 16
      %v909 = vrot.slane %v907, 1
      %v910 = vsel %vm584, %v905, %v909
      %v911 = vshrl.u32 %v526, 16
      %v913 = vor.u32 %v911, %v909
      %v915 = vshll.u32 %v582, 16
      %v917 = vrot.slane %v915, 1
      %v918 = vsel %vm584, %v913, %v917
      %919 = vrot.lane.b32.xlu0 %v616, 64
      %v920 = vpop.permute.xlu0 %919
      %921 = vrot.lane.b32.xlu0 %v624, 64
      %v922 = vpop.permute.xlu0 %921
      %923 = vrot.lane.b32.xlu0 %v636, 64
      %v924 = vpop.permute.xlu0 %923
      %925 = vrot.lane.b32.xlu0 %v644, 64
      %v926 = vpop.permute.xlu0 %925
      %927 = vrot.lane.b32.xlu0 %v656, 64
      %v928 = vpop.permute.xlu0 %927
      %929 = vrot.lane.b32.xlu0 %v664, 64
      %v930 = vpop.permute.xlu0 %929
      %931 = vrot.lane.b32.xlu0 %v676, 64
      %v932 = vpop.permute.xlu0 %931
      %933 = vrot.lane.b32.xlu0 %v684, 64
      %v934 = vpop.permute.xlu0 %933
      %935 = vrot.lane.b32.xlu0 %v696, 64
      %v936 = vpop.permute.xlu0 %935
      %937 = vrot.lane.b32.xlu0 %v704, 64
      %v938 = vpop.permute.xlu0 %937
      %939 = vrot.lane.b32.xlu0 %v716, 64
      %v940 = vpop.permute.xlu0 %939
      %941 = vrot.lane.b32.xlu0 %v724, 64
      %v942 = vpop.permute.xlu0 %941
      %943 = vrot.lane.b32.xlu0 %v736, 64
      %v944 = vpop.permute.xlu0 %943
      %945 = vrot.lane.b32.xlu0 %v744, 64
      %v946 = vpop.permute.xlu0 %945
      %947 = vrot.lane.b32.xlu0 %v910, 64
      %v948 = vpop.permute.xlu0 %947
      %949 = vrot.lane.b32.xlu0 %v918, 64
      %v950 = vpop.permute.xlu0 %949
      %v952 = vrot.slane %v572, 1
      %v953 = vrot.slane %v526, 1
      %v954 = vsel %vm793, %v952, %v953
      %v955 = vrot.slane %v582, 1
      %v956 = vsel %vm793, %v953, %v955
      %957 = vrot.lane.b32.xlu0 %v801, 80
      %v958 = vpop.permute.xlu0 %957
      %959 = vrot.lane.b32.xlu0 %v803, 80
      %v960 = vpop.permute.xlu0 %959
      %961 = vrot.lane.b32.xlu0 %v806, 80
      %v962 = vpop.permute.xlu0 %961
      %963 = vrot.lane.b32.xlu0 %v808, 80
      %v964 = vpop.permute.xlu0 %963
      %965 = vrot.lane.b32.xlu0 %v811, 80
      %v966 = vpop.permute.xlu0 %965
      %967 = vrot.lane.b32.xlu0 %v813, 80
      %v968 = vpop.permute.xlu0 %967
      %969 = vrot.lane.b32.xlu0 %v816, 80
      %v970 = vpop.permute.xlu0 %969
      %971 = vrot.lane.b32.xlu0 %v818, 80
      %v972 = vpop.permute.xlu0 %971
      %973 = vrot.lane.b32.xlu0 %v821, 80
      %v974 = vpop.permute.xlu0 %973
      %975 = vrot.lane.b32.xlu0 %v823, 80
      %v976 = vpop.permute.xlu0 %975
      %977 = vrot.lane.b32.xlu0 %v826, 80
      %v978 = vpop.permute.xlu0 %977
      %979 = vrot.lane.b32.xlu0 %v828, 80
      %v980 = vpop.permute.xlu0 %979
      %981 = vrot.lane.b32.xlu0 %v831, 80
      %v982 = vpop.permute.xlu0 %981
      %983 = vrot.lane.b32.xlu0 %v833, 80
      %v984 = vpop.permute.xlu0 %983
      %985 = vrot.lane.b32.xlu0 %v954, 80
      %v986 = vpop.permute.xlu0 %985
      %987 = vrot.lane.b32.xlu0 %v956, 80
      %v988 = vpop.permute.xlu0 %987
      %990 = vrot.lane.b32.xlu0 %v566, 96
      %v991 = vpop.permute.xlu0 %990
      %992 = vrot.lane.b32.xlu0 %v436, 96
      %v993 = vpop.permute.xlu0 %992
      %994 = vrot.lane.b32.xlu0 %v567, 96
      %v995 = vpop.permute.xlu0 %994
      %996 = vrot.lane.b32.xlu0 %v451, 96
      %v997 = vpop.permute.xlu0 %996
      %998 = vrot.lane.b32.xlu0 %v568, 96
      %v999 = vpop.permute.xlu0 %998
      %1000 = vrot.lane.b32.xlu0 %v466, 96
      %v1001 = vpop.permute.xlu0 %1000
      %1002 = vrot.lane.b32.xlu0 %v569, 96
      %v1003 = vpop.permute.xlu0 %1002
      %1004 = vrot.lane.b32.xlu0 %v481, 96
      %v1005 = vpop.permute.xlu0 %1004
      %1006 = vrot.lane.b32.xlu0 %v570, 96
      %v1007 = vpop.permute.xlu0 %1006
      %1008 = vrot.lane.b32.xlu0 %v496, 96
      %v1009 = vpop.permute.xlu0 %1008
      %1010 = vrot.lane.b32.xlu0 %v571, 96
      %v1011 = vpop.permute.xlu0 %1010
      %1012 = vrot.lane.b32.xlu0 %v511, 96
      %v1013 = vpop.permute.xlu0 %1012
      %1014 = vrot.lane.b32.xlu0 %v572, 96
      %v1015 = vpop.permute.xlu0 %1014
      %1016 = vrot.lane.b32.xlu0 %v526, 96
      %v1017 = vpop.permute.xlu0 %1016
      %1018 = vrot.lane.b32.xlu0 %v573, 96
      %v1019 = vpop.permute.xlu0 %1018
      %1020 = vrot.lane.b32.xlu0 %v541, 96
      %v1021 = vpop.permute.xlu0 %1020
      %v1023 = vshrl.u32 %v573, 16
      %v1025 = vshll.u32 %v573, 16
      %v1027 = vrot.slane %v1025, 1
      %v1028 = vor.u32 %v1023, %v1027
      %v1030 = vshll.u32 %v541, 16
      %v1032 = vrot.slane %v1030, 1
      %v1033 = vsel %vm584, %v1028, %v1032
      %v1034 = vshrl.u32 %v541, 16
      %v1036 = vor.u32 %v1034, %v1032
      %v1038 = vshll.u32 %v583, 16
      %v1040 = vrot.slane %v1038, 1
      %v1041 = vsel %vm584, %v1036, %v1040
      %1042 = vrot.lane.b32.xlu0 %v636, 112
      %v1043 = vpop.permute.xlu0 %1042
      %1044 = vrot.lane.b32.xlu0 %v644, 112
      %v1045 = vpop.permute.xlu0 %1044
      %1046 = vrot.lane.b32.xlu0 %v656, 112
      %v1047 = vpop.permute.xlu0 %1046
      %1048 = vrot.lane.b32.xlu0 %v664, 112
      %v1049 = vpop.permute.xlu0 %1048
      %1050 = vrot.lane.b32.xlu0 %v676, 112
      %v1051 = vpop.permute.xlu0 %1050
      %1052 = vrot.lane.b32.xlu0 %v684, 112
      %v1053 = vpop.permute.xlu0 %1052
      %1054 = vrot.lane.b32.xlu0 %v696, 112
      %v1055 = vpop.permute.xlu0 %1054
      %1056 = vrot.lane.b32.xlu0 %v704, 112
      %v1057 = vpop.permute.xlu0 %1056
      %1058 = vrot.lane.b32.xlu0 %v716, 112
      %v1059 = vpop.permute.xlu0 %1058
      %1060 = vrot.lane.b32.xlu0 %v724, 112
      %v1061 = vpop.permute.xlu0 %1060
      %1062 = vrot.lane.b32.xlu0 %v736, 112
      %v1063 = vpop.permute.xlu0 %1062
      %1064 = vrot.lane.b32.xlu0 %v744, 112
      %v1065 = vpop.permute.xlu0 %1064
      %1066 = vrot.lane.b32.xlu0 %v910, 112
      %v1067 = vpop.permute.xlu0 %1066
      %1068 = vrot.lane.b32.xlu0 %v918, 112
      %v1069 = vpop.permute.xlu0 %1068
      %1070 = vrot.lane.b32.xlu0 %v1033, 112
      %v1071 = vpop.permute.xlu0 %1070
      %1072 = vrot.lane.b32.xlu0 %v1041, 112
      %v1073 = vpop.permute.xlu0 %1072
      %v1075 = vrot.slane %v573, 1
      %v1076 = vrot.slane %v541, 1
      %v1077 = vsel %vm793, %v1075, %v1076
      %v1078 = vrot.slane %v583, 1
      %v1079 = vsel %vm793, %v1076, %v1078
      %vm1080 = vcmask 130048
      %v1082 = vsel %vm1080, %v564, %v746
      %v1084 = vsel %vm1080, %v406, %v748
      %v1086 = vsel %vm1080, %v565, %v750
      %v1088 = vsel %vm1080, %v421, %v752
      %v1090 = vsel %vm1080, %v566, %v754
      %v1092 = vsel %vm1080, %v436, %v756
      %v1094 = vsel %vm1080, %v567, %v758
      %v1096 = vsel %vm1080, %v451, %v760
      %v1098 = vsel %vm1080, %v568, %v762
      %v1100 = vsel %vm1080, %v466, %v764
      %v1102 = vsel %vm1080, %v569, %v766
      %v1104 = vsel %vm1080, %v481, %v768
      %v1106 = vsel %vm1080, %v570, %v770
      %v1108 = vsel %vm1080, %v496, %v772
      %v1110 = vsel %vm1080, %v571, %v774
      %v1112 = vsel %vm1080, %v511, %v776
      %vm1113 = vcmask 261120
      %v1115 = vsel %vm1113, %v1082, %v835
      %v1117 = vsel %vm1113, %v1084, %v837
      %v1119 = vsel %vm1113, %v1086, %v839
      %v1121 = vsel %vm1113, %v1088, %v841
      %v1123 = vsel %vm1113, %v1090, %v843
      %v1125 = vsel %vm1113, %v1092, %v845
      %v1127 = vsel %vm1113, %v1094, %v847
      %v1129 = vsel %vm1113, %v1096, %v849
      %v1131 = vsel %vm1113, %v1098, %v851
      %v1133 = vsel %vm1113, %v1100, %v853
      %v1135 = vsel %vm1113, %v1102, %v855
      %v1137 = vsel %vm1113, %v1104, %v857
      %v1139 = vsel %vm1113, %v1106, %v859
      %v1141 = vsel %vm1113, %v1108, %v861
      %v1143 = vsel %vm1113, %v1110, %v863
      %v1145 = vsel %vm1113, %v1112, %v865
      %vm1146 = vcmask 392192
      %v1148 = vsel %vm1146, %v1115, %v868
      %v1150 = vsel %vm1146, %v1117, %v870
      %v1152 = vsel %vm1146, %v1119, %v872
      %v1154 = vsel %vm1146, %v1121, %v874
      %v1156 = vsel %vm1146, %v1123, %v876
      %v1158 = vsel %vm1146, %v1125, %v878
      %v1160 = vsel %vm1146, %v1127, %v880
      %v1162 = vsel %vm1146, %v1129, %v882
      %v1164 = vsel %vm1146, %v1131, %v884
      %v1166 = vsel %vm1146, %v1133, %v886
      %v1168 = vsel %vm1146, %v1135, %v888
      %v1170 = vsel %vm1146, %v1137, %v890
      %v1172 = vsel %vm1146, %v1139, %v892
      %v1174 = vsel %vm1146, %v1141, %v894
      %v1176 = vsel %vm1146, %v1143, %v896
      %v1178 = vsel %vm1146, %v1145, %v898
      %vm1179 = vcmask 523264
      %v1181 = vsel %vm1179, %v1148, %v920
      %v1183 = vsel %vm1179, %v1150, %v922
      %v1185 = vsel %vm1179, %v1152, %v924
      %v1187 = vsel %vm1179, %v1154, %v926
      %v1189 = vsel %vm1179, %v1156, %v928
      %v1191 = vsel %vm1179, %v1158, %v930
      %v1193 = vsel %vm1179, %v1160, %v932
      %v1195 = vsel %vm1179, %v1162, %v934
      %v1197 = vsel %vm1179, %v1164, %v936
      %v1199 = vsel %vm1179, %v1166, %v938
      %v1201 = vsel %vm1179, %v1168, %v940
      %v1203 = vsel %vm1179, %v1170, %v942
      %v1205 = vsel %vm1179, %v1172, %v944
      %v1207 = vsel %vm1179, %v1174, %v946
      %v1209 = vsel %vm1179, %v1176, %v948
      %v1211 = vsel %vm1179, %v1178, %v950
      %vm1212 = vcmask 654336
      %v1214 = vsel %vm1212, %v1181, %v958
      %v1216 = vsel %vm1212, %v1183, %v960
      %v1218 = vsel %vm1212, %v1185, %v962
      %v1220 = vsel %vm1212, %v1187, %v964
      %v1222 = vsel %vm1212, %v1189, %v966
      %v1224 = vsel %vm1212, %v1191, %v968
      %v1226 = vsel %vm1212, %v1193, %v970
      %v1228 = vsel %vm1212, %v1195, %v972
      %v1230 = vsel %vm1212, %v1197, %v974
      %v1232 = vsel %vm1212, %v1199, %v976
      %v1234 = vsel %vm1212, %v1201, %v978
      %v1236 = vsel %vm1212, %v1203, %v980
      %v1238 = vsel %vm1212, %v1205, %v982
      %v1240 = vsel %vm1212, %v1207, %v984
      %v1242 = vsel %vm1212, %v1209, %v986
      %v1244 = vsel %vm1212, %v1211, %v988
      %vm1245 = vcmask 785408
      %v1247 = vsel %vm1245, %v1214, %v991
      %v1249 = vsel %vm1245, %v1216, %v993
      %v1251 = vsel %vm1245, %v1218, %v995
      %v1253 = vsel %vm1245, %v1220, %v997
      %v1255 = vsel %vm1245, %v1222, %v999
      %v1257 = vsel %vm1245, %v1224, %v1001
      %v1259 = vsel %vm1245, %v1226, %v1003
      %v1261 = vsel %vm1245, %v1228, %v1005
      %v1263 = vsel %vm1245, %v1230, %v1007
      %v1265 = vsel %vm1245, %v1232, %v1009
      %v1267 = vsel %vm1245, %v1234, %v1011
      %v1269 = vsel %vm1245, %v1236, %v1013
      %v1271 = vsel %vm1245, %v1238, %v1015
      %v1273 = vsel %vm1245, %v1240, %v1017
      %v1275 = vsel %vm1245, %v1242, %v1019
      %v1277 = vsel %vm1245, %v1244, %v1021
      %vm1278 = vcmask 916480
      %v1280 = vsel %vm1278, %v1247, %v1043
      %v1283 = vsel %vm1278, %v1249, %v1045
      %v1286 = vsel %vm1278, %v1251, %v1047
      %v1289 = vsel %vm1278, %v1253, %v1049
      %v1292 = vsel %vm1278, %v1255, %v1051
      %v1295 = vsel %vm1278, %v1257, %v1053
      %v1298 = vsel %vm1278, %v1259, %v1055
      %v1301 = vsel %vm1278, %v1261, %v1057
      %v1304 = vsel %vm1278, %v1263, %v1059
      %v1307 = vsel %vm1278, %v1265, %v1061
      %v1310 = vsel %vm1278, %v1267, %v1063
      %v1313 = vsel %vm1278, %v1269, %v1065
      %v1316 = vsel %vm1278, %v1271, %v1067
      %v1319 = vsel %vm1278, %v1273, %v1069
      %v1322 = vsel %vm1278, %v1275, %v1071
      %v1325 = vsel %vm1278, %v1277, %v1073
      %v1327 = vld [vmem:[%s2] sm:$0xf]
      %v1328 = vld [vmem:[%s2 + $0x4] sm:$0xf]
      %v1329 = vld [vmem:[%s2 + $0x8] sm:$0xf]
      %v1330 = vld [vmem:[%s2 + $0xc] sm:$0xf]
      %v1331 = vld [vmem:[%s2 + $0x10] sm:$0xf]
      %v1332 = vld [vmem:[%s2 + $0x14] sm:$0xf]
      %v1333 = vld [vmem:[%s2 + $0x18] sm:$0xf]
      %v1334 = vld [vmem:[%s2 + $0x1c] sm:$0xf]
      %v1335 = vld [vmem:[%s2 + $0x20] sm:$0xf]
      %v1336 = vld [vmem:[%s2 + $0x24] sm:$0xf]
      %v1337 = vld [vmem:[%s2 + $0x28] sm:$0xf]
      %v1338 = vld [vmem:[%s2 + $0x2c] sm:$0xf]
      %v1339 = vld [vmem:[%s2 + $0x30] sm:$0xf]
      %v1340 = vld [vmem:[%s2 + $0x34] sm:$0xf]
      %v1341 = vld [vmem:[%s2 + $0x38] sm:$0xf]
      %v1342 = vld [vmem:[%s2 + $0x3c] sm:$0xf]
      %v1343 = vld [vmem:[%s2 + $0x40] sm:$0xf]
      %v1344 = vld [vmem:[%s2 + $0x44] sm:$0xf]
      %v1363 = vunpack.c.l.b16 %v1327
      %v1364 = vunpack.c.l.b16 %v1328
      %v1365 = vunpack.c.l.b16 %v1329
      %v1366 = vunpack.c.l.b16 %v1330
      %v1367 = vunpack.c.l.b16 %v1331
      %v1368 = vunpack.c.l.b16 %v1332
      %v1369 = vunpack.c.l.b16 %v1333
      %v1370 = vunpack.c.l.b16 %v1334
      %v1371 = vunpack.c.l.b16 %v1335
      %v1372 = vunpack.c.l.b16 %v1336
      %v1373 = vunpack.c.l.b16 %v1337
      %v1374 = vunpack.c.l.b16 %v1338
      %v1375 = vunpack.c.l.b16 %v1339
      %v1376 = vunpack.c.l.b16 %v1340
      %v1377 = vunpack.c.l.b16 %v1341
      %v1378 = vunpack.c.l.b16 %v1342
      %v1379 = vunpack.c.l.b16 %v1343
      %v1380 = vunpack.c.l.b16 %v1344
      %v1381 = vpack.c.b16 %v1364, %v1363
      %v1382 = vpack.c.b16 %v1366, %v1365
      %v1383 = vpack.c.b16 %v1368, %v1367
      %v1384 = vpack.c.b16 %v1370, %v1369
      %v1385 = vpack.c.b16 %v1372, %v1371
      %v1386 = vpack.c.b16 %v1374, %v1373
      %v1387 = vpack.c.b16 %v1376, %v1375
      %v1388 = vpack.c.b16 %v1378, %v1377
      %v1389 = vpack.c.b16 %v1380, %v1379
      %v1400 = vsel %vm1080, %v806, 0
      %v1403 = vsel %vm1080, %v808, 0
      %v1406 = vsel %vm1080, %v811, 0
      %v1409 = vsel %vm1080, %v813, 0
      %v1412 = vsel %vm1080, %v816, 0
      %v1415 = vsel %vm1080, %v818, 0
      %v1418 = vsel %vm1080, %v821, 0
      %v1421 = vsel %vm1080, %v823, 0
      %v1424 = vsel %vm1080, %v826, 0
      %v1427 = vsel %vm1080, %v828, 0
      %v1430 = vsel %vm1080, %v831, 0
      %v1433 = vsel %vm1080, %v833, 0
      %v1436 = vsel %vm1080, %v954, 0
      %v1439 = vsel %vm1080, %v956, 0
      %v1442 = vsel %vm1080, %v1077, 0
      %v1445 = vsel %vm1080, %v1079, 0
      %1447 = vmatprep.subr.bf16.mxu0 0
      %1448 = vmatpush1.bf16.msra.mxu0 %v1388
      %1449 = vmatprep.subr.bf16.mxu0 0
      %1450 = vmatpush1.bf16.msra.mxu0 %v1387
      %1451 = vmatprep.subr.bf16.mxu0 0
      %1452 = vmatpush1.bf16.msra.mxu0 %v1386
      %1453 = vmatprep.subr.bf16.mxu0 0
      %1454 = vmatpush1.bf16.msra.mxu0 %v1385
      %1455 = vmatprep.subr.bf16.mxu0 0
      %1456 = vmatpush1.bf16.msra.mxu0 %v1384
      %1457 = vmatprep.subr.bf16.mxu0 0
      %1458 = vmatpush1.bf16.msra.mxu0 %v1383
      %1459 = vmatprep.subr.bf16.mxu0 0
      %1460 = vmatpush1.bf16.msra.mxu0 %v1382
      %1461 = vmatprep.subr.bf16.mxu0 0
      %1462 = vmatpush1.bf16.msra.mxu0 %v1381
      %1463 = vmatprep.subr.bf16.mxu0 0
      %1464 = vmatpush2.bf16.msra.mxu0 0
      %1465 = vmatprep.subr.bf16.mxu0 0
      %1466 = vmatpush2.bf16.msra.mxu0 0
      %1467 = vmatprep.subr.bf16.mxu0 0
      %1468 = vmatpush2.bf16.msra.mxu0 0
      %1469 = vmatprep.subr.bf16.mxu0 0
      %1470 = vmatpush2.bf16.msra.mxu0 0
      %1471 = vmatprep.subr.bf16.mxu0 0
      %1472 = vmatpush2.bf16.msra.mxu0 0
      %1473 = vmatprep.subr.bf16.mxu0 0
      %1474 = vmatpush2.bf16.msra.mxu0 0
      %1475 = vmatprep.subr.bf16.mxu0 0
      %1476 = vmatpush2.bf16.msra.mxu0 0
      %1477 = vmatprep.subr.bf16.mxu0 0
      %1478 = vmatpush2.bf16.msra.mxu0 %v1389
      %1479 = vmatprep.mubr.bf16.mxu0 %v1400
      %1480 = vmatmul.mubr.bf16.gmra.mxu0 %v1280
      %v1481 = vpop.f32.mrf.mxu0
      %v1482 = vadd.f32 0.0, %v1481
      %v1483 = vpop.f32.mrf.mxu0
      %v1484 = vpop.f32.mrf.mxu0
      %v1485 = vadd.f32 0.0, %v1484
      %v1486 = vpop.f32.mrf.mxu0
      %1487 = vmatprep.mubr.bf16.mxu0 %v1403
      %1488 = vmatmul.mubr.bf16.gmra.mxu0 %v1283
      %v1489 = vpop.f32.mrf.mxu0
      %v1490 = vadd.f32 0.0, %v1489
      %v1491 = vpop.f32.mrf.mxu0
      %v1492 = vpop.f32.mrf.mxu0
      %v1493 = vadd.f32 0.0, %v1492
      %v1494 = vpop.f32.mrf.mxu0
      %1495 = vmatprep.mubr.bf16.mxu0 %v1406
      %1496 = vmatmul.mubr.bf16.gmra.mxu0 %v1286
      %v1497 = vpop.f32.mrf.mxu0
      %v1498 = vadd.f32 0.0, %v1497
      %v1499 = vpop.f32.mrf.mxu0
      %v1500 = vpop.f32.mrf.mxu0
      %v1501 = vadd.f32 0.0, %v1500
      %v1502 = vpop.f32.mrf.mxu0
      %1503 = vmatprep.mubr.bf16.mxu0 %v1409
      %1504 = vmatmul.mubr.bf16.gmra.mxu0 %v1289
      %v1505 = vpop.f32.mrf.mxu0
      %v1506 = vadd.f32 0.0, %v1505
      %v1507 = vpop.f32.mrf.mxu0
      %v1508 = vpop.f32.mrf.mxu0
      %v1509 = vadd.f32 0.0, %v1508
      %v1510 = vpop.f32.mrf.mxu0
      %1511 = vmatprep.mubr.bf16.mxu0 %v1412
      %1512 = vmatmul.mubr.bf16.gmra.mxu0 %v1292
      %v1513 = vpop.f32.mrf.mxu0
      %v1514 = vadd.f32 0.0, %v1513
      %v1515 = vpop.f32.mrf.mxu0
      %v1516 = vpop.f32.mrf.mxu0
      %v1517 = vadd.f32 0.0, %v1516
      %v1518 = vpop.f32.mrf.mxu0
      %1519 = vmatprep.mubr.bf16.mxu0 %v1415
      %1520 = vmatmul.mubr.bf16.gmra.mxu0 %v1295
      %v1521 = vpop.f32.mrf.mxu0
      %v1522 = vadd.f32 0.0, %v1521
      %v1523 = vpop.f32.mrf.mxu0
      %v1524 = vpop.f32.mrf.mxu0
      %v1525 = vadd.f32 0.0, %v1524
      %v1526 = vpop.f32.mrf.mxu0
      %1527 = vmatprep.mubr.bf16.mxu0 %v1418
      %1528 = vmatmul.mubr.bf16.gmra.mxu0 %v1298
      %v1529 = vpop.f32.mrf.mxu0
      %v1530 = vadd.f32 0.0, %v1529
      %v1531 = vpop.f32.mrf.mxu0
      %v1532 = vpop.f32.mrf.mxu0
      %v1533 = vadd.f32 0.0, %v1532
      %v1534 = vpop.f32.mrf.mxu0
      %1535 = vmatprep.mubr.bf16.mxu0 %v1421
      %1536 = vmatmul.mubr.bf16.gmra.mxu0 %v1301
      %v1537 = vpop.f32.mrf.mxu0
      %v1538 = vadd.f32 0.0, %v1537
      %v1539 = vpop.f32.mrf.mxu0
      %v1540 = vpop.f32.mrf.mxu0
      %v1541 = vadd.f32 0.0, %v1540
      %v1542 = vpop.f32.mrf.mxu0
      %1543 = vmatprep.mubr.bf16.mxu0 %v1424
      %1544 = vmatmul.mubr.bf16.gmra.mxu0 %v1304
      %v1545 = vpop.f32.mrf.mxu0
      %v1546 = vadd.f32 0.0, %v1545
      %v1547 = vpop.f32.mrf.mxu0
      %v1548 = vpop.f32.mrf.mxu0
      %v1549 = vadd.f32 0.0, %v1548
      %v1550 = vpop.f32.mrf.mxu0
      %1551 = vmatprep.mubr.bf16.mxu0 %v1427
      %1552 = vmatmul.mubr.bf16.gmra.mxu0 %v1307
      %v1553 = vpop.f32.mrf.mxu0
      %v1554 = vadd.f32 0.0, %v1553
      %v1555 = vpop.f32.mrf.mxu0
      %v1556 = vpop.f32.mrf.mxu0
      %v1557 = vadd.f32 0.0, %v1556
      %v1558 = vpop.f32.mrf.mxu0
      %1559 = vmatprep.mubr.bf16.mxu0 %v1430
      %1560 = vmatmul.mubr.bf16.gmra.mxu0 %v1310
      %v1561 = vpop.f32.mrf.mxu0
      %v1562 = vadd.f32 0.0, %v1561
      %v1563 = vpop.f32.mrf.mxu0
      %v1564 = vpop.f32.mrf.mxu0
      %v1565 = vadd.f32 0.0, %v1564
      %v1566 = vpop.f32.mrf.mxu0
      %1567 = vmatprep.mubr.bf16.mxu0 %v1433
      %1568 = vmatmul.mubr.bf16.gmra.mxu0 %v1313
      %v1569 = vpop.f32.mrf.mxu0
      %v1570 = vadd.f32 0.0, %v1569
      %v1571 = vpop.f32.mrf.mxu0
      %v1572 = vpop.f32.mrf.mxu0
      %v1573 = vadd.f32 0.0, %v1572
      %v1574 = vpop.f32.mrf.mxu0
      %1575 = vmatprep.mubr.bf16.mxu0 %v1436
      %1576 = vmatmul.mubr.bf16.gmra.mxu0 %v1316
      %v1577 = vpop.f32.mrf.mxu0
      %v1578 = vadd.f32 0.0, %v1577
      %v1579 = vpop.f32.mrf.mxu0
      %v1580 = vpop.f32.mrf.mxu0
      %v1581 = vadd.f32 0.0, %v1580
      %v1582 = vpop.f32.mrf.mxu0
      %1583 = vmatprep.mubr.bf16.mxu0 %v1439
      %1584 = vmatmul.mubr.bf16.gmra.mxu0 %v1319
      %v1585 = vpop.f32.mrf.mxu0
      %v1586 = vadd.f32 0.0, %v1585
      %v1587 = vpop.f32.mrf.mxu0
      %v1588 = vpop.f32.mrf.mxu0
      %v1589 = vadd.f32 0.0, %v1588
      %v1590 = vpop.f32.mrf.mxu0
      %1591 = vmatprep.mubr.bf16.mxu0 %v1442
      %1592 = vmatmul.mubr.bf16.gmra.mxu0 %v1322
      %v1593 = vpop.f32.mrf.mxu0
      %v1594 = vadd.f32 0.0, %v1593
      %v1595 = vpop.f32.mrf.mxu0
      %v1596 = vpop.f32.mrf.mxu0
      %v1597 = vadd.f32 0.0, %v1596
      %v1598 = vpop.f32.mrf.mxu0
      %1599 = vmatprep.mubr.bf16.mxu0 %v1445
      %1600 = vmatmul.mubr.bf16.gmra.mxu0 %v1325
      %v1601 = vpop.f32.mrf.mxu0
      %v1602 = vadd.f32 0.0, %v1601
      %v1603 = vpop.f32.mrf.mxu0
      %v1604 = vpop.f32.mrf.mxu0
      %v1605 = vadd.f32 0.0, %v1604
      %v1606 = vpop.f32.mrf.mxu0
      %1607 = vdwg.mxu0
      %v1608 = vmax.f32 %v1482, 0.0
      %v1609 = vmax.f32 %v1485, 0.0
      %v1610 = vmax.f32 %v1490, 0.0
      %v1611 = vmax.f32 %v1493, 0.0
      %v1612 = vmax.f32 %v1498, 0.0
      %v1613 = vmax.f32 %v1501, 0.0
      %v1614 = vmax.f32 %v1506, 0.0
      %v1615 = vmax.f32 %v1509, 0.0
      %v1616 = vmax.f32 %v1514, 0.0
      %v1617 = vmax.f32 %v1517, 0.0
      %v1618 = vmax.f32 %v1522, 0.0
      %v1619 = vmax.f32 %v1525, 0.0
      %v1620 = vmax.f32 %v1530, 0.0
      %v1621 = vmax.f32 %v1533, 0.0
      %v1622 = vmax.f32 %v1538, 0.0
      %v1623 = vmax.f32 %v1541, 0.0
      %v1624 = vmax.f32 %v1546, 0.0
      %v1625 = vmax.f32 %v1549, 0.0
      %v1626 = vmax.f32 %v1554, 0.0
      %v1627 = vmax.f32 %v1557, 0.0
      %v1628 = vmax.f32 %v1562, 0.0
      %v1629 = vmax.f32 %v1565, 0.0
      %v1630 = vmax.f32 %v1570, 0.0
      %v1631 = vmax.f32 %v1573, 0.0
      %v1632 = vmax.f32 %v1578, 0.0
      %v1633 = vmax.f32 %v1581, 0.0
      %v1634 = vmax.f32 %v1586, 0.0
      %v1635 = vmax.f32 %v1589, 0.0
      %v1636 = vmax.f32 %v1594, 0.0
      %v1637 = vmax.f32 %v1597, 0.0
      %v1638 = vmax.f32 %v1602, 0.0
      %v1639 = vmax.f32 %v1605, 0.0
      %v1640 = vpack.c.bf16 %v1609, %v1608
      %v1641 = vpack.c.bf16 %v1611, %v1610
      %v1642 = vpack.c.bf16 %v1613, %v1612
      %v1643 = vpack.c.bf16 %v1615, %v1614
      %v1644 = vpack.c.bf16 %v1617, %v1616
      %v1645 = vpack.c.bf16 %v1619, %v1618
      %v1646 = vpack.c.bf16 %v1621, %v1620
      %v1647 = vpack.c.bf16 %v1623, %v1622
      %v1648 = vpack.c.bf16 %v1625, %v1624
      %v1649 = vpack.c.bf16 %v1627, %v1626
      %v1650 = vpack.c.bf16 %v1629, %v1628
      %v1651 = vpack.c.bf16 %v1631, %v1630
      %v1652 = vpack.c.bf16 %v1633, %v1632
      %v1653 = vpack.c.bf16 %v1635, %v1634
      %v1654 = vpack.c.bf16 %v1637, %v1636
      %v1655 = vpack.c.bf16 %v1639, %v1638
      %v1672 = vunpack.c.l.b16 %v1640
      %v1673 = vunpack.c.h.b16 %v1640
      %v1674 = vunpack.c.l.b16 %v1641
      %v1675 = vunpack.c.h.b16 %v1641
      %v1676 = vunpack.c.l.b16 %v1642
      %v1677 = vunpack.c.h.b16 %v1642
      %v1678 = vunpack.c.l.b16 %v1643
      %v1679 = vunpack.c.h.b16 %v1643
      %v1680 = vunpack.c.l.b16 %v1644
      %v1681 = vunpack.c.h.b16 %v1644
      %v1682 = vunpack.c.l.b16 %v1645
      %v1683 = vunpack.c.h.b16 %v1645
      %v1684 = vunpack.c.l.b16 %v1646
      %v1685 = vunpack.c.h.b16 %v1646
      %v1686 = vunpack.c.l.b16 %v1647
      %v1687 = vunpack.c.h.b16 %v1647
      %v1688 = vunpack.c.l.b16 %v1648
      %v1689 = vunpack.c.h.b16 %v1648
      %v1690 = vunpack.c.l.b16 %v1649
      %v1691 = vunpack.c.h.b16 %v1649
      %v1692 = vunpack.c.l.b16 %v1650
      %v1693 = vunpack.c.h.b16 %v1650
      %v1694 = vunpack.c.l.b16 %v1651
      %v1695 = vunpack.c.h.b16 %v1651
      %v1696 = vunpack.c.l.b16 %v1652
      %v1697 = vunpack.c.h.b16 %v1652
      %v1698 = vunpack.c.l.b16 %v1653
      %v1699 = vunpack.c.h.b16 %v1653
      %v1700 = vunpack.c.l.b16 %v1654
      %v1701 = vunpack.c.h.b16 %v1654
      %v1702 = vunpack.c.l.b16 %v1655
      %v1703 = vunpack.c.h.b16 %v1655
      %v1704 = vpack.c.b16 %v1672, %v1672
      %v1705 = vpack.c.b16 %v1673, %v1673
      %v1706 = vpack.c.b16 %v1674, %v1674
      %v1707 = vpack.c.b16 %v1675, %v1675
      %v1708 = vpack.c.b16 %v1676, %v1676
      %v1709 = vpack.c.b16 %v1677, %v1677
      %v1710 = vpack.c.b16 %v1678, %v1678
      %v1711 = vpack.c.b16 %v1679, %v1679
      %v1712 = vpack.c.b16 %v1680, %v1680
      %v1713 = vpack.c.b16 %v1681, %v1681
      %v1714 = vpack.c.b16 %v1682, %v1682
      %v1715 = vpack.c.b16 %v1683, %v1683
      %v1716 = vpack.c.b16 %v1684, %v1684
      %v1717 = vpack.c.b16 %v1685, %v1685
      %v1718 = vpack.c.b16 %v1686, %v1686
      %v1719 = vpack.c.b16 %v1687, %v1687
      %v1720 = vpack.c.b16 %v1688, %v1688
      %v1721 = vpack.c.b16 %v1689, %v1689
      %v1722 = vpack.c.b16 %v1690, %v1690
      %v1723 = vpack.c.b16 %v1691, %v1691
      %v1724 = vpack.c.b16 %v1692, %v1692
      %v1725 = vpack.c.b16 %v1693, %v1693
      %v1726 = vpack.c.b16 %v1694, %v1694
      %v1727 = vpack.c.b16 %v1695, %v1695
      %v1728 = vpack.c.b16 %v1696, %v1696
      %v1729 = vpack.c.b16 %v1697, %v1697
      %v1730 = vpack.c.b16 %v1698, %v1698
      %v1731 = vpack.c.b16 %v1699, %v1699
      %v1732 = vpack.c.b16 %v1700, %v1700
      %v1733 = vpack.c.b16 %v1701, %v1701
      %v1734 = vpack.c.b16 %v1702, %v1702
      %v1735 = vpack.c.b16 %v1703, %v1703
      %vm1768 = vcmask 125952
      %1769 = vst.msk [vmem:[%s247] sm:$0xf] %vm1768, %v1704
      %1770 = vst.msk [vmem:[%s247 + $0x4] sm:$0xf] %vm1768, %v1705
      %1771 = vst.msk [vmem:[%s247 + $0x8] sm:$0xf] %vm1768, %v1706
      %1772 = vst.msk [vmem:[%s247 + $0xc] sm:$0xf] %vm1768, %v1707
      %1773 = vst.msk [vmem:[%s247 + $0x10] sm:$0xf] %vm1768, %v1708
      %1774 = vst.msk [vmem:[%s247 + $0x14] sm:$0xf] %vm1768, %v1709
      %1775 = vst.msk [vmem:[%s247 + $0x18] sm:$0xf] %vm1768, %v1710
      %1776 = vst.msk [vmem:[%s247 + $0x1c] sm:$0xf] %vm1768, %v1711
      %1777 = vst.msk [vmem:[%s247 + $0x20] sm:$0xf] %vm1768, %v1712
      %1778 = vst.msk [vmem:[%s247 + $0x24] sm:$0xf] %vm1768, %v1713
      %1779 = vst.msk [vmem:[%s247 + $0x28] sm:$0xf] %vm1768, %v1714
      %1780 = vst.msk [vmem:[%s247 + $0x2c] sm:$0xf] %vm1768, %v1715
      %1781 = vst.msk [vmem:[%s247 + $0x30] sm:$0xf] %vm1768, %v1716
      %1782 = vst.msk [vmem:[%s247 + $0x34] sm:$0xf] %vm1768, %v1717
      %1783 = vst.msk [vmem:[%s247 + $0x38] sm:$0xf] %vm1768, %v1718
      %1784 = vst.msk [vmem:[%s247 + $0x3c] sm:$0xf] %vm1768, %v1719
      %1785 = vst.msk [vmem:[%s247 + $0x40] sm:$0xf] %vm1768, %v1720
      %1786 = vst.msk [vmem:[%s247 + $0x44] sm:$0xf] %vm1768, %v1721
      %1787 = vst.msk [vmem:[%s247 + $0x48] sm:$0xf] %vm1768, %v1722
      %1788 = vst.msk [vmem:[%s247 + $0x4c] sm:$0xf] %vm1768, %v1723
      %1789 = vst.msk [vmem:[%s247 + $0x50] sm:$0xf] %vm1768, %v1724
      %1790 = vst.msk [vmem:[%s247 + $0x54] sm:$0xf] %vm1768, %v1725
      %1791 = vst.msk [vmem:[%s247 + $0x58] sm:$0xf] %vm1768, %v1726
      %1792 = vst.msk [vmem:[%s247 + $0x5c] sm:$0xf] %vm1768, %v1727
      %1793 = vst.msk [vmem:[%s247 + $0x60] sm:$0xf] %vm1768, %v1728
      %1794 = vst.msk [vmem:[%s247 + $0x64] sm:$0xf] %vm1768, %v1729
      %1795 = vst.msk [vmem:[%s247 + $0x68] sm:$0xf] %vm1768, %v1730
      %1796 = vst.msk [vmem:[%s247 + $0x6c] sm:$0xf] %vm1768, %v1731
      %1797 = vst.msk [vmem:[%s247 + $0x70] sm:$0xf] %vm1768, %v1732
      %1798 = vst.msk [vmem:[%s247 + $0x74] sm:$0xf] %vm1768, %v1733
      %1799 = vst.msk [vmem:[%s247 + $0x78] sm:$0xf] %vm1768, %v1734
      %1800 = vst.msk [vmem:[%s247 + $0x7c] sm:$0xf] %vm1768, %v1735
      %s1801 = smul.u32 8, %s19
      %p1802 = scmp.lt.s32.totalorder %s18, 1
      %s1803 = scalar_select %p1802, %s18, 1
      %p1804 = scmp.lt.s32.totalorder %s1801, 31
      %s1805 = scalar_select %p1804, %s1801, 31
      %s1806 = smul.addr %s1805, 4
      %s1807 = smul.addr %s1803, 128
      %s1808 = sadd.s32 %s1806, %s1807
      %s1809 = smul.addr %s1808, 4
      %s1810 = scalar_lea.vmem %s3, %s1809
      // Predicated region
      $region33: #{enhancenet_forward.10} parent=31 // pred_check
        %p1811 = pneg %p123
      $region34: #{enhancenet_forward.10} parent=31 // pred_check_branch
        %1813 = sbr.rel (%p1811) target = $region36
      $region35: #{enhancenet_forward.10} parent=31 // pred_region
        %s1814 = smul.u32 8, %s19
      $region36: #{enhancenet_forward.10} parent=31 // pred_fallthru
        _
    $region32: #{enhancenet_forward.10} parent=5 // pred_fallthru
      _
    %p1815 = scmp.le.s32.totalorder 2, %s9
    // Predicated region
    $region37: #{enhancenet_forward.10} parent=5 // pred_check
      %p1816 = pneg %p1815
    $region38: #{enhancenet_forward.10} parent=5 // pred_check_branch
      %1818 = sbr.rel (%p1816) target = $region40
    $region39: #{enhancenet_forward.10} parent=5 // pred_region
      %s1819 = ssub.s32 %s9, 2
      // Predicated region
      $region41: #{enhancenet_forward.10} parent=39 // pred_check
        %p1820 = pneg %p129
      $region42: #{enhancenet_forward.10} parent=39 // pred_check_branch
        %1822 = sbr.rel (%p1820) target = $region44
      $region43: #{enhancenet_forward.10} parent=39 // pred_region
        %s1823 = smul.u32 8, %s21
        %p1824 = scmp.lt.s32.totalorder %s20, 1
        %s1825 = scalar_select %p1824, %s20, 1
        %p1826 = scmp.lt.s32.totalorder %s1823, 31
        %s1827 = scalar_select %p1826, %s1823, 31
        %s1828 = smul.addr %s1827, 4
        %s1829 = smul.addr %s1825, 128
        %s1830 = sadd.s32 %s1828, %s1829
        %s1831 = smul.addr %s1830, 4
        %s1832 = scalar_lea.vmem %s3, %s1831
      $region44: #{enhancenet_forward.10} parent=39 // pred_fallthru
        _
    $region40: #{enhancenet_forward.10} parent=5 // pred_fallthru
      _
  $region6: #{enhancenet_forward.10} parent=0 // loop_footer
    %s13 = sadd.s32 1, %s9
  $region7: #{enhancenet_forward.10} parent=0 // loop_footer_branch
    %8 = sbr.rel target = $region3
  $region8: #{enhancenet_forward.10} parent=0 // loop_exit
    _

// kernel: enhancenet_forward.9
$region0: #{enhancenet_forward.9}
  #allocation0 [shape = 'u32[]', space=smem, size = 0x4, offset = 0x4, fixed_abs, tag = 'smem constant byte address 0x4 - core index']
  #allocation1 [shape = 'u32[144,128]{1,0:T(1,128)}', space=vmem, size = 0x12000, scoped, tag = 'internal scratch']
  %s0 = inlined_call_operand.vmem [shape: bf16[2,16,16,16], index: 0, kind: input, shape index: {}]
  %s1 = inlined_call_operand.vmem [shape: bf16[2,2,2,16,16], index: 1, kind: input, shape index: {}]
  %s2 = inlined_call_operand.vmem [shape: bf16[144,16], index: 2, kind: input, shape index: {}]
  %s3 = inlined_call_operand.vmem [shape: bf16[2,32,32,16], index: 3, kind: output, shape index: {}]
  %s4 = sld [smem:[#allocation0]]
  $region45: #{enhancenet_forward.9} parent=0
    _
  %s6 = ssub.s32 1, %s4
  %s7 = scalar_select 0, %s6, %s4
  loop: start=0, step=1, limit=6
  $region2: #{enhancenet_forward.9} parent=0 // loop_pre_header
    _
  $region3: #{enhancenet_forward.9} parent=0 // loop_header
    %s9 = sphi 0, %s13
    %p10 = scmp.ge.s32.totalorder %s9, 6
    %s16 = sphi 0, %s28
    %s17 = sphi 0, %s24
    %s18 = sphi 0, %s16
    %s19 = sphi 0, %s17
    %s20 = sphi 0, %s18
    %s21 = sphi 0, %s19
    %s33 = sphi 0, %s35
    %s36 = sphi 0, %s33
    %s37 = sphi 0, %s36
    %s53 = sphi 0, %s37
    %s61 = sphi 0, %s63
    %s64 = sphi 0, %s61
    %s65 = sphi 0, %s64
    %s81 = sphi 0, %s65
    %s85 = sphi 0, %s85
    %s87 = sphi 0, %s85
    %s88 = sphi 0, %s87
    %s102 = sphi 0, %s88
    %s110 = sphi 0, %s112
    %s113 = sphi 0, %s110
    %s114 = sphi 0, %s113
    %s130 = sphi 0, %s114
  $region4: #{enhancenet_forward.9} parent=0 // loop_header_branch
    %12 = sbr.rel (%p10) target = $region8
  $region5: #{enhancenet_forward.9} parent=0 // loop_body
    %s14 = ssub.s32 %s9, 1
    %s15 = ssub.s32 %s9, 2
    %s22 = sadd.s32 1, %s17
    %p23 = scmp.ge.s32.totalorder %s22, 2
    %s24 = scalar_select %p23, 0, %s22
    %s25 = sadd.s32 1, %s16
    %s26 = scalar_select %p23, %s25, %s16
    %p27 = scmp.ge.s32.totalorder %s26, 2
    %s28 = scalar_select %p27, 0, %s26
    %s29 = ssub.s32 %s16, %s28
    %s30 = ssub.s32 %s17, %s24
    %s31 = sor.u32 %s29, %s30
    %p32 = scmp.eq.s32.totalorder %s31, 0
    %s34 = sadd.s32 %s33, 1
    %s35 = scalar_select %p32, %s33, %s34
    %p38 = pneg %p32
    %p39 = scmp.eq.s32.totalorder %s9, 3
    %p40 = por %p38, %p39
    %p41 = scmp.ne.s32.totalorder %s33, %s36
    %p42 = scmp.eq.s32.totalorder %s9, 0
    %p43 = por %p41, %p42
    %p44 = scmp.ne.s32.totalorder %s33, %s36
    %p45 = scmp.eq.s32.totalorder %s14, 3
    %p46 = por %p44, %p45
    %p47 = scmp.ne.s32.totalorder %s36, %s37
    %p48 = scmp.eq.s32.totalorder %s14, 0
    %p49 = por %p47, %p48
    %p50 = scmp.ne.s32.totalorder %s36, %s37
    %p51 = scmp.eq.s32.totalorder %s15, 3
    %p52 = por %p50, %p51
    %p54 = scmp.ne.s32.totalorder %s37, %s53
    %p55 = scmp.eq.s32.totalorder %s15, 0
    %p56 = por %p54, %p55
    %s57 = ssub.s32 %s16, %s28
    %s58 = ssub.s32 %s17, %s24
    %s59 = sor.u32 %s57, %s58
    %p60 = scmp.eq.s32.totalorder %s59, 0
    %s62 = sadd.s32 %s61, 1
    %s63 = scalar_select %p60, %s61, %s62
    %p66 = pneg %p60
    %p67 = scmp.eq.s32.totalorder %s9, 3
    %p68 = por %p66, %p67
    %p69 = scmp.ne.s32.totalorder %s61, %s64
    %p70 = scmp.eq.s32.totalorder %s9, 0
    %p71 = por %p69, %p70
    %p72 = scmp.ne.s32.totalorder %s61, %s64
    %p73 = scmp.eq.s32.totalorder %s14, 3
    %p74 = por %p72, %p73
    %p75 = scmp.ne.s32.totalorder %s64, %s65
    %p76 = scmp.eq.s32.totalorder %s14, 0
    %p77 = por %p75, %p76
    %p78 = scmp.ne.s32.totalorder %s64, %s65
    %p79 = scmp.eq.s32.totalorder %s15, 3
    %p80 = por %p78, %p79
    %p82 = scmp.ne.s32.totalorder %s65, %s81
    %p83 = scmp.eq.s32.totalorder %s15, 0
    %p84 = por %p82, %p83
    %s86 = sadd.s32 %s85, 1
    %p89 = scmp.eq.s32.totalorder %s9, 3
    %p90 = scmp.ne.s32.totalorder %s85, %s87
    %p91 = scmp.eq.s32.totalorder %s9, 0
    %p92 = por %p90, %p91
    %p93 = scmp.ne.s32.totalorder %s85, %s87
    %p94 = scmp.eq.s32.totalorder %s14, 3
    %p95 = por %p93, %p94
    %p96 = scmp.ne.s32.totalorder %s87, %s88
    %p97 = scmp.eq.s32.totalorder %s14, 0
    %p98 = por %p96, %p97
    %p99 = scmp.ne.s32.totalorder %s87, %s88
    %p100 = scmp.eq.s32.totalorder %s15, 3
    %p101 = por %p99, %p100
    %p103 = scmp.ne.s32.totalorder %s88, %s102
    %p104 = scmp.eq.s32.totalorder %s15, 0
    %p105 = por %p103, %p104
    %s106 = ssub.s32 %s16, %s28
    %s107 = ssub.s32 %s17, %s24
    %s108 = sor.u32 %s106, %s107
    %p109 = scmp.eq.s32.totalorder %s108, 0
    %s111 = sadd.s32 %s110, 1
    %s112 = scalar_select %p109, %s110, %s111
    %p115 = pneg %p109
    %p116 = scmp.eq.s32.totalorder %s9, 3
    %p117 = por %p115, %p116
    %p118 = scmp.ne.s32.totalorder %s110, %s113
    %p119 = scmp.eq.s32.totalorder %s9, 0
    %p120 = por %p118, %p119
    %p121 = scmp.ne.s32.totalorder %s110, %s113
    %p122 = scmp.eq.s32.totalorder %s14, 3
    %p123 = por %p121, %p122
    %p124 = scmp.ne.s32.totalorder %s113, %s114
    %p125 = scmp.eq.s32.totalorder %s14, 0
    %p126 = por %p124, %p125
    %p127 = scmp.ne.s32.totalorder %s113, %s114
    %p128 = scmp.eq.s32.totalorder %s15, 3
    %p129 = por %p127, %p128
    %p131 = scmp.ne.s32.totalorder %s114, %s130
    %p132 = scmp.eq.s32.totalorder %s15, 0
    %p133 = por %p131, %p132
    %p134 = scmp.le.s32.totalorder 1, %s9
    %p135 = scmp.lt.s32.totalorder %s9, 5
    %p136 = pnand %p134, %p135
    %p137 = pneg %p136
    // Predicated region
    $region9: #{enhancenet_forward.9} parent=5 // pred_check
      _
    $region10: #{enhancenet_forward.9} parent=5 // pred_check_branch
      %139 = sbr.rel (%p136) target = $region12
    $region11: #{enhancenet_forward.9} parent=5 // pred_region
      %s140 = ssub.s32 %s9, 1
      // Predicated region
      $region13: #{enhancenet_forward.9} parent=11 // pred_check
        %p141 = pneg %p98
      $region14: #{enhancenet_forward.9} parent=11 // pred_check_branch
        %143 = sbr.rel (%p141) target = $region16
      $region15: #{enhancenet_forward.9} parent=11 // pred_region
        _
      $region16: #{enhancenet_forward.9} parent=11 // pred_fallthru
        _
    $region12: #{enhancenet_forward.9} parent=5 // pred_fallthru
      _
    %p144 = scmp.lt.s32.totalorder %s9, 4
    // Predicated region
    $region17: #{enhancenet_forward.9} parent=5 // pred_check
      %p145 = pneg %p144
    $region18: #{enhancenet_forward.9} parent=5 // pred_check_branch
      %147 = sbr.rel (%p145) target = $region20
    $region19: #{enhancenet_forward.9} parent=5 // pred_region
      // Predicated region
      $region21: #{enhancenet_forward.9} parent=19 // pred_check
        %p148 = pneg %p43
      $region22: #{enhancenet_forward.9} parent=19 // pred_check_branch
        %150 = sbr.rel (%p148) target = $region24
      $region23: #{enhancenet_forward.9} parent=19 // pred_region
        %s151 = smul.u32 8, %s17
        %p152 = scmp.lt.s32.totalorder %s16, 1
        %s153 = scalar_select %p152, %s16, 1
        %p154 = scmp.lt.s32.totalorder %s151, 15
        %s155 = scalar_select %p154, %s151, 15
        %s156 = smul.addr %s155, 2
        %s157 = smul.addr %s153, 32
        %s158 = sadd.s32 %s156, %s157
        %s159 = smul.addr %s158, 4
        %s160 = scalar_lea.vmem %s0, %s159
        %s161 = smul.u32 8, %s17
      $region24: #{enhancenet_forward.9} parent=19 // pred_fallthru
        _
      // Predicated region
      $region25: #{enhancenet_forward.9} parent=19 // pred_check
        %p162 = pneg %p71
      $region26: #{enhancenet_forward.9} parent=19 // pred_check_branch
        %164 = sbr.rel (%p162) target = $region28
      $region27: #{enhancenet_forward.9} parent=19 // pred_region
        %p165 = scmp.lt.s32.totalorder %s16, 1
        %s166 = scalar_select %p165, %s16, 1
        %p167 = scmp.lt.s32.totalorder %s17, 1
        %s168 = scalar_select %p167, %s17, 1
        %s169 = smul.addr %s168, 4
        %s170 = smul.addr %s166, 8
        %s171 = sadd.s32 %s169, %s170
        %s172 = smul.addr %s171, 4
        %s173 = scalar_lea.vmem %s1, %s172
      $region28: #{enhancenet_forward.9} parent=19 // pred_fallthru
        _
    $region20: #{enhancenet_forward.9} parent=5 // pred_fallthru
      _
    %p174 = scmp.le.s32.totalorder 1, %s9
    %p175 = scmp.lt.s32.totalorder %s9, 5
    %p176 = pnand %p174, %p175
    %p177 = pneg %p176
    // Predicated region
    $region29: #{enhancenet_forward.9} parent=5 // pred_check
      _
    $region30: #{enhancenet_forward.9} parent=5 // pred_check_branch
      %179 = sbr.rel (%p176) target = $region32
    $region31: #{enhancenet_forward.9} parent=5 // pred_region
      %s180 = ssub.s32 %s9, 1
      %s181 = smul.u32 8, %s19
      %p182 = scmp.lt.s32.totalorder %s18, 1
      %s183 = scalar_select %p182, %s18, 1
      %p184 = scmp.lt.s32.totalorder %s181, 15
      %s185 = scalar_select %p184, %s181, 15
      %s186 = smul.addr %s185, 2
      %s187 = smul.addr %s183, 32
      %s188 = sadd.s32 %s186, %s187
      %s189 = smul.addr %s188, 4
      %s190 = scalar_lea.vmem %s0, %s189
      %p191 = pneg %p49
      %p192 = pneg %p46
      %p193 = scmp.lt.s32.totalorder %s18, 1
      %s194 = scalar_select %p193, %s18, 1
      %p195 = scmp.lt.s32.totalorder %s19, 1
      %s196 = scalar_select %p195, %s19, 1
      %s197 = smul.addr %s196, 4
      %s198 = smul.addr %s194, 8
      %s199 = sadd.s32 %s197, %s198
      %s200 = smul.addr %s199, 4
      %s201 = scalar_lea.vmem %s1, %s200
      %p202 = pneg %p77
      %p203 = pneg %p74
      %p204 = pneg %p98
      %p205 = pneg %p95
      %p206 = pneg %p126
      %p207 = pneg %p123
      %s208 = smul.u32 16, %s19
      %p209 = scmp.lt.s32.totalorder %s18, 1
      %s210 = scalar_select %p209, %s18, 1
      %p211 = scmp.lt.s32.totalorder %s208, 31
      %s212 = scalar_select %p211, %s208, 31
      %s213 = smul.addr %s212, 4
      %s214 = smul.addr %s210, 128
      %s215 = sadd.s32 %s213, %s214
      %s216 = smul.addr %s215, 4
      %s217 = scalar_lea.vmem %s3, %s216
      %s218 = smul.u32 8, %s19
      %p219 = scmp.lt.s32.totalorder %s18, 1
      %s220 = scalar_select %p219, %s18, 1
      %p221 = scmp.lt.s32.totalorder %s218, 15
      %s222 = scalar_select %p221, %s218, 15
      %s223 = smul.addr %s222, 2
      %s224 = smul.addr %s220, 32
      %s225 = sadd.s32 %s223, %s224
      %s226 = smul.addr %s225, 4
      %s227 = scalar_lea.vmem %s0, %s226
      %s228 = smul.u32 8, %s19
      %p229 = scmp.lt.s32.totalorder %s18, 1
      %s230 = scalar_select %p229, %s18, 1
      %p231 = scmp.lt.s32.totalorder %s19, 1
      %s232 = scalar_select %p231, %s19, 1
      %s233 = smul.addr %s232, 4
      %s234 = smul.addr %s230, 8
      %s235 = sadd.s32 %s233, %s234
      %s236 = smul.addr %s235, 4
      %s237 = scalar_lea.vmem %s1, %s236
      %s238 = smul.u32 16, %s19
      %p239 = scmp.lt.s32.totalorder %s18, 1
      %s240 = scalar_select %p239, %s18, 1
      %p241 = scmp.lt.s32.totalorder %s238, 31
      %s242 = scalar_select %p241, %s238, 31
      %s243 = smul.addr %s242, 4
      %s244 = smul.addr %s240, 128
      %s245 = sadd.s32 %s243, %s244
      %s246 = smul.addr %s245, 4
      %s247 = scalar_lea.vmem %s3, %s246
      %s248 = smul.u32 16, %s19
      %v250 = vld [vmem:[%s227] sm:$0xf]
      %v251 = vld [vmem:[%s227 + $0x4] sm:$0xf]
      %v252 = vld [vmem:[%s227 + $0x8] sm:$0xf]
      %v253 = vld [vmem:[%s227 + $0xc] sm:$0xf]
      %v254 = vld [vmem:[%s227 + $0x10] sm:$0xf]
      %v255 = vld [vmem:[%s227 + $0x14] sm:$0xf]
      %v256 = vld [vmem:[%s227 + $0x18] sm:$0xf]
      %v257 = vld [vmem:[%s227 + $0x1c] sm:$0xf]
      %v258 = vld [vmem:[%s227 + $0x20] sm:$0xf]
      %v259 = vld [vmem:[%s227 + $0x24] sm:$0xf]
      %v260 = vld [vmem:[%s227 + $0x28] sm:$0xf]
      %v261 = vld [vmem:[%s227 + $0x2c] sm:$0xf]
      %v262 = vld [vmem:[%s227 + $0x30] sm:$0xf]
      %v263 = vld [vmem:[%s227 + $0x34] sm:$0xf]
      %v264 = vld [vmem:[%s227 + $0x38] sm:$0xf]
      %v265 = vld [vmem:[%s227 + $0x3c] sm:$0xf]
      %v266 = vld [vmem:[%s237] sm:$0xf]
      %v267 = vld [vmem:[%s237 + $0x4] sm:$0xf]
      %s268 = scalar_lea.vmem %s237, 8
      %v269 = vld [vmem:[%s268] sm:$0xf]
      %v270 = vld [vmem:[%s268 + $0x4] sm:$0xf]
      %v292 = vunpack.c.l.s4 1966171168
      %v293 = vunpack.c.0.s8 %v292
      %v294 = vlaneseq
      %v295 = vshrl.u32 %v294, 7
      %v296 = vsub.s32 %v293, %v295
      %v297 = vrot.slane %v266, %v296
      %v298 = vcombine.high %v297, %v297
      %v300 = vunpack.c.l.s4 1966171168
      %v301 = vunpack.c.0.s8 %v300
      %v302 = vlaneseq
      %v303 = vshrl.u32 %v302, 7
      %v304 = vsub.s32 %v301, %v303
      %v305 = vrot.slane %v297, %v304
      %v307 = vunpack.c.l.s4 1966171168
      %v308 = vunpack.c.0.s8 %v307
      %v309 = vlaneseq
      %v310 = vshrl.u32 %v309, 7
      %v311 = vsub.s32 %v308, %v310
      %v312 = vrot.slane %v298, %v311
      %v313 = vcombine.high %v305, %v305
      %v314 = vcombine.high %v312, %v312
      %v316 = vunpack.c.l.s4 1966171168
      %v317 = vunpack.c.0.s8 %v316
      %v318 = vlaneseq
      %v319 = vshrl.u32 %v318, 7
      %v320 = vsub.s32 %v317, %v319
      %v321 = vrot.slane %v267, %v320
      %v322 = vcombine.high %v321, %v321
      %v324 = vunpack.c.l.s4 1966171168
      %v325 = vunpack.c.0.s8 %v324
      %v326 = vlaneseq
      %v327 = vshrl.u32 %v326, 7
      %v328 = vsub.s32 %v325, %v327
      %v329 = vrot.slane %v321, %v328
      %v331 = vunpack.c.l.s4 1966171168
      %v332 = vunpack.c.0.s8 %v331
      %v333 = vlaneseq
      %v334 = vshrl.u32 %v333, 7
      %v335 = vsub.s32 %v332, %v334
      %v336 = vrot.slane %v322, %v335
      %v337 = vcombine.high %v329, %v329
      %v338 = vcombine.high %v336, %v336
      %v340 = vunpack.c.l.s4 1966171168
      %v341 = vunpack.c.0.s8 %v340
      %v342 = vlaneseq
      %v343 = vshrl.u32 %v342, 7
      %v344 = vsub.s32 %v341, %v343
      %v345 = vrot.slane %v250, %v344
      %v346 = vcombine.high %v345, %v345
      %v348 = vunpack.c.l.s4 1966171168
      %v349 = vunpack.c.0.s8 %v348
      %v350 = vlaneseq
      %v351 = vshrl.u32 %v350, 7
      %v352 = vsub.s32 %v349, %v351
      %v353 = vrot.slane %v345, %v352
      %v355 = vunpack.c.l.s4 1966171168
      %v356 = vunpack.c.0.s8 %v355
      %v357 = vlaneseq
      %v358 = vshrl.u32 %v357, 7
      %v359 = vsub.s32 %v356, %v358
      %v360 = vrot.slane %v346, %v359
      %v361 = vcombine.high %v353, %v353
      %v362 = vcombine.high %v360, %v360
      %v364 = vunpack.c.l.s4 1966171168
      %v365 = vunpack.c.0.s8 %v364
      %v366 = vlaneseq
      %v367 = vshrl.u32 %v366, 7
      %v368 = vsub.s32 %v365, %v367
      %v369 = vrot.slane %v251, %v368
      %v370 = vcombine.high %v369, %v369
      %v372 = vunpack.c.l.s4 1966171168
      %v373 = vunpack.c.0.s8 %v372
      %v374 = vlaneseq
      %v375 = vshrl.u32 %v374, 7
      %v376 = vsub.s32 %v373, %v375
      %v377 = vrot.slane %v369, %v376
      %v379 = vunpack.c.l.s4 1966171168
      %v380 = vunpack.c.0.s8 %v379
      %v381 = vlaneseq
      %v382 = vshrl.u32 %v381, 7
      %v383 = vsub.s32 %v380, %v382
      %v384 = vrot.slane %v370, %v383
      %v385 = vcombine.high %v377, %v377
      %v386 = vcombine.high %v384, %v384
      %v388 = vunpack.c.l.s4 1966171168
      %v389 = vunpack.c.0.s8 %v388
      %v390 = vlaneseq
      %v391 = vshrl.u32 %v390, 7
      %v392 = vsub.s32 %v389, %v391
      %v393 = vrot.slane %v252, %v392
      %v394 = vcombine.high %v393, %v393
      %v396 = vunpack.c.l.s4 1966171168
      %v397 = vunpack.c.0.s8 %v396
      %v398 = vlaneseq
      %v399 = vshrl.u32 %v398, 7
      %v400 = vsub.s32 %v397, %v399
      %v401 = vrot.slane %v393, %v400
      %v403 = vunpack.c.l.s4 1966171168
      %v404 = vunpack.c.0.s8 %v403
      %v405 = vlaneseq
      %v406 = vshrl.u32 %v405, 7
      %v407 = vsub.s32 %v404, %v406
      %v408 = vrot.slane %v394, %v407
      %v409 = vcombine.high %v401, %v401
      %v410 = vcombine.high %v408, %v408
      %v412 = vunpack.c.l.s4 1966171168
      %v413 = vunpack.c.0.s8 %v412
      %v414 = vlaneseq
      %v415 = vshrl.u32 %v414, 7
      %v416 = vsub.s32 %v413, %v415
      %v417 = vrot.slane %v253, %v416
      %v418 = vcombine.high %v417, %v417
      %v420 = vunpack.c.l.s4 1966171168
      %v421 = vunpack.c.0.s8 %v420
      %v422 = vlaneseq
      %v423 = vshrl.u32 %v422, 7
      %v424 = vsub.s32 %v421, %v423
      %v425 = vrot.slane %v417, %v424
      %v427 = vunpack.c.l.s4 1966171168
      %v428 = vunpack.c.0.s8 %v427
      %v429 = vlaneseq
      %v430 = vshrl.u32 %v429, 7
      %v431 = vsub.s32 %v428, %v430
      %v432 = vrot.slane %v418, %v431
      %v433 = vcombine.high %v425, %v425
      %v434 = vcombine.high %v432, %v432
      %v436 = vunpack.c.l.s4 1966171168
      %v437 = vunpack.c.0.s8 %v436
      %v438 = vlaneseq
      %v439 = vshrl.u32 %v438, 7
      %v440 = vsub.s32 %v437, %v439
      %v441 = vrot.slane %v254, %v440
      %v442 = vcombine.high %v441, %v441
      %v444 = vunpack.c.l.s4 1966171168
      %v445 = vunpack.c.0.s8 %v444
      %v446 = vlaneseq
      %v447 = vshrl.u32 %v446, 7
      %v448 = vsub.s32 %v445, %v447
      %v449 = vrot.slane %v441, %v448
      %v451 = vunpack.c.l.s4 1966171168
      %v452 = vunpack.c.0.s8 %v451
      %v453 = vlaneseq
      %v454 = vshrl.u32 %v453, 7
      %v455 = vsub.s32 %v452, %v454
      %v456 = vrot.slane %v442, %v455
      %v457 = vcombine.high %v449, %v449
      %v458 = vcombine.high %v456, %v456
      %v460 = vunpack.c.l.s4 1966171168
      %v461 = vunpack.c.0.s8 %v460
      %v462 = vlaneseq
      %v463 = vshrl.u32 %v462, 7
      %v464 = vsub.s32 %v461, %v463
      %v465 = vrot.slane %v255, %v464
      %v466 = vcombine.high %v465, %v465
      %v468 = vunpack.c.l.s4 1966171168
      %v469 = vunpack.c.0.s8 %v468
      %v470 = vlaneseq
      %v471 = vshrl.u32 %v470, 7
      %v472 = vsub.s32 %v469, %v471
      %v473 = vrot.slane %v465, %v472
      %v475 = vunpack.c.l.s4 1966171168
      %v476 = vunpack.c.0.s8 %v475
      %v477 = vlaneseq
      %v478 = vshrl.u32 %v477, 7
      %v479 = vsub.s32 %v476, %v478
      %v480 = vrot.slane %v466, %v479
      %v481 = vcombine.high %v473, %v473
      %v482 = vcombine.high %v480, %v480
      %v484 = vunpack.c.l.s4 1966171168
      %v485 = vunpack.c.0.s8 %v484
      %v486 = vlaneseq
      %v487 = vshrl.u32 %v486, 7
      %v488 = vsub.s32 %v485, %v487
      %v489 = vrot.slane %v256, %v488
      %v490 = vcombine.high %v489, %v489
      %v492 = vunpack.c.l.s4 1966171168
      %v493 = vunpack.c.0.s8 %v492
      %v494 = vlaneseq
      %v495 = vshrl.u32 %v494, 7
      %v496 = vsub.s32 %v493, %v495
      %v497 = vrot.slane %v489, %v496
      %v499 = vunpack.c.l.s4 1966171168
      %v500 = vunpack.c.0.s8 %v499
      %v501 = vlaneseq
      %v502 = vshrl.u32 %v501, 7
      %v503 = vsub.s32 %v500, %v502
      %v504 = vrot.slane %v490, %v503
      %v505 = vcombine.high %v497, %v497
      %v506 = vcombine.high %v504, %v504
      %v508 = vunpack.c.l.s4 1966171168
      %v509 = vunpack.c.0.s8 %v508
      %v510 = vlaneseq
      %v511 = vshrl.u32 %v510, 7
      %v512 = vsub.s32 %v509, %v511
      %v513 = vrot.slane %v257, %v512
      %v514 = vcombine.high %v513, %v513
      %v516 = vunpack.c.l.s4 1966171168
      %v517 = vunpack.c.0.s8 %v516
      %v518 = vlaneseq
      %v519 = vshrl.u32 %v518, 7
      %v520 = vsub.s32 %v517, %v519
      %v521 = vrot.slane %v513, %v520
      %v523 = vunpack.c.l.s4 1966171168
      %v524 = vunpack.c.0.s8 %v523
      %v525 = vlaneseq
      %v526 = vshrl.u32 %v525, 7
      %v527 = vsub.s32 %v524, %v526
      %v528 = vrot.slane %v514, %v527
      %v529 = vcombine.high %v521, %v521
      %v530 = vcombine.high %v528, %v528
      %v532 = vunpack.c.l.s4 1966171168
      %v533 = vunpack.c.0.s8 %v532
      %v534 = vlaneseq
      %v535 = vshrl.u32 %v534, 7
      %v536 = vsub.s32 %v533, %v535
      %v537 = vrot.slane %v258, %v536
      %v538 = vcombine.high %v537, %v537
      %v540 = vunpack.c.l.s4 1966171168
      %v541 = vunpack.c.0.s8 %v540
      %v542 = vlaneseq
      %v543 = vshrl.u32 %v542, 7
      %v544 = vsub.s32 %v541, %v543
      %v545 = vrot.slane %v537, %v544
      %v547 = vunpack.c.l.s4 1966171168
      %v548 = vunpack.c.0.s8 %v547
      %v549 = vlaneseq
      %v550 = vshrl.u32 %v549, 7
      %v551 = vsub.s32 %v548, %v550
      %v552 = vrot.slane %v538, %v551
      %v553 = vcombine.high %v545, %v545
      %v554 = vcombine.high %v552, %v552
      %v556 = vunpack.c.l.s4 1966171168
      %v557 = vunpack.c.0.s8 %v556
      %v558 = vlaneseq
      %v559 = vshrl.u32 %v558, 7
      %v560 = vsub.s32 %v557, %v559
      %v561 = vrot.slane %v259, %v560
      %v562 = vcombine.high %v561, %v561
      %v564 = vunpack.c.l.s4 1966171168
      %v565 = vunpack.c.0.s8 %v564
      %v566 = vlaneseq
      %v567 = vshrl.u32 %v566, 7
      %v568 = vsub.s32 %v565, %v567
      %v569 = vrot.slane %v561, %v568
      %v571 = vunpack.c.l.s4 1966171168
      %v572 = vunpack.c.0.s8 %v571
      %v573 = vlaneseq
      %v574 = vshrl.u32 %v573, 7
      %v575 = vsub.s32 %v572, %v574
      %v576 = vrot.slane %v562, %v575
      %v577 = vcombine.high %v569, %v569
      %v578 = vcombine.high %v576, %v576
      %v580 = vunpack.c.l.s4 1966171168
      %v581 = vunpack.c.0.s8 %v580
      %v582 = vlaneseq
      %v583 = vshrl.u32 %v582, 7
      %v584 = vsub.s32 %v581, %v583
      %v585 = vrot.slane %v260, %v584
      %v586 = vcombine.high %v585, %v585
      %v588 = vunpack.c.l.s4 1966171168
      %v589 = vunpack.c.0.s8 %v588
      %v590 = vlaneseq
      %v591 = vshrl.u32 %v590, 7
      %v592 = vsub.s32 %v589, %v591
      %v593 = vrot.slane %v585, %v592
      %v595 = vunpack.c.l.s4 1966171168
      %v596 = vunpack.c.0.s8 %v595
      %v597 = vlaneseq
      %v598 = vshrl.u32 %v597, 7
      %v599 = vsub.s32 %v596, %v598
      %v600 = vrot.slane %v586, %v599
      %v601 = vcombine.high %v593, %v593
      %v602 = vcombine.high %v600, %v600
      %v604 = vunpack.c.l.s4 1966171168
      %v605 = vunpack.c.0.s8 %v604
      %v606 = vlaneseq
      %v607 = vshrl.u32 %v606, 7
      %v608 = vsub.s32 %v605, %v607
      %v609 = vrot.slane %v261, %v608
      %v610 = vcombine.high %v609, %v609
      %v612 = vunpack.c.l.s4 1966171168
      %v613 = vunpack.c.0.s8 %v612
      %v614 = vlaneseq
      %v615 = vshrl.u32 %v614, 7
      %v616 = vsub.s32 %v613, %v615
      %v617 = vrot.slane %v609, %v616
      %v619 = vunpack.c.l.s4 1966171168
      %v620 = vunpack.c.0.s8 %v619
      %v621 = vlaneseq
      %v622 = vshrl.u32 %v621, 7
      %v623 = vsub.s32 %v620, %v622
      %v624 = vrot.slane %v610, %v623
      %v625 = vcombine.high %v617, %v617
      %v626 = vcombine.high %v624, %v624
      %v628 = vunpack.c.l.s4 1966171168
      %v629 = vunpack.c.0.s8 %v628
      %v630 = vlaneseq
      %v631 = vshrl.u32 %v630, 7
      %v632 = vsub.s32 %v629, %v631
      %v633 = vrot.slane %v262, %v632
      %v634 = vcombine.high %v633, %v633
      %v636 = vunpack.c.l.s4 1966171168
      %v637 = vunpack.c.0.s8 %v636
      %v638 = vlaneseq
      %v639 = vshrl.u32 %v638, 7
      %v640 = vsub.s32 %v637, %v639
      %v641 = vrot.slane %v633, %v640
      %v643 = vunpack.c.l.s4 1966171168
      %v644 = vunpack.c.0.s8 %v643
      %v645 = vlaneseq
      %v646 = vshrl.u32 %v645, 7
      %v647 = vsub.s32 %v644, %v646
      %v648 = vrot.slane %v634, %v647
      %v649 = vcombine.high %v641, %v641
      %v650 = vcombine.high %v648, %v648
      %v652 = vunpack.c.l.s4 1966171168
      %v653 = vunpack.c.0.s8 %v652
      %v654 = vlaneseq
      %v655 = vshrl.u32 %v654, 7
      %v656 = vsub.s32 %v653, %v655
      %v657 = vrot.slane %v263, %v656
      %v658 = vcombine.high %v657, %v657
      %v660 = vunpack.c.l.s4 1966171168
      %v661 = vunpack.c.0.s8 %v660
      %v662 = vlaneseq
      %v663 = vshrl.u32 %v662, 7
      %v664 = vsub.s32 %v661, %v663
      %v665 = vrot.slane %v657, %v664
      %v667 = vunpack.c.l.s4 1966171168
      %v668 = vunpack.c.0.s8 %v667
      %v669 = vlaneseq
      %v670 = vshrl.u32 %v669, 7
      %v671 = vsub.s32 %v668, %v670
      %v672 = vrot.slane %v658, %v671
      %v673 = vcombine.high %v665, %v665
      %v674 = vcombine.high %v672, %v672
      %v676 = vunpack.c.l.s4 1966171168
      %v677 = vunpack.c.0.s8 %v676
      %v678 = vlaneseq
      %v679 = vshrl.u32 %v678, 7
      %v680 = vsub.s32 %v677, %v679
      %v681 = vrot.slane %v264, %v680
      %v682 = vcombine.high %v681, %v681
      %v684 = vunpack.c.l.s4 1966171168
      %v685 = vunpack.c.0.s8 %v684
      %v686 = vlaneseq
      %v687 = vshrl.u32 %v686, 7
      %v688 = vsub.s32 %v685, %v687
      %v689 = vrot.slane %v681, %v688
      %v691 = vunpack.c.l.s4 1966171168
      %v692 = vunpack.c.0.s8 %v691
      %v693 = vlaneseq
      %v694 = vshrl.u32 %v693, 7
      %v695 = vsub.s32 %v692, %v694
      %v696 = vrot.slane %v682, %v695
      %v697 = vcombine.high %v689, %v689
      %v698 = vcombine.high %v696, %v696
      %v700 = vunpack.c.l.s4 1966171168
      %v701 = vunpack.c.0.s8 %v700
      %v702 = vlaneseq
      %v703 = vshrl.u32 %v702, 7
      %v704 = vsub.s32 %v701, %v703
      %v705 = vrot.slane %v265, %v704
      %v706 = vcombine.high %v705, %v705
      %v708 = vunpack.c.l.s4 1966171168
      %v709 = vunpack.c.0.s8 %v708
      %v710 = vlaneseq
      %v711 = vshrl.u32 %v710, 7
      %v712 = vsub.s32 %v709, %v711
      %v713 = vrot.slane %v705, %v712
      %v715 = vunpack.c.l.s4 1966171168
      %v716 = vunpack.c.0.s8 %v715
      %v717 = vlaneseq
      %v718 = vshrl.u32 %v717, 7
      %v719 = vsub.s32 %v716, %v718
      %v720 = vrot.slane %v706, %v719
      %v721 = vcombine.high %v713, %v713
      %v722 = vcombine.high %v720, %v720
      %v724 = vunpack.c.l.s4 1966171168
      %v725 = vunpack.c.0.s8 %v724
      %v726 = vlaneseq
      %v727 = vshrl.u32 %v726, 7
      %v728 = vsub.s32 %v725, %v727
      %v729 = vrot.slane %v269, %v728
      %v730 = vcombine.high %v729, %v729
      %v732 = vunpack.c.l.s4 1966171168
      %v733 = vunpack.c.0.s8 %v732
      %v734 = vlaneseq
      %v735 = vshrl.u32 %v734, 7
      %v736 = vsub.s32 %v733, %v735
      %v737 = vrot.slane %v729, %v736
      %v739 = vunpack.c.l.s4 1966171168
      %v740 = vunpack.c.0.s8 %v739
      %v741 = vlaneseq
      %v742 = vshrl.u32 %v741, 7
      %v743 = vsub.s32 %v740, %v742
      %v744 = vrot.slane %v730, %v743
      %v745 = vcombine.high %v737, %v737
      %v746 = vcombine.high %v744, %v744
      %v748 = vunpack.c.l.s4 1966171168
      %v749 = vunpack.c.0.s8 %v748
      %v750 = vlaneseq
      %v751 = vshrl.u32 %v750, 7
      %v752 = vsub.s32 %v749, %v751
      %v753 = vrot.slane %v270, %v752
      %v754 = vcombine.high %v753, %v753
      %v756 = vunpack.c.l.s4 1966171168
      %v757 = vunpack.c.0.s8 %v756
      %v758 = vlaneseq
      %v759 = vshrl.u32 %v758, 7
      %v760 = vsub.s32 %v757, %v759
      %v761 = vrot.slane %v753, %v760
      %v763 = vunpack.c.l.s4 1966171168
      %v764 = vunpack.c.0.s8 %v763
      %v765 = vlaneseq
      %v766 = vshrl.u32 %v765, 7
      %v767 = vsub.s32 %v764, %v766
      %v768 = vrot.slane %v754, %v767
      %v769 = vcombine.high %v761, %v761
      %v770 = vcombine.high %v768, %v768
      %v771 = vunpack.i.l.s16 %v305
      %v772 = vunpack.i.h.s16 %v305
      %v773 = vunpack.i.l.s16 %v312
      %v774 = vunpack.i.h.s16 %v312
      %v775 = vunpack.i.l.s16 %v313
      %v776 = vunpack.i.h.s16 %v313
      %v777 = vunpack.i.l.s16 %v314
      %v778 = vunpack.i.h.s16 %v314
      %v779 = vunpack.i.l.s16 %v329
      %v780 = vunpack.i.h.s16 %v329
      %v781 = vunpack.i.l.s16 %v336
      %v782 = vunpack.i.h.s16 %v336
      %v783 = vunpack.i.l.s16 %v337
      %v784 = vunpack.i.h.s16 %v337
      %v785 = vunpack.i.l.s16 %v338
      %v786 = vunpack.i.h.s16 %v338
      %v787 = vunpack.i.l.s16 %v353
      %v788 = vunpack.i.h.s16 %v353
      %v789 = vunpack.i.l.s16 %v360
      %v790 = vunpack.i.h.s16 %v360
      %v791 = vunpack.i.l.s16 %v361
      %v792 = vunpack.i.h.s16 %v361
      %v793 = vunpack.i.l.s16 %v362
      %v794 = vunpack.i.h.s16 %v362
      %v795 = vunpack.i.l.s16 %v377
      %v796 = vunpack.i.h.s16 %v377
      %v797 = vunpack.i.l.s16 %v384
      %v798 = vunpack.i.h.s16 %v384
      %v799 = vunpack.i.l.s16 %v385
      %v800 = vunpack.i.h.s16 %v385
      %v801 = vunpack.i.l.s16 %v386
      %v802 = vunpack.i.h.s16 %v386
      %v803 = vunpack.i.l.s16 %v401
      %v804 = vunpack.i.h.s16 %v401
      %v805 = vunpack.i.l.s16 %v408
      %v806 = vunpack.i.h.s16 %v408
      %v807 = vunpack.i.l.s16 %v409
      %v808 = vunpack.i.h.s16 %v409
      %v809 = vunpack.i.l.s16 %v410
      %v810 = vunpack.i.h.s16 %v410
      %v811 = vunpack.i.l.s16 %v425
      %v812 = vunpack.i.h.s16 %v425
      %v813 = vunpack.i.l.s16 %v432
      %v814 = vunpack.i.h.s16 %v432
      %v815 = vunpack.i.l.s16 %v433
      %v816 = vunpack.i.h.s16 %v433
      %v817 = vunpack.i.l.s16 %v434
      %v818 = vunpack.i.h.s16 %v434
      %v819 = vunpack.i.l.s16 %v449
      %v820 = vunpack.i.h.s16 %v449
      %v821 = vunpack.i.l.s16 %v456
      %v822 = vunpack.i.h.s16 %v456
      %v823 = vunpack.i.l.s16 %v457
      %v824 = vunpack.i.h.s16 %v457
      %v825 = vunpack.i.l.s16 %v458
      %v826 = vunpack.i.h.s16 %v458
      %v827 = vunpack.i.l.s16 %v473
      %v828 = vunpack.i.h.s16 %v473
      %v829 = vunpack.i.l.s16 %v480
      %v830 = vunpack.i.h.s16 %v480
      %v831 = vunpack.i.l.s16 %v481
      %v832 = vunpack.i.h.s16 %v481
      %v833 = vunpack.i.l.s16 %v482
      %v834 = vunpack.i.h.s16 %v482
      %v835 = vunpack.i.l.s16 %v497
      %v836 = vunpack.i.h.s16 %v497
      %v837 = vunpack.i.l.s16 %v504
      %v838 = vunpack.i.h.s16 %v504
      %v839 = vunpack.i.l.s16 %v505
      %v840 = vunpack.i.h.s16 %v505
      %v841 = vunpack.i.l.s16 %v506
      %v842 = vunpack.i.h.s16 %v506
      %v843 = vunpack.i.l.s16 %v521
      %v844 = vunpack.i.h.s16 %v521
      %v845 = vunpack.i.l.s16 %v528
      %v846 = vunpack.i.h.s16 %v528
      %v847 = vunpack.i.l.s16 %v529
      %v848 = vunpack.i.h.s16 %v529
      %v849 = vunpack.i.l.s16 %v530
      %v850 = vunpack.i.h.s16 %v530
      %v851 = vunpack.i.l.s16 %v545
      %v852 = vunpack.i.h.s16 %v545
      %v853 = vunpack.i.l.s16 %v552
      %v854 = vunpack.i.h.s16 %v552
      %v855 = vunpack.i.l.s16 %v553
      %v856 = vunpack.i.h.s16 %v553
      %v857 = vunpack.i.l.s16 %v554
      %v858 = vunpack.i.h.s16 %v554
      %v859 = vunpack.i.l.s16 %v569
      %v860 = vunpack.i.h.s16 %v569
      %v861 = vunpack.i.l.s16 %v576
      %v862 = vunpack.i.h.s16 %v576
      %v863 = vunpack.i.l.s16 %v577
      %v864 = vunpack.i.h.s16 %v577
      %v865 = vunpack.i.l.s16 %v578
      %v866 = vunpack.i.h.s16 %v578
      %v867 = vunpack.i.l.s16 %v593
      %v868 = vunpack.i.h.s16 %v593
      %v869 = vunpack.i.l.s16 %v600
      %v870 = vunpack.i.h.s16 %v600
      %v871 = vunpack.i.l.s16 %v601
      %v872 = vunpack.i.h.s16 %v601
      %v873 = vunpack.i.l.s16 %v602
      %v874 = vunpack.i.h.s16 %v602
      %v875 = vunpack.i.l.s16 %v617
      %v876 = vunpack.i.h.s16 %v617
      %v877 = vunpack.i.l.s16 %v624
      %v878 = vunpack.i.h.s16 %v624
      %v879 = vunpack.i.l.s16 %v625
      %v880 = vunpack.i.h.s16 %v625
      %v881 = vunpack.i.l.s16 %v626
      %v882 = vunpack.i.h.s16 %v626
      %v883 = vunpack.i.l.s16 %v641
      %v884 = vunpack.i.h.s16 %v641
      %v885 = vunpack.i.l.s16 %v648
      %v886 = vunpack.i.h.s16 %v648
      %v887 = vunpack.i.l.s16 %v649
      %v888 = vunpack.i.h.s16 %v649
      %v889 = vunpack.i.l.s16 %v650
      %v890 = vunpack.i.h.s16 %v650
      %v891 = vunpack.i.l.s16 %v665
      %v892 = vunpack.i.h.s16 %v665
      %v893 = vunpack.i.l.s16 %v672
      %v894 = vunpack.i.h.s16 %v672
      %v895 = vunpack.i.l.s16 %v673
      %v896 = vunpack.i.h.s16 %v673
      %v897 = vunpack.i.l.s16 %v674
      %v898 = vunpack.i.h.s16 %v674
      %v899 = vunpack.i.l.s16 %v689
      %v900 = vunpack.i.h.s16 %v689
      %v901 = vunpack.i.l.s16 %v696
      %v902 = vunpack.i.h.s16 %v696
      %v903 = vunpack.i.l.s16 %v697
      %v904 = vunpack.i.h.s16 %v697
      %v905 = vunpack.i.l.s16 %v698
      %v906 = vunpack.i.h.s16 %v698
      %v907 = vunpack.i.l.s16 %v713
      %v908 = vunpack.i.h.s16 %v713
      %v909 = vunpack.i.l.s16 %v720
      %v910 = vunpack.i.h.s16 %v720
      %v911 = vunpack.i.l.s16 %v721
      %v912 = vunpack.i.h.s16 %v721
      %v913 = vunpack.i.l.s16 %v722
      %v914 = vunpack.i.h.s16 %v722
      %v915 = vunpack.i.l.s16 %v737
      %v916 = vunpack.i.h.s16 %v737
      %v917 = vunpack.i.l.s16 %v744
      %v918 = vunpack.i.h.s16 %v744
      %v919 = vunpack.i.l.s16 %v745
      %v920 = vunpack.i.h.s16 %v745
      %v921 = vunpack.i.l.s16 %v746
      %v922 = vunpack.i.h.s16 %v746
      %v923 = vunpack.i.l.s16 %v761
      %v924 = vunpack.i.h.s16 %v761
      %v925 = vunpack.i.l.s16 %v768
      %v926 = vunpack.i.h.s16 %v768
      %v927 = vunpack.i.l.s16 %v769
      %v928 = vunpack.i.h.s16 %v769
      %v929 = vunpack.i.l.s16 %v770
      %v930 = vunpack.i.h.s16 %v770
      %v931 = vpack.i.b16 %v771, %v771
      %v932 = vpack.i.b16 %v772, %v772
      %v933 = vpack.i.b16 %v773, %v773
      %v934 = vpack.i.b16 %v774, %v774
      %v935 = vpack.i.b16 %v775, %v775
      %v936 = vpack.i.b16 %v776, %v776
      %v937 = vpack.i.b16 %v777, %v777
      %v938 = vpack.i.b16 %v778, %v778
      %v939 = vpack.i.b16 %v779, %v779
      %v940 = vpack.i.b16 %v780, %v780
      %v941 = vpack.i.b16 %v781, %v781
      %v942 = vpack.i.b16 %v782, %v782
      %v943 = vpack.i.b16 %v783, %v783
      %v944 = vpack.i.b16 %v784, %v784
      %v945 = vpack.i.b16 %v785, %v785
      %v946 = vpack.i.b16 %v786, %v786
      %v947 = vpack.i.b16 %v787, %v787
      %v948 = vpack.i.b16 %v788, %v788
      %v949 = vpack.i.b16 %v789, %v789
      %v950 = vpack.i.b16 %v790, %v790
      %v951 = vpack.i.b16 %v791, %v791
      %v952 = vpack.i.b16 %v792, %v792
      %v953 = vpack.i.b16 %v793, %v793
      %v954 = vpack.i.b16 %v794, %v794
      %v955 = vpack.i.b16 %v795, %v795
      %v956 = vpack.i.b16 %v796, %v796
      %v957 = vpack.i.b16 %v797, %v797
      %v958 = vpack.i.b16 %v798, %v798
      %v959 = vpack.i.b16 %v799, %v799
      %v960 = vpack.i.b16 %v800, %v800
      %v961 = vpack.i.b16 %v801, %v801
      %v962 = vpack.i.b16 %v802, %v802
      %v963 = vpack.i.b16 %v803, %v803
      %v964 = vpack.i.b16 %v804, %v804
      %v965 = vpack.i.b16 %v805, %v805
      %v966 = vpack.i.b16 %v806, %v806
      %v967 = vpack.i.b16 %v807, %v807
      %v968 = vpack.i.b16 %v808, %v808
      %v969 = vpack.i.b16 %v809, %v809
      %v970 = vpack.i.b16 %v810, %v810
      %v971 = vpack.i.b16 %v811, %v811
      %v972 = vpack.i.b16 %v812, %v812
      %v973 = vpack.i.b16 %v813, %v813
      %v974 = vpack.i.b16 %v814, %v814
      %v975 = vpack.i.b16 %v815, %v815
      %v976 = vpack.i.b16 %v816, %v816
      %v977 = vpack.i.b16 %v817, %v817
      %v978 = vpack.i.b16 %v818, %v818
      %v979 = vpack.i.b16 %v819, %v819
      %v980 = vpack.i.b16 %v820, %v820
      %v981 = vpack.i.b16 %v821, %v821
      %v982 = vpack.i.b16 %v822, %v822
      %v983 = vpack.i.b16 %v823, %v823
      %v984 = vpack.i.b16 %v824, %v824
      %v985 = vpack.i.b16 %v825, %v825
      %v986 = vpack.i.b16 %v826, %v826
      %v987 = vpack.i.b16 %v827, %v827
      %v988 = vpack.i.b16 %v828, %v828
      %v989 = vpack.i.b16 %v829, %v829
      %v990 = vpack.i.b16 %v830, %v830
      %v991 = vpack.i.b16 %v831, %v831
      %v992 = vpack.i.b16 %v832, %v832
      %v993 = vpack.i.b16 %v833, %v833
      %v994 = vpack.i.b16 %v834, %v834
      %v995 = vpack.i.b16 %v835, %v835
      %v996 = vpack.i.b16 %v836, %v836
      %v997 = vpack.i.b16 %v837, %v837
      %v998 = vpack.i.b16 %v838, %v838
      %v999 = vpack.i.b16 %v839, %v839
      %v1000 = vpack.i.b16 %v840, %v840
      %v1001 = vpack.i.b16 %v841, %v841
      %v1002 = vpack.i.b16 %v842, %v842
      %v1003 = vpack.i.b16 %v843, %v843
      %v1004 = vpack.i.b16 %v844, %v844
      %v1005 = vpack.i.b16 %v845, %v845
      %v1006 = vpack.i.b16 %v846, %v846
      %v1007 = vpack.i.b16 %v847, %v847
      %v1008 = vpack.i.b16 %v848, %v848
      %v1009 = vpack.i.b16 %v849, %v849
      %v1010 = vpack.i.b16 %v850, %v850
      %v1011 = vpack.i.b16 %v851, %v851
      %v1012 = vpack.i.b16 %v852, %v852
      %v1013 = vpack.i.b16 %v853, %v853
      %v1014 = vpack.i.b16 %v854, %v854
      %v1015 = vpack.i.b16 %v855, %v855
      %v1016 = vpack.i.b16 %v856, %v856
      %v1017 = vpack.i.b16 %v857, %v857
      %v1018 = vpack.i.b16 %v858, %v858
      %v1019 = vpack.i.b16 %v859, %v859
      %v1020 = vpack.i.b16 %v860, %v860
      %v1021 = vpack.i.b16 %v861, %v861
      %v1022 = vpack.i.b16 %v862, %v862
      %v1023 = vpack.i.b16 %v863, %v863
      %v1024 = vpack.i.b16 %v864, %v864
      %v1025 = vpack.i.b16 %v865, %v865
      %v1026 = vpack.i.b16 %v866, %v866
      %v1027 = vpack.i.b16 %v867, %v867
      %v1028 = vpack.i.b16 %v868, %v868
      %v1029 = vpack.i.b16 %v869, %v869
      %v1030 = vpack.i.b16 %v870, %v870
      %v1031 = vpack.i.b16 %v871, %v871
      %v1032 = vpack.i.b16 %v872, %v872
      %v1033 = vpack.i.b16 %v873, %v873
      %v1034 = vpack.i.b16 %v874, %v874
      %v1035 = vpack.i.b16 %v875, %v875
      %v1036 = vpack.i.b16 %v876, %v876
      %v1037 = vpack.i.b16 %v877, %v877
      %v1038 = vpack.i.b16 %v878, %v878
      %v1039 = vpack.i.b16 %v879, %v879
      %v1040 = vpack.i.b16 %v880, %v880
      %v1041 = vpack.i.b16 %v881, %v881
      %v1042 = vpack.i.b16 %v882, %v882
      %v1043 = vpack.i.b16 %v883, %v883
      %v1044 = vpack.i.b16 %v884, %v884
      %v1045 = vpack.i.b16 %v885, %v885
      %v1046 = vpack.i.b16 %v886, %v886
      %v1047 = vpack.i.b16 %v887, %v887
      %v1048 = vpack.i.b16 %v888, %v888
      %v1049 = vpack.i.b16 %v889, %v889
      %v1050 = vpack.i.b16 %v890, %v890
      %v1051 = vpack.i.b16 %v891, %v891
      %v1052 = vpack.i.b16 %v892, %v892
      %v1053 = vpack.i.b16 %v893, %v893
      %v1054 = vpack.i.b16 %v894, %v894
      %v1055 = vpack.i.b16 %v895, %v895
      %v1056 = vpack.i.b16 %v896, %v896
      %v1057 = vpack.i.b16 %v897, %v897
      %v1058 = vpack.i.b16 %v898, %v898
      %v1059 = vpack.i.b16 %v899, %v899
      %v1060 = vpack.i.b16 %v900, %v900
      %v1061 = vpack.i.b16 %v901, %v901
      %v1062 = vpack.i.b16 %v902, %v902
      %v1063 = vpack.i.b16 %v903, %v903
      %v1064 = vpack.i.b16 %v904, %v904
      %v1065 = vpack.i.b16 %v905, %v905
      %v1066 = vpack.i.b16 %v906, %v906
      %v1067 = vpack.i.b16 %v907, %v907
      %v1068 = vpack.i.b16 %v908, %v908
      %v1069 = vpack.i.b16 %v909, %v909
      %v1070 = vpack.i.b16 %v910, %v910
      %v1071 = vpack.i.b16 %v911, %v911
      %v1072 = vpack.i.b16 %v912, %v912
      %v1073 = vpack.i.b16 %v913, %v913
      %v1074 = vpack.i.b16 %v914, %v914
      %v1075 = vpack.i.b16 %v915, %v915
      %v1076 = vpack.i.b16 %v916, %v916
      %v1077 = vpack.i.b16 %v917, %v917
      %v1078 = vpack.i.b16 %v918, %v918
      %v1079 = vpack.i.b16 %v919, %v919
      %v1080 = vpack.i.b16 %v920, %v920
      %v1081 = vpack.i.b16 %v921, %v921
      %v1082 = vpack.i.b16 %v922, %v922
      %v1083 = vpack.i.b16 %v923, %v923
      %v1084 = vpack.i.b16 %v924, %v924
      %v1085 = vpack.i.b16 %v925, %v925
      %v1086 = vpack.i.b16 %v926, %v926
      %v1087 = vpack.i.b16 %v927, %v927
      %v1088 = vpack.i.b16 %v928, %v928
      %v1089 = vpack.i.b16 %v929, %v929
      %v1090 = vpack.i.b16 %v930, %v930
      %v1091 = vlaneseq
      %v1092 = vshrl.u32 %v1091, 7
      %v1093 = vsub.s32 0, %v1092
      %v1094 = vrot.slane %v931, %v1093
      %v1095 = vlaneseq
      %v1096 = vshrl.u32 %v1095, 7
      %v1097 = vsub.s32 0, %v1096
      %v1098 = vrot.slane %v932, %v1097
      %v1099 = vlaneseq
      %v1100 = vshrl.u32 %v1099, 7
      %v1101 = vsub.s32 0, %v1100
      %v1102 = vrot.slane %v933, %v1101
      %v1103 = vlaneseq
      %v1104 = vshrl.u32 %v1103, 7
      %v1105 = vsub.s32 0, %v1104
      %v1106 = vrot.slane %v934, %v1105
      %v1107 = vlaneseq
      %v1108 = vshrl.u32 %v1107, 7
      %v1109 = vsub.s32 0, %v1108
      %v1110 = vrot.slane %v935, %v1109
      %v1111 = vlaneseq
      %v1112 = vshrl.u32 %v1111, 7
      %v1113 = vsub.s32 0, %v1112
      %v1114 = vrot.slane %v936, %v1113
      %v1115 = vlaneseq
      %v1116 = vshrl.u32 %v1115, 7
      %v1117 = vsub.s32 0, %v1116
      %v1118 = vrot.slane %v937, %v1117
      %v1119 = vlaneseq
      %v1120 = vshrl.u32 %v1119, 7
      %v1121 = vsub.s32 0, %v1120
      %v1122 = vrot.slane %v938, %v1121
      %v1123 = vlaneseq
      %v1124 = vshrl.u32 %v1123, 7
      %v1125 = vsub.s32 0, %v1124
      %v1126 = vrot.slane %v939, %v1125
      %v1127 = vlaneseq
      %v1128 = vshrl.u32 %v1127, 7
      %v1129 = vsub.s32 0, %v1128
      %v1130 = vrot.slane %v940, %v1129
      %v1131 = vlaneseq
      %v1132 = vshrl.u32 %v1131, 7
      %v1133 = vsub.s32 0, %v1132
      %v1134 = vrot.slane %v941, %v1133
      %v1135 = vlaneseq
      %v1136 = vshrl.u32 %v1135, 7
      %v1137 = vsub.s32 0, %v1136
      %v1138 = vrot.slane %v942, %v1137
      %v1139 = vlaneseq
      %v1140 = vshrl.u32 %v1139, 7
      %v1141 = vsub.s32 0, %v1140
      %v1142 = vrot.slane %v943, %v1141
      %v1143 = vlaneseq
      %v1144 = vshrl.u32 %v1143, 7
      %v1145 = vsub.s32 0, %v1144
      %v1146 = vrot.slane %v944, %v1145
      %v1147 = vlaneseq
      %v1148 = vshrl.u32 %v1147, 7
      %v1149 = vsub.s32 0, %v1148
      %v1150 = vrot.slane %v945, %v1149
      %v1151 = vlaneseq
      %v1152 = vshrl.u32 %v1151, 7
      %v1153 = vsub.s32 0, %v1152
      %v1154 = vrot.slane %v946, %v1153
      %v1155 = vlaneseq
      %v1156 = vshrl.u32 %v1155, 7
      %v1157 = vsub.s32 0, %v1156
      %v1158 = vrot.slane %v947, %v1157
      %v1159 = vlaneseq
      %v1160 = vshrl.u32 %v1159, 7
      %v1161 = vsub.s32 0, %v1160
      %v1162 = vrot.slane %v948, %v1161
      %v1163 = vlaneseq
      %v1164 = vshrl.u32 %v1163, 7
      %v1165 = vsub.s32 0, %v1164
      %v1166 = vrot.slane %v949, %v1165
      %v1167 = vlaneseq
      %v1168 = vshrl.u32 %v1167, 7
      %v1169 = vsub.s32 0, %v1168
      %v1170 = vrot.slane %v950, %v1169
      %v1171 = vlaneseq
      %v1172 = vshrl.u32 %v1171, 7
      %v1173 = vsub.s32 0, %v1172
      %v1174 = vrot.slane %v951, %v1173
      %v1175 = vlaneseq
      %v1176 = vshrl.u32 %v1175, 7
      %v1177 = vsub.s32 0, %v1176
      %v1178 = vrot.slane %v952, %v1177
      %v1179 = vlaneseq
      %v1180 = vshrl.u32 %v1179, 7
      %v1181 = vsub.s32 0, %v1180
      %v1182 = vrot.slane %v953, %v1181
      %v1183 = vlaneseq
      %v1184 = vshrl.u32 %v1183, 7
      %v1185 = vsub.s32 0, %v1184
      %v1186 = vrot.slane %v954, %v1185
      %v1187 = vlaneseq
      %v1188 = vshrl.u32 %v1187, 7
      %v1189 = vsub.s32 0, %v1188
      %v1190 = vrot.slane %v955, %v1189
      %v1191 = vlaneseq
      %v1192 = vshrl.u32 %v1191, 7
      %v1193 = vsub.s32 0, %v1192
      %v1194 = vrot.slane %v956, %v1193
      %v1195 = vlaneseq
      %v1196 = vshrl.u32 %v1195, 7
      %v1197 = vsub.s32 0, %v1196
      %v1198 = vrot.slane %v957, %v1197
      %v1199 = vlaneseq
      %v1200 = vshrl.u32 %v1199, 7
      %v1201 = vsub.s32 0, %v1200
      %v1202 = vrot.slane %v958, %v1201
      %v1203 = vlaneseq
      %v1204 = vshrl.u32 %v1203, 7
      %v1205 = vsub.s32 0, %v1204
      %v1206 = vrot.slane %v959, %v1205
      %v1207 = vlaneseq
      %v1208 = vshrl.u32 %v1207, 7
      %v1209 = vsub.s32 0, %v1208
      %v1210 = vrot.slane %v960, %v1209
      %v1211 = vlaneseq
      %v1212 = vshrl.u32 %v1211, 7
      %v1213 = vsub.s32 0, %v1212
      %v1214 = vrot.slane %v961, %v1213
      %v1215 = vlaneseq
      %v1216 = vshrl.u32 %v1215, 7
      %v1217 = vsub.s32 0, %v1216
      %v1218 = vrot.slane %v962, %v1217
      %v1219 = vlaneseq
      %v1220 = vshrl.u32 %v1219, 7
      %v1221 = vsub.s32 0, %v1220
      %v1222 = vrot.slane %v963, %v1221
      %v1223 = vlaneseq
      %v1224 = vshrl.u32 %v1223, 7
      %v1225 = vsub.s32 0, %v1224
      %v1226 = vrot.slane %v964, %v1225
      %v1227 = vlaneseq
      %v1228 = vshrl.u32 %v1227, 7
      %v1229 = vsub.s32 0, %v1228
      %v1230 = vrot.slane %v965, %v1229
      %v1231 = vlaneseq
      %v1232 = vshrl.u32 %v1231, 7
      %v1233 = vsub.s32 0, %v1232
      %v1234 = vrot.slane %v966, %v1233
      %v1235 = vlaneseq
      %v1236 = vshrl.u32 %v1235, 7
      %v1237 = vsub.s32 0, %v1236
      %v1238 = vrot.slane %v967, %v1237
      %v1239 = vlaneseq
      %v1240 = vshrl.u32 %v1239, 7
      %v1241 = vsub.s32 0, %v1240
      %v1242 = vrot.slane %v968, %v1241
      %v1243 = vlaneseq
      %v1244 = vshrl.u32 %v1243, 7
      %v1245 = vsub.s32 0, %v1244
      %v1246 = vrot.slane %v969, %v1245
      %v1247 = vlaneseq
      %v1248 = vshrl.u32 %v1247, 7
      %v1249 = vsub.s32 0, %v1248
      %v1250 = vrot.slane %v970, %v1249
      %v1251 = vlaneseq
      %v1252 = vshrl.u32 %v1251, 7
      %v1253 = vsub.s32 0, %v1252
      %v1254 = vrot.slane %v971, %v1253
      %v1255 = vlaneseq
      %v1256 = vshrl.u32 %v1255, 7
      %v1257 = vsub.s32 0, %v1256
      %v1258 = vrot.slane %v972, %v1257
      %v1259 = vlaneseq
      %v1260 = vshrl.u32 %v1259, 7
      %v1261 = vsub.s32 0, %v1260
      %v1262 = vrot.slane %v973, %v1261
      %v1263 = vlaneseq
      %v1264 = vshrl.u32 %v1263, 7
      %v1265 = vsub.s32 0, %v1264
      %v1266 = vrot.slane %v974, %v1265
      %v1267 = vlaneseq
      %v1268 = vshrl.u32 %v1267, 7
      %v1269 = vsub.s32 0, %v1268
      %v1270 = vrot.slane %v975, %v1269
      %v1271 = vlaneseq
      %v1272 = vshrl.u32 %v1271, 7
      %v1273 = vsub.s32 0, %v1272
      %v1274 = vrot.slane %v976, %v1273
      %v1275 = vlaneseq
      %v1276 = vshrl.u32 %v1275, 7
      %v1277 = vsub.s32 0, %v1276
      %v1278 = vrot.slane %v977, %v1277
      %v1279 = vlaneseq
      %v1280 = vshrl.u32 %v1279, 7
      %v1281 = vsub.s32 0, %v1280
      %v1282 = vrot.slane %v978, %v1281
      %v1283 = vlaneseq
      %v1284 = vshrl.u32 %v1283, 7
      %v1285 = vsub.s32 0, %v1284
      %v1286 = vrot.slane %v979, %v1285
      %v1287 = vlaneseq
      %v1288 = vshrl.u32 %v1287, 7
      %v1289 = vsub.s32 0, %v1288
      %v1290 = vrot.slane %v980, %v1289
      %v1291 = vlaneseq
      %v1292 = vshrl.u32 %v1291, 7
      %v1293 = vsub.s32 0, %v1292
      %v1294 = vrot.slane %v981, %v1293
      %v1295 = vlaneseq
      %v1296 = vshrl.u32 %v1295, 7
      %v1297 = vsub.s32 0, %v1296
      %v1298 = vrot.slane %v982, %v1297
      %v1299 = vlaneseq
      %v1300 = vshrl.u32 %v1299, 7
      %v1301 = vsub.s32 0, %v1300
      %v1302 = vrot.slane %v983, %v1301
      %v1303 = vlaneseq
      %v1304 = vshrl.u32 %v1303, 7
      %v1305 = vsub.s32 0, %v1304
      %v1306 = vrot.slane %v984, %v1305
      %v1307 = vlaneseq
      %v1308 = vshrl.u32 %v1307, 7
      %v1309 = vsub.s32 0, %v1308
      %v1310 = vrot.slane %v985, %v1309
      %v1311 = vlaneseq
      %v1312 = vshrl.u32 %v1311, 7
      %v1313 = vsub.s32 0, %v1312
      %v1314 = vrot.slane %v986, %v1313
      %v1315 = vlaneseq
      %v1316 = vshrl.u32 %v1315, 7
      %v1317 = vsub.s32 0, %v1316
      %v1318 = vrot.slane %v987, %v1317
      %v1319 = vlaneseq
      %v1320 = vshrl.u32 %v1319, 7
      %v1321 = vsub.s32 0, %v1320
      %v1322 = vrot.slane %v988, %v1321
      %v1323 = vlaneseq
      %v1324 = vshrl.u32 %v1323, 7
      %v1325 = vsub.s32 0, %v1324
      %v1326 = vrot.slane %v989, %v1325
      %v1327 = vlaneseq
      %v1328 = vshrl.u32 %v1327, 7
      %v1329 = vsub.s32 0, %v1328
      %v1330 = vrot.slane %v990, %v1329
      %v1331 = vlaneseq
      %v1332 = vshrl.u32 %v1331, 7
      %v1333 = vsub.s32 0, %v1332
      %v1334 = vrot.slane %v991, %v1333
      %v1335 = vlaneseq
      %v1336 = vshrl.u32 %v1335, 7
      %v1337 = vsub.s32 0, %v1336
      %v1338 = vrot.slane %v992, %v1337
      %v1339 = vlaneseq
      %v1340 = vshrl.u32 %v1339, 7
      %v1341 = vsub.s32 0, %v1340
      %v1342 = vrot.slane %v993, %v1341
      %v1343 = vlaneseq
      %v1344 = vshrl.u32 %v1343, 7
      %v1345 = vsub.s32 0, %v1344
      %v1346 = vrot.slane %v994, %v1345
      %v1347 = vlaneseq
      %v1348 = vshrl.u32 %v1347, 7
      %v1349 = vsub.s32 0, %v1348
      %v1350 = vrot.slane %v995, %v1349
      %v1351 = vlaneseq
      %v1352 = vshrl.u32 %v1351, 7
      %v1353 = vsub.s32 0, %v1352
      %v1354 = vrot.slane %v996, %v1353
      %v1355 = vlaneseq
      %v1356 = vshrl.u32 %v1355, 7
      %v1357 = vsub.s32 0, %v1356
      %v1358 = vrot.slane %v997, %v1357
      %v1359 = vlaneseq
      %v1360 = vshrl.u32 %v1359, 7
      %v1361 = vsub.s32 0, %v1360
      %v1362 = vrot.slane %v998, %v1361
      %v1363 = vlaneseq
      %v1364 = vshrl.u32 %v1363, 7
      %v1365 = vsub.s32 0, %v1364
      %v1366 = vrot.slane %v999, %v1365
      %v1367 = vlaneseq
      %v1368 = vshrl.u32 %v1367, 7
      %v1369 = vsub.s32 0, %v1368
      %v1370 = vrot.slane %v1000, %v1369
      %v1371 = vlaneseq
      %v1372 = vshrl.u32 %v1371, 7
      %v1373 = vsub.s32 0, %v1372
      %v1374 = vrot.slane %v1001, %v1373
      %v1375 = vlaneseq
      %v1376 = vshrl.u32 %v1375, 7
      %v1377 = vsub.s32 0, %v1376
      %v1378 = vrot.slane %v1002, %v1377
      %v1379 = vlaneseq
      %v1380 = vshrl.u32 %v1379, 7
      %v1381 = vsub.s32 0, %v1380
      %v1382 = vrot.slane %v1003, %v1381
      %v1383 = vlaneseq
      %v1384 = vshrl.u32 %v1383, 7
      %v1385 = vsub.s32 0, %v1384
      %v1386 = vrot.slane %v1004, %v1385
      %v1387 = vlaneseq
      %v1388 = vshrl.u32 %v1387, 7
      %v1389 = vsub.s32 0, %v1388
      %v1390 = vrot.slane %v1005, %v1389
      %v1391 = vlaneseq
      %v1392 = vshrl.u32 %v1391, 7
      %v1393 = vsub.s32 0, %v1392
      %v1394 = vrot.slane %v1006, %v1393
      %v1395 = vlaneseq
      %v1396 = vshrl.u32 %v1395, 7
      %v1397 = vsub.s32 0, %v1396
      %v1398 = vrot.slane %v1007, %v1397
      %v1399 = vlaneseq
      %v1400 = vshrl.u32 %v1399, 7
      %v1401 = vsub.s32 0, %v1400
      %v1402 = vrot.slane %v1008, %v1401
      %v1403 = vlaneseq
      %v1404 = vshrl.u32 %v1403, 7
      %v1405 = vsub.s32 0, %v1404
      %v1406 = vrot.slane %v1009, %v1405
      %v1407 = vlaneseq
      %v1408 = vshrl.u32 %v1407, 7
      %v1409 = vsub.s32 0, %v1408
      %v1410 = vrot.slane %v1010, %v1409
      %v1411 = vlaneseq
      %v1412 = vshrl.u32 %v1411, 7
      %v1413 = vsub.s32 0, %v1412
      %v1414 = vrot.slane %v1011, %v1413
      %v1415 = vlaneseq
      %v1416 = vshrl.u32 %v1415, 7
      %v1417 = vsub.s32 0, %v1416
      %v1418 = vrot.slane %v1012, %v1417
      %v1419 = vlaneseq
      %v1420 = vshrl.u32 %v1419, 7
      %v1421 = vsub.s32 0, %v1420
      %v1422 = vrot.slane %v1013, %v1421
      %v1423 = vlaneseq
      %v1424 = vshrl.u32 %v1423, 7
      %v1425 = vsub.s32 0, %v1424
      %v1426 = vrot.slane %v1014, %v1425
      %v1427 = vlaneseq
      %v1428 = vshrl.u32 %v1427, 7
      %v1429 = vsub.s32 0, %v1428
      %v1430 = vrot.slane %v1015, %v1429
      %v1431 = vlaneseq
      %v1432 = vshrl.u32 %v1431, 7
      %v1433 = vsub.s32 0, %v1432
      %v1434 = vrot.slane %v1016, %v1433
      %v1435 = vlaneseq
      %v1436 = vshrl.u32 %v1435, 7
      %v1437 = vsub.s32 0, %v1436
      %v1438 = vrot.slane %v1017, %v1437
      %v1439 = vlaneseq
      %v1440 = vshrl.u32 %v1439, 7
      %v1441 = vsub.s32 0, %v1440
      %v1442 = vrot.slane %v1018, %v1441
      %v1443 = vlaneseq
      %v1444 = vshrl.u32 %v1443, 7
      %v1445 = vsub.s32 0, %v1444
      %v1446 = vrot.slane %v1019, %v1445
      %v1447 = vlaneseq
      %v1448 = vshrl.u32 %v1447, 7
      %v1449 = vsub.s32 0, %v1448
      %v1450 = vrot.slane %v1020, %v1449
      %v1451 = vlaneseq
      %v1452 = vshrl.u32 %v1451, 7
      %v1453 = vsub.s32 0, %v1452
      %v1454 = vrot.slane %v1021, %v1453
      %v1455 = vlaneseq
      %v1456 = vshrl.u32 %v1455, 7
      %v1457 = vsub.s32 0, %v1456
      %v1458 = vrot.slane %v1022, %v1457
      %v1459 = vlaneseq
      %v1460 = vshrl.u32 %v1459, 7
      %v1461 = vsub.s32 0, %v1460
      %v1462 = vrot.slane %v1023, %v1461
      %v1463 = vlaneseq
      %v1464 = vshrl.u32 %v1463, 7
      %v1465 = vsub.s32 0, %v1464
      %v1466 = vrot.slane %v1024, %v1465
      %v1467 = vlaneseq
      %v1468 = vshrl.u32 %v1467, 7
      %v1469 = vsub.s32 0, %v1468
      %v1470 = vrot.slane %v1025, %v1469
      %v1471 = vlaneseq
      %v1472 = vshrl.u32 %v1471, 7
      %v1473 = vsub.s32 0, %v1472
      %v1474 = vrot.slane %v1026, %v1473
      %v1475 = vlaneseq
      %v1476 = vshrl.u32 %v1475, 7
      %v1477 = vsub.s32 0, %v1476
      %v1478 = vrot.slane %v1027, %v1477
      %v1479 = vlaneseq
      %v1480 = vshrl.u32 %v1479, 7
      %v1481 = vsub.s32 0, %v1480
      %v1482 = vrot.slane %v1028, %v1481
      %v1483 = vlaneseq
      %v1484 = vshrl.u32 %v1483, 7
      %v1485 = vsub.s32 0, %v1484
      %v1486 = vrot.slane %v1029, %v1485
      %v1487 = vlaneseq
      %v1488 = vshrl.u32 %v1487, 7
      %v1489 = vsub.s32 0, %v1488
      %v1490 = vrot.slane %v1030, %v1489
      %v1491 = vlaneseq
      %v1492 = vshrl.u32 %v1491, 7
      %v1493 = vsub.s32 0, %v1492
      %v1494 = vrot.slane %v1031, %v1493
      %v1495 = vlaneseq
      %v1496 = vshrl.u32 %v1495, 7
      %v1497 = vsub.s32 0, %v1496
      %v1498 = vrot.slane %v1032, %v1497
      %v1499 = vlaneseq
      %v1500 = vshrl.u32 %v1499, 7
      %v1501 = vsub.s32 0, %v1500
      %v1502 = vrot.slane %v1033, %v1501
      %v1503 = vlaneseq
      %v1504 = vshrl.u32 %v1503, 7
      %v1505 = vsub.s32 0, %v1504
      %v1506 = vrot.slane %v1034, %v1505
      %v1507 = vlaneseq
      %v1508 = vshrl.u32 %v1507, 7
      %v1509 = vsub.s32 0, %v1508
      %v1510 = vrot.slane %v1035, %v1509
      %v1511 = vlaneseq
      %v1512 = vshrl.u32 %v1511, 7
      %v1513 = vsub.s32 0, %v1512
      %v1514 = vrot.slane %v1036, %v1513
      %v1515 = vlaneseq
      %v1516 = vshrl.u32 %v1515, 7
      %v1517 = vsub.s32 0, %v1516
      %v1518 = vrot.slane %v1037, %v1517
      %v1519 = vlaneseq
      %v1520 = vshrl.u32 %v1519, 7
      %v1521 = vsub.s32 0, %v1520
      %v1522 = vrot.slane %v1038, %v1521
      %v1523 = vlaneseq
      %v1524 = vshrl.u32 %v1523, 7
      %v1525 = vsub.s32 0, %v1524
      %v1526 = vrot.slane %v1039, %v1525
      %v1527 = vlaneseq
      %v1528 = vshrl.u32 %v1527, 7
      %v1529 = vsub.s32 0, %v1528
      %v1530 = vrot.slane %v1040, %v1529
      %v1531 = vlaneseq
      %v1532 = vshrl.u32 %v1531, 7
      %v1533 = vsub.s32 0, %v1532
      %v1534 = vrot.slane %v1041, %v1533
      %v1535 = vlaneseq
      %v1536 = vshrl.u32 %v1535, 7
      %v1537 = vsub.s32 0, %v1536
      %v1538 = vrot.slane %v1042, %v1537
      %v1539 = vlaneseq
      %v1540 = vshrl.u32 %v1539, 7
      %v1541 = vsub.s32 0, %v1540
      %v1542 = vrot.slane %v1043, %v1541
      %v1543 = vlaneseq
      %v1544 = vshrl.u32 %v1543, 7
      %v1545 = vsub.s32 0, %v1544
      %v1546 = vrot.slane %v1044, %v1545
      %v1547 = vlaneseq
      %v1548 = vshrl.u32 %v1547, 7
      %v1549 = vsub.s32 0, %v1548
      %v1550 = vrot.slane %v1045, %v1549
      %v1551 = vlaneseq
      %v1552 = vshrl.u32 %v1551, 7
      %v1553 = vsub.s32 0, %v1552
      %v1554 = vrot.slane %v1046, %v1553
      %v1555 = vlaneseq
      %v1556 = vshrl.u32 %v1555, 7
      %v1557 = vsub.s32 0, %v1556
      %v1558 = vrot.slane %v1047, %v1557
      %v1559 = vlaneseq
      %v1560 = vshrl.u32 %v1559, 7
      %v1561 = vsub.s32 0, %v1560
      %v1562 = vrot.slane %v1048, %v1561
      %v1563 = vlaneseq
      %v1564 = vshrl.u32 %v1563, 7
      %v1565 = vsub.s32 0, %v1564
      %v1566 = vrot.slane %v1049, %v1565
      %v1567 = vlaneseq
      %v1568 = vshrl.u32 %v1567, 7
      %v1569 = vsub.s32 0, %v1568
      %v1570 = vrot.slane %v1050, %v1569
      %v1571 = vlaneseq
      %v1572 = vshrl.u32 %v1571, 7
      %v1573 = vsub.s32 0, %v1572
      %v1574 = vrot.slane %v1051, %v1573
      %v1575 = vlaneseq
      %v1576 = vshrl.u32 %v1575, 7
      %v1577 = vsub.s32 0, %v1576
      %v1578 = vrot.slane %v1052, %v1577
      %v1579 = vlaneseq
      %v1580 = vshrl.u32 %v1579, 7
      %v1581 = vsub.s32 0, %v1580
      %v1582 = vrot.slane %v1053, %v1581
      %v1583 = vlaneseq
      %v1584 = vshrl.u32 %v1583, 7
      %v1585 = vsub.s32 0, %v1584
      %v1586 = vrot.slane %v1054, %v1585
      %v1587 = vlaneseq
      %v1588 = vshrl.u32 %v1587, 7
      %v1589 = vsub.s32 0, %v1588
      %v1590 = vrot.slane %v1055, %v1589
      %v1591 = vlaneseq
      %v1592 = vshrl.u32 %v1591, 7
      %v1593 = vsub.s32 0, %v1592
      %v1594 = vrot.slane %v1056, %v1593
      %v1595 = vlaneseq
      %v1596 = vshrl.u32 %v1595, 7
      %v1597 = vsub.s32 0, %v1596
      %v1598 = vrot.slane %v1057, %v1597
      %v1599 = vlaneseq
      %v1600 = vshrl.u32 %v1599, 7
      %v1601 = vsub.s32 0, %v1600
      %v1602 = vrot.slane %v1058, %v1601
      %v1603 = vlaneseq
      %v1604 = vshrl.u32 %v1603, 7
      %v1605 = vsub.s32 0, %v1604
      %v1606 = vrot.slane %v1059, %v1605
      %v1607 = vlaneseq
      %v1608 = vshrl.u32 %v1607, 7
      %v1609 = vsub.s32 0, %v1608
      %v1610 = vrot.slane %v1060, %v1609
      %v1611 = vlaneseq
      %v1612 = vshrl.u32 %v1611, 7
      %v1613 = vsub.s32 0, %v1612
      %v1614 = vrot.slane %v1061, %v1613
      %v1615 = vlaneseq
      %v1616 = vshrl.u32 %v1615, 7
      %v1617 = vsub.s32 0, %v1616
      %v1618 = vrot.slane %v1062, %v1617
      %v1619 = vlaneseq
      %v1620 = vshrl.u32 %v1619, 7
      %v1621 = vsub.s32 0, %v1620
      %v1622 = vrot.slane %v1063, %v1621
      %v1623 = vlaneseq
      %v1624 = vshrl.u32 %v1623, 7
      %v1625 = vsub.s32 0, %v1624
      %v1626 = vrot.slane %v1064, %v1625
      %v1627 = vlaneseq
      %v1628 = vshrl.u32 %v1627, 7
      %v1629 = vsub.s32 0, %v1628
      %v1630 = vrot.slane %v1065, %v1629
      %v1631 = vlaneseq
      %v1632 = vshrl.u32 %v1631, 7
      %v1633 = vsub.s32 0, %v1632
      %v1634 = vrot.slane %v1066, %v1633
      %v1635 = vlaneseq
      %v1636 = vshrl.u32 %v1635, 7
      %v1637 = vsub.s32 0, %v1636
      %v1638 = vrot.slane %v1067, %v1637
      %v1639 = vlaneseq
      %v1640 = vshrl.u32 %v1639, 7
      %v1641 = vsub.s32 0, %v1640
      %v1642 = vrot.slane %v1068, %v1641
      %v1643 = vlaneseq
      %v1644 = vshrl.u32 %v1643, 7
      %v1645 = vsub.s32 0, %v1644
      %v1646 = vrot.slane %v1069, %v1645
      %v1647 = vlaneseq
      %v1648 = vshrl.u32 %v1647, 7
      %v1649 = vsub.s32 0, %v1648
      %v1650 = vrot.slane %v1070, %v1649
      %v1651 = vlaneseq
      %v1652 = vshrl.u32 %v1651, 7
      %v1653 = vsub.s32 0, %v1652
      %v1654 = vrot.slane %v1071, %v1653
      %v1655 = vlaneseq
      %v1656 = vshrl.u32 %v1655, 7
      %v1657 = vsub.s32 0, %v1656
      %v1658 = vrot.slane %v1072, %v1657
      %v1659 = vlaneseq
      %v1660 = vshrl.u32 %v1659, 7
      %v1661 = vsub.s32 0, %v1660
      %v1662 = vrot.slane %v1073, %v1661
      %v1663 = vlaneseq
      %v1664 = vshrl.u32 %v1663, 7
      %v1665 = vsub.s32 0, %v1664
      %v1666 = vrot.slane %v1074, %v1665
      %v1667 = vlaneseq
      %v1668 = vshrl.u32 %v1667, 7
      %v1669 = vsub.s32 0, %v1668
      %v1670 = vrot.slane %v1075, %v1669
      %v1671 = vlaneseq
      %v1672 = vshrl.u32 %v1671, 7
      %v1673 = vsub.s32 0, %v1672
      %v1674 = vrot.slane %v1076, %v1673
      %v1675 = vlaneseq
      %v1676 = vshrl.u32 %v1675, 7
      %v1677 = vsub.s32 0, %v1676
      %v1678 = vrot.slane %v1077, %v1677
      %v1679 = vlaneseq
      %v1680 = vshrl.u32 %v1679, 7
      %v1681 = vsub.s32 0, %v1680
      %v1682 = vrot.slane %v1078, %v1681
      %v1683 = vlaneseq
      %v1684 = vshrl.u32 %v1683, 7
      %v1685 = vsub.s32 0, %v1684
      %v1686 = vrot.slane %v1079, %v1685
      %v1687 = vlaneseq
      %v1688 = vshrl.u32 %v1687, 7
      %v1689 = vsub.s32 0, %v1688
      %v1690 = vrot.slane %v1080, %v1689
      %v1691 = vlaneseq
      %v1692 = vshrl.u32 %v1691, 7
      %v1693 = vsub.s32 0, %v1692
      %v1694 = vrot.slane %v1081, %v1693
      %v1695 = vlaneseq
      %v1696 = vshrl.u32 %v1695, 7
      %v1697 = vsub.s32 0, %v1696
      %v1698 = vrot.slane %v1082, %v1697
      %v1699 = vlaneseq
      %v1700 = vshrl.u32 %v1699, 7
      %v1701 = vsub.s32 0, %v1700
      %v1702 = vrot.slane %v1083, %v1701
      %v1703 = vlaneseq
      %v1704 = vshrl.u32 %v1703, 7
      %v1705 = vsub.s32 0, %v1704
      %v1706 = vrot.slane %v1084, %v1705
      %v1707 = vlaneseq
      %v1708 = vshrl.u32 %v1707, 7
      %v1709 = vsub.s32 0, %v1708
      %v1710 = vrot.slane %v1085, %v1709
      %v1711 = vlaneseq
      %v1712 = vshrl.u32 %v1711, 7
      %v1713 = vsub.s32 0, %v1712
      %v1714 = vrot.slane %v1086, %v1713
      %v1715 = vlaneseq
      %v1716 = vshrl.u32 %v1715, 7
      %v1717 = vsub.s32 0, %v1716
      %v1718 = vrot.slane %v1087, %v1717
      %v1719 = vlaneseq
      %v1720 = vshrl.u32 %v1719, 7
      %v1721 = vsub.s32 0, %v1720
      %v1722 = vrot.slane %v1088, %v1721
      %v1723 = vlaneseq
      %v1724 = vshrl.u32 %v1723, 7
      %v1725 = vsub.s32 0, %v1724
      %v1726 = vrot.slane %v1089, %v1725
      %v1727 = vlaneseq
      %v1728 = vshrl.u32 %v1727, 7
      %v1729 = vsub.s32 0, %v1728
      %v1730 = vrot.slane %v1090, %v1729
      %v1732 = vpack.i.b16 %v1094, %v1094
      %v1734 = vlaneseq
      %v1735 = vshrl.u32 %v1734, 7
      %v1736 = vsub.s32 0, %v1735
      %v1737 = vrot.slane %v1732, %v1736
      %v1739 = vpack.i.b16 %v1098, %v1098
      %v1741 = vlaneseq
      %v1742 = vshrl.u32 %v1741, 7
      %v1743 = vsub.s32 0, %v1742
      %v1744 = vrot.slane %v1739, %v1743
      %v1746 = vpack.i.b16 %v1102, %v1102
      %v1748 = vlaneseq
      %v1749 = vshrl.u32 %v1748, 7
      %v1750 = vsub.s32 0, %v1749
      %v1751 = vrot.slane %v1746, %v1750
      %v1753 = vpack.i.b16 %v1106, %v1106
      %v1755 = vlaneseq
      %v1756 = vshrl.u32 %v1755, 7
      %v1757 = vsub.s32 0, %v1756
      %v1758 = vrot.slane %v1753, %v1757
      %v1760 = vpack.i.b16 %v1110, %v1110
      %v1762 = vlaneseq
      %v1763 = vshrl.u32 %v1762, 7
      %v1764 = vsub.s32 0, %v1763
      %v1765 = vrot.slane %v1760, %v1764
      %v1767 = vpack.i.b16 %v1114, %v1114
      %v1769 = vlaneseq
      %v1770 = vshrl.u32 %v1769, 7
      %v1771 = vsub.s32 0, %v1770
      %v1772 = vrot.slane %v1767, %v1771
      %v1774 = vpack.i.b16 %v1118, %v1118
      %v1776 = vlaneseq
      %v1777 = vshrl.u32 %v1776, 7
      %v1778 = vsub.s32 0, %v1777
      %v1779 = vrot.slane %v1774, %v1778
      %v1781 = vpack.i.b16 %v1122, %v1122
      %v1783 = vlaneseq
      %v1784 = vshrl.u32 %v1783, 7
      %v1785 = vsub.s32 0, %v1784
      %v1786 = vrot.slane %v1781, %v1785
      %v1788 = vpack.i.b16 %v1126, %v1126
      %v1790 = vlaneseq
      %v1791 = vshrl.u32 %v1790, 7
      %v1792 = vsub.s32 0, %v1791
      %v1793 = vrot.slane %v1788, %v1792
      %v1795 = vpack.i.b16 %v1130, %v1130
      %v1797 = vlaneseq
      %v1798 = vshrl.u32 %v1797, 7
      %v1799 = vsub.s32 0, %v1798
      %v1800 = vrot.slane %v1795, %v1799
      %v1802 = vpack.i.b16 %v1134, %v1134
      %v1804 = vlaneseq
      %v1805 = vshrl.u32 %v1804, 7
      %v1806 = vsub.s32 0, %v1805
      %v1807 = vrot.slane %v1802, %v1806
      %v1809 = vpack.i.b16 %v1138, %v1138
      %v1811 = vlaneseq
      %v1812 = vshrl.u32 %v1811, 7
      %v1813 = vsub.s32 0, %v1812
      %v1814 = vrot.slane %v1809, %v1813
      %v1816 = vpack.i.b16 %v1142, %v1142
      %v1818 = vlaneseq
      %v1819 = vshrl.u32 %v1818, 7
      %v1820 = vsub.s32 0, %v1819
      %v1821 = vrot.slane %v1816, %v1820
      %v1823 = vpack.i.b16 %v1146, %v1146
      %v1825 = vlaneseq
      %v1826 = vshrl.u32 %v1825, 7
      %v1827 = vsub.s32 0, %v1826
      %v1828 = vrot.slane %v1823, %v1827
      %v1830 = vpack.i.b16 %v1150, %v1150
      %v1832 = vlaneseq
      %v1833 = vshrl.u32 %v1832, 7
      %v1834 = vsub.s32 0, %v1833
      %v1835 = vrot.slane %v1830, %v1834
      %v1837 = vpack.i.b16 %v1154, %v1154
      %v1839 = vlaneseq
      %v1840 = vshrl.u32 %v1839, 7
      %v1841 = vsub.s32 0, %v1840
      %v1842 = vrot.slane %v1837, %v1841
      %v1844 = vpack.i.b16 %v1158, %v1158
      %v1846 = vlaneseq
      %v1847 = vshrl.u32 %v1846, 7
      %v1848 = vsub.s32 0, %v1847
      %v1849 = vrot.slane %v1844, %v1848
      %v1851 = vpack.i.b16 %v1162, %v1162
      %v1853 = vlaneseq
      %v1854 = vshrl.u32 %v1853, 7
      %v1855 = vsub.s32 0, %v1854
      %v1856 = vrot.slane %v1851, %v1855
      %v1858 = vpack.i.b16 %v1166, %v1166
      %v1860 = vlaneseq
      %v1861 = vshrl.u32 %v1860, 7
      %v1862 = vsub.s32 0, %v1861
      %v1863 = vrot.slane %v1858, %v1862
      %v1865 = vpack.i.b16 %v1170, %v1170
      %v1867 = vlaneseq
      %v1868 = vshrl.u32 %v1867, 7
      %v1869 = vsub.s32 0, %v1868
      %v1870 = vrot.slane %v1865, %v1869
      %v1872 = vpack.i.b16 %v1174, %v1174
      %v1874 = vlaneseq
      %v1875 = vshrl.u32 %v1874, 7
      %v1876 = vsub.s32 0, %v1875
      %v1877 = vrot.slane %v1872, %v1876
      %v1879 = vpack.i.b16 %v1178, %v1178
      %v1881 = vlaneseq
      %v1882 = vshrl.u32 %v1881, 7
      %v1883 = vsub.s32 0, %v1882
      %v1884 = vrot.slane %v1879, %v1883
      %v1886 = vpack.i.b16 %v1182, %v1182
      %v1888 = vlaneseq
      %v1889 = vshrl.u32 %v1888, 7
      %v1890 = vsub.s32 0, %v1889
      %v1891 = vrot.slane %v1886, %v1890
      %v1893 = vpack.i.b16 %v1186, %v1186
      %v1895 = vlaneseq
      %v1896 = vshrl.u32 %v1895, 7
      %v1897 = vsub.s32 0, %v1896
      %v1898 = vrot.slane %v1893, %v1897
      %v1900 = vpack.i.b16 %v1190, %v1190
      %v1902 = vlaneseq
      %v1903 = vshrl.u32 %v1902, 7
      %v1904 = vsub.s32 0, %v1903
      %v1905 = vrot.slane %v1900, %v1904
      %v1907 = vpack.i.b16 %v1194, %v1194
      %v1909 = vlaneseq
      %v1910 = vshrl.u32 %v1909, 7
      %v1911 = vsub.s32 0, %v1910
      %v1912 = vrot.slane %v1907, %v1911
      %v1914 = vpack.i.b16 %v1198, %v1198
      %v1916 = vlaneseq
      %v1917 = vshrl.u32 %v1916, 7
      %v1918 = vsub.s32 0, %v1917
      %v1919 = vrot.slane %v1914, %v1918
      %v1921 = vpack.i.b16 %v1202, %v1202
      %v1923 = vlaneseq
      %v1924 = vshrl.u32 %v1923, 7
      %v1925 = vsub.s32 0, %v1924
      %v1926 = vrot.slane %v1921, %v1925
      %v1928 = vpack.i.b16 %v1206, %v1206
      %v1930 = vlaneseq
      %v1931 = vshrl.u32 %v1930, 7
      %v1932 = vsub.s32 0, %v1931
      %v1933 = vrot.slane %v1928, %v1932
      %v1935 = vpack.i.b16 %v1210, %v1210
      %v1937 = vlaneseq
      %v1938 = vshrl.u32 %v1937, 7
      %v1939 = vsub.s32 0, %v1938
      %v1940 = vrot.slane %v1935, %v1939
      %v1942 = vpack.i.b16 %v1214, %v1214
      %v1944 = vlaneseq
      %v1945 = vshrl.u32 %v1944, 7
      %v1946 = vsub.s32 0, %v1945
      %v1947 = vrot.slane %v1942, %v1946
      %v1949 = vpack.i.b16 %v1218, %v1218
      %v1951 = vlaneseq
      %v1952 = vshrl.u32 %v1951, 7
      %v1953 = vsub.s32 0, %v1952
      %v1954 = vrot.slane %v1949, %v1953
      %v1956 = vpack.i.b16 %v1222, %v1222
      %v1958 = vlaneseq
      %v1959 = vshrl.u32 %v1958, 7
      %v1960 = vsub.s32 0, %v1959
      %v1961 = vrot.slane %v1956, %v1960
      %v1963 = vpack.i.b16 %v1226, %v1226
      %v1965 = vlaneseq
      %v1966 = vshrl.u32 %v1965, 7
      %v1967 = vsub.s32 0, %v1966
      %v1968 = vrot.slane %v1963, %v1967
      %v1970 = vpack.i.b16 %v1230, %v1230
      %v1972 = vlaneseq
      %v1973 = vshrl.u32 %v1972, 7
      %v1974 = vsub.s32 0, %v1973
      %v1975 = vrot.slane %v1970, %v1974
      %v1977 = vpack.i.b16 %v1234, %v1234
      %v1979 = vlaneseq
      %v1980 = vshrl.u32 %v1979, 7
      %v1981 = vsub.s32 0, %v1980
      %v1982 = vrot.slane %v1977, %v1981
      %v1984 = vpack.i.b16 %v1238, %v1238
      %v1986 = vlaneseq
      %v1987 = vshrl.u32 %v1986, 7
      %v1988 = vsub.s32 0, %v1987
      %v1989 = vrot.slane %v1984, %v1988
      %v1991 = vpack.i.b16 %v1242, %v1242
      %v1993 = vlaneseq
      %v1994 = vshrl.u32 %v1993, 7
      %v1995 = vsub.s32 0, %v1994
      %v1996 = vrot.slane %v1991, %v1995
      %v1998 = vpack.i.b16 %v1246, %v1246
      %v2000 = vlaneseq
      %v2001 = vshrl.u32 %v2000, 7
      %v2002 = vsub.s32 0, %v2001
      %v2003 = vrot.slane %v1998, %v2002
      %v2005 = vpack.i.b16 %v1250, %v1250
      %v2007 = vlaneseq
      %v2008 = vshrl.u32 %v2007, 7
      %v2009 = vsub.s32 0, %v2008
      %v2010 = vrot.slane %v2005, %v2009
      %v2012 = vpack.i.b16 %v1254, %v1254
      %v2014 = vlaneseq
      %v2015 = vshrl.u32 %v2014, 7
      %v2016 = vsub.s32 0, %v2015
      %v2017 = vrot.slane %v2012, %v2016
      %v2019 = vpack.i.b16 %v1258, %v1258
      %v2021 = vlaneseq
      %v2022 = vshrl.u32 %v2021, 7
      %v2023 = vsub.s32 0, %v2022
      %v2024 = vrot.slane %v2019, %v2023
      %v2026 = vpack.i.b16 %v1262, %v1262
      %v2028 = vlaneseq
      %v2029 = vshrl.u32 %v2028, 7
      %v2030 = vsub.s32 0, %v2029
      %v2031 = vrot.slane %v2026, %v2030
      %v2033 = vpack.i.b16 %v1266, %v1266
      %v2035 = vlaneseq
      %v2036 = vshrl.u32 %v2035, 7
      %v2037 = vsub.s32 0, %v2036
      %v2038 = vrot.slane %v2033, %v2037
      %v2040 = vpack.i.b16 %v1270, %v1270
      %v2042 = vlaneseq
      %v2043 = vshrl.u32 %v2042, 7
      %v2044 = vsub.s32 0, %v2043
      %v2045 = vrot.slane %v2040, %v2044
      %v2047 = vpack.i.b16 %v1274, %v1274
      %v2049 = vlaneseq
      %v2050 = vshrl.u32 %v2049, 7
      %v2051 = vsub.s32 0, %v2050
      %v2052 = vrot.slane %v2047, %v2051
      %v2054 = vpack.i.b16 %v1278, %v1278
      %v2056 = vlaneseq
      %v2057 = vshrl.u32 %v2056, 7
      %v2058 = vsub.s32 0, %v2057
      %v2059 = vrot.slane %v2054, %v2058
      %v2061 = vpack.i.b16 %v1282, %v1282
      %v2063 = vlaneseq
      %v2064 = vshrl.u32 %v2063, 7
      %v2065 = vsub.s32 0, %v2064
      %v2066 = vrot.slane %v2061, %v2065
      %v2068 = vpack.i.b16 %v1286, %v1286
      %v2070 = vlaneseq
      %v2071 = vshrl.u32 %v2070, 7
      %v2072 = vsub.s32 0, %v2071
      %v2073 = vrot.slane %v2068, %v2072
      %v2075 = vpack.i.b16 %v1290, %v1290
      %v2077 = vlaneseq
      %v2078 = vshrl.u32 %v2077, 7
      %v2079 = vsub.s32 0, %v2078
      %v2080 = vrot.slane %v2075, %v2079
      %v2082 = vpack.i.b16 %v1294, %v1294
      %v2084 = vlaneseq
      %v2085 = vshrl.u32 %v2084, 7
      %v2086 = vsub.s32 0, %v2085
      %v2087 = vrot.slane %v2082, %v2086
      %v2089 = vpack.i.b16 %v1298, %v1298
      %v2091 = vlaneseq
      %v2092 = vshrl.u32 %v2091, 7
      %v2093 = vsub.s32 0, %v2092
      %v2094 = vrot.slane %v2089, %v2093
      %v2096 = vpack.i.b16 %v1302, %v1302
      %v2098 = vlaneseq
      %v2099 = vshrl.u32 %v2098, 7
      %v2100 = vsub.s32 0, %v2099
      %v2101 = vrot.slane %v2096, %v2100
      %v2103 = vpack.i.b16 %v1306, %v1306
      %v2105 = vlaneseq
      %v2106 = vshrl.u32 %v2105, 7
      %v2107 = vsub.s32 0, %v2106
      %v2108 = vrot.slane %v2103, %v2107
      %v2110 = vpack.i.b16 %v1310, %v1310
      %v2112 = vlaneseq
      %v2113 = vshrl.u32 %v2112, 7
      %v2114 = vsub.s32 0, %v2113
      %v2115 = vrot.slane %v2110, %v2114
      %v2117 = vpack.i.b16 %v1314, %v1314
      %v2119 = vlaneseq
      %v2120 = vshrl.u32 %v2119, 7
      %v2121 = vsub.s32 0, %v2120
      %v2122 = vrot.slane %v2117, %v2121
      %v2124 = vpack.i.b16 %v1318, %v1318
      %v2126 = vlaneseq
      %v2127 = vshrl.u32 %v2126, 7
      %v2128 = vsub.s32 0, %v2127
      %v2129 = vrot.slane %v2124, %v2128
      %v2131 = vpack.i.b16 %v1322, %v1322
      %v2133 = vlaneseq
      %v2134 = vshrl.u32 %v2133, 7
      %v2135 = vsub.s32 0, %v2134
      %v2136 = vrot.slane %v2131, %v2135
      %v2138 = vpack.i.b16 %v1326, %v1326
      %v2140 = vlaneseq
      %v2141 = vshrl.u32 %v2140, 7
      %v2142 = vsub.s32 0, %v2141
      %v2143 = vrot.slane %v2138, %v2142
      %v2145 = vpack.i.b16 %v1330, %v1330
      %v2147 = vlaneseq
      %v2148 = vshrl.u32 %v2147, 7
      %v2149 = vsub.s32 0, %v2148
      %v2150 = vrot.slane %v2145, %v2149
      %v2152 = vpack.i.b16 %v1334, %v1334
      %v2154 = vlaneseq
      %v2155 = vshrl.u32 %v2154, 7
      %v2156 = vsub.s32 0, %v2155
      %v2157 = vrot.slane %v2152, %v2156
      %v2159 = vpack.i.b16 %v1338, %v1338
      %v2161 = vlaneseq
      %v2162 = vshrl.u32 %v2161, 7
      %v2163 = vsub.s32 0, %v2162
      %v2164 = vrot.slane %v2159, %v2163
      %v2166 = vpack.i.b16 %v1342, %v1342
      %v2168 = vlaneseq
      %v2169 = vshrl.u32 %v2168, 7
      %v2170 = vsub.s32 0, %v2169
      %v2171 = vrot.slane %v2166, %v2170
      %v2173 = vpack.i.b16 %v1346, %v1346
      %v2175 = vlaneseq
      %v2176 = vshrl.u32 %v2175, 7
      %v2177 = vsub.s32 0, %v2176
      %v2178 = vrot.slane %v2173, %v2177
      %v2180 = vpack.i.b16 %v1350, %v1350
      %v2182 = vlaneseq
      %v2183 = vshrl.u32 %v2182, 7
      %v2184 = vsub.s32 0, %v2183
      %v2185 = vrot.slane %v2180, %v2184
      %v2187 = vpack.i.b16 %v1354, %v1354
      %v2189 = vlaneseq
      %v2190 = vshrl.u32 %v2189, 7
      %v2191 = vsub.s32 0, %v2190
      %v2192 = vrot.slane %v2187, %v2191
      %v2194 = vpack.i.b16 %v1358, %v1358
      %v2196 = vlaneseq
      %v2197 = vshrl.u32 %v2196, 7
      %v2198 = vsub.s32 0, %v2197
      %v2199 = vrot.slane %v2194, %v2198
      %v2201 = vpack.i.b16 %v1362, %v1362
      %v2203 = vlaneseq
      %v2204 = vshrl.u32 %v2203, 7
      %v2205 = vsub.s32 0, %v2204
      %v2206 = vrot.slane %v2201, %v2205
      %v2208 = vpack.i.b16 %v1366, %v1366
      %v2210 = vlaneseq
      %v2211 = vshrl.u32 %v2210, 7
      %v2212 = vsub.s32 0, %v2211
      %v2213 = vrot.slane %v2208, %v2212
      %v2215 = vpack.i.b16 %v1370, %v1370
      %v2217 = vlaneseq
      %v2218 = vshrl.u32 %v2217, 7
      %v2219 = vsub.s32 0, %v2218
      %v2220 = vrot.slane %v2215, %v2219
      %v2222 = vpack.i.b16 %v1374, %v1374
      %v2224 = vlaneseq
      %v2225 = vshrl.u32 %v2224, 7
      %v2226 = vsub.s32 0, %v2225
      %v2227 = vrot.slane %v2222, %v2226
      %v2229 = vpack.i.b16 %v1378, %v1378
      %v2231 = vlaneseq
      %v2232 = vshrl.u32 %v2231, 7
      %v2233 = vsub.s32 0, %v2232
      %v2234 = vrot.slane %v2229, %v2233
      %v2236 = vpack.i.b16 %v1382, %v1382
      %v2238 = vlaneseq
      %v2239 = vshrl.u32 %v2238, 7
      %v2240 = vsub.s32 0, %v2239
      %v2241 = vrot.slane %v2236, %v2240
      %v2243 = vpack.i.b16 %v1386, %v1386
      %v2245 = vlaneseq
      %v2246 = vshrl.u32 %v2245, 7
      %v2247 = vsub.s32 0, %v2246
      %v2248 = vrot.slane %v2243, %v2247
      %v2250 = vpack.i.b16 %v1390, %v1390
      %v2252 = vlaneseq
      %v2253 = vshrl.u32 %v2252, 7
      %v2254 = vsub.s32 0, %v2253
      %v2255 = vrot.slane %v2250, %v2254
      %v2257 = vpack.i.b16 %v1394, %v1394
      %v2259 = vlaneseq
      %v2260 = vshrl.u32 %v2259, 7
      %v2261 = vsub.s32 0, %v2260
      %v2262 = vrot.slane %v2257, %v2261
      %v2264 = vpack.i.b16 %v1398, %v1398
      %v2266 = vlaneseq
      %v2267 = vshrl.u32 %v2266, 7
      %v2268 = vsub.s32 0, %v2267
      %v2269 = vrot.slane %v2264, %v2268
      %v2271 = vpack.i.b16 %v1402, %v1402
      %v2273 = vlaneseq
      %v2274 = vshrl.u32 %v2273, 7
      %v2275 = vsub.s32 0, %v2274
      %v2276 = vrot.slane %v2271, %v2275
      %v2278 = vpack.i.b16 %v1406, %v1406
      %v2280 = vlaneseq
      %v2281 = vshrl.u32 %v2280, 7
      %v2282 = vsub.s32 0, %v2281
      %v2283 = vrot.slane %v2278, %v2282
      %v2285 = vpack.i.b16 %v1410, %v1410
      %v2287 = vlaneseq
      %v2288 = vshrl.u32 %v2287, 7
      %v2289 = vsub.s32 0, %v2288
      %v2290 = vrot.slane %v2285, %v2289
      %v2292 = vpack.i.b16 %v1414, %v1414
      %v2294 = vlaneseq
      %v2295 = vshrl.u32 %v2294, 7
      %v2296 = vsub.s32 0, %v2295
      %v2297 = vrot.slane %v2292, %v2296
      %v2299 = vpack.i.b16 %v1418, %v1418
      %v2301 = vlaneseq
      %v2302 = vshrl.u32 %v2301, 7
      %v2303 = vsub.s32 0, %v2302
      %v2304 = vrot.slane %v2299, %v2303
      %v2306 = vpack.i.b16 %v1422, %v1422
      %v2308 = vlaneseq
      %v2309 = vshrl.u32 %v2308, 7
      %v2310 = vsub.s32 0, %v2309
      %v2311 = vrot.slane %v2306, %v2310
      %v2313 = vpack.i.b16 %v1426, %v1426
      %v2315 = vlaneseq
      %v2316 = vshrl.u32 %v2315, 7
      %v2317 = vsub.s32 0, %v2316
      %v2318 = vrot.slane %v2313, %v2317
      %v2320 = vpack.i.b16 %v1430, %v1430
      %v2322 = vlaneseq
      %v2323 = vshrl.u32 %v2322, 7
      %v2324 = vsub.s32 0, %v2323
      %v2325 = vrot.slane %v2320, %v2324
      %v2327 = vpack.i.b16 %v1434, %v1434
      %v2329 = vlaneseq
      %v2330 = vshrl.u32 %v2329, 7
      %v2331 = vsub.s32 0, %v2330
      %v2332 = vrot.slane %v2327, %v2331
      %v2334 = vpack.i.b16 %v1438, %v1438
      %v2336 = vlaneseq
      %v2337 = vshrl.u32 %v2336, 7
      %v2338 = vsub.s32 0, %v2337
      %v2339 = vrot.slane %v2334, %v2338
      %v2341 = vpack.i.b16 %v1442, %v1442
      %v2343 = vlaneseq
      %v2344 = vshrl.u32 %v2343, 7
      %v2345 = vsub.s32 0, %v2344
      %v2346 = vrot.slane %v2341, %v2345
      %v2348 = vpack.i.b16 %v1446, %v1446
      %v2350 = vlaneseq
      %v2351 = vshrl.u32 %v2350, 7
      %v2352 = vsub.s32 0, %v2351
      %v2353 = vrot.slane %v2348, %v2352
      %v2355 = vpack.i.b16 %v1450, %v1450
      %v2357 = vlaneseq
      %v2358 = vshrl.u32 %v2357, 7
      %v2359 = vsub.s32 0, %v2358
      %v2360 = vrot.slane %v2355, %v2359
      %v2362 = vpack.i.b16 %v1454, %v1454
      %v2364 = vlaneseq
      %v2365 = vshrl.u32 %v2364, 7
      %v2366 = vsub.s32 0, %v2365
      %v2367 = vrot.slane %v2362, %v2366
      %v2369 = vpack.i.b16 %v1458, %v1458
      %v2371 = vlaneseq
      %v2372 = vshrl.u32 %v2371, 7
      %v2373 = vsub.s32 0, %v2372
      %v2374 = vrot.slane %v2369, %v2373
      %v2376 = vpack.i.b16 %v1462, %v1462
      %v2378 = vlaneseq
      %v2379 = vshrl.u32 %v2378, 7
      %v2380 = vsub.s32 0, %v2379
      %v2381 = vrot.slane %v2376, %v2380
      %v2383 = vpack.i.b16 %v1466, %v1466
      %v2385 = vlaneseq
      %v2386 = vshrl.u32 %v2385, 7
      %v2387 = vsub.s32 0, %v2386
      %v2388 = vrot.slane %v2383, %v2387
      %v2390 = vpack.i.b16 %v1470, %v1470
      %v2392 = vlaneseq
      %v2393 = vshrl.u32 %v2392, 7
      %v2394 = vsub.s32 0, %v2393
      %v2395 = vrot.slane %v2390, %v2394
      %v2397 = vpack.i.b16 %v1474, %v1474
      %v2399 = vlaneseq
      %v2400 = vshrl.u32 %v2399, 7
      %v2401 = vsub.s32 0, %v2400
      %v2402 = vrot.slane %v2397, %v2401
      %v2404 = vpack.i.b16 %v1478, %v1478
      %v2406 = vlaneseq
      %v2407 = vshrl.u32 %v2406, 7
      %v2408 = vsub.s32 0, %v2407
      %v2409 = vrot.slane %v2404, %v2408
      %v2411 = vpack.i.b16 %v1482, %v1482
      %v2413 = vlaneseq
      %v2414 = vshrl.u32 %v2413, 7
      %v2415 = vsub.s32 0, %v2414
      %v2416 = vrot.slane %v2411, %v2415
      %v2418 = vpack.i.b16 %v1486, %v1486
      %v2420 = vlaneseq
      %v2421 = vshrl.u32 %v2420, 7
      %v2422 = vsub.s32 0, %v2421
      %v2423 = vrot.slane %v2418, %v2422
      %v2425 = vpack.i.b16 %v1490, %v1490
      %v2427 = vlaneseq
      %v2428 = vshrl.u32 %v2427, 7
      %v2429 = vsub.s32 0, %v2428
      %v2430 = vrot.slane %v2425, %v2429
      %v2432 = vpack.i.b16 %v1494, %v1494
      %v2434 = vlaneseq
      %v2435 = vshrl.u32 %v2434, 7
      %v2436 = vsub.s32 0, %v2435
      %v2437 = vrot.slane %v2432, %v2436
      %v2439 = vpack.i.b16 %v1498, %v1498
      %v2441 = vlaneseq
      %v2442 = vshrl.u32 %v2441, 7
      %v2443 = vsub.s32 0, %v2442
      %v2444 = vrot.slane %v2439, %v2443
      %v2446 = vpack.i.b16 %v1502, %v1502
      %v2448 = vlaneseq
      %v2449 = vshrl.u32 %v2448, 7
      %v2450 = vsub.s32 0, %v2449
      %v2451 = vrot.slane %v2446, %v2450
      %v2453 = vpack.i.b16 %v1506, %v1506
      %v2455 = vlaneseq
      %v2456 = vshrl.u32 %v2455, 7
      %v2457 = vsub.s32 0, %v2456
      %v2458 = vrot.slane %v2453, %v2457
      %v2460 = vpack.i.b16 %v1510, %v1510
      %v2462 = vlaneseq
      %v2463 = vshrl.u32 %v2462, 7
      %v2464 = vsub.s32 0, %v2463
      %v2465 = vrot.slane %v2460, %v2464
      %v2467 = vpack.i.b16 %v1514, %v1514
      %v2469 = vlaneseq
      %v2470 = vshrl.u32 %v2469, 7
      %v2471 = vsub.s32 0, %v2470
      %v2472 = vrot.slane %v2467, %v2471
      %v2474 = vpack.i.b16 %v1518, %v1518
      %v2476 = vlaneseq
      %v2477 = vshrl.u32 %v2476, 7
      %v2478 = vsub.s32 0, %v2477
      %v2479 = vrot.slane %v2474, %v2478
      %v2481 = vpack.i.b16 %v1522, %v1522
      %v2483 = vlaneseq
      %v2484 = vshrl.u32 %v2483, 7
      %v2485 = vsub.s32 0, %v2484
      %v2486 = vrot.slane %v2481, %v2485
      %v2488 = vpack.i.b16 %v1526, %v1526
      %v2490 = vlaneseq
      %v2491 = vshrl.u32 %v2490, 7
      %v2492 = vsub.s32 0, %v2491
      %v2493 = vrot.slane %v2488, %v2492
      %v2495 = vpack.i.b16 %v1530, %v1530
      %v2497 = vlaneseq
      %v2498 = vshrl.u32 %v2497, 7
      %v2499 = vsub.s32 0, %v2498
      %v2500 = vrot.slane %v2495, %v2499
      %v2502 = vpack.i.b16 %v1534, %v1534
      %v2504 = vlaneseq
      %v2505 = vshrl.u32 %v2504, 7
      %v2506 = vsub.s32 0, %v2505
      %v2507 = vrot.slane %v2502, %v2506
      %v2509 = vpack.i.b16 %v1538, %v1538
      %v2511 = vlaneseq
      %v2512 = vshrl.u32 %v2511, 7
      %v2513 = vsub.s32 0, %v2512
      %v2514 = vrot.slane %v2509, %v2513
      %v2516 = vpack.i.b16 %v1542, %v1542
      %v2518 = vlaneseq
      %v2519 = vshrl.u32 %v2518, 7
      %v2520 = vsub.s32 0, %v2519
      %v2521 = vrot.slane %v2516, %v2520
      %v2523 = vpack.i.b16 %v1546, %v1546
      %v2525 = vlaneseq
      %v2526 = vshrl.u32 %v2525, 7
      %v2527 = vsub.s32 0, %v2526
      %v2528 = vrot.slane %v2523, %v2527
      %v2530 = vpack.i.b16 %v1550, %v1550
      %v2532 = vlaneseq
      %v2533 = vshrl.u32 %v2532, 7
      %v2534 = vsub.s32 0, %v2533
      %v2535 = vrot.slane %v2530, %v2534
      %v2537 = vpack.i.b16 %v1554, %v1554
      %v2539 = vlaneseq
      %v2540 = vshrl.u32 %v2539, 7
      %v2541 = vsub.s32 0, %v2540
      %v2542 = vrot.slane %v2537, %v2541
      %v2544 = vpack.i.b16 %v1558, %v1558
      %v2546 = vlaneseq
      %v2547 = vshrl.u32 %v2546, 7
      %v2548 = vsub.s32 0, %v2547
      %v2549 = vrot.slane %v2544, %v2548
      %v2551 = vpack.i.b16 %v1562, %v1562
      %v2553 = vlaneseq
      %v2554 = vshrl.u32 %v2553, 7
      %v2555 = vsub.s32 0, %v2554
      %v2556 = vrot.slane %v2551, %v2555
      %v2558 = vpack.i.b16 %v1566, %v1566
      %v2560 = vlaneseq
      %v2561 = vshrl.u32 %v2560, 7
      %v2562 = vsub.s32 0, %v2561
      %v2563 = vrot.slane %v2558, %v2562
      %v2565 = vpack.i.b16 %v1570, %v1570
      %v2567 = vlaneseq
      %v2568 = vshrl.u32 %v2567, 7
      %v2569 = vsub.s32 0, %v2568
      %v2570 = vrot.slane %v2565, %v2569
      %v2572 = vpack.i.b16 %v1574, %v1574
      %v2574 = vlaneseq
      %v2575 = vshrl.u32 %v2574, 7
      %v2576 = vsub.s32 0, %v2575
      %v2577 = vrot.slane %v2572, %v2576
      %v2579 = vpack.i.b16 %v1578, %v1578
      %v2581 = vlaneseq
      %v2582 = vshrl.u32 %v2581, 7
      %v2583 = vsub.s32 0, %v2582
      %v2584 = vrot.slane %v2579, %v2583
      %v2586 = vpack.i.b16 %v1582, %v1582
      %v2588 = vlaneseq
      %v2589 = vshrl.u32 %v2588, 7
      %v2590 = vsub.s32 0, %v2589
      %v2591 = vrot.slane %v2586, %v2590
      %v2593 = vpack.i.b16 %v1586, %v1586
      %v2595 = vlaneseq
      %v2596 = vshrl.u32 %v2595, 7
      %v2597 = vsub.s32 0, %v2596
      %v2598 = vrot.slane %v2593, %v2597
      %v2600 = vpack.i.b16 %v1590, %v1590
      %v2602 = vlaneseq
      %v2603 = vshrl.u32 %v2602, 7
      %v2604 = vsub.s32 0, %v2603
      %v2605 = vrot.slane %v2600, %v2604
      %v2607 = vpack.i.b16 %v1594, %v1594
      %v2609 = vlaneseq
      %v2610 = vshrl.u32 %v2609, 7
      %v2611 = vsub.s32 0, %v2610
      %v2612 = vrot.slane %v2607, %v2611
      %v2614 = vpack.i.b16 %v1598, %v1598
      %v2616 = vlaneseq
      %v2617 = vshrl.u32 %v2616, 7
      %v2618 = vsub.s32 0, %v2617
      %v2619 = vrot.slane %v2614, %v2618
      %v2621 = vpack.i.b16 %v1602, %v1602
      %v2623 = vlaneseq
      %v2624 = vshrl.u32 %v2623, 7
      %v2625 = vsub.s32 0, %v2624
      %v2626 = vrot.slane %v2621, %v2625
      %v2628 = vpack.i.b16 %v1606, %v1606
      %v2630 = vlaneseq
      %v2631 = vshrl.u32 %v2630, 7
      %v2632 = vsub.s32 0, %v2631
      %v2633 = vrot.slane %v2628, %v2632
      %v2635 = vpack.i.b16 %v1610, %v1610
      %v2637 = vlaneseq
      %v2638 = vshrl.u32 %v2637, 7
      %v2639 = vsub.s32 0, %v2638
      %v2640 = vrot.slane %v2635, %v2639
      %v2642 = vpack.i.b16 %v1614, %v1614
      %v2644 = vlaneseq
      %v2645 = vshrl.u32 %v2644, 7
      %v2646 = vsub.s32 0, %v2645
      %v2647 = vrot.slane %v2642, %v2646
      %v2649 = vpack.i.b16 %v1618, %v1618
      %v2651 = vlaneseq
      %v2652 = vshrl.u32 %v2651, 7
      %v2653 = vsub.s32 0, %v2652
      %v2654 = vrot.slane %v2649, %v2653
      %v2656 = vpack.i.b16 %v1622, %v1622
      %v2658 = vlaneseq
      %v2659 = vshrl.u32 %v2658, 7
      %v2660 = vsub.s32 0, %v2659
      %v2661 = vrot.slane %v2656, %v2660
      %v2663 = vpack.i.b16 %v1626, %v1626
      %v2665 = vlaneseq
      %v2666 = vshrl.u32 %v2665, 7
      %v2667 = vsub.s32 0, %v2666
      %v2668 = vrot.slane %v2663, %v2667
      %v2670 = vpack.i.b16 %v1630, %v1630
      %v2672 = vlaneseq
      %v2673 = vshrl.u32 %v2672, 7
      %v2674 = vsub.s32 0, %v2673
      %v2675 = vrot.slane %v2670, %v2674
      %v2677 = vpack.i.b16 %v1634, %v1634
      %v2679 = vlaneseq
      %v2680 = vshrl.u32 %v2679, 7
      %v2681 = vsub.s32 0, %v2680
      %v2682 = vrot.slane %v2677, %v2681
      %v2684 = vpack.i.b16 %v1638, %v1638
      %v2686 = vlaneseq
      %v2687 = vshrl.u32 %v2686, 7
      %v2688 = vsub.s32 0, %v2687
      %v2689 = vrot.slane %v2684, %v2688
      %v2691 = vpack.i.b16 %v1642, %v1642
      %v2693 = vlaneseq
      %v2694 = vshrl.u32 %v2693, 7
      %v2695 = vsub.s32 0, %v2694
      %v2696 = vrot.slane %v2691, %v2695
      %v2698 = vpack.i.b16 %v1646, %v1646
      %v2700 = vlaneseq
      %v2701 = vshrl.u32 %v2700, 7
      %v2702 = vsub.s32 0, %v2701
      %v2703 = vrot.slane %v2698, %v2702
      %v2705 = vpack.i.b16 %v1650, %v1650
      %v2707 = vlaneseq
      %v2708 = vshrl.u32 %v2707, 7
      %v2709 = vsub.s32 0, %v2708
      %v2710 = vrot.slane %v2705, %v2709
      %v2712 = vpack.i.b16 %v1654, %v1654
      %v2714 = vlaneseq
      %v2715 = vshrl.u32 %v2714, 7
      %v2716 = vsub.s32 0, %v2715
      %v2717 = vrot.slane %v2712, %v2716
      %v2719 = vpack.i.b16 %v1658, %v1658
      %v2721 = vlaneseq
      %v2722 = vshrl.u32 %v2721, 7
      %v2723 = vsub.s32 0, %v2722
      %v2724 = vrot.slane %v2719, %v2723
      %v2726 = vpack.i.b16 %v1662, %v1662
      %v2728 = vlaneseq
      %v2729 = vshrl.u32 %v2728, 7
      %v2730 = vsub.s32 0, %v2729
      %v2731 = vrot.slane %v2726, %v2730
      %v2733 = vpack.i.b16 %v1666, %v1666
      %v2735 = vlaneseq
      %v2736 = vshrl.u32 %v2735, 7
      %v2737 = vsub.s32 0, %v2736
      %v2738 = vrot.slane %v2733, %v2737
      %v2740 = vpack.i.b16 %v1670, %v1670
      %v2742 = vlaneseq
      %v2743 = vshrl.u32 %v2742, 7
      %v2744 = vsub.s32 0, %v2743
      %v2745 = vrot.slane %v2740, %v2744
      %v2747 = vpack.i.b16 %v1674, %v1674
      %v2749 = vlaneseq
      %v2750 = vshrl.u32 %v2749, 7
      %v2751 = vsub.s32 0, %v2750
      %v2752 = vrot.slane %v2747, %v2751
      %v2754 = vpack.i.b16 %v1678, %v1678
      %v2756 = vlaneseq
      %v2757 = vshrl.u32 %v2756, 7
      %v2758 = vsub.s32 0, %v2757
      %v2759 = vrot.slane %v2754, %v2758
      %v2761 = vpack.i.b16 %v1682, %v1682
      %v2763 = vlaneseq
      %v2764 = vshrl.u32 %v2763, 7
      %v2765 = vsub.s32 0, %v2764
      %v2766 = vrot.slane %v2761, %v2765
      %v2768 = vpack.i.b16 %v1686, %v1686
      %v2770 = vlaneseq
      %v2771 = vshrl.u32 %v2770, 7
      %v2772 = vsub.s32 0, %v2771
      %v2773 = vrot.slane %v2768, %v2772
      %v2775 = vpack.i.b16 %v1690, %v1690
      %v2777 = vlaneseq
      %v2778 = vshrl.u32 %v2777, 7
      %v2779 = vsub.s32 0, %v2778
      %v2780 = vrot.slane %v2775, %v2779
      %v2782 = vpack.i.b16 %v1694, %v1694
      %v2784 = vlaneseq
      %v2785 = vshrl.u32 %v2784, 7
      %v2786 = vsub.s32 0, %v2785
      %v2787 = vrot.slane %v2782, %v2786
      %v2789 = vpack.i.b16 %v1698, %v1698
      %v2791 = vlaneseq
      %v2792 = vshrl.u32 %v2791, 7
      %v2793 = vsub.s32 0, %v2792
      %v2794 = vrot.slane %v2789, %v2793
      %v2796 = vpack.i.b16 %v1702, %v1702
      %v2798 = vlaneseq
      %v2799 = vshrl.u32 %v2798, 7
      %v2800 = vsub.s32 0, %v2799
      %v2801 = vrot.slane %v2796, %v2800
      %v2803 = vpack.i.b16 %v1706, %v1706
      %v2805 = vlaneseq
      %v2806 = vshrl.u32 %v2805, 7
      %v2807 = vsub.s32 0, %v2806
      %v2808 = vrot.slane %v2803, %v2807
      %v2810 = vpack.i.b16 %v1710, %v1710
      %v2812 = vlaneseq
      %v2813 = vshrl.u32 %v2812, 7
      %v2814 = vsub.s32 0, %v2813
      %v2815 = vrot.slane %v2810, %v2814
      %v2817 = vpack.i.b16 %v1714, %v1714
      %v2819 = vlaneseq
      %v2820 = vshrl.u32 %v2819, 7
      %v2821 = vsub.s32 0, %v2820
      %v2822 = vrot.slane %v2817, %v2821
      %v2824 = vpack.i.b16 %v1718, %v1718
      %v2826 = vlaneseq
      %v2827 = vshrl.u32 %v2826, 7
      %v2828 = vsub.s32 0, %v2827
      %v2829 = vrot.slane %v2824, %v2828
      %v2831 = vpack.i.b16 %v1722, %v1722
      %v2833 = vlaneseq
      %v2834 = vshrl.u32 %v2833, 7
      %v2835 = vsub.s32 0, %v2834
      %v2836 = vrot.slane %v2831, %v2835
      %v2838 = vpack.i.b16 %v1726, %v1726
      %v2840 = vlaneseq
      %v2841 = vshrl.u32 %v2840, 7
      %v2842 = vsub.s32 0, %v2841
      %v2843 = vrot.slane %v2838, %v2842
      %v2845 = vpack.i.b16 %v1730, %v1730
      %v2847 = vlaneseq
      %v2848 = vshrl.u32 %v2847, 7
      %v2849 = vsub.s32 0, %v2848
      %v2850 = vrot.slane %v2845, %v2849
      %v3011 = vcombine.low %v1737, %v1744
      %v3012 = vcombine.low %v1751, %v1758
      %v3013 = vcombine.low %v1765, %v1772
      %v3014 = vcombine.low %v1779, %v1786
      %v3016 = vunpack.c.l.s4 1966171168
      %v3017 = vunpack.c.0.s8 %v3016
      %v3018 = vlaneseq
      %v3019 = vshrl.u32 %v3018, 7
      %v3020 = vsub.s32 %v3017, %v3019
      %v3021 = vrot.slane %v3011, %v3020
      %v3023 = vunpack.c.l.s4 1966171168
      %v3024 = vunpack.c.0.s8 %v3023
      %v3025 = vlaneseq
      %v3026 = vshrl.u32 %v3025, 7
      %v3027 = vsub.s32 %v3024, %v3026
      %v3028 = vrot.slane %v3012, %v3027
      %v3030 = vunpack.c.l.s4 1966171168
      %v3031 = vunpack.c.0.s8 %v3030
      %v3032 = vlaneseq
      %v3033 = vshrl.u32 %v3032, 7
      %v3034 = vsub.s32 %v3031, %v3033
      %v3035 = vrot.slane %v3013, %v3034
      %v3037 = vunpack.c.l.s4 1966171168
      %v3038 = vunpack.c.0.s8 %v3037
      %v3039 = vlaneseq
      %v3040 = vshrl.u32 %v3039, 7
      %v3041 = vsub.s32 %v3038, %v3040
      %v3042 = vrot.slane %v3014, %v3041
      %v3043 = vcombine.low %v3021, %v3028
      %v3044 = vcombine.low %v3035, %v3042
      %v3046 = vunpack.c.l.s4 1966171168
      %v3047 = vunpack.c.0.s8 %v3046
      %v3048 = vlaneseq
      %v3049 = vshrl.u32 %v3048, 7
      %v3050 = vsub.s32 %v3047, %v3049
      %v3051 = vrot.slane %v3043, %v3050
      %v3053 = vunpack.c.l.s4 1966171168
      %v3054 = vunpack.c.0.s8 %v3053
      %v3055 = vlaneseq
      %v3056 = vshrl.u32 %v3055, 7
      %v3057 = vsub.s32 %v3054, %v3056
      %v3058 = vrot.slane %v3044, %v3057
      %v3059 = vcombine.low %v3051, %v3058
      %v3060 = vcombine.low %v1793, %v1800
      %v3061 = vcombine.low %v1807, %v1814
      %v3062 = vcombine.low %v1821, %v1828
      %v3063 = vcombine.low %v1835, %v1842
      %v3065 = vunpack.c.l.s4 1966171168
      %v3066 = vunpack.c.0.s8 %v3065
      %v3067 = vlaneseq
      %v3068 = vshrl.u32 %v3067, 7
      %v3069 = vsub.s32 %v3066, %v3068
      %v3070 = vrot.slane %v3060, %v3069
      %v3072 = vunpack.c.l.s4 1966171168
      %v3073 = vunpack.c.0.s8 %v3072
      %v3074 = vlaneseq
      %v3075 = vshrl.u32 %v3074, 7
      %v3076 = vsub.s32 %v3073, %v3075
      %v3077 = vrot.slane %v3061, %v3076
      %v3079 = vunpack.c.l.s4 1966171168
      %v3080 = vunpack.c.0.s8 %v3079
      %v3081 = vlaneseq
      %v3082 = vshrl.u32 %v3081, 7
      %v3083 = vsub.s32 %v3080, %v3082
      %v3084 = vrot.slane %v3062, %v3083
      %v3086 = vunpack.c.l.s4 1966171168
      %v3087 = vunpack.c.0.s8 %v3086
      %v3088 = vlaneseq
      %v3089 = vshrl.u32 %v3088, 7
      %v3090 = vsub.s32 %v3087, %v3089
      %v3091 = vrot.slane %v3063, %v3090
      %v3092 = vcombine.low %v3070, %v3077
      %v3093 = vcombine.low %v3084, %v3091
      %v3095 = vunpack.c.l.s4 1966171168
      %v3096 = vunpack.c.0.s8 %v3095
      %v3097 = vlaneseq
      %v3098 = vshrl.u32 %v3097, 7
      %v3099 = vsub.s32 %v3096, %v3098
      %v3100 = vrot.slane %v3092, %v3099
      %v3102 = vunpack.c.l.s4 1966171168
      %v3103 = vunpack.c.0.s8 %v3102
      %v3104 = vlaneseq
      %v3105 = vshrl.u32 %v3104, 7
      %v3106 = vsub.s32 %v3103, %v3105
      %v3107 = vrot.slane %v3093, %v3106
      %v3108 = vcombine.low %v3100, %v3107
      %v3109 = vcombine.low %v1849, %v1856
      %v3110 = vcombine.low %v1863, %v1870
      %v3111 = vcombine.low %v1877, %v1884
      %v3112 = vcombine.low %v1891, %v1898
      %v3114 = vunpack.c.l.s4 1966171168
      %v3115 = vunpack.c.0.s8 %v3114
      %v3116 = vlaneseq
      %v3117 = vshrl.u32 %v3116, 7
      %v3118 = vsub.s32 %v3115, %v3117
      %v3119 = vrot.slane %v3109, %v3118
      %v3121 = vunpack.c.l.s4 1966171168
      %v3122 = vunpack.c.0.s8 %v3121
      %v3123 = vlaneseq
      %v3124 = vshrl.u32 %v3123, 7
      %v3125 = vsub.s32 %v3122, %v3124
      %v3126 = vrot.slane %v3110, %v3125
      %v3128 = vunpack.c.l.s4 1966171168
      %v3129 = vunpack.c.0.s8 %v3128
      %v3130 = vlaneseq
      %v3131 = vshrl.u32 %v3130, 7
      %v3132 = vsub.s32 %v3129, %v3131
      %v3133 = vrot.slane %v3111, %v3132
      %v3135 = vunpack.c.l.s4 1966171168
      %v3136 = vunpack.c.0.s8 %v3135
      %v3137 = vlaneseq
      %v3138 = vshrl.u32 %v3137, 7
      %v3139 = vsub.s32 %v3136, %v3138
      %v3140 = vrot.slane %v3112, %v3139
      %v3141 = vcombine.low %v3119, %v3126
      %v3142 = vcombine.low %v3133, %v3140
      %v3144 = vunpack.c.l.s4 1966171168
      %v3145 = vunpack.c.0.s8 %v3144
      %v3146 = vlaneseq
      %v3147 = vshrl.u32 %v3146, 7
      %v3148 = vsub.s32 %v3145, %v3147
      %v3149 = vrot.slane %v3141, %v3148
      %v3151 = vunpack.c.l.s4 1966171168
      %v3152 = vunpack.c.0.s8 %v3151
      %v3153 = vlaneseq
      %v3154 = vshrl.u32 %v3153, 7
      %v3155 = vsub.s32 %v3152, %v3154
      %v3156 = vrot.slane %v3142, %v3155
      %v3157 = vcombine.low %v3149, %v3156
      %v3158 = vcombine.low %v1905, %v1912
      %v3159 = vcombine.low %v1919, %v1926
      %v3160 = vcombine.low %v1933, %v1940
      %v3161 = vcombine.low %v1947, %v1954
      %v3163 = vunpack.c.l.s4 1966171168
      %v3164 = vunpack.c.0.s8 %v3163
      %v3165 = vlaneseq
      %v3166 = vshrl.u32 %v3165, 7
      %v3167 = vsub.s32 %v3164, %v3166
      %v3168 = vrot.slane %v3158, %v3167
      %v3170 = vunpack.c.l.s4 1966171168
      %v3171 = vunpack.c.0.s8 %v3170
      %v3172 = vlaneseq
      %v3173 = vshrl.u32 %v3172, 7
      %v3174 = vsub.s32 %v3171, %v3173
      %v3175 = vrot.slane %v3159, %v3174
      %v3177 = vunpack.c.l.s4 1966171168
      %v3178 = vunpack.c.0.s8 %v3177
      %v3179 = vlaneseq
      %v3180 = vshrl.u32 %v3179, 7
      %v3181 = vsub.s32 %v3178, %v3180
      %v3182 = vrot.slane %v3160, %v3181
      %v3184 = vunpack.c.l.s4 1966171168
      %v3185 = vunpack.c.0.s8 %v3184
      %v3186 = vlaneseq
      %v3187 = vshrl.u32 %v3186, 7
      %v3188 = vsub.s32 %v3185, %v3187
      %v3189 = vrot.slane %v3161, %v3188
      %v3190 = vcombine.low %v3168, %v3175
      %v3191 = vcombine.low %v3182, %v3189
      %v3193 = vunpack.c.l.s4 1966171168
      %v3194 = vunpack.c.0.s8 %v3193
      %v3195 = vlaneseq
      %v3196 = vshrl.u32 %v3195, 7
      %v3197 = vsub.s32 %v3194, %v3196
      %v3198 = vrot.slane %v3190, %v3197
      %v3200 = vunpack.c.l.s4 1966171168
      %v3201 = vunpack.c.0.s8 %v3200
      %v3202 = vlaneseq
      %v3203 = vshrl.u32 %v3202, 7
      %v3204 = vsub.s32 %v3201, %v3203
      %v3205 = vrot.slane %v3191, %v3204
      %v3206 = vcombine.low %v3198, %v3205
      %v3207 = vcombine.low %v1961, %v1968
      %v3208 = vcombine.low %v1975, %v1982
      %v3209 = vcombine.low %v1989, %v1996
      %v3210 = vcombine.low %v2003, %v2010
      %v3212 = vunpack.c.l.s4 1966171168
      %v3213 = vunpack.c.0.s8 %v3212
      %v3214 = vlaneseq
      %v3215 = vshrl.u32 %v3214, 7
      %v3216 = vsub.s32 %v3213, %v3215
      %v3217 = vrot.slane %v3207, %v3216
      %v3219 = vunpack.c.l.s4 1966171168
      %v3220 = vunpack.c.0.s8 %v3219
      %v3221 = vlaneseq
      %v3222 = vshrl.u32 %v3221, 7
      %v3223 = vsub.s32 %v3220, %v3222
      %v3224 = vrot.slane %v3208, %v3223
      %v3226 = vunpack.c.l.s4 1966171168
      %v3227 = vunpack.c.0.s8 %v3226
      %v3228 = vlaneseq
      %v3229 = vshrl.u32 %v3228, 7
      %v3230 = vsub.s32 %v3227, %v3229
      %v3231 = vrot.slane %v3209, %v3230
      %v3233 = vunpack.c.l.s4 1966171168
      %v3234 = vunpack.c.0.s8 %v3233
      %v3235 = vlaneseq
      %v3236 = vshrl.u32 %v3235, 7
      %v3237 = vsub.s32 %v3234, %v3236
      %v3238 = vrot.slane %v3210, %v3237
      %v3239 = vcombine.low %v3217, %v3224
      %v3240 = vcombine.low %v3231, %v3238
      %v3242 = vunpack.c.l.s4 1966171168
      %v3243 = vunpack.c.0.s8 %v3242
      %v3244 = vlaneseq
      %v3245 = vshrl.u32 %v3244, 7
      %v3246 = vsub.s32 %v3243, %v3245
      %v3247 = vrot.slane %v3239, %v3246
      %v3249 = vunpack.c.l.s4 1966171168
      %v3250 = vunpack.c.0.s8 %v3249
      %v3251 = vlaneseq
      %v3252 = vshrl.u32 %v3251, 7
      %v3253 = vsub.s32 %v3250, %v3252
      %v3254 = vrot.slane %v3240, %v3253
      %v3255 = vcombine.low %v3247, %v3254
      %v3256 = vcombine.low %v2017, %v2024
      %v3257 = vcombine.low %v2031, %v2038
      %v3258 = vcombine.low %v2045, %v2052
      %v3259 = vcombine.low %v2059, %v2066
      %v3261 = vunpack.c.l.s4 1966171168
      %v3262 = vunpack.c.0.s8 %v3261
      %v3263 = vlaneseq
      %v3264 = vshrl.u32 %v3263, 7
      %v3265 = vsub.s32 %v3262, %v3264
      %v3266 = vrot.slane %v3256, %v3265
      %v3268 = vunpack.c.l.s4 1966171168
      %v3269 = vunpack.c.0.s8 %v3268
      %v3270 = vlaneseq
      %v3271 = vshrl.u32 %v3270, 7
      %v3272 = vsub.s32 %v3269, %v3271
      %v3273 = vrot.slane %v3257, %v3272
      %v3275 = vunpack.c.l.s4 1966171168
      %v3276 = vunpack.c.0.s8 %v3275
      %v3277 = vlaneseq
      %v3278 = vshrl.u32 %v3277, 7
      %v3279 = vsub.s32 %v3276, %v3278
      %v3280 = vrot.slane %v3258, %v3279
      %v3282 = vunpack.c.l.s4 1966171168
      %v3283 = vunpack.c.0.s8 %v3282
      %v3284 = vlaneseq
      %v3285 = vshrl.u32 %v3284, 7
      %v3286 = vsub.s32 %v3283, %v3285
      %v3287 = vrot.slane %v3259, %v3286
      %v3288 = vcombine.low %v3266, %v3273
      %v3289 = vcombine.low %v3280, %v3287
      %v3291 = vunpack.c.l.s4 1966171168
      %v3292 = vunpack.c.0.s8 %v3291
      %v3293 = vlaneseq
      %v3294 = vshrl.u32 %v3293, 7
      %v3295 = vsub.s32 %v3292, %v3294
      %v3296 = vrot.slane %v3288, %v3295
      %v3298 = vunpack.c.l.s4 1966171168
      %v3299 = vunpack.c.0.s8 %v3298
      %v3300 = vlaneseq
      %v3301 = vshrl.u32 %v3300, 7
      %v3302 = vsub.s32 %v3299, %v3301
      %v3303 = vrot.slane %v3289, %v3302
      %v3304 = vcombine.low %v3296, %v3303
      %v3305 = vcombine.low %v2073, %v2080
      %v3306 = vcombine.low %v2087, %v2094
      %v3307 = vcombine.low %v2101, %v2108
      %v3308 = vcombine.low %v2115, %v2122
      %v3310 = vunpack.c.l.s4 1966171168
      %v3311 = vunpack.c.0.s8 %v3310
      %v3312 = vlaneseq
      %v3313 = vshrl.u32 %v3312, 7
      %v3314 = vsub.s32 %v3311, %v3313
      %v3315 = vrot.slane %v3305, %v3314
      %v3317 = vunpack.c.l.s4 1966171168
      %v3318 = vunpack.c.0.s8 %v3317
      %v3319 = vlaneseq
      %v3320 = vshrl.u32 %v3319, 7
      %v3321 = vsub.s32 %v3318, %v3320
      %v3322 = vrot.slane %v3306, %v3321
      %v3324 = vunpack.c.l.s4 1966171168
      %v3325 = vunpack.c.0.s8 %v3324
      %v3326 = vlaneseq
      %v3327 = vshrl.u32 %v3326, 7
      %v3328 = vsub.s32 %v3325, %v3327
      %v3329 = vrot.slane %v3307, %v3328
      %v3331 = vunpack.c.l.s4 1966171168
      %v3332 = vunpack.c.0.s8 %v3331
      %v3333 = vlaneseq
      %v3334 = vshrl.u32 %v3333, 7
      %v3335 = vsub.s32 %v3332, %v3334
      %v3336 = vrot.slane %v3308, %v3335
      %v3337 = vcombine.low %v3315, %v3322
      %v3338 = vcombine.low %v3329, %v3336
      %v3340 = vunpack.c.l.s4 1966171168
      %v3341 = vunpack.c.0.s8 %v3340
      %v3342 = vlaneseq
      %v3343 = vshrl.u32 %v3342, 7
      %v3344 = vsub.s32 %v3341, %v3343
      %v3345 = vrot.slane %v3337, %v3344
      %v3347 = vunpack.c.l.s4 1966171168
      %v3348 = vunpack.c.0.s8 %v3347
      %v3349 = vlaneseq
      %v3350 = vshrl.u32 %v3349, 7
      %v3351 = vsub.s32 %v3348, %v3350
      %v3352 = vrot.slane %v3338, %v3351
      %v3353 = vcombine.low %v3345, %v3352
      %v3354 = vcombine.low %v2129, %v2136
      %v3355 = vcombine.low %v2143, %v2150
      %v3356 = vcombine.low %v2157, %v2164
      %v3357 = vcombine.low %v2171, %v2178
      %v3359 = vunpack.c.l.s4 1966171168
      %v3360 = vunpack.c.0.s8 %v3359
      %v3361 = vlaneseq
      %v3362 = vshrl.u32 %v3361, 7
      %v3363 = vsub.s32 %v3360, %v3362
      %v3364 = vrot.slane %v3354, %v3363
      %v3366 = vunpack.c.l.s4 1966171168
      %v3367 = vunpack.c.0.s8 %v3366
      %v3368 = vlaneseq
      %v3369 = vshrl.u32 %v3368, 7
      %v3370 = vsub.s32 %v3367, %v3369
      %v3371 = vrot.slane %v3355, %v3370
      %v3373 = vunpack.c.l.s4 1966171168
      %v3374 = vunpack.c.0.s8 %v3373
      %v3375 = vlaneseq
      %v3376 = vshrl.u32 %v3375, 7
      %v3377 = vsub.s32 %v3374, %v3376
      %v3378 = vrot.slane %v3356, %v3377
      %v3380 = vunpack.c.l.s4 1966171168
      %v3381 = vunpack.c.0.s8 %v3380
      %v3382 = vlaneseq
      %v3383 = vshrl.u32 %v3382, 7
      %v3384 = vsub.s32 %v3381, %v3383
      %v3385 = vrot.slane %v3357, %v3384
      %v3386 = vcombine.low %v3364, %v3371
      %v3387 = vcombine.low %v3378, %v3385
      %v3389 = vunpack.c.l.s4 1966171168
      %v3390 = vunpack.c.0.s8 %v3389
      %v3391 = vlaneseq
      %v3392 = vshrl.u32 %v3391, 7
      %v3393 = vsub.s32 %v3390, %v3392
      %v3394 = vrot.slane %v3386, %v3393
      %v3396 = vunpack.c.l.s4 1966171168
      %v3397 = vunpack.c.0.s8 %v3396
      %v3398 = vlaneseq
      %v3399 = vshrl.u32 %v3398, 7
      %v3400 = vsub.s32 %v3397, %v3399
      %v3401 = vrot.slane %v3387, %v3400
      %v3402 = vcombine.low %v3394, %v3401
      %v3403 = vcombine.low %v2185, %v2192
      %v3404 = vcombine.low %v2199, %v2206
      %v3405 = vcombine.low %v2213, %v2220
      %v3406 = vcombine.low %v2227, %v2234
      %v3408 = vunpack.c.l.s4 1966171168
      %v3409 = vunpack.c.0.s8 %v3408
      %v3410 = vlaneseq
      %v3411 = vshrl.u32 %v3410, 7
      %v3412 = vsub.s32 %v3409, %v3411
      %v3413 = vrot.slane %v3403, %v3412
      %v3415 = vunpack.c.l.s4 1966171168
      %v3416 = vunpack.c.0.s8 %v3415
      %v3417 = vlaneseq
      %v3418 = vshrl.u32 %v3417, 7
      %v3419 = vsub.s32 %v3416, %v3418
      %v3420 = vrot.slane %v3404, %v3419
      %v3422 = vunpack.c.l.s4 1966171168
      %v3423 = vunpack.c.0.s8 %v3422
      %v3424 = vlaneseq
      %v3425 = vshrl.u32 %v3424, 7
      %v3426 = vsub.s32 %v3423, %v3425
      %v3427 = vrot.slane %v3405, %v3426
      %v3429 = vunpack.c.l.s4 1966171168
      %v3430 = vunpack.c.0.s8 %v3429
      %v3431 = vlaneseq
      %v3432 = vshrl.u32 %v3431, 7
      %v3433 = vsub.s32 %v3430, %v3432
      %v3434 = vrot.slane %v3406, %v3433
      %v3435 = vcombine.low %v3413, %v3420
      %v3436 = vcombine.low %v3427, %v3434
      %v3438 = vunpack.c.l.s4 1966171168
      %v3439 = vunpack.c.0.s8 %v3438
      %v3440 = vlaneseq
      %v3441 = vshrl.u32 %v3440, 7
      %v3442 = vsub.s32 %v3439, %v3441
      %v3443 = vrot.slane %v3435, %v3442
      %v3445 = vunpack.c.l.s4 1966171168
      %v3446 = vunpack.c.0.s8 %v3445
      %v3447 = vlaneseq
      %v3448 = vshrl.u32 %v3447, 7
      %v3449 = vsub.s32 %v3446, %v3448
      %v3450 = vrot.slane %v3436, %v3449
      %v3451 = vcombine.low %v3443, %v3450
      %v3452 = vcombine.low %v2241, %v2248
      %v3453 = vcombine.low %v2255, %v2262
      %v3454 = vcombine.low %v2269, %v2276
      %v3455 = vcombine.low %v2283, %v2290
      %v3457 = vunpack.c.l.s4 1966171168
      %v3458 = vunpack.c.0.s8 %v3457
      %v3459 = vlaneseq
      %v3460 = vshrl.u32 %v3459, 7
      %v3461 = vsub.s32 %v3458, %v3460
      %v3462 = vrot.slane %v3452, %v3461
      %v3464 = vunpack.c.l.s4 1966171168
      %v3465 = vunpack.c.0.s8 %v3464
      %v3466 = vlaneseq
      %v3467 = vshrl.u32 %v3466, 7
      %v3468 = vsub.s32 %v3465, %v3467
      %v3469 = vrot.slane %v3453, %v3468
      %v3471 = vunpack.c.l.s4 1966171168
      %v3472 = vunpack.c.0.s8 %v3471
      %v3473 = vlaneseq
      %v3474 = vshrl.u32 %v3473, 7
      %v3475 = vsub.s32 %v3472, %v3474
      %v3476 = vrot.slane %v3454, %v3475
      %v3478 = vunpack.c.l.s4 1966171168
      %v3479 = vunpack.c.0.s8 %v3478
      %v3480 = vlaneseq
      %v3481 = vshrl.u32 %v3480, 7
      %v3482 = vsub.s32 %v3479, %v3481
      %v3483 = vrot.slane %v3455, %v3482
      %v3484 = vcombine.low %v3462, %v3469
      %v3485 = vcombine.low %v3476, %v3483
      %v3487 = vunpack.c.l.s4 1966171168
      %v3488 = vunpack.c.0.s8 %v3487
      %v3489 = vlaneseq
      %v3490 = vshrl.u32 %v3489, 7
      %v3491 = vsub.s32 %v3488, %v3490
      %v3492 = vrot.slane %v3484, %v3491
      %v3494 = vunpack.c.l.s4 1966171168
      %v3495 = vunpack.c.0.s8 %v3494
      %v3496 = vlaneseq
      %v3497 = vshrl.u32 %v3496, 7
      %v3498 = vsub.s32 %v3495, %v3497
      %v3499 = vrot.slane %v3485, %v3498
      %v3500 = vcombine.low %v3492, %v3499
      %v3501 = vcombine.low %v2297, %v2304
      %v3502 = vcombine.low %v2311, %v2318
      %v3503 = vcombine.low %v2325, %v2332
      %v3504 = vcombine.low %v2339, %v2346
      %v3506 = vunpack.c.l.s4 1966171168
      %v3507 = vunpack.c.0.s8 %v3506
      %v3508 = vlaneseq
      %v3509 = vshrl.u32 %v3508, 7
      %v3510 = vsub.s32 %v3507, %v3509
      %v3511 = vrot.slane %v3501, %v3510
      %v3513 = vunpack.c.l.s4 1966171168
      %v3514 = vunpack.c.0.s8 %v3513
      %v3515 = vlaneseq
      %v3516 = vshrl.u32 %v3515, 7
      %v3517 = vsub.s32 %v3514, %v3516
      %v3518 = vrot.slane %v3502, %v3517
      %v3520 = vunpack.c.l.s4 1966171168
      %v3521 = vunpack.c.0.s8 %v3520
      %v3522 = vlaneseq
      %v3523 = vshrl.u32 %v3522, 7
      %v3524 = vsub.s32 %v3521, %v3523
      %v3525 = vrot.slane %v3503, %v3524
      %v3527 = vunpack.c.l.s4 1966171168
      %v3528 = vunpack.c.0.s8 %v3527
      %v3529 = vlaneseq
      %v3530 = vshrl.u32 %v3529, 7
      %v3531 = vsub.s32 %v3528, %v3530
      %v3532 = vrot.slane %v3504, %v3531
      %v3533 = vcombine.low %v3511, %v3518
      %v3534 = vcombine.low %v3525, %v3532
      %v3536 = vunpack.c.l.s4 1966171168
      %v3537 = vunpack.c.0.s8 %v3536
      %v3538 = vlaneseq
      %v3539 = vshrl.u32 %v3538, 7
      %v3540 = vsub.s32 %v3537, %v3539
      %v3541 = vrot.slane %v3533, %v3540
      %v3543 = vunpack.c.l.s4 1966171168
      %v3544 = vunpack.c.0.s8 %v3543
      %v3545 = vlaneseq
      %v3546 = vshrl.u32 %v3545, 7
      %v3547 = vsub.s32 %v3544, %v3546
      %v3548 = vrot.slane %v3534, %v3547
      %v3549 = vcombine.low %v3541, %v3548
      %v3550 = vcombine.low %v2353, %v2360
      %v3551 = vcombine.low %v2367, %v2374
      %v3552 = vcombine.low %v2381, %v2388
      %v3553 = vcombine.low %v2395, %v2402
      %v3555 = vunpack.c.l.s4 1966171168
      %v3556 = vunpack.c.0.s8 %v3555
      %v3557 = vlaneseq
      %v3558 = vshrl.u32 %v3557, 7
      %v3559 = vsub.s32 %v3556, %v3558
      %v3560 = vrot.slane %v3550, %v3559
      %v3562 = vunpack.c.l.s4 1966171168
      %v3563 = vunpack.c.0.s8 %v3562
      %v3564 = vlaneseq
      %v3565 = vshrl.u32 %v3564, 7
      %v3566 = vsub.s32 %v3563, %v3565
      %v3567 = vrot.slane %v3551, %v3566
      %v3569 = vunpack.c.l.s4 1966171168
      %v3570 = vunpack.c.0.s8 %v3569
      %v3571 = vlaneseq
      %v3572 = vshrl.u32 %v3571, 7
      %v3573 = vsub.s32 %v3570, %v3572
      %v3574 = vrot.slane %v3552, %v3573
      %v3576 = vunpack.c.l.s4 1966171168
      %v3577 = vunpack.c.0.s8 %v3576
      %v3578 = vlaneseq
      %v3579 = vshrl.u32 %v3578, 7
      %v3580 = vsub.s32 %v3577, %v3579
      %v3581 = vrot.slane %v3553, %v3580
      %v3582 = vcombine.low %v3560, %v3567
      %v3583 = vcombine.low %v3574, %v3581
      %v3585 = vunpack.c.l.s4 1966171168
      %v3586 = vunpack.c.0.s8 %v3585
      %v3587 = vlaneseq
      %v3588 = vshrl.u32 %v3587, 7
      %v3589 = vsub.s32 %v3586, %v3588
      %v3590 = vrot.slane %v3582, %v3589
      %v3592 = vunpack.c.l.s4 1966171168
      %v3593 = vunpack.c.0.s8 %v3592
      %v3594 = vlaneseq
      %v3595 = vshrl.u32 %v3594, 7
      %v3596 = vsub.s32 %v3593, %v3595
      %v3597 = vrot.slane %v3583, %v3596
      %v3598 = vcombine.low %v3590, %v3597
      %v3599 = vcombine.low %v2409, %v2416
      %v3600 = vcombine.low %v2423, %v2430
      %v3601 = vcombine.low %v2437, %v2444
      %v3602 = vcombine.low %v2451, %v2458
      %v3604 = vunpack.c.l.s4 1966171168
      %v3605 = vunpack.c.0.s8 %v3604
      %v3606 = vlaneseq
      %v3607 = vshrl.u32 %v3606, 7
      %v3608 = vsub.s32 %v3605, %v3607
      %v3609 = vrot.slane %v3599, %v3608
      %v3611 = vunpack.c.l.s4 1966171168
      %v3612 = vunpack.c.0.s8 %v3611
      %v3613 = vlaneseq
      %v3614 = vshrl.u32 %v3613, 7
      %v3615 = vsub.s32 %v3612, %v3614
      %v3616 = vrot.slane %v3600, %v3615
      %v3618 = vunpack.c.l.s4 1966171168
      %v3619 = vunpack.c.0.s8 %v3618
      %v3620 = vlaneseq
      %v3621 = vshrl.u32 %v3620, 7
      %v3622 = vsub.s32 %v3619, %v3621
      %v3623 = vrot.slane %v3601, %v3622
      %v3625 = vunpack.c.l.s4 1966171168
      %v3626 = vunpack.c.0.s8 %v3625
      %v3627 = vlaneseq
      %v3628 = vshrl.u32 %v3627, 7
      %v3629 = vsub.s32 %v3626, %v3628
      %v3630 = vrot.slane %v3602, %v3629
      %v3631 = vcombine.low %v3609, %v3616
      %v3632 = vcombine.low %v3623, %v3630
      %v3634 = vunpack.c.l.s4 1966171168
      %v3635 = vunpack.c.0.s8 %v3634
      %v3636 = vlaneseq
      %v3637 = vshrl.u32 %v3636, 7
      %v3638 = vsub.s32 %v3635, %v3637
      %v3639 = vrot.slane %v3631, %v3638
      %v3641 = vunpack.c.l.s4 1966171168
      %v3642 = vunpack.c.0.s8 %v3641
      %v3643 = vlaneseq
      %v3644 = vshrl.u32 %v3643, 7
      %v3645 = vsub.s32 %v3642, %v3644
      %v3646 = vrot.slane %v3632, %v3645
      %v3647 = vcombine.low %v3639, %v3646
      %v3648 = vcombine.low %v2465, %v2472
      %v3649 = vcombine.low %v2479, %v2486
      %v3650 = vcombine.low %v2493, %v2500
      %v3651 = vcombine.low %v2507, %v2514
      %v3653 = vunpack.c.l.s4 1966171168
      %v3654 = vunpack.c.0.s8 %v3653
      %v3655 = vlaneseq
      %v3656 = vshrl.u32 %v3655, 7
      %v3657 = vsub.s32 %v3654, %v3656
      %v3658 = vrot.slane %v3648, %v3657
      %v3660 = vunpack.c.l.s4 1966171168
      %v3661 = vunpack.c.0.s8 %v3660
      %v3662 = vlaneseq
      %v3663 = vshrl.u32 %v3662, 7
      %v3664 = vsub.s32 %v3661, %v3663
      %v3665 = vrot.slane %v3649, %v3664
      %v3667 = vunpack.c.l.s4 1966171168
      %v3668 = vunpack.c.0.s8 %v3667
      %v3669 = vlaneseq
      %v3670 = vshrl.u32 %v3669, 7
      %v3671 = vsub.s32 %v3668, %v3670
      %v3672 = vrot.slane %v3650, %v3671
      %v3674 = vunpack.c.l.s4 1966171168
      %v3675 = vunpack.c.0.s8 %v3674
      %v3676 = vlaneseq
      %v3677 = vshrl.u32 %v3676, 7
      %v3678 = vsub.s32 %v3675, %v3677
      %v3679 = vrot.slane %v3651, %v3678
      %v3680 = vcombine.low %v3658, %v3665
      %v3681 = vcombine.low %v3672, %v3679
      %v3683 = vunpack.c.l.s4 1966171168
      %v3684 = vunpack.c.0.s8 %v3683
      %v3685 = vlaneseq
      %v3686 = vshrl.u32 %v3685, 7
      %v3687 = vsub.s32 %v3684, %v3686
      %v3688 = vrot.slane %v3680, %v3687
      %v3690 = vunpack.c.l.s4 1966171168
      %v3691 = vunpack.c.0.s8 %v3690
      %v3692 = vlaneseq
      %v3693 = vshrl.u32 %v3692, 7
      %v3694 = vsub.s32 %v3691, %v3693
      %v3695 = vrot.slane %v3681, %v3694
      %v3696 = vcombine.low %v3688, %v3695
      %v3697 = vcombine.low %v2521, %v2528
      %v3698 = vcombine.low %v2535, %v2542
      %v3699 = vcombine.low %v2549, %v2556
      %v3700 = vcombine.low %v2563, %v2570
      %v3702 = vunpack.c.l.s4 1966171168
      %v3703 = vunpack.c.0.s8 %v3702
      %v3704 = vlaneseq
      %v3705 = vshrl.u32 %v3704, 7
      %v3706 = vsub.s32 %v3703, %v3705
      %v3707 = vrot.slane %v3697, %v3706
      %v3709 = vunpack.c.l.s4 1966171168
      %v3710 = vunpack.c.0.s8 %v3709
      %v3711 = vlaneseq
      %v3712 = vshrl.u32 %v3711, 7
      %v3713 = vsub.s32 %v3710, %v3712
      %v3714 = vrot.slane %v3698, %v3713
      %v3716 = vunpack.c.l.s4 1966171168
      %v3717 = vunpack.c.0.s8 %v3716
      %v3718 = vlaneseq
      %v3719 = vshrl.u32 %v3718, 7
      %v3720 = vsub.s32 %v3717, %v3719
      %v3721 = vrot.slane %v3699, %v3720
      %v3723 = vunpack.c.l.s4 1966171168
      %v3724 = vunpack.c.0.s8 %v3723
      %v3725 = vlaneseq
      %v3726 = vshrl.u32 %v3725, 7
      %v3727 = vsub.s32 %v3724, %v3726
      %v3728 = vrot.slane %v3700, %v3727
      %v3729 = vcombine.low %v3707, %v3714
      %v3730 = vcombine.low %v3721, %v3728
      %v3732 = vunpack.c.l.s4 1966171168
      %v3733 = vunpack.c.0.s8 %v3732
      %v3734 = vlaneseq
      %v3735 = vshrl.u32 %v3734, 7
      %v3736 = vsub.s32 %v3733, %v3735
      %v3737 = vrot.slane %v3729, %v3736
      %v3739 = vunpack.c.l.s4 1966171168
      %v3740 = vunpack.c.0.s8 %v3739
      %v3741 = vlaneseq
      %v3742 = vshrl.u32 %v3741, 7
      %v3743 = vsub.s32 %v3740, %v3742
      %v3744 = vrot.slane %v3730, %v3743
      %v3745 = vcombine.low %v3737, %v3744
      %v3746 = vcombine.low %v2577, %v2584
      %v3747 = vcombine.low %v2591, %v2598
      %v3748 = vcombine.low %v2605, %v2612
      %v3749 = vcombine.low %v2619, %v2626
      %v3751 = vunpack.c.l.s4 1966171168
      %v3752 = vunpack.c.0.s8 %v3751
      %v3753 = vlaneseq
      %v3754 = vshrl.u32 %v3753, 7
      %v3755 = vsub.s32 %v3752, %v3754
      %v3756 = vrot.slane %v3746, %v3755
      %v3758 = vunpack.c.l.s4 1966171168
      %v3759 = vunpack.c.0.s8 %v3758
      %v3760 = vlaneseq
      %v3761 = vshrl.u32 %v3760, 7
      %v3762 = vsub.s32 %v3759, %v3761
      %v3763 = vrot.slane %v3747, %v3762
      %v3765 = vunpack.c.l.s4 1966171168
      %v3766 = vunpack.c.0.s8 %v3765
      %v3767 = vlaneseq
      %v3768 = vshrl.u32 %v3767, 7
      %v3769 = vsub.s32 %v3766, %v3768
      %v3770 = vrot.slane %v3748, %v3769
      %v3772 = vunpack.c.l.s4 1966171168
      %v3773 = vunpack.c.0.s8 %v3772
      %v3774 = vlaneseq
      %v3775 = vshrl.u32 %v3774, 7
      %v3776 = vsub.s32 %v3773, %v3775
      %v3777 = vrot.slane %v3749, %v3776
      %v3778 = vcombine.low %v3756, %v3763
      %v3779 = vcombine.low %v3770, %v3777
      %v3781 = vunpack.c.l.s4 1966171168
      %v3782 = vunpack.c.0.s8 %v3781
      %v3783 = vlaneseq
      %v3784 = vshrl.u32 %v3783, 7
      %v3785 = vsub.s32 %v3782, %v3784
      %v3786 = vrot.slane %v3778, %v3785
      %v3788 = vunpack.c.l.s4 1966171168
      %v3789 = vunpack.c.0.s8 %v3788
      %v3790 = vlaneseq
      %v3791 = vshrl.u32 %v3790, 7
      %v3792 = vsub.s32 %v3789, %v3791
      %v3793 = vrot.slane %v3779, %v3792
      %v3794 = vcombine.low %v3786, %v3793
      %v3795 = vcombine.low %v2633, %v2640
      %v3796 = vcombine.low %v2647, %v2654
      %v3797 = vcombine.low %v2661, %v2668
      %v3798 = vcombine.low %v2675, %v2682
      %v3800 = vunpack.c.l.s4 1966171168
      %v3801 = vunpack.c.0.s8 %v3800
      %v3802 = vlaneseq
      %v3803 = vshrl.u32 %v3802, 7
      %v3804 = vsub.s32 %v3801, %v3803
      %v3805 = vrot.slane %v3795, %v3804
      %v3807 = vunpack.c.l.s4 1966171168
      %v3808 = vunpack.c.0.s8 %v3807
      %v3809 = vlaneseq
      %v3810 = vshrl.u32 %v3809, 7
      %v3811 = vsub.s32 %v3808, %v3810
      %v3812 = vrot.slane %v3796, %v3811
      %v3814 = vunpack.c.l.s4 1966171168
      %v3815 = vunpack.c.0.s8 %v3814
      %v3816 = vlaneseq
      %v3817 = vshrl.u32 %v3816, 7
      %v3818 = vsub.s32 %v3815, %v3817
      %v3819 = vrot.slane %v3797, %v3818
      %v3821 = vunpack.c.l.s4 1966171168
      %v3822 = vunpack.c.0.s8 %v3821
      %v3823 = vlaneseq
      %v3824 = vshrl.u32 %v3823, 7
      %v3825 = vsub.s32 %v3822, %v3824
      %v3826 = vrot.slane %v3798, %v3825
      %v3827 = vcombine.low %v3805, %v3812
      %v3828 = vcombine.low %v3819, %v3826
      %v3830 = vunpack.c.l.s4 1966171168
      %v3831 = vunpack.c.0.s8 %v3830
      %v3832 = vlaneseq
      %v3833 = vshrl.u32 %v3832, 7
      %v3834 = vsub.s32 %v3831, %v3833
      %v3835 = vrot.slane %v3827, %v3834
      %v3837 = vunpack.c.l.s4 1966171168
      %v3838 = vunpack.c.0.s8 %v3837
      %v3839 = vlaneseq
      %v3840 = vshrl.u32 %v3839, 7
      %v3841 = vsub.s32 %v3838, %v3840
      %v3842 = vrot.slane %v3828, %v3841
      %v3843 = vcombine.low %v3835, %v3842
      %v3844 = vcombine.low %v2689, %v2696
      %v3845 = vcombine.low %v2703, %v2710
      %v3846 = vcombine.low %v2717, %v2724
      %v3847 = vcombine.low %v2731, %v2738
      %v3849 = vunpack.c.l.s4 1966171168
      %v3850 = vunpack.c.0.s8 %v3849
      %v3851 = vlaneseq
      %v3852 = vshrl.u32 %v3851, 7
      %v3853 = vsub.s32 %v3850, %v3852
      %v3854 = vrot.slane %v3844, %v3853
      %v3856 = vunpack.c.l.s4 1966171168
      %v3857 = vunpack.c.0.s8 %v3856
      %v3858 = vlaneseq
      %v3859 = vshrl.u32 %v3858, 7
      %v3860 = vsub.s32 %v3857, %v3859
      %v3861 = vrot.slane %v3845, %v3860
      %v3863 = vunpack.c.l.s4 1966171168
      %v3864 = vunpack.c.0.s8 %v3863
      %v3865 = vlaneseq
      %v3866 = vshrl.u32 %v3865, 7
      %v3867 = vsub.s32 %v3864, %v3866
      %v3868 = vrot.slane %v3846, %v3867
      %v3870 = vunpack.c.l.s4 1966171168
      %v3871 = vunpack.c.0.s8 %v3870
      %v3872 = vlaneseq
      %v3873 = vshrl.u32 %v3872, 7
      %v3874 = vsub.s32 %v3871, %v3873
      %v3875 = vrot.slane %v3847, %v3874
      %v3876 = vcombine.low %v3854, %v3861
      %v3877 = vcombine.low %v3868, %v3875
      %v3879 = vunpack.c.l.s4 1966171168
      %v3880 = vunpack.c.0.s8 %v3879
      %v3881 = vlaneseq
      %v3882 = vshrl.u32 %v3881, 7
      %v3883 = vsub.s32 %v3880, %v3882
      %v3884 = vrot.slane %v3876, %v3883
      %v3886 = vunpack.c.l.s4 1966171168
      %v3887 = vunpack.c.0.s8 %v3886
      %v3888 = vlaneseq
      %v3889 = vshrl.u32 %v3888, 7
      %v3890 = vsub.s32 %v3887, %v3889
      %v3891 = vrot.slane %v3877, %v3890
      %v3892 = vcombine.low %v3884, %v3891
      %v3893 = vcombine.low %v2745, %v2752
      %v3894 = vcombine.low %v2759, %v2766
      %v3895 = vcombine.low %v2773, %v2780
      %v3896 = vcombine.low %v2787, %v2794
      %v3898 = vunpack.c.l.s4 1966171168
      %v3899 = vunpack.c.0.s8 %v3898
      %v3900 = vlaneseq
      %v3901 = vshrl.u32 %v3900, 7
      %v3902 = vsub.s32 %v3899, %v3901
      %v3903 = vrot.slane %v3893, %v3902
      %v3905 = vunpack.c.l.s4 1966171168
      %v3906 = vunpack.c.0.s8 %v3905
      %v3907 = vlaneseq
      %v3908 = vshrl.u32 %v3907, 7
      %v3909 = vsub.s32 %v3906, %v3908
      %v3910 = vrot.slane %v3894, %v3909
      %v3912 = vunpack.c.l.s4 1966171168
      %v3913 = vunpack.c.0.s8 %v3912
      %v3914 = vlaneseq
      %v3915 = vshrl.u32 %v3914, 7
      %v3916 = vsub.s32 %v3913, %v3915
      %v3917 = vrot.slane %v3895, %v3916
      %v3919 = vunpack.c.l.s4 1966171168
      %v3920 = vunpack.c.0.s8 %v3919
      %v3921 = vlaneseq
      %v3922 = vshrl.u32 %v3921, 7
      %v3923 = vsub.s32 %v3920, %v3922
      %v3924 = vrot.slane %v3896, %v3923
      %v3925 = vcombine.low %v3903, %v3910
      %v3926 = vcombine.low %v3917, %v3924
      %v3928 = vunpack.c.l.s4 1966171168
      %v3929 = vunpack.c.0.s8 %v3928
      %v3930 = vlaneseq
      %v3931 = vshrl.u32 %v3930, 7
      %v3932 = vsub.s32 %v3929, %v3931
      %v3933 = vrot.slane %v3925, %v3932
      %v3935 = vunpack.c.l.s4 1966171168
      %v3936 = vunpack.c.0.s8 %v3935
      %v3937 = vlaneseq
      %v3938 = vshrl.u32 %v3937, 7
      %v3939 = vsub.s32 %v3936, %v3938
      %v3940 = vrot.slane %v3926, %v3939
      %v3941 = vcombine.low %v3933, %v3940
      %v3942 = vcombine.low %v2801, %v2808
      %v3943 = vcombine.low %v2815, %v2822
      %v3944 = vcombine.low %v2829, %v2836
      %v3945 = vcombine.low %v2843, %v2850
      %v3947 = vunpack.c.l.s4 1966171168
      %v3948 = vunpack.c.0.s8 %v3947
      %v3949 = vlaneseq
      %v3950 = vshrl.u32 %v3949, 7
      %v3951 = vsub.s32 %v3948, %v3950
      %v3952 = vrot.slane %v3942, %v3951
      %v3954 = vunpack.c.l.s4 1966171168
      %v3955 = vunpack.c.0.s8 %v3954
      %v3956 = vlaneseq
      %v3957 = vshrl.u32 %v3956, 7
      %v3958 = vsub.s32 %v3955, %v3957
      %v3959 = vrot.slane %v3943, %v3958
      %v3961 = vunpack.c.l.s4 1966171168
      %v3962 = vunpack.c.0.s8 %v3961
      %v3963 = vlaneseq
      %v3964 = vshrl.u32 %v3963, 7
      %v3965 = vsub.s32 %v3962, %v3964
      %v3966 = vrot.slane %v3944, %v3965
      %v3968 = vunpack.c.l.s4 1966171168
      %v3969 = vunpack.c.0.s8 %v3968
      %v3970 = vlaneseq
      %v3971 = vshrl.u32 %v3970, 7
      %v3972 = vsub.s32 %v3969, %v3971
      %v3973 = vrot.slane %v3945, %v3972
      %v3974 = vcombine.low %v3952, %v3959
      %v3975 = vcombine.low %v3966, %v3973
      %v3977 = vunpack.c.l.s4 1966171168
      %v3978 = vunpack.c.0.s8 %v3977
      %v3979 = vlaneseq
      %v3980 = vshrl.u32 %v3979, 7
      %v3981 = vsub.s32 %v3978, %v3980
      %v3982 = vrot.slane %v3974, %v3981
      %v3984 = vunpack.c.l.s4 1966171168
      %v3985 = vunpack.c.0.s8 %v3984
      %v3986 = vlaneseq
      %v3987 = vshrl.u32 %v3986, 7
      %v3988 = vsub.s32 %v3985, %v3987
      %v3989 = vrot.slane %v3975, %v3988
      %v3990 = vcombine.low %v3982, %v3989
      %vm3991 = vsmask.f32 256
      %v3993 = vshrl.u32 %v3059, 16
      %v3995 = vrot.slane %v3993, 7
      %v3996 = vshll.u32 %v3059, 16
      %v3998 = vor.u32 %v3995, %v3996
      %v4000 = vshrl.u32 %v3108, 16
      %v4002 = vrot.slane %v4000, 7
      %v4003 = vshll.u32 %v3108, 16
      %v4005 = vor.u32 %v4002, %v4003
      %v4006 = vsel %vm3991, %v3995, %v4005
      %v4008 = vshrl.u32 %v3157, 16
      %v4010 = vrot.slane %v4008, 7
      %v4011 = vshll.u32 %v3157, 16
      %v4013 = vor.u32 %v4010, %v4011
      %v4015 = vshrl.u32 %v3206, 16
      %v4017 = vrot.slane %v4015, 7
      %v4018 = vshll.u32 %v3206, 16
      %v4020 = vor.u32 %v4017, %v4018
      %v4021 = vsel %vm3991, %v4010, %v4020
      %v4023 = vshrl.u32 %v3255, 16
      %v4025 = vrot.slane %v4023, 7
      %v4026 = vshll.u32 %v3255, 16
      %v4028 = vor.u32 %v4025, %v4026
      %v4030 = vshrl.u32 %v3304, 16
      %v4032 = vrot.slane %v4030, 7
      %v4033 = vshll.u32 %v3304, 16
      %v4035 = vor.u32 %v4032, %v4033
      %v4036 = vsel %vm3991, %v4025, %v4035
      %v4038 = vshrl.u32 %v3353, 16
      %v4040 = vrot.slane %v4038, 7
      %v4041 = vshll.u32 %v3353, 16
      %v4043 = vor.u32 %v4040, %v4041
      %v4045 = vshrl.u32 %v3402, 16
      %v4047 = vrot.slane %v4045, 7
      %v4048 = vshll.u32 %v3402, 16
      %v4050 = vor.u32 %v4047, %v4048
      %v4051 = vsel %vm3991, %v4040, %v4050
      %v4053 = vshrl.u32 %v3451, 16
      %v4055 = vrot.slane %v4053, 7
      %v4056 = vshll.u32 %v3451, 16
      %v4058 = vor.u32 %v4055, %v4056
      %v4060 = vshrl.u32 %v3500, 16
      %v4062 = vrot.slane %v4060, 7
      %v4063 = vshll.u32 %v3500, 16
      %v4065 = vor.u32 %v4062, %v4063
      %v4066 = vsel %vm3991, %v4055, %v4065
      %v4068 = vshrl.u32 %v3549, 16
      %v4070 = vrot.slane %v4068, 7
      %v4071 = vshll.u32 %v3549, 16
      %v4073 = vor.u32 %v4070, %v4071
      %v4075 = vshrl.u32 %v3598, 16
      %v4077 = vrot.slane %v4075, 7
      %v4078 = vshll.u32 %v3598, 16
      %v4080 = vor.u32 %v4077, %v4078
      %v4081 = vsel %vm3991, %v4070, %v4080
      %v4083 = vshrl.u32 %v3647, 16
      %v4085 = vrot.slane %v4083, 7
      %v4086 = vshll.u32 %v3647, 16
      %v4088 = vor.u32 %v4085, %v4086
      %v4090 = vshrl.u32 %v3696, 16
      %v4092 = vrot.slane %v4090, 7
      %v4093 = vshll.u32 %v3696, 16
      %v4095 = vor.u32 %v4092, %v4093
      %v4096 = vsel %vm3991, %v4085, %v4095
      %v4098 = vshrl.u32 %v3745, 16
      %v4100 = vrot.slane %v4098, 7
      %v4101 = vshll.u32 %v3745, 16
      %v4103 = vor.u32 %v4100, %v4101
      %v4105 = vshrl.u32 %v3794, 16
      %v4107 = vrot.slane %v4105, 7
      %v4108 = vshll.u32 %v3794, 16
      %v4110 = vor.u32 %v4107, %v4108
      %v4111 = vsel %vm3991, %v4100, %v4110
      %v4113 = vshrl.u32 %v3843, 16
      %v4115 = vrot.slane %v4113, 7
      %v4116 = vshll.u32 %v3843, 16
      %v4118 = vor.u32 %v4115, %v4116
      %v4120 = vshrl.u32 %v3892, 16
      %v4122 = vrot.slane %v4120, 7
      %v4123 = vshll.u32 %v3892, 16
      %v4125 = vor.u32 %v4122, %v4123
      %v4126 = vsel %vm3991, %v4115, %v4125
      %v4128 = vshrl.u32 %v3941, 16
      %v4130 = vrot.slane %v4128, 7
      %v4131 = vshll.u32 %v3941, 16
      %v4133 = vor.u32 %v4130, %v4131
      %v4135 = vshrl.u32 %v3990, 16
      %v4137 = vrot.slane %v4135, 7
      %v4138 = vshll.u32 %v3990, 16
      %v4140 = vor.u32 %v4137, %v4138
      %v4141 = vsel %vm3991, %v4130, %v4140
      %vm4162 = vcmask 1040384
      %vm4163 = vmand %vm4162, %vm3991
      %v4164 = vsel %vm4163, 0, %v3998
      %v4165 = vsel %vm4163, 0, %v4013
      %v4166 = vsel %vm4163, 0, %v4028
      %v4167 = vsel %vm4163, 0, %v4043
      %v4168 = vsel %vm4163, 0, %v4058
      %v4169 = vsel %vm4163, 0, %v4073
      %v4170 = vsel %vm4163, 0, %v4088
      %v4171 = vsel %vm4163, 0, %v4103
      %v4172 = vsel %vm4163, 0, %v4118
      %v4173 = vsel %vm4163, 0, %v4133
      %v4174 = vsel %vm4163, %v4002, 0
      %v4175 = vsel %vm4163, %v4017, 0
      %v4176 = vsel %vm4163, %v4032, 0
      %v4177 = vsel %vm4163, %v4047, 0
      %v4178 = vsel %vm4163, %v4062, 0
      %v4179 = vsel %vm4163, %v4077, 0
      %v4180 = vsel %vm4163, %v4092, 0
      %v4181 = vsel %vm4163, %v4107, 0
      %v4182 = vsel %vm4163, %v4122, 0
      %v4183 = vsel %vm4163, %v4137, 0
      %vm4184 = vsmask.f32 7424
      %v4186 = vshrl.u32 %v4164, 16
      %v4188 = vshll.u32 %v4164, 16
      %v4190 = vrot.slane %v4188, 1
      %v4191 = vor.u32 %v4186, %v4190
      %v4193 = vshll.u32 %v4006, 16
      %v4195 = vrot.slane %v4193, 1
      %v4196 = vsel %vm4184, %v4191, %v4195
      %v4197 = vshrl.u32 %v4006, 16
      %v4199 = vor.u32 %v4197, %v4195
      %v4201 = vshll.u32 %v4174, 16
      %v4203 = vrot.slane %v4201, 1
      %v4204 = vsel %vm4184, %v4199, %v4203
      %v4206 = vshrl.u32 %v4165, 16
      %v4208 = vshll.u32 %v4165, 16
      %v4210 = vrot.slane %v4208, 1
      %v4211 = vor.u32 %v4206, %v4210
      %v4213 = vshll.u32 %v4021, 16
      %v4215 = vrot.slane %v4213, 1
      %v4216 = vsel %vm4184, %v4211, %v4215
      %v4217 = vshrl.u32 %v4021, 16
      %v4219 = vor.u32 %v4217, %v4215
      %v4221 = vshll.u32 %v4175, 16
      %v4223 = vrot.slane %v4221, 1
      %v4224 = vsel %vm4184, %v4219, %v4223
      %v4226 = vshrl.u32 %v4166, 16
      %v4228 = vshll.u32 %v4166, 16
      %v4230 = vrot.slane %v4228, 1
      %v4231 = vor.u32 %v4226, %v4230
      %v4233 = vshll.u32 %v4036, 16
      %v4235 = vrot.slane %v4233, 1
      %v4236 = vsel %vm4184, %v4231, %v4235
      %v4237 = vshrl.u32 %v4036, 16
      %v4239 = vor.u32 %v4237, %v4235
      %v4241 = vshll.u32 %v4176, 16
      %v4243 = vrot.slane %v4241, 1
      %v4244 = vsel %vm4184, %v4239, %v4243
      %v4246 = vshrl.u32 %v4167, 16
      %v4248 = vshll.u32 %v4167, 16
      %v4250 = vrot.slane %v4248, 1
      %v4251 = vor.u32 %v4246, %v4250
      %v4253 = vshll.u32 %v4051, 16
      %v4255 = vrot.slane %v4253, 1
      %v4256 = vsel %vm4184, %v4251, %v4255
      %v4257 = vshrl.u32 %v4051, 16
      %v4259 = vor.u32 %v4257, %v4255
      %v4261 = vshll.u32 %v4177, 16
      %v4263 = vrot.slane %v4261, 1
      %v4264 = vsel %vm4184, %v4259, %v4263
      %v4266 = vshrl.u32 %v4168, 16
      %v4268 = vshll.u32 %v4168, 16
      %v4270 = vrot.slane %v4268, 1
      %v4271 = vor.u32 %v4266, %v4270
      %v4273 = vshll.u32 %v4066, 16
      %v4275 = vrot.slane %v4273, 1
      %v4276 = vsel %vm4184, %v4271, %v4275
      %v4277 = vshrl.u32 %v4066, 16
      %v4279 = vor.u32 %v4277, %v4275
      %v4281 = vshll.u32 %v4178, 16
      %v4283 = vrot.slane %v4281, 1
      %v4284 = vsel %vm4184, %v4279, %v4283
      %v4286 = vshrl.u32 %v4169, 16
      %v4288 = vshll.u32 %v4169, 16
      %v4290 = vrot.slane %v4288, 1
      %v4291 = vor.u32 %v4286, %v4290
      %v4293 = vshll.u32 %v4081, 16
      %v4295 = vrot.slane %v4293, 1
      %v4296 = vsel %vm4184, %v4291, %v4295
      %v4297 = vshrl.u32 %v4081, 16
      %v4299 = vor.u32 %v4297, %v4295
      %v4301 = vshll.u32 %v4179, 16
      %v4303 = vrot.slane %v4301, 1
      %v4304 = vsel %vm4184, %v4299, %v4303
      %v4306 = vshrl.u32 %v4170, 16
      %v4308 = vshll.u32 %v4170, 16
      %v4310 = vrot.slane %v4308, 1
      %v4311 = vor.u32 %v4306, %v4310
      %v4313 = vshll.u32 %v4096, 16
      %v4315 = vrot.slane %v4313, 1
      %v4316 = vsel %vm4184, %v4311, %v4315
      %v4317 = vshrl.u32 %v4096, 16
      %v4319 = vor.u32 %v4317, %v4315
      %v4321 = vshll.u32 %v4180, 16
      %v4323 = vrot.slane %v4321, 1
      %v4324 = vsel %vm4184, %v4319, %v4323
      %v4326 = vshrl.u32 %v4171, 16
      %v4328 = vshll.u32 %v4171, 16
      %v4330 = vrot.slane %v4328, 1
      %v4331 = vor.u32 %v4326, %v4330
      %v4333 = vshll.u32 %v4111, 16
      %v4335 = vrot.slane %v4333, 1
      %v4336 = vsel %vm4184, %v4331, %v4335
      %v4337 = vshrl.u32 %v4111, 16
      %v4339 = vor.u32 %v4337, %v4335
      %v4341 = vshll.u32 %v4181, 16
      %v4343 = vrot.slane %v4341, 1
      %v4344 = vsel %vm4184, %v4339, %v4343
      %v4346 = vshrl.u32 %v4172, 16
      %v4348 = vshll.u32 %v4172, 16
      %v4350 = vrot.slane %v4348, 1
      %v4351 = vor.u32 %v4346, %v4350
      %v4353 = vshll.u32 %v4126, 16
      %v4355 = vrot.slane %v4353, 1
      %v4356 = vsel %vm4184, %v4351, %v4355
      %v4357 = vshrl.u32 %v4126, 16
      %v4359 = vor.u32 %v4357, %v4355
      %v4361 = vshll.u32 %v4182, 16
      %v4363 = vrot.slane %v4361, 1
      %v4364 = vsel %vm4184, %v4359, %v4363
      %4365 = vrot.lane.b32.xlu0 %v4196, 16
      %v4366 = vpop.permute.xlu0 %4365
      %4367 = vrot.lane.b32.xlu0 %v4204, 16
      %v4368 = vpop.permute.xlu0 %4367
      %4369 = vrot.lane.b32.xlu0 %v4216, 16
      %v4370 = vpop.permute.xlu0 %4369
      %4371 = vrot.lane.b32.xlu0 %v4224, 16
      %v4372 = vpop.permute.xlu0 %4371
      %4373 = vrot.lane.b32.xlu0 %v4236, 16
      %v4374 = vpop.permute.xlu0 %4373
      %4375 = vrot.lane.b32.xlu0 %v4244, 16
      %v4376 = vpop.permute.xlu0 %4375
      %4377 = vrot.lane.b32.xlu0 %v4256, 16
      %v4378 = vpop.permute.xlu0 %4377
      %4379 = vrot.lane.b32.xlu0 %v4264, 16
      %v4380 = vpop.permute.xlu0 %4379
      %4381 = vrot.lane.b32.xlu0 %v4276, 16
      %v4382 = vpop.permute.xlu0 %4381
      %4383 = vrot.lane.b32.xlu0 %v4284, 16
      %v4384 = vpop.permute.xlu0 %4383
      %4385 = vrot.lane.b32.xlu0 %v4296, 16
      %v4386 = vpop.permute.xlu0 %4385
      %4387 = vrot.lane.b32.xlu0 %v4304, 16
      %v4388 = vpop.permute.xlu0 %4387
      %4389 = vrot.lane.b32.xlu0 %v4316, 16
      %v4390 = vpop.permute.xlu0 %4389
      %4391 = vrot.lane.b32.xlu0 %v4324, 16
      %v4392 = vpop.permute.xlu0 %4391
      %4393 = vrot.lane.b32.xlu0 %v4336, 16
      %v4394 = vpop.permute.xlu0 %4393
      %4395 = vrot.lane.b32.xlu0 %v4344, 16
      %v4396 = vpop.permute.xlu0 %4395
      %4397 = vrot.lane.b32.xlu0 %v4356, 16
      %v4398 = vpop.permute.xlu0 %4397
      %4399 = vrot.lane.b32.xlu0 %v4364, 16
      %v4400 = vpop.permute.xlu0 %4399
      %vm4419 = vcmask 1046528
      %v4420 = vrot.slane %v4164, 1
      %v4421 = vrot.slane %v4006, 1
      %v4422 = vsel %vm4419, %v4420, %v4421
      %v4423 = vrot.slane %v4174, 1
      %v4424 = vsel %vm4419, %v4421, %v4423
      %v4425 = vrot.slane %v4165, 1
      %v4426 = vrot.slane %v4021, 1
      %v4427 = vsel %vm4419, %v4425, %v4426
      %v4428 = vrot.slane %v4175, 1
      %v4429 = vsel %vm4419, %v4426, %v4428
      %v4430 = vrot.slane %v4166, 1
      %v4431 = vrot.slane %v4036, 1
      %v4432 = vsel %vm4419, %v4430, %v4431
      %v4433 = vrot.slane %v4176, 1
      %v4434 = vsel %vm4419, %v4431, %v4433
      %v4435 = vrot.slane %v4167, 1
      %v4436 = vrot.slane %v4051, 1
      %v4437 = vsel %vm4419, %v4435, %v4436
      %v4438 = vrot.slane %v4177, 1
      %v4439 = vsel %vm4419, %v4436, %v4438
      %v4440 = vrot.slane %v4168, 1
      %v4441 = vrot.slane %v4066, 1
      %v4442 = vsel %vm4419, %v4440, %v4441
      %v4443 = vrot.slane %v4178, 1
      %v4444 = vsel %vm4419, %v4441, %v4443
      %v4445 = vrot.slane %v4169, 1
      %v4446 = vrot.slane %v4081, 1
      %v4447 = vsel %vm4419, %v4445, %v4446
      %v4448 = vrot.slane %v4179, 1
      %v4449 = vsel %vm4419, %v4446, %v4448
      %v4450 = vrot.slane %v4170, 1
      %v4451 = vrot.slane %v4096, 1
      %v4452 = vsel %vm4419, %v4450, %v4451
      %v4453 = vrot.slane %v4180, 1
      %v4454 = vsel %vm4419, %v4451, %v4453
      %v4455 = vrot.slane %v4171, 1
      %v4456 = vrot.slane %v4111, 1
      %v4457 = vsel %vm4419, %v4455, %v4456
      %v4458 = vrot.slane %v4181, 1
      %v4459 = vsel %vm4419, %v4456, %v4458
      %v4460 = vrot.slane %v4172, 1
      %v4461 = vrot.slane %v4126, 1
      %v4462 = vsel %vm4419, %v4460, %v4461
      %v4463 = vrot.slane %v4182, 1
      %v4464 = vsel %vm4419, %v4461, %v4463
      %4465 = vrot.lane.b32.xlu0 %v4422, 32
      %v4466 = vpop.permute.xlu0 %4465
      %4467 = vrot.lane.b32.xlu0 %v4424, 32
      %v4468 = vpop.permute.xlu0 %4467
      %4469 = vrot.lane.b32.xlu0 %v4427, 32
      %v4470 = vpop.permute.xlu0 %4469
      %4471 = vrot.lane.b32.xlu0 %v4429, 32
      %v4472 = vpop.permute.xlu0 %4471
      %4473 = vrot.lane.b32.xlu0 %v4432, 32
      %v4474 = vpop.permute.xlu0 %4473
      %4475 = vrot.lane.b32.xlu0 %v4434, 32
      %v4476 = vpop.permute.xlu0 %4475
      %4477 = vrot.lane.b32.xlu0 %v4437, 32
      %v4478 = vpop.permute.xlu0 %4477
      %4479 = vrot.lane.b32.xlu0 %v4439, 32
      %v4480 = vpop.permute.xlu0 %4479
      %4481 = vrot.lane.b32.xlu0 %v4442, 32
      %v4482 = vpop.permute.xlu0 %4481
      %4483 = vrot.lane.b32.xlu0 %v4444, 32
      %v4484 = vpop.permute.xlu0 %4483
      %4485 = vrot.lane.b32.xlu0 %v4447, 32
      %v4486 = vpop.permute.xlu0 %4485
      %4487 = vrot.lane.b32.xlu0 %v4449, 32
      %v4488 = vpop.permute.xlu0 %4487
      %4489 = vrot.lane.b32.xlu0 %v4452, 32
      %v4490 = vpop.permute.xlu0 %4489
      %4491 = vrot.lane.b32.xlu0 %v4454, 32
      %v4492 = vpop.permute.xlu0 %4491
      %4493 = vrot.lane.b32.xlu0 %v4457, 32
      %v4494 = vpop.permute.xlu0 %4493
      %4495 = vrot.lane.b32.xlu0 %v4459, 32
      %v4496 = vpop.permute.xlu0 %4495
      %4497 = vrot.lane.b32.xlu0 %v4462, 32
      %v4498 = vpop.permute.xlu0 %4497
      %4499 = vrot.lane.b32.xlu0 %v4464, 32
      %v4500 = vpop.permute.xlu0 %4499
      %4501 = vrot.lane.b32.xlu0 %v4165, 48
      %v4502 = vpop.permute.xlu0 %4501
      %4503 = vrot.lane.b32.xlu0 %v4021, 48
      %v4504 = vpop.permute.xlu0 %4503
      %4505 = vrot.lane.b32.xlu0 %v4166, 48
      %v4506 = vpop.permute.xlu0 %4505
      %4507 = vrot.lane.b32.xlu0 %v4036, 48
      %v4508 = vpop.permute.xlu0 %4507
      %4509 = vrot.lane.b32.xlu0 %v4167, 48
      %v4510 = vpop.permute.xlu0 %4509
      %4511 = vrot.lane.b32.xlu0 %v4051, 48
      %v4512 = vpop.permute.xlu0 %4511
      %4513 = vrot.lane.b32.xlu0 %v4168, 48
      %v4514 = vpop.permute.xlu0 %4513
      %4515 = vrot.lane.b32.xlu0 %v4066, 48
      %v4516 = vpop.permute.xlu0 %4515
      %4517 = vrot.lane.b32.xlu0 %v4169, 48
      %v4518 = vpop.permute.xlu0 %4517
      %4519 = vrot.lane.b32.xlu0 %v4081, 48
      %v4520 = vpop.permute.xlu0 %4519
      %4521 = vrot.lane.b32.xlu0 %v4170, 48
      %v4522 = vpop.permute.xlu0 %4521
      %4523 = vrot.lane.b32.xlu0 %v4096, 48
      %v4524 = vpop.permute.xlu0 %4523
      %4525 = vrot.lane.b32.xlu0 %v4171, 48
      %v4526 = vpop.permute.xlu0 %4525
      %4527 = vrot.lane.b32.xlu0 %v4111, 48
      %v4528 = vpop.permute.xlu0 %4527
      %4529 = vrot.lane.b32.xlu0 %v4172, 48
      %v4530 = vpop.permute.xlu0 %4529
      %4531 = vrot.lane.b32.xlu0 %v4126, 48
      %v4532 = vpop.permute.xlu0 %4531
      %4533 = vrot.lane.b32.xlu0 %v4216, 64
      %v4534 = vpop.permute.xlu0 %4533
      %4535 = vrot.lane.b32.xlu0 %v4224, 64
      %v4536 = vpop.permute.xlu0 %4535
      %4537 = vrot.lane.b32.xlu0 %v4236, 64
      %v4538 = vpop.permute.xlu0 %4537
      %4539 = vrot.lane.b32.xlu0 %v4244, 64
      %v4540 = vpop.permute.xlu0 %4539
      %4541 = vrot.lane.b32.xlu0 %v4256, 64
      %v4542 = vpop.permute.xlu0 %4541
      %4543 = vrot.lane.b32.xlu0 %v4264, 64
      %v4544 = vpop.permute.xlu0 %4543
      %4545 = vrot.lane.b32.xlu0 %v4276, 64
      %v4546 = vpop.permute.xlu0 %4545
      %4547 = vrot.lane.b32.xlu0 %v4284, 64
      %v4548 = vpop.permute.xlu0 %4547
      %4549 = vrot.lane.b32.xlu0 %v4296, 64
      %v4550 = vpop.permute.xlu0 %4549
      %4551 = vrot.lane.b32.xlu0 %v4304, 64
      %v4552 = vpop.permute.xlu0 %4551
      %4553 = vrot.lane.b32.xlu0 %v4316, 64
      %v4554 = vpop.permute.xlu0 %4553
      %4555 = vrot.lane.b32.xlu0 %v4324, 64
      %v4556 = vpop.permute.xlu0 %4555
      %4557 = vrot.lane.b32.xlu0 %v4336, 64
      %v4558 = vpop.permute.xlu0 %4557
      %4559 = vrot.lane.b32.xlu0 %v4344, 64
      %v4560 = vpop.permute.xlu0 %4559
      %4561 = vrot.lane.b32.xlu0 %v4356, 64
      %v4562 = vpop.permute.xlu0 %4561
      %4563 = vrot.lane.b32.xlu0 %v4364, 64
      %v4564 = vpop.permute.xlu0 %4563
      %4565 = vrot.lane.b32.xlu0 %v4427, 80
      %v4566 = vpop.permute.xlu0 %4565
      %4567 = vrot.lane.b32.xlu0 %v4429, 80
      %v4568 = vpop.permute.xlu0 %4567
      %4569 = vrot.lane.b32.xlu0 %v4432, 80
      %v4570 = vpop.permute.xlu0 %4569
      %4571 = vrot.lane.b32.xlu0 %v4434, 80
      %v4572 = vpop.permute.xlu0 %4571
      %4573 = vrot.lane.b32.xlu0 %v4437, 80
      %v4574 = vpop.permute.xlu0 %4573
      %4575 = vrot.lane.b32.xlu0 %v4439, 80
      %v4576 = vpop.permute.xlu0 %4575
      %4577 = vrot.lane.b32.xlu0 %v4442, 80
      %v4578 = vpop.permute.xlu0 %4577
      %4579 = vrot.lane.b32.xlu0 %v4444, 80
      %v4580 = vpop.permute.xlu0 %4579
      %4581 = vrot.lane.b32.xlu0 %v4447, 80
      %v4582 = vpop.permute.xlu0 %4581
      %4583 = vrot.lane.b32.xlu0 %v4449, 80
      %v4584 = vpop.permute.xlu0 %4583
      %4585 = vrot.lane.b32.xlu0 %v4452, 80
      %v4586 = vpop.permute.xlu0 %4585
      %4587 = vrot.lane.b32.xlu0 %v4454, 80
      %v4588 = vpop.permute.xlu0 %4587
      %4589 = vrot.lane.b32.xlu0 %v4457, 80
      %v4590 = vpop.permute.xlu0 %4589
      %4591 = vrot.lane.b32.xlu0 %v4459, 80
      %v4592 = vpop.permute.xlu0 %4591
      %4593 = vrot.lane.b32.xlu0 %v4462, 80
      %v4594 = vpop.permute.xlu0 %4593
      %4595 = vrot.lane.b32.xlu0 %v4464, 80
      %v4596 = vpop.permute.xlu0 %4595
      %4598 = vrot.lane.b32.xlu0 %v4165, 96
      %v4599 = vpop.permute.xlu0 %4598
      %4600 = vrot.lane.b32.xlu0 %v4021, 96
      %v4601 = vpop.permute.xlu0 %4600
      %4602 = vrot.lane.b32.xlu0 %v4166, 96
      %v4603 = vpop.permute.xlu0 %4602
      %4604 = vrot.lane.b32.xlu0 %v4036, 96
      %v4605 = vpop.permute.xlu0 %4604
      %4606 = vrot.lane.b32.xlu0 %v4167, 96
      %v4607 = vpop.permute.xlu0 %4606
      %4608 = vrot.lane.b32.xlu0 %v4051, 96
      %v4609 = vpop.permute.xlu0 %4608
      %4610 = vrot.lane.b32.xlu0 %v4168, 96
      %v4611 = vpop.permute.xlu0 %4610
      %4612 = vrot.lane.b32.xlu0 %v4066, 96
      %v4613 = vpop.permute.xlu0 %4612
      %4614 = vrot.lane.b32.xlu0 %v4169, 96
      %v4615 = vpop.permute.xlu0 %4614
      %4616 = vrot.lane.b32.xlu0 %v4081, 96
      %v4617 = vpop.permute.xlu0 %4616
      %4618 = vrot.lane.b32.xlu0 %v4170, 96
      %v4619 = vpop.permute.xlu0 %4618
      %4620 = vrot.lane.b32.xlu0 %v4096, 96
      %v4621 = vpop.permute.xlu0 %4620
      %4622 = vrot.lane.b32.xlu0 %v4171, 96
      %v4623 = vpop.permute.xlu0 %4622
      %4624 = vrot.lane.b32.xlu0 %v4111, 96
      %v4625 = vpop.permute.xlu0 %4624
      %4626 = vrot.lane.b32.xlu0 %v4172, 96
      %v4627 = vpop.permute.xlu0 %4626
      %4628 = vrot.lane.b32.xlu0 %v4126, 96
      %v4629 = vpop.permute.xlu0 %4628
      %4630 = vrot.lane.b32.xlu0 %v4173, 96
      %v4631 = vpop.permute.xlu0 %4630
      %4632 = vrot.lane.b32.xlu0 %v4141, 96
      %v4633 = vpop.permute.xlu0 %4632
      %v4635 = vshrl.u32 %v4173, 16
      %v4637 = vshll.u32 %v4173, 16
      %v4639 = vrot.slane %v4637, 1
      %v4640 = vor.u32 %v4635, %v4639
      %v4642 = vshll.u32 %v4141, 16
      %v4644 = vrot.slane %v4642, 1
      %v4645 = vsel %vm4184, %v4640, %v4644
      %v4646 = vshrl.u32 %v4141, 16
      %v4648 = vor.u32 %v4646, %v4644
      %v4650 = vshll.u32 %v4183, 16
      %v4652 = vrot.slane %v4650, 1
      %v4653 = vsel %vm4184, %v4648, %v4652
      %4654 = vrot.lane.b32.xlu0 %v4216, 112
      %v4655 = vpop.permute.xlu0 %4654
      %4656 = vrot.lane.b32.xlu0 %v4224, 112
      %v4657 = vpop.permute.xlu0 %4656
      %4658 = vrot.lane.b32.xlu0 %v4236, 112
      %v4659 = vpop.permute.xlu0 %4658
      %4660 = vrot.lane.b32.xlu0 %v4244, 112
      %v4661 = vpop.permute.xlu0 %4660
      %4662 = vrot.lane.b32.xlu0 %v4256, 112
      %v4663 = vpop.permute.xlu0 %4662
      %4664 = vrot.lane.b32.xlu0 %v4264, 112
      %v4665 = vpop.permute.xlu0 %4664
      %4666 = vrot.lane.b32.xlu0 %v4276, 112
      %v4667 = vpop.permute.xlu0 %4666
      %4668 = vrot.lane.b32.xlu0 %v4284, 112
      %v4669 = vpop.permute.xlu0 %4668
      %4670 = vrot.lane.b32.xlu0 %v4296, 112
      %v4671 = vpop.permute.xlu0 %4670
      %4672 = vrot.lane.b32.xlu0 %v4304, 112
      %v4673 = vpop.permute.xlu0 %4672
      %4674 = vrot.lane.b32.xlu0 %v4316, 112
      %v4675 = vpop.permute.xlu0 %4674
      %4676 = vrot.lane.b32.xlu0 %v4324, 112
      %v4677 = vpop.permute.xlu0 %4676
      %4678 = vrot.lane.b32.xlu0 %v4336, 112
      %v4679 = vpop.permute.xlu0 %4678
      %4680 = vrot.lane.b32.xlu0 %v4344, 112
      %v4681 = vpop.permute.xlu0 %4680
      %4682 = vrot.lane.b32.xlu0 %v4356, 112
      %v4683 = vpop.permute.xlu0 %4682
      %4684 = vrot.lane.b32.xlu0 %v4364, 112
      %v4685 = vpop.permute.xlu0 %4684
      %4686 = vrot.lane.b32.xlu0 %v4645, 112
      %v4687 = vpop.permute.xlu0 %4686
      %4688 = vrot.lane.b32.xlu0 %v4653, 112
      %v4689 = vpop.permute.xlu0 %4688
      %v4691 = vrot.slane %v4173, 1
      %v4692 = vrot.slane %v4141, 1
      %v4693 = vsel %vm4419, %v4691, %v4692
      %v4694 = vrot.slane %v4183, 1
      %v4695 = vsel %vm4419, %v4692, %v4694
      %vm4696 = vcmask 130048
      %v4698 = vsel %vm4696, %v4164, %v4366
      %v4700 = vsel %vm4696, %v4006, %v4368
      %v4702 = vsel %vm4696, %v4165, %v4370
      %v4704 = vsel %vm4696, %v4021, %v4372
      %v4706 = vsel %vm4696, %v4166, %v4374
      %v4708 = vsel %vm4696, %v4036, %v4376
      %v4710 = vsel %vm4696, %v4167, %v4378
      %v4712 = vsel %vm4696, %v4051, %v4380
      %v4714 = vsel %vm4696, %v4168, %v4382
      %v4716 = vsel %vm4696, %v4066, %v4384
      %v4718 = vsel %vm4696, %v4169, %v4386
      %v4720 = vsel %vm4696, %v4081, %v4388
      %v4722 = vsel %vm4696, %v4170, %v4390
      %v4724 = vsel %vm4696, %v4096, %v4392
      %v4726 = vsel %vm4696, %v4171, %v4394
      %v4728 = vsel %vm4696, %v4111, %v4396
      %v4730 = vsel %vm4696, %v4172, %v4398
      %v4732 = vsel %vm4696, %v4126, %v4400
      %vm4733 = vcmask 261120
      %v4735 = vsel %vm4733, %v4698, %v4466
      %v4737 = vsel %vm4733, %v4700, %v4468
      %v4739 = vsel %vm4733, %v4702, %v4470
      %v4741 = vsel %vm4733, %v4704, %v4472
      %v4743 = vsel %vm4733, %v4706, %v4474
      %v4745 = vsel %vm4733, %v4708, %v4476
      %v4747 = vsel %vm4733, %v4710, %v4478
      %v4749 = vsel %vm4733, %v4712, %v4480
      %v4751 = vsel %vm4733, %v4714, %v4482
      %v4753 = vsel %vm4733, %v4716, %v4484
      %v4755 = vsel %vm4733, %v4718, %v4486
      %v4757 = vsel %vm4733, %v4720, %v4488
      %v4759 = vsel %vm4733, %v4722, %v4490
      %v4761 = vsel %vm4733, %v4724, %v4492
      %v4763 = vsel %vm4733, %v4726, %v4494
      %v4765 = vsel %vm4733, %v4728, %v4496
      %v4767 = vsel %vm4733, %v4730, %v4498
      %v4769 = vsel %vm4733, %v4732, %v4500
      %vm4770 = vcmask 392192
      %v4772 = vsel %vm4770, %v4735, %v4502
      %v4774 = vsel %vm4770, %v4737, %v4504
      %v4775 = vsel %vm4770, %v4739, %v4502
      %v4776 = vsel %vm4770, %v4741, %v4504
      %v4778 = vsel %vm4770, %v4739, %v4506
      %v4780 = vsel %vm4770, %v4741, %v4508
      %v4781 = vsel %vm4770, %v4743, %v4506
      %v4782 = vsel %vm4770, %v4745, %v4508
      %v4784 = vsel %vm4770, %v4743, %v4510
      %v4786 = vsel %vm4770, %v4745, %v4512
      %v4787 = vsel %vm4770, %v4747, %v4510
      %v4788 = vsel %vm4770, %v4749, %v4512
      %v4790 = vsel %vm4770, %v4747, %v4514
      %v4792 = vsel %vm4770, %v4749, %v4516
      %v4793 = vsel %vm4770, %v4751, %v4514
      %v4794 = vsel %vm4770, %v4753, %v4516
      %v4796 = vsel %vm4770, %v4751, %v4518
      %v4798 = vsel %vm4770, %v4753, %v4520
      %v4799 = vsel %vm4770, %v4755, %v4518
      %v4800 = vsel %vm4770, %v4757, %v4520
      %v4802 = vsel %vm4770, %v4755, %v4522
      %v4804 = vsel %vm4770, %v4757, %v4524
      %v4805 = vsel %vm4770, %v4759, %v4522
      %v4806 = vsel %vm4770, %v4761, %v4524
      %v4808 = vsel %vm4770, %v4759, %v4526
      %v4810 = vsel %vm4770, %v4761, %v4528
      %v4811 = vsel %vm4770, %v4763, %v4526
      %v4812 = vsel %vm4770, %v4765, %v4528
      %v4814 = vsel %vm4770, %v4763, %v4530
      %v4816 = vsel %vm4770, %v4765, %v4532
      %v4817 = vsel %vm4770, %v4767, %v4530
      %v4818 = vsel %vm4770, %v4769, %v4532
      %vm4819 = vcmask 523264
      %v4821 = vsel %vm4819, %v4772, %v4534
      %v4823 = vsel %vm4819, %v4774, %v4536
      %v4824 = vsel %vm4819, %v4775, %v4534
      %v4825 = vsel %vm4819, %v4776, %v4536
      %v4827 = vsel %vm4819, %v4778, %v4538
      %v4829 = vsel %vm4819, %v4780, %v4540
      %v4830 = vsel %vm4819, %v4781, %v4538
      %v4831 = vsel %vm4819, %v4782, %v4540
      %v4833 = vsel %vm4819, %v4784, %v4542
      %v4835 = vsel %vm4819, %v4786, %v4544
      %v4836 = vsel %vm4819, %v4787, %v4542
      %v4837 = vsel %vm4819, %v4788, %v4544
      %v4839 = vsel %vm4819, %v4790, %v4546
      %v4841 = vsel %vm4819, %v4792, %v4548
      %v4842 = vsel %vm4819, %v4793, %v4546
      %v4843 = vsel %vm4819, %v4794, %v4548
      %v4845 = vsel %vm4819, %v4796, %v4550
      %v4847 = vsel %vm4819, %v4798, %v4552
      %v4848 = vsel %vm4819, %v4799, %v4550
      %v4849 = vsel %vm4819, %v4800, %v4552
      %v4851 = vsel %vm4819, %v4802, %v4554
      %v4853 = vsel %vm4819, %v4804, %v4556
      %v4854 = vsel %vm4819, %v4805, %v4554
      %v4855 = vsel %vm4819, %v4806, %v4556
      %v4857 = vsel %vm4819, %v4808, %v4558
      %v4859 = vsel %vm4819, %v4810, %v4560
      %v4860 = vsel %vm4819, %v4811, %v4558
      %v4861 = vsel %vm4819, %v4812, %v4560
      %v4863 = vsel %vm4819, %v4814, %v4562
      %v4865 = vsel %vm4819, %v4816, %v4564
      %v4866 = vsel %vm4819, %v4817, %v4562
      %v4867 = vsel %vm4819, %v4818, %v4564
      %vm4868 = vcmask 654336
      %v4870 = vsel %vm4868, %v4821, %v4566
      %v4872 = vsel %vm4868, %v4823, %v4568
      %v4873 = vsel %vm4868, %v4824, %v4566
      %v4874 = vsel %vm4868, %v4825, %v4568
      %v4876 = vsel %vm4868, %v4827, %v4570
      %v4878 = vsel %vm4868, %v4829, %v4572
      %v4879 = vsel %vm4868, %v4830, %v4570
      %v4880 = vsel %vm4868, %v4831, %v4572
      %v4882 = vsel %vm4868, %v4833, %v4574
      %v4884 = vsel %vm4868, %v4835, %v4576
      %v4885 = vsel %vm4868, %v4836, %v4574
      %v4886 = vsel %vm4868, %v4837, %v4576
      %v4888 = vsel %vm4868, %v4839, %v4578
      %v4890 = vsel %vm4868, %v4841, %v4580
      %v4891 = vsel %vm4868, %v4842, %v4578
      %v4892 = vsel %vm4868, %v4843, %v4580
      %v4894 = vsel %vm4868, %v4845, %v4582
      %v4896 = vsel %vm4868, %v4847, %v4584
      %v4897 = vsel %vm4868, %v4848, %v4582
      %v4898 = vsel %vm4868, %v4849, %v4584
      %v4900 = vsel %vm4868, %v4851, %v4586
      %v4902 = vsel %vm4868, %v4853, %v4588
      %v4903 = vsel %vm4868, %v4854, %v4586
      %v4904 = vsel %vm4868, %v4855, %v4588
      %v4906 = vsel %vm4868, %v4857, %v4590
      %v4908 = vsel %vm4868, %v4859, %v4592
      %v4909 = vsel %vm4868, %v4860, %v4590
      %v4910 = vsel %vm4868, %v4861, %v4592
      %v4912 = vsel %vm4868, %v4863, %v4594
      %v4914 = vsel %vm4868, %v4865, %v4596
      %v4915 = vsel %vm4868, %v4866, %v4594
      %v4916 = vsel %vm4868, %v4867, %v4596
      %vm4917 = vcmask 785408
      %v4919 = vsel %vm4917, %v4870, %v4599
      %v4921 = vsel %vm4917, %v4872, %v4601
      %v4923 = vsel %vm4917, %v4873, %v4603
      %v4925 = vsel %vm4917, %v4874, %v4605
      %v4926 = vsel %vm4917, %v4876, %v4603
      %v4927 = vsel %vm4917, %v4878, %v4605
      %v4929 = vsel %vm4917, %v4879, %v4607
      %v4931 = vsel %vm4917, %v4880, %v4609
      %v4932 = vsel %vm4917, %v4882, %v4607
      %v4933 = vsel %vm4917, %v4884, %v4609
      %v4935 = vsel %vm4917, %v4885, %v4611
      %v4937 = vsel %vm4917, %v4886, %v4613
      %v4938 = vsel %vm4917, %v4888, %v4611
      %v4939 = vsel %vm4917, %v4890, %v4613
      %v4941 = vsel %vm4917, %v4891, %v4615
      %v4943 = vsel %vm4917, %v4892, %v4617
      %v4944 = vsel %vm4917, %v4894, %v4615
      %v4945 = vsel %vm4917, %v4896, %v4617
      %v4947 = vsel %vm4917, %v4897, %v4619
      %v4949 = vsel %vm4917, %v4898, %v4621
      %v4950 = vsel %vm4917, %v4900, %v4619
      %v4951 = vsel %vm4917, %v4902, %v4621
      %v4953 = vsel %vm4917, %v4903, %v4623
      %v4955 = vsel %vm4917, %v4904, %v4625
      %v4956 = vsel %vm4917, %v4906, %v4623
      %v4957 = vsel %vm4917, %v4908, %v4625
      %v4959 = vsel %vm4917, %v4909, %v4627
      %v4961 = vsel %vm4917, %v4910, %v4629
      %v4962 = vsel %vm4917, %v4912, %v4627
      %v4963 = vsel %vm4917, %v4914, %v4629
      %v4965 = vsel %vm4917, %v4915, %v4631
      %v4967 = vsel %vm4917, %v4916, %v4633
      %vm4968 = vcmask 916480
      %v4970 = vsel %vm4968, %v4919, %v4655
      %v4973 = vsel %vm4968, %v4921, %v4657
      %v4976 = vsel %vm4968, %v4923, %v4659
      %v4979 = vsel %vm4968, %v4925, %v4661
      %v4981 = vsel %vm4968, %v4926, %v4659
      %v4983 = vsel %vm4968, %v4927, %v4661
      %v4986 = vsel %vm4968, %v4929, %v4663
      %v4989 = vsel %vm4968, %v4931, %v4665
      %v4991 = vsel %vm4968, %v4932, %v4663
      %v4993 = vsel %vm4968, %v4933, %v4665
      %v4996 = vsel %vm4968, %v4935, %v4667
      %v4999 = vsel %vm4968, %v4937, %v4669
      %v5001 = vsel %vm4968, %v4938, %v4667
      %v5003 = vsel %vm4968, %v4939, %v4669
      %v5006 = vsel %vm4968, %v4941, %v4671
      %v5009 = vsel %vm4968, %v4943, %v4673
      %v5011 = vsel %vm4968, %v4944, %v4671
      %v5013 = vsel %vm4968, %v4945, %v4673
      %v5016 = vsel %vm4968, %v4947, %v4675
      %v5019 = vsel %vm4968, %v4949, %v4677
      %v5021 = vsel %vm4968, %v4950, %v4675
      %v5023 = vsel %vm4968, %v4951, %v4677
      %v5026 = vsel %vm4968, %v4953, %v4679
      %v5029 = vsel %vm4968, %v4955, %v4681
      %v5031 = vsel %vm4968, %v4956, %v4679
      %v5033 = vsel %vm4968, %v4957, %v4681
      %v5036 = vsel %vm4968, %v4959, %v4683
      %v5039 = vsel %vm4968, %v4961, %v4685
      %v5041 = vsel %vm4968, %v4962, %v4683
      %v5043 = vsel %vm4968, %v4963, %v4685
      %v5046 = vsel %vm4968, %v4965, %v4687
      %v5049 = vsel %vm4968, %v4967, %v4689
      %v5051 = vld [vmem:[%s2] sm:$0xf]
      %v5052 = vld [vmem:[%s2 + $0x4] sm:$0xf]
      %v5053 = vld [vmem:[%s2 + $0x8] sm:$0xf]
      %v5054 = vld [vmem:[%s2 + $0xc] sm:$0xf]
      %v5055 = vld [vmem:[%s2 + $0x10] sm:$0xf]
      %v5056 = vld [vmem:[%s2 + $0x14] sm:$0xf]
      %v5057 = vld [vmem:[%s2 + $0x18] sm:$0xf]
      %v5058 = vld [vmem:[%s2 + $0x1c] sm:$0xf]
      %v5059 = vld [vmem:[%s2 + $0x20] sm:$0xf]
      %v5060 = vld [vmem:[%s2 + $0x24] sm:$0xf]
      %v5061 = vld [vmem:[%s2 + $0x28] sm:$0xf]
      %v5062 = vld [vmem:[%s2 + $0x2c] sm:$0xf]
      %v5063 = vld [vmem:[%s2 + $0x30] sm:$0xf]
      %v5064 = vld [vmem:[%s2 + $0x34] sm:$0xf]
      %v5065 = vld [vmem:[%s2 + $0x38] sm:$0xf]
      %v5066 = vld [vmem:[%s2 + $0x3c] sm:$0xf]
      %v5067 = vld [vmem:[%s2 + $0x40] sm:$0xf]
      %v5068 = vld [vmem:[%s2 + $0x44] sm:$0xf]
      %v5087 = vunpack.c.l.b16 %v5051
      %v5088 = vunpack.c.l.b16 %v5052
      %v5089 = vunpack.c.l.b16 %v5053
      %v5090 = vunpack.c.l.b16 %v5054
      %v5091 = vunpack.c.l.b16 %v5055
      %v5092 = vunpack.c.l.b16 %v5056
      %v5093 = vunpack.c.l.b16 %v5057
      %v5094 = vunpack.c.l.b16 %v5058
      %v5095 = vunpack.c.l.b16 %v5059
      %v5096 = vunpack.c.l.b16 %v5060
      %v5097 = vunpack.c.l.b16 %v5061
      %v5098 = vunpack.c.l.b16 %v5062
      %v5099 = vunpack.c.l.b16 %v5063
      %v5100 = vunpack.c.l.b16 %v5064
      %v5101 = vunpack.c.l.b16 %v5065
      %v5102 = vunpack.c.l.b16 %v5066
      %v5103 = vunpack.c.l.b16 %v5067
      %v5104 = vunpack.c.l.b16 %v5068
      %v5105 = vpack.c.b16 %v5088, %v5087
      %v5106 = vpack.c.b16 %v5090, %v5089
      %v5107 = vpack.c.b16 %v5092, %v5091
      %v5108 = vpack.c.b16 %v5094, %v5093
      %v5109 = vpack.c.b16 %v5096, %v5095
      %v5110 = vpack.c.b16 %v5098, %v5097
      %v5111 = vpack.c.b16 %v5100, %v5099
      %v5112 = vpack.c.b16 %v5102, %v5101
      %v5113 = vpack.c.b16 %v5104, %v5103
      %v5124 = vsel %vm4696, %v4427, 0
      %v5127 = vsel %vm4696, %v4429, 0
      %v5130 = vsel %vm4696, %v4432, 0
      %v5133 = vsel %vm4696, %v4434, 0
      %v5136 = vsel %vm4696, %v4437, 0
      %v5139 = vsel %vm4696, %v4439, 0
      %v5142 = vsel %vm4696, %v4442, 0
      %v5145 = vsel %vm4696, %v4444, 0
      %v5148 = vsel %vm4696, %v4447, 0
      %v5151 = vsel %vm4696, %v4449, 0
      %v5154 = vsel %vm4696, %v4452, 0
      %v5157 = vsel %vm4696, %v4454, 0
      %v5160 = vsel %vm4696, %v4457, 0
      %v5163 = vsel %vm4696, %v4459, 0
      %v5166 = vsel %vm4696, %v4462, 0
      %v5169 = vsel %vm4696, %v4464, 0
      %v5172 = vsel %vm4696, %v4693, 0
      %v5175 = vsel %vm4696, %v4695, 0
      %5177 = vmatprep.subr.bf16.mxu0 0
      %5178 = vmatpush1.bf16.msra.mxu0 %v5112
      %5179 = vmatprep.subr.bf16.mxu0 0
      %5180 = vmatpush1.bf16.msra.mxu0 %v5111
      %5181 = vmatprep.subr.bf16.mxu0 0
      %5182 = vmatpush1.bf16.msra.mxu0 %v5110
      %5183 = vmatprep.subr.bf16.mxu0 0
      %5184 = vmatpush1.bf16.msra.mxu0 %v5109
      %5185 = vmatprep.subr.bf16.mxu0 0
      %5186 = vmatpush1.bf16.msra.mxu0 %v5108
      %5187 = vmatprep.subr.bf16.mxu0 0
      %5188 = vmatpush1.bf16.msra.mxu0 %v5107
      %5189 = vmatprep.subr.bf16.mxu0 0
      %5190 = vmatpush1.bf16.msra.mxu0 %v5106
      %5191 = vmatprep.subr.bf16.mxu0 0
      %5192 = vmatpush1.bf16.msra.mxu0 %v5105
      %5193 = vmatprep.subr.bf16.mxu0 0
      %5194 = vmatpush2.bf16.msra.mxu0 0
      %5195 = vmatprep.subr.bf16.mxu0 0
      %5196 = vmatpush2.bf16.msra.mxu0 0
      %5197 = vmatprep.subr.bf16.mxu0 0
      %5198 = vmatpush2.bf16.msra.mxu0 0
      %5199 = vmatprep.subr.bf16.mxu0 0
      %5200 = vmatpush2.bf16.msra.mxu0 0
      %5201 = vmatprep.subr.bf16.mxu0 0
      %5202 = vmatpush2.bf16.msra.mxu0 0
      %5203 = vmatprep.subr.bf16.mxu0 0
      %5204 = vmatpush2.bf16.msra.mxu0 0
      %5205 = vmatprep.subr.bf16.mxu0 0
      %5206 = vmatpush2.bf16.msra.mxu0 0
      %5207 = vmatprep.subr.bf16.mxu0 0
      %5208 = vmatpush2.bf16.msra.mxu0 %v5113
      %5209 = vmatprep.mubr.bf16.mxu0 %v5124
      %5210 = vmatmul.mubr.bf16.gmra.mxu0 %v4970
      %v5211 = vpop.f32.mrf.mxu0
      %v5212 = vadd.f32 0.0, %v5211
      %v5213 = vpop.f32.mrf.mxu0
      %v5214 = vpop.f32.mrf.mxu0
      %v5215 = vadd.f32 0.0, %v5214
      %v5216 = vpop.f32.mrf.mxu0
      %5217 = vmatprep.mubr.bf16.mxu0 %v5127
      %5218 = vmatmul.mubr.bf16.gmra.mxu0 %v4973
      %v5219 = vpop.f32.mrf.mxu0
      %v5220 = vadd.f32 0.0, %v5219
      %v5221 = vpop.f32.mrf.mxu0
      %v5222 = vpop.f32.mrf.mxu0
      %v5223 = vadd.f32 0.0, %v5222
      %v5224 = vpop.f32.mrf.mxu0
      %5225 = vmatprep.mubr.bf16.mxu0 %v5130
      %5226 = vmatmul.mubr.bf16.gmra.mxu0 %v4976
      %v5227 = vpop.f32.mrf.mxu0
      %v5228 = vadd.f32 0.0, %v5227
      %v5229 = vpop.f32.mrf.mxu0
      %v5230 = vpop.f32.mrf.mxu0
      %v5231 = vadd.f32 0.0, %v5230
      %v5232 = vpop.f32.mrf.mxu0
      %5233 = vmatprep.mubr.bf16.mxu0 %v5133
      %5234 = vmatmul.mubr.bf16.gmra.mxu0 %v4979
      %v5235 = vpop.f32.mrf.mxu0
      %v5236 = vadd.f32 0.0, %v5235
      %v5237 = vpop.f32.mrf.mxu0
      %v5238 = vpop.f32.mrf.mxu0
      %v5239 = vadd.f32 0.0, %v5238
      %v5240 = vpop.f32.mrf.mxu0
      %5241 = vmatprep.mubr.bf16.mxu0 %v5130
      %5242 = vmatmul.mubr.bf16.gmra.mxu0 %v4981
      %v5243 = vpop.f32.mrf.mxu0
      %v5244 = vadd.f32 0.0, %v5243
      %v5245 = vpop.f32.mrf.mxu0
      %v5246 = vpop.f32.mrf.mxu0
      %v5247 = vadd.f32 0.0, %v5246
      %v5248 = vpop.f32.mrf.mxu0
      %5249 = vmatprep.mubr.bf16.mxu0 %v5133
      %5250 = vmatmul.mubr.bf16.gmra.mxu0 %v4983
      %v5251 = vpop.f32.mrf.mxu0
      %v5252 = vadd.f32 0.0, %v5251
      %v5253 = vpop.f32.mrf.mxu0
      %v5254 = vpop.f32.mrf.mxu0
      %v5255 = vadd.f32 0.0, %v5254
      %v5256 = vpop.f32.mrf.mxu0
      %5257 = vmatprep.mubr.bf16.mxu0 %v5136
      %5258 = vmatmul.mubr.bf16.gmra.mxu0 %v4986
      %v5259 = vpop.f32.mrf.mxu0
      %v5260 = vadd.f32 0.0, %v5259
      %v5261 = vpop.f32.mrf.mxu0
      %v5262 = vpop.f32.mrf.mxu0
      %v5263 = vadd.f32 0.0, %v5262
      %v5264 = vpop.f32.mrf.mxu0
      %5265 = vmatprep.mubr.bf16.mxu0 %v5139
      %5266 = vmatmul.mubr.bf16.gmra.mxu0 %v4989
      %v5267 = vpop.f32.mrf.mxu0
      %v5268 = vadd.f32 0.0, %v5267
      %v5269 = vpop.f32.mrf.mxu0
      %v5270 = vpop.f32.mrf.mxu0
      %v5271 = vadd.f32 0.0, %v5270
      %v5272 = vpop.f32.mrf.mxu0
      %5273 = vmatprep.mubr.bf16.mxu0 %v5136
      %5274 = vmatmul.mubr.bf16.gmra.mxu0 %v4991
      %v5275 = vpop.f32.mrf.mxu0
      %v5276 = vadd.f32 0.0, %v5275
      %v5277 = vpop.f32.mrf.mxu0
      %v5278 = vpop.f32.mrf.mxu0
      %v5279 = vadd.f32 0.0, %v5278
      %v5280 = vpop.f32.mrf.mxu0
      %5281 = vmatprep.mubr.bf16.mxu0 %v5139
      %5282 = vmatmul.mubr.bf16.gmra.mxu0 %v4993
      %v5283 = vpop.f32.mrf.mxu0
      %v5284 = vadd.f32 0.0, %v5283
      %v5285 = vpop.f32.mrf.mxu0
      %v5286 = vpop.f32.mrf.mxu0
      %v5287 = vadd.f32 0.0, %v5286
      %v5288 = vpop.f32.mrf.mxu0
      %5289 = vmatprep.mubr.bf16.mxu0 %v5142
      %5290 = vmatmul.mubr.bf16.gmra.mxu0 %v4996
      %v5291 = vpop.f32.mrf.mxu0
      %v5292 = vadd.f32 0.0, %v5291
      %v5293 = vpop.f32.mrf.mxu0
      %v5294 = vpop.f32.mrf.mxu0
      %v5295 = vadd.f32 0.0, %v5294
      %v5296 = vpop.f32.mrf.mxu0
      %5297 = vmatprep.mubr.bf16.mxu0 %v5145
      %5298 = vmatmul.mubr.bf16.gmra.mxu0 %v4999
      %v5299 = vpop.f32.mrf.mxu0
      %v5300 = vadd.f32 0.0, %v5299
      %v5301 = vpop.f32.mrf.mxu0
      %v5302 = vpop.f32.mrf.mxu0
      %v5303 = vadd.f32 0.0, %v5302
      %v5304 = vpop.f32.mrf.mxu0
      %5305 = vmatprep.mubr.bf16.mxu0 %v5142
      %5306 = vmatmul.mubr.bf16.gmra.mxu0 %v5001
      %v5307 = vpop.f32.mrf.mxu0
      %v5308 = vadd.f32 0.0, %v5307
      %v5309 = vpop.f32.mrf.mxu0
      %v5310 = vpop.f32.mrf.mxu0
      %v5311 = vadd.f32 0.0, %v5310
      %v5312 = vpop.f32.mrf.mxu0
      %5313 = vmatprep.mubr.bf16.mxu0 %v5145
      %5314 = vmatmul.mubr.bf16.gmra.mxu0 %v5003
      %v5315 = vpop.f32.mrf.mxu0
      %v5316 = vadd.f32 0.0, %v5315
      %v5317 = vpop.f32.mrf.mxu0
      %v5318 = vpop.f32.mrf.mxu0
      %v5319 = vadd.f32 0.0, %v5318
      %v5320 = vpop.f32.mrf.mxu0
      %5321 = vmatprep.mubr.bf16.mxu0 %v5148
      %5322 = vmatmul.mubr.bf16.gmra.mxu0 %v5006
      %v5323 = vpop.f32.mrf.mxu0
      %v5324 = vadd.f32 0.0, %v5323
      %v5325 = vpop.f32.mrf.mxu0
      %v5326 = vpop.f32.mrf.mxu0
      %v5327 = vadd.f32 0.0, %v5326
      %v5328 = vpop.f32.mrf.mxu0
      %5329 = vmatprep.mubr.bf16.mxu0 %v5151
      %5330 = vmatmul.mubr.bf16.gmra.mxu0 %v5009
      %v5331 = vpop.f32.mrf.mxu0
      %v5332 = vadd.f32 0.0, %v5331
      %v5333 = vpop.f32.mrf.mxu0
      %v5334 = vpop.f32.mrf.mxu0
      %v5335 = vadd.f32 0.0, %v5334
      %v5336 = vpop.f32.mrf.mxu0
      %5337 = vmatprep.mubr.bf16.mxu0 %v5148
      %5338 = vmatmul.mubr.bf16.gmra.mxu0 %v5011
      %v5339 = vpop.f32.mrf.mxu0
      %v5340 = vadd.f32 0.0, %v5339
      %v5341 = vpop.f32.mrf.mxu0
      %v5342 = vpop.f32.mrf.mxu0
      %v5343 = vadd.f32 0.0, %v5342
      %v5344 = vpop.f32.mrf.mxu0
      %5345 = vmatprep.mubr.bf16.mxu0 %v5151
      %5346 = vmatmul.mubr.bf16.gmra.mxu0 %v5013
      %v5347 = vpop.f32.mrf.mxu0
      %v5348 = vadd.f32 0.0, %v5347
      %v5349 = vpop.f32.mrf.mxu0
      %v5350 = vpop.f32.mrf.mxu0
      %v5351 = vadd.f32 0.0, %v5350
      %v5352 = vpop.f32.mrf.mxu0
      %5353 = vmatprep.mubr.bf16.mxu0 %v5154
      %5354 = vmatmul.mubr.bf16.gmra.mxu0 %v5016
      %v5355 = vpop.f32.mrf.mxu0
      %v5356 = vadd.f32 0.0, %v5355
      %v5357 = vpop.f32.mrf.mxu0
      %v5358 = vpop.f32.mrf.mxu0
      %v5359 = vadd.f32 0.0, %v5358
      %v5360 = vpop.f32.mrf.mxu0
      %5361 = vmatprep.mubr.bf16.mxu0 %v5157
      %5362 = vmatmul.mubr.bf16.gmra.mxu0 %v5019
      %v5363 = vpop.f32.mrf.mxu0
      %v5364 = vadd.f32 0.0, %v5363
      %v5365 = vpop.f32.mrf.mxu0
      %v5366 = vpop.f32.mrf.mxu0
      %v5367 = vadd.f32 0.0, %v5366
      %v5368 = vpop.f32.mrf.mxu0
      %5369 = vmatprep.mubr.bf16.mxu0 %v5154
      %5370 = vmatmul.mubr.bf16.gmra.mxu0 %v5021
      %v5371 = vpop.f32.mrf.mxu0
      %v5372 = vadd.f32 0.0, %v5371
      %v5373 = vpop.f32.mrf.mxu0
      %v5374 = vpop.f32.mrf.mxu0
      %v5375 = vadd.f32 0.0, %v5374
      %v5376 = vpop.f32.mrf.mxu0
      %5377 = vmatprep.mubr.bf16.mxu0 %v5157
      %5378 = vmatmul.mubr.bf16.gmra.mxu0 %v5023
      %v5379 = vpop.f32.mrf.mxu0
      %v5380 = vadd.f32 0.0, %v5379
      %v5381 = vpop.f32.mrf.mxu0
      %v5382 = vpop.f32.mrf.mxu0
      %v5383 = vadd.f32 0.0, %v5382
      %v5384 = vpop.f32.mrf.mxu0
      %5385 = vmatprep.mubr.bf16.mxu0 %v5160
      %5386 = vmatmul.mubr.bf16.gmra.mxu0 %v5026
      %v5387 = vpop.f32.mrf.mxu0
      %v5388 = vadd.f32 0.0, %v5387
      %v5389 = vpop.f32.mrf.mxu0
      %v5390 = vpop.f32.mrf.mxu0
      %v5391 = vadd.f32 0.0, %v5390
      %v5392 = vpop.f32.mrf.mxu0
      %5393 = vmatprep.mubr.bf16.mxu0 %v5163
      %5394 = vmatmul.mubr.bf16.gmra.mxu0 %v5029
      %v5395 = vpop.f32.mrf.mxu0
      %v5396 = vadd.f32 0.0, %v5395
      %v5397 = vpop.f32.mrf.mxu0
      %v5398 = vpop.f32.mrf.mxu0
      %v5399 = vadd.f32 0.0, %v5398
      %v5400 = vpop.f32.mrf.mxu0
      %5401 = vmatprep.mubr.bf16.mxu0 %v5160
      %5402 = vmatmul.mubr.bf16.gmra.mxu0 %v5031
      %v5403 = vpop.f32.mrf.mxu0
      %v5404 = vadd.f32 0.0, %v5403
      %v5405 = vpop.f32.mrf.mxu0
      %v5406 = vpop.f32.mrf.mxu0
      %v5407 = vadd.f32 0.0, %v5406
      %v5408 = vpop.f32.mrf.mxu0
      %5409 = vmatprep.mubr.bf16.mxu0 %v5163
      %5410 = vmatmul.mubr.bf16.gmra.mxu0 %v5033
      %v5411 = vpop.f32.mrf.mxu0
      %v5412 = vadd.f32 0.0, %v5411
      %v5413 = vpop.f32.mrf.mxu0
      %v5414 = vpop.f32.mrf.mxu0
      %v5415 = vadd.f32 0.0, %v5414
      %v5416 = vpop.f32.mrf.mxu0
      %5417 = vmatprep.mubr.bf16.mxu0 %v5166
      %5418 = vmatmul.mubr.bf16.gmra.mxu0 %v5036
      %v5419 = vpop.f32.mrf.mxu0
      %v5420 = vadd.f32 0.0, %v5419
      %v5421 = vpop.f32.mrf.mxu0
      %v5422 = vpop.f32.mrf.mxu0
      %v5423 = vadd.f32 0.0, %v5422
      %v5424 = vpop.f32.mrf.mxu0
      %5425 = vmatprep.mubr.bf16.mxu0 %v5169
      %5426 = vmatmul.mubr.bf16.gmra.mxu0 %v5039
      %v5427 = vpop.f32.mrf.mxu0
      %v5428 = vadd.f32 0.0, %v5427
      %v5429 = vpop.f32.mrf.mxu0
      %v5430 = vpop.f32.mrf.mxu0
      %v5431 = vadd.f32 0.0, %v5430
      %v5432 = vpop.f32.mrf.mxu0
      %5433 = vmatprep.mubr.bf16.mxu0 %v5166
      %5434 = vmatmul.mubr.bf16.gmra.mxu0 %v5041
      %v5435 = vpop.f32.mrf.mxu0
      %v5436 = vadd.f32 0.0, %v5435
      %v5437 = vpop.f32.mrf.mxu0
      %v5438 = vpop.f32.mrf.mxu0
      %v5439 = vadd.f32 0.0, %v5438
      %v5440 = vpop.f32.mrf.mxu0
      %5441 = vmatprep.mubr.bf16.mxu0 %v5169
      %5442 = vmatmul.mubr.bf16.gmra.mxu0 %v5043
      %v5443 = vpop.f32.mrf.mxu0
      %v5444 = vadd.f32 0.0, %v5443
      %v5445 = vpop.f32.mrf.mxu0
      %v5446 = vpop.f32.mrf.mxu0
      %v5447 = vadd.f32 0.0, %v5446
      %v5448 = vpop.f32.mrf.mxu0
      %5449 = vmatprep.mubr.bf16.mxu0 %v5172
      %5450 = vmatmul.mubr.bf16.gmra.mxu0 %v5046
      %v5451 = vpop.f32.mrf.mxu0
      %v5452 = vadd.f32 0.0, %v5451
      %v5453 = vpop.f32.mrf.mxu0
      %v5454 = vpop.f32.mrf.mxu0
      %v5455 = vadd.f32 0.0, %v5454
      %v5456 = vpop.f32.mrf.mxu0
      %5457 = vmatprep.mubr.bf16.mxu0 %v5175
      %5458 = vmatmul.mubr.bf16.gmra.mxu0 %v5049
      %v5459 = vpop.f32.mrf.mxu0
      %v5460 = vadd.f32 0.0, %v5459
      %v5461 = vpop.f32.mrf.mxu0
      %v5462 = vpop.f32.mrf.mxu0
      %v5463 = vadd.f32 0.0, %v5462
      %v5464 = vpop.f32.mrf.mxu0
      %5465 = vdwg.mxu0
      %v5466 = vmax.f32 %v5212, 0.0
      %v5467 = vmax.f32 %v5215, 0.0
      %v5468 = vmax.f32 %v5220, 0.0
      %v5469 = vmax.f32 %v5223, 0.0
      %v5470 = vmax.f32 %v5228, 0.0
      %v5471 = vmax.f32 %v5231, 0.0
      %v5472 = vmax.f32 %v5236, 0.0
      %v5473 = vmax.f32 %v5239, 0.0
      %v5474 = vmax.f32 %v5244, 0.0
      %v5475 = vmax.f32 %v5247, 0.0
      %v5476 = vmax.f32 %v5252, 0.0
      %v5477 = vmax.f32 %v5255, 0.0
      %v5478 = vmax.f32 %v5260, 0.0
      %v5479 = vmax.f32 %v5263, 0.0
      %v5480 = vmax.f32 %v5268, 0.0
      %v5481 = vmax.f32 %v5271, 0.0
      %v5482 = vmax.f32 %v5276, 0.0
      %v5483 = vmax.f32 %v5279, 0.0
      %v5484 = vmax.f32 %v5284, 0.0
      %v5485 = vmax.f32 %v5287, 0.0
      %v5486 = vmax.f32 %v5292, 0.0
      %v5487 = vmax.f32 %v5295, 0.0
      %v5488 = vmax.f32 %v5300, 0.0
      %v5489 = vmax.f32 %v5303, 0.0
      %v5490 = vmax.f32 %v5308, 0.0
      %v5491 = vmax.f32 %v5311, 0.0
      %v5492 = vmax.f32 %v5316, 0.0
      %v5493 = vmax.f32 %v5319, 0.0
      %v5494 = vmax.f32 %v5324, 0.0
      %v5495 = vmax.f32 %v5327, 0.0
      %v5496 = vmax.f32 %v5332, 0.0
      %v5497 = vmax.f32 %v5335, 0.0
      %v5498 = vmax.f32 %v5340, 0.0
      %v5499 = vmax.f32 %v5343, 0.0
      %v5500 = vmax.f32 %v5348, 0.0
      %v5501 = vmax.f32 %v5351, 0.0
      %v5502 = vmax.f32 %v5356, 0.0
      %v5503 = vmax.f32 %v5359, 0.0
      %v5504 = vmax.f32 %v5364, 0.0
      %v5505 = vmax.f32 %v5367, 0.0
      %v5506 = vmax.f32 %v5372, 0.0
      %v5507 = vmax.f32 %v5375, 0.0
      %v5508 = vmax.f32 %v5380, 0.0
      %v5509 = vmax.f32 %v5383, 0.0
      %v5510 = vmax.f32 %v5388, 0.0
      %v5511 = vmax.f32 %v5391, 0.0
      %v5512 = vmax.f32 %v5396, 0.0
      %v5513 = vmax.f32 %v5399, 0.0
      %v5514 = vmax.f32 %v5404, 0.0
      %v5515 = vmax.f32 %v5407, 0.0
      %v5516 = vmax.f32 %v5412, 0.0
      %v5517 = vmax.f32 %v5415, 0.0
      %v5518 = vmax.f32 %v5420, 0.0
      %v5519 = vmax.f32 %v5423, 0.0
      %v5520 = vmax.f32 %v5428, 0.0
      %v5521 = vmax.f32 %v5431, 0.0
      %v5522 = vmax.f32 %v5436, 0.0
      %v5523 = vmax.f32 %v5439, 0.0
      %v5524 = vmax.f32 %v5444, 0.0
      %v5525 = vmax.f32 %v5447, 0.0
      %v5526 = vmax.f32 %v5452, 0.0
      %v5527 = vmax.f32 %v5455, 0.0
      %v5528 = vmax.f32 %v5460, 0.0
      %v5529 = vmax.f32 %v5463, 0.0
      %v5530 = vpack.c.bf16 %v5467, %v5466
      %v5531 = vpack.c.bf16 %v5469, %v5468
      %v5532 = vpack.c.bf16 %v5471, %v5470
      %v5533 = vpack.c.bf16 %v5473, %v5472
      %v5534 = vpack.c.bf16 %v5475, %v5474
      %v5535 = vpack.c.bf16 %v5477, %v5476
      %v5536 = vpack.c.bf16 %v5479, %v5478
      %v5537 = vpack.c.bf16 %v5481, %v5480
      %v5538 = vpack.c.bf16 %v5483, %v5482
      %v5539 = vpack.c.bf16 %v5485, %v5484
      %v5540 = vpack.c.bf16 %v5487, %v5486
      %v5541 = vpack.c.bf16 %v5489, %v5488
      %v5542 = vpack.c.bf16 %v5491, %v5490
      %v5543 = vpack.c.bf16 %v5493, %v5492
      %v5544 = vpack.c.bf16 %v5495, %v5494
      %v5545 = vpack.c.bf16 %v5497, %v5496
      %v5546 = vpack.c.bf16 %v5499, %v5498
      %v5547 = vpack.c.bf16 %v5501, %v5500
      %v5548 = vpack.c.bf16 %v5503, %v5502
      %v5549 = vpack.c.bf16 %v5505, %v5504
      %v5550 = vpack.c.bf16 %v5507, %v5506
      %v5551 = vpack.c.bf16 %v5509, %v5508
      %v5552 = vpack.c.bf16 %v5511, %v5510
      %v5553 = vpack.c.bf16 %v5513, %v5512
      %v5554 = vpack.c.bf16 %v5515, %v5514
      %v5555 = vpack.c.bf16 %v5517, %v5516
      %v5556 = vpack.c.bf16 %v5519, %v5518
      %v5557 = vpack.c.bf16 %v5521, %v5520
      %v5558 = vpack.c.bf16 %v5523, %v5522
      %v5559 = vpack.c.bf16 %v5525, %v5524
      %v5560 = vpack.c.bf16 %v5527, %v5526
      %v5561 = vpack.c.bf16 %v5529, %v5528
      %v5594 = vunpack.c.l.b16 %v5530
      %v5595 = vunpack.c.h.b16 %v5530
      %v5596 = vunpack.c.l.b16 %v5531
      %v5597 = vunpack.c.h.b16 %v5531
      %v5598 = vunpack.c.l.b16 %v5532
      %v5599 = vunpack.c.h.b16 %v5532
      %v5600 = vunpack.c.l.b16 %v5533
      %v5601 = vunpack.c.h.b16 %v5533
      %v5602 = vunpack.c.l.b16 %v5534
      %v5603 = vunpack.c.h.b16 %v5534
      %v5604 = vunpack.c.l.b16 %v5535
      %v5605 = vunpack.c.h.b16 %v5535
      %v5606 = vunpack.c.l.b16 %v5536
      %v5607 = vunpack.c.h.b16 %v5536
      %v5608 = vunpack.c.l.b16 %v5537
      %v5609 = vunpack.c.h.b16 %v5537
      %v5610 = vunpack.c.l.b16 %v5538
      %v5611 = vunpack.c.h.b16 %v5538
      %v5612 = vunpack.c.l.b16 %v5539
      %v5613 = vunpack.c.h.b16 %v5539
      %v5614 = vunpack.c.l.b16 %v5540
      %v5615 = vunpack.c.h.b16 %v5540
      %v5616 = vunpack.c.l.b16 %v5541
      %v5617 = vunpack.c.h.b16 %v5541
      %v5618 = vunpack.c.l.b16 %v5542
      %v5619 = vunpack.c.h.b16 %v5542
      %v5620 = vunpack.c.l.b16 %v5543
      %v5621 = vunpack.c.h.b16 %v5543
      %v5622 = vunpack.c.l.b16 %v5544
      %v5623 = vunpack.c.h.b16 %v5544
      %v5624 = vunpack.c.l.b16 %v5545
      %v5625 = vunpack.c.h.b16 %v5545
      %v5626 = vunpack.c.l.b16 %v5546
      %v5627 = vunpack.c.h.b16 %v5546
      %v5628 = vunpack.c.l.b16 %v5547
      %v5629 = vunpack.c.h.b16 %v5547
      %v5630 = vunpack.c.l.b16 %v5548
      %v5631 = vunpack.c.h.b16 %v5548
      %v5632 = vunpack.c.l.b16 %v5549
      %v5633 = vunpack.c.h.b16 %v5549
      %v5634 = vunpack.c.l.b16 %v5550
      %v5635 = vunpack.c.h.b16 %v5550
      %v5636 = vunpack.c.l.b16 %v5551
      %v5637 = vunpack.c.h.b16 %v5551
      %v5638 = vunpack.c.l.b16 %v5552
      %v5639 = vunpack.c.h.b16 %v5552
      %v5640 = vunpack.c.l.b16 %v5553
      %v5641 = vunpack.c.h.b16 %v5553
      %v5642 = vunpack.c.l.b16 %v5554
      %v5643 = vunpack.c.h.b16 %v5554
      %v5644 = vunpack.c.l.b16 %v5555
      %v5645 = vunpack.c.h.b16 %v5555
      %v5646 = vunpack.c.l.b16 %v5556
      %v5647 = vunpack.c.h.b16 %v5556
      %v5648 = vunpack.c.l.b16 %v5557
      %v5649 = vunpack.c.h.b16 %v5557
      %v5650 = vunpack.c.l.b16 %v5558
      %v5651 = vunpack.c.h.b16 %v5558
      %v5652 = vunpack.c.l.b16 %v5559
      %v5653 = vunpack.c.h.b16 %v5559
      %v5654 = vunpack.c.l.b16 %v5560
      %v5655 = vunpack.c.h.b16 %v5560
      %v5656 = vunpack.c.l.b16 %v5561
      %v5657 = vunpack.c.h.b16 %v5561
      %v5658 = vpack.c.b16 %v5594, %v5594
      %v5659 = vpack.c.b16 %v5595, %v5595
      %v5660 = vpack.c.b16 %v5596, %v5596
      %v5661 = vpack.c.b16 %v5597, %v5597
      %v5662 = vpack.c.b16 %v5598, %v5598
      %v5663 = vpack.c.b16 %v5599, %v5599
      %v5664 = vpack.c.b16 %v5600, %v5600
      %v5665 = vpack.c.b16 %v5601, %v5601
      %v5666 = vpack.c.b16 %v5602, %v5602
      %v5667 = vpack.c.b16 %v5603, %v5603
      %v5668 = vpack.c.b16 %v5604, %v5604
      %v5669 = vpack.c.b16 %v5605, %v5605
      %v5670 = vpack.c.b16 %v5606, %v5606
      %v5671 = vpack.c.b16 %v5607, %v5607
      %v5672 = vpack.c.b16 %v5608, %v5608
      %v5673 = vpack.c.b16 %v5609, %v5609
      %v5674 = vpack.c.b16 %v5610, %v5610
      %v5675 = vpack.c.b16 %v5611, %v5611
      %v5676 = vpack.c.b16 %v5612, %v5612
      %v5677 = vpack.c.b16 %v5613, %v5613
      %v5678 = vpack.c.b16 %v5614, %v5614
      %v5679 = vpack.c.b16 %v5615, %v5615
      %v5680 = vpack.c.b16 %v5616, %v5616
      %v5681 = vpack.c.b16 %v5617, %v5617
      %v5682 = vpack.c.b16 %v5618, %v5618
      %v5683 = vpack.c.b16 %v5619, %v5619
      %v5684 = vpack.c.b16 %v5620, %v5620
      %v5685 = vpack.c.b16 %v5621, %v5621
      %v5686 = vpack.c.b16 %v5622, %v5622
      %v5687 = vpack.c.b16 %v5623, %v5623
      %v5688 = vpack.c.b16 %v5624, %v5624
      %v5689 = vpack.c.b16 %v5625, %v5625
      %v5690 = vpack.c.b16 %v5626, %v5626
      %v5691 = vpack.c.b16 %v5627, %v5627
      %v5692 = vpack.c.b16 %v5628, %v5628
      %v5693 = vpack.c.b16 %v5629, %v5629
      %v5694 = vpack.c.b16 %v5630, %v5630
      %v5695 = vpack.c.b16 %v5631, %v5631
      %v5696 = vpack.c.b16 %v5632, %v5632
      %v5697 = vpack.c.b16 %v5633, %v5633
      %v5698 = vpack.c.b16 %v5634, %v5634
      %v5699 = vpack.c.b16 %v5635, %v5635
      %v5700 = vpack.c.b16 %v5636, %v5636
      %v5701 = vpack.c.b16 %v5637, %v5637
      %v5702 = vpack.c.b16 %v5638, %v5638
      %v5703 = vpack.c.b16 %v5639, %v5639
      %v5704 = vpack.c.b16 %v5640, %v5640
      %v5705 = vpack.c.b16 %v5641, %v5641
      %v5706 = vpack.c.b16 %v5642, %v5642
      %v5707 = vpack.c.b16 %v5643, %v5643
      %v5708 = vpack.c.b16 %v5644, %v5644
      %v5709 = vpack.c.b16 %v5645, %v5645
      %v5710 = vpack.c.b16 %v5646, %v5646
      %v5711 = vpack.c.b16 %v5647, %v5647
      %v5712 = vpack.c.b16 %v5648, %v5648
      %v5713 = vpack.c.b16 %v5649, %v5649
      %v5714 = vpack.c.b16 %v5650, %v5650
      %v5715 = vpack.c.b16 %v5651, %v5651
      %v5716 = vpack.c.b16 %v5652, %v5652
      %v5717 = vpack.c.b16 %v5653, %v5653
      %v5718 = vpack.c.b16 %v5654, %v5654
      %v5719 = vpack.c.b16 %v5655, %v5655
      %v5720 = vpack.c.b16 %v5656, %v5656
      %v5721 = vpack.c.b16 %v5657, %v5657
      %vm5786 = vcmask 125952
      %5787 = vst.msk [vmem:[%s247] sm:$0xf] %vm5786, %v5658
      %5788 = vst.msk [vmem:[%s247 + $0x4] sm:$0xf] %vm5786, %v5659
      %5789 = vst.msk [vmem:[%s247 + $0x8] sm:$0xf] %vm5786, %v5660
      %5790 = vst.msk [vmem:[%s247 + $0xc] sm:$0xf] %vm5786, %v5661
      %5791 = vst.msk [vmem:[%s247 + $0x10] sm:$0xf] %vm5786, %v5662
      %5792 = vst.msk [vmem:[%s247 + $0x14] sm:$0xf] %vm5786, %v5663
      %5793 = vst.msk [vmem:[%s247 + $0x18] sm:$0xf] %vm5786, %v5664
      %5794 = vst.msk [vmem:[%s247 + $0x1c] sm:$0xf] %vm5786, %v5665
      %5795 = vst.msk [vmem:[%s247 + $0x20] sm:$0xf] %vm5786, %v5666
      %5796 = vst.msk [vmem:[%s247 + $0x24] sm:$0xf] %vm5786, %v5667
      %5797 = vst.msk [vmem:[%s247 + $0x28] sm:$0xf] %vm5786, %v5668
      %5798 = vst.msk [vmem:[%s247 + $0x2c] sm:$0xf] %vm5786, %v5669
      %5799 = vst.msk [vmem:[%s247 + $0x30] sm:$0xf] %vm5786, %v5670
      %5800 = vst.msk [vmem:[%s247 + $0x34] sm:$0xf] %vm5786, %v5671
      %5801 = vst.msk [vmem:[%s247 + $0x38] sm:$0xf] %vm5786, %v5672
      %5802 = vst.msk [vmem:[%s247 + $0x3c] sm:$0xf] %vm5786, %v5673
      %5803 = vst.msk [vmem:[%s247 + $0x40] sm:$0xf] %vm5786, %v5674
      %5804 = vst.msk [vmem:[%s247 + $0x44] sm:$0xf] %vm5786, %v5675
      %5805 = vst.msk [vmem:[%s247 + $0x48] sm:$0xf] %vm5786, %v5676
      %5806 = vst.msk [vmem:[%s247 + $0x4c] sm:$0xf] %vm5786, %v5677
      %5807 = vst.msk [vmem:[%s247 + $0x50] sm:$0xf] %vm5786, %v5678
      %5808 = vst.msk [vmem:[%s247 + $0x54] sm:$0xf] %vm5786, %v5679
      %5809 = vst.msk [vmem:[%s247 + $0x58] sm:$0xf] %vm5786, %v5680
      %5810 = vst.msk [vmem:[%s247 + $0x5c] sm:$0xf] %vm5786, %v5681
      %5811 = vst.msk [vmem:[%s247 + $0x60] sm:$0xf] %vm5786, %v5682
      %5812 = vst.msk [vmem:[%s247 + $0x64] sm:$0xf] %vm5786, %v5683
      %5813 = vst.msk [vmem:[%s247 + $0x68] sm:$0xf] %vm5786, %v5684
      %5814 = vst.msk [vmem:[%s247 + $0x6c] sm:$0xf] %vm5786, %v5685
      %5815 = vst.msk [vmem:[%s247 + $0x70] sm:$0xf] %vm5786, %v5686
      %5816 = vst.msk [vmem:[%s247 + $0x74] sm:$0xf] %vm5786, %v5687
      %5817 = vst.msk [vmem:[%s247 + $0x78] sm:$0xf] %vm5786, %v5688
      %5818 = vst.msk [vmem:[%s247 + $0x7c] sm:$0xf] %vm5786, %v5689
      %5819 = vst.msk [vmem:[%s247 + $0x80] sm:$0xf] %vm5786, %v5690
      %5820 = vst.msk [vmem:[%s247 + $0x84] sm:$0xf] %vm5786, %v5691
      %5821 = vst.msk [vmem:[%s247 + $0x88] sm:$0xf] %vm5786, %v5692
      %5822 = vst.msk [vmem:[%s247 + $0x8c] sm:$0xf] %vm5786, %v5693
      %5823 = vst.msk [vmem:[%s247 + $0x90] sm:$0xf] %vm5786, %v5694
      %5824 = vst.msk [vmem:[%s247 + $0x94] sm:$0xf] %vm5786, %v5695
      %5825 = vst.msk [vmem:[%s247 + $0x98] sm:$0xf] %vm5786, %v5696
      %5826 = vst.msk [vmem:[%s247 + $0x9c] sm:$0xf] %vm5786, %v5697
      %5827 = vst.msk [vmem:[%s247 + $0xa0] sm:$0xf] %vm5786, %v5698
      %5828 = vst.msk [vmem:[%s247 + $0xa4] sm:$0xf] %vm5786, %v5699
      %5829 = vst.msk [vmem:[%s247 + $0xa8] sm:$0xf] %vm5786, %v5700
      %5830 = vst.msk [vmem:[%s247 + $0xac] sm:$0xf] %vm5786, %v5701
      %5831 = vst.msk [vmem:[%s247 + $0xb0] sm:$0xf] %vm5786, %v5702
      %5832 = vst.msk [vmem:[%s247 + $0xb4] sm:$0xf] %vm5786, %v5703
      %5833 = vst.msk [vmem:[%s247 + $0xb8] sm:$0xf] %vm5786, %v5704
      %5834 = vst.msk [vmem:[%s247 + $0xbc] sm:$0xf] %vm5786, %v5705
      %5835 = vst.msk [vmem:[%s247 + $0xc0] sm:$0xf] %vm5786, %v5706
      %5836 = vst.msk [vmem:[%s247 + $0xc4] sm:$0xf] %vm5786, %v5707
      %5837 = vst.msk [vmem:[%s247 + $0xc8] sm:$0xf] %vm5786, %v5708
      %5838 = vst.msk [vmem:[%s247 + $0xcc] sm:$0xf] %vm5786, %v5709
      %5839 = vst.msk [vmem:[%s247 + $0xd0] sm:$0xf] %vm5786, %v5710
      %5840 = vst.msk [vmem:[%s247 + $0xd4] sm:$0xf] %vm5786, %v5711
      %5841 = vst.msk [vmem:[%s247 + $0xd8] sm:$0xf] %vm5786, %v5712
      %5842 = vst.msk [vmem:[%s247 + $0xdc] sm:$0xf] %vm5786, %v5713
      %5843 = vst.msk [vmem:[%s247 + $0xe0] sm:$0xf] %vm5786, %v5714
      %5844 = vst.msk [vmem:[%s247 + $0xe4] sm:$0xf] %vm5786, %v5715
      %5845 = vst.msk [vmem:[%s247 + $0xe8] sm:$0xf] %vm5786, %v5716
      %5846 = vst.msk [vmem:[%s247 + $0xec] sm:$0xf] %vm5786, %v5717
      %5847 = vst.msk [vmem:[%s247 + $0xf0] sm:$0xf] %vm5786, %v5718
      %5848 = vst.msk [vmem:[%s247 + $0xf4] sm:$0xf] %vm5786, %v5719
      %5849 = vst.msk [vmem:[%s247 + $0xf8] sm:$0xf] %vm5786, %v5720
      %5850 = vst.msk [vmem:[%s247 + $0xfc] sm:$0xf] %vm5786, %v5721
      %s5851 = smul.u32 16, %s19
      %p5852 = scmp.lt.s32.totalorder %s18, 1
      %s5853 = scalar_select %p5852, %s18, 1
      %p5854 = scmp.lt.s32.totalorder %s5851, 31
      %s5855 = scalar_select %p5854, %s5851, 31
      %s5856 = smul.addr %s5855, 4
      %s5857 = smul.addr %s5853, 128
      %s5858 = sadd.s32 %s5856, %s5857
      %s5859 = smul.addr %s5858, 4
      %s5860 = scalar_lea.vmem %s3, %s5859
      // Predicated region
      $region33: #{enhancenet_forward.9} parent=31 // pred_check
        %p5861 = pneg %p123
      $region34: #{enhancenet_forward.9} parent=31 // pred_check_branch
        %5863 = sbr.rel (%p5861) target = $region36
      $region35: #{enhancenet_forward.9} parent=31 // pred_region
        %s5864 = smul.u32 16, %s19
      $region36: #{enhancenet_forward.9} parent=31 // pred_fallthru
        _
    $region32: #{enhancenet_forward.9} parent=5 // pred_fallthru
      _
    %p5865 = scmp.le.s32.totalorder 2, %s9
    // Predicated region
    $region37: #{enhancenet_forward.9} parent=5 // pred_check
      %p5866 = pneg %p5865
    $region38: #{enhancenet_forward.9} parent=5 // pred_check_branch
      %5868 = sbr.rel (%p5866) target = $region40
    $region39: #{enhancenet_forward.9} parent=5 // pred_region
      %s5869 = ssub.s32 %s9, 2
      // Predicated region
      $region41: #{enhancenet_forward.9} parent=39 // pred_check
        %p5870 = pneg %p129
      $region42: #{enhancenet_forward.9} parent=39 // pred_check_branch
        %5872 = sbr.rel (%p5870) target = $region44
      $region43: #{enhancenet_forward.9} parent=39 // pred_region
        %s5873 = smul.u32 16, %s21
        %p5874 = scmp.lt.s32.totalorder %s20, 1
        %s5875 = scalar_select %p5874, %s20, 1
        %p5876 = scmp.lt.s32.totalorder %s5873, 31
        %s5877 = scalar_select %p5876, %s5873, 31
        %s5878 = smul.addr %s5877, 4
        %s5879 = smul.addr %s5875, 128
        %s5880 = sadd.s32 %s5878, %s5879
        %s5881 = smul.addr %s5880, 4
        %s5882 = scalar_lea.vmem %s3, %s5881
      $region44: #{enhancenet_forward.9} parent=39 // pred_fallthru
        _
    $region40: #{enhancenet_forward.9} parent=5 // pred_fallthru
      _
  $region6: #{enhancenet_forward.9} parent=0 // loop_footer
    %s13 = sadd.s32 1, %s9
  $region7: #{enhancenet_forward.9} parent=0 // loop_footer_branch
    %8 = sbr.rel target = $region3
  $region8: #{enhancenet_forward.9} parent=0 // loop_exit
    _

</llo_original>
